<compile_context>
chip_gen: v5e
topology: v5e:2x2
jax: 0.10.0
libtpu: 0.0.40
codegen_flags: <defaults>
</compile_context>

<pallas_src>
import jax
import jax.numpy as jnp
from jax import lax
from jax.experimental import pallas as pl
from jax.experimental.pallas import tpu as pltpu

EPS = 1e-5          # nn.BatchNorm1d eps
NEG_SLOPE = 0.01    # nn.LeakyReLU default negative_slope
LANE = 128          # lane-dense feature padding

_VMEM = pl.BlockSpec(memory_space=pltpu.MemorySpace.VMEM)
_SMEM = pl.BlockSpec(memory_space=pltpu.MemorySpace.SMEM)


# ---------------------------------------------------------------------------
# shared math helpers (used inside the Pallas kernel and in the reference)
# ---------------------------------------------------------------------------
def _batchnorm_train(x, bn_w, bn_b):
    # nn.BatchNorm1d training mode: per-feature batch stats, biased variance.
    mean = jnp.mean(x, axis=0, keepdims=True)
    var = jnp.mean((x - mean) ** 2, axis=0, keepdims=True)
    return (x - mean) * lax.rsqrt(var + EPS) * bn_w + bn_b


def _leaky_relu(x):
    return jnp.where(x > 0, x, NEG_SLOPE * x)


def _col_to_row(col):
    # (n,1) -> (1,n) without a transpose op: mask the column onto the diagonal
    # of an (n,n) tile, then reduce over sublanes.
    n = col.shape[0]
    i0 = lax.broadcasted_iota(jnp.int32, (n, n), 0)
    i1 = lax.broadcasted_iota(jnp.int32, (n, n), 1)
    return jnp.sum(jnp.where(i0 == i1, col, 0.0), axis=0, keepdims=True)


# ---------------------------------------------------------------------------
# the single fused GraphUnet kernel
# ---------------------------------------------------------------------------
def _make_fused_kernel(sizes, l_n):
    """sizes = (N, k1, k2, ...) static per-level node counts; l_n = len(ks)."""
    f32 = jnp.float32

    def kernel(g_ref, h_ref, gw_ref, gb_ref, gbnw_ref, gbnb_ref,
               pw_ref, pb_ref, out_ref):
        # stacked GCN params: 0..l_n-1 = down, l_n = bottom,
        # l_n+1..2l_n = up, 2l_n+1..3l_n = off (GCN11)

        def gcn(idx, g_lvl, dis, x):
            # GCN with the D^-1/2 (A+I) D^-1/2 scaling folded into broadcasts.
            xn = _batchnorm_train(x, gbnw_ref[idx], gbnb_ref[idx])
            xp = jnp.dot(xn, gw_ref[idx], preferred_element_type=f32) + gb_ref[idx]
            xs = dis * xp
            return _leaky_relu(
                dis * (jnp.dot(g_lvl, xs, preferred_element_type=f32) + xs))

        g = g_ref[...]
        h = h_ref[...]
        org_h = h

        adj, diss, pts, downs = [], [], [], []

        # ------------------------- down path -------------------------------
        for i in range(l_n):
            n, kk = sizes[i], sizes[i + 1]
            dis = lax.rsqrt(jnp.sum(g, axis=1, keepdims=True) + 1.0)
            h = gcn(i, g, dis, h)
            adj.append(g)
            diss.append(dis)
            downs.append(h)

            # Pool: top-k on the raw logits (sigmoid is monotone -> same idx);
            # sigmoid evaluated only for the selected values below.
            logit = (jnp.dot(h, pw_ref[i], preferred_element_type=f32)[:, 0:1]
                     + pb_ref[i])                                    # (n, 1)

            sub_pos = lax.broadcasted_iota(jnp.int32, (n, 1), 0).astype(f32)
            lane_pos = lax.broadcasted_iota(jnp.int32, (1, n), 1).astype(f32)
            P = jnp.zeros((kk, n), f32)       # rows = one-hot selections
            PT = jnp.zeros((n, kk), f32)      # its transpose, built directly
            vals = jnp.zeros((kk, 1), f32)    # sigmoid(selected logits)
            masked = logit
            for r in range(kk):               # in-kernel iterative argmax top-k
                m = jnp.max(masked, axis=0, keepdims=True)                    # (1,1)
                first = jnp.min(jnp.where(masked == m, sub_pos, float(n)),
                                axis=0, keepdims=True)                        # (1,1)
                sel_col = (sub_pos == first)                                  # (n,1)
                sel_row = (lane_pos == first)                                 # (1,n)
                unit_col = (lax.broadcasted_iota(jnp.int32, (kk, 1), 0)
                            == r).astype(f32)                                 # (kk,1)
                unit_row = (lax.broadcasted_iota(jnp.int32, (1, kk), 1)
                            == r).astype(f32)                                 # (1,kk)
                P = P + unit_col * sel_row.astype(f32)
                PT = PT + sel_col.astype(f32) * unit_row
                vals = vals + unit_col * (1.0 / (1.0 + jnp.exp(-m)))
                masked = jnp.where(sel_col, -jnp.inf, masked)

            # Gather pooled features / adjacency via one-hot matmuls (MXU).
            h = jnp.dot(P, h, preferred_element_type=f32) * vals              # (kk,LANE)
            ug = (g != 0.0).astype(f32)
            ug2 = (jnp.dot(ug, ug, preferred_element_type=f32) != 0.0).astype(f32)
            sel = jnp.dot(jnp.dot(P, ug2, preferred_element_type=f32), PT,
                          preferred_element_type=f32)                         # (kk,kk)
            # norm_g: divide column j by row-degree[j] (faithful broadcast),
            # done with a transpose-free column->row move.
            deg_row = _col_to_row(jnp.sum(sel, axis=1, keepdims=True))        # (1,kk)
            g = sel / deg_row
            pts.append(PT)

        # ------------------------- bottom GCN ------------------------------
        dis = lax.rsqrt(jnp.sum(g, axis=1, keepdims=True) + 1.0)
        h = gcn(l_n, g, dis, h)

        # ------------------------- up path ---------------------------------
        for i in range(l_n):
            up_idx = l_n - 1 - i
            g_lvl, dis_lvl = adj[up_idx], diss[up_idx]
            PT, dh = pts[up_idx], downs[up_idx]
            h_full = jnp.dot(PT, h, preferred_element_type=f32)   # unpool scatter
            off = h_full - dh
            oi = 2 * l_n + 1 + i                                   # off GCN11 params
            off_w = _leaky_relu(
                jnp.dot(_batchnorm_train(off, gbnw_ref[oi], gbnb_ref[oi]),
                        gw_ref[oi], preferred_element_type=f32) + gb_ref[oi])
            h = off_w * h_full + dh
            h = gcn(l_n + 1 + i, g_lvl, dis_lvl, h)                # up GCN

        out_ref[...] = h + org_h

    return kernel


# ---------------------------------------------------------------------------
# forward wrapper: ONE pallas_call for the whole network
# ---------------------------------------------------------------------------
def graph_unet_forward(stacked, ks, g, h):
    """stacked = pre-stacked lane-padded params; g (N,N); h (N,LANE)."""
    n0 = g.shape[0]
    sizes = [n0]
    for k in ks:
        sizes.append(max(2, int(k * sizes[-1])))   # static per-level node counts
    l_n = len(ks)

    gw, gb, gbnw, gbnb, pw, pb = stacked
    kernel = _make_fused_kernel(tuple(sizes), l_n)
    h_out = pl.pallas_call(
        kernel,
        out_shape=jax.ShapeDtypeStruct((n0, LANE), jnp.float32),
        in_specs=[_VMEM, _VMEM, _VMEM, _VMEM, _VMEM, _VMEM, _VMEM, _SMEM],
        out_specs=_VMEM,
    )(g, h, gw, gb, gbnw, gbnb, pw, pb)

    # Module returns (h, hs=[], g) where the final g is adj_ms[0] == input g.
    return h_out, [], g


# ---------------------------------------------------------------------------
# pure-JAX reference (faithful to the PyTorch module, unpadded f32)
# ---------------------------------------------------------------------------
def _ref_gcn(g, h, p):
    hn = _batchnorm_train(h, p["bn_w"], p["bn_b"])
    n = g.shape[0]
    g = g + jnp.eye(n, dtype=jnp.float32)
    dhat = jnp.diag(jnp.sum(g, axis=1) ** -0.5)
    gn = dhat @ g @ dhat
    hp = hn @ p["w"] + p["b"]
    return _leaky_relu(gn @ hp)


def _ref_gcn11(x, p):
    x = _batchnorm_train(x, p["bn_w"], p["bn_b"])
    return _leaky_relu(x @ p["w"] + p["b"])


def graph_unet_ref(params, ks, g, h):
    l_n = len(ks)
    adj_ms, indices_list, down_outs = [], [], []
    org_h = h
    for i in range(l_n):
        h = _ref_gcn(g, h, params["down"][i])
        adj_ms.append(g)
        down_outs.append(h)
        p = params["pool"][i]
        scores = (1.0 / (1.0 + jnp.exp(-(h @ p["w"] + p["b"]))))[:, 0]
        n = g.shape[0]
        kk = max(2, int(ks[i] * n))
        values, idx = jax.lax.top_k(scores, kk)
        new_h = h[idx, :] * values[:, None]
        un_g = (g != 0).astype(jnp.float32)
        un_g = ((un_g @ un_g) != 0).astype(jnp.float32)
        un_g = un_g[idx, :][:, idx]
        g = un_g / jnp.sum(un_g, axis=1)
        h = new_h
        indices_list.append(idx)
    h = _ref_gcn(g, h, params["bottom"])
    for i in range(l_n):
        up_idx = l_n - i - 1
        g, idx = adj_ms[up_idx], indices_list[up_idx]
        h_full = jnp.zeros((g.shape[0], h.shape[1]), h.dtype).at[idx].set(h)
        off = h_full - down_outs[up_idx]
        off_w = _ref_gcn11(off, params["off"][i])
        h = off_w * h_full + down_outs[up_idx]
        h = _ref_gcn(g, h, params["up"][i])
    return h + org_h, [], g


# ---------------------------------------------------------------------------
# deterministic parameter init (shapes follow the PyTorch module __init__)
# ---------------------------------------------------------------------------
def _init_linear(key, in_dim, out_dim):
    k1, k2 = jax.random.split(key)
    bound = 1.0 / jnp.sqrt(float(in_dim))
    w = jax.random.uniform(k1, (in_dim, out_dim), jnp.float32, -bound, bound)  # W^T layout
    b = jax.random.uniform(k2, (1, out_dim), jnp.float32, -bound, bound)
    return w, b


def _init_gcn(key, dim):
    w, b = _init_linear(key, dim, dim)
    return {"w": w, "b": b,
            "bn_w": jnp.ones((1, dim), jnp.float32),     # BatchNorm1d default affine
            "bn_b": jnp.zeros((1, dim), jnp.float32)}


def _init_pool(key, dim):
    w, b = _init_linear(key, dim, 1)
    return {"w": w, "b": b}


def init_params(key, dim, l_n):
    keys = jax.random.split(key, 1 + 4 * l_n)
    params = {"bottom": _init_gcn(keys[0], dim),
              "down": [], "up": [], "off": [], "pool": []}
    ki = 1
    for _ in range(l_n):
        params["down"].append(_init_gcn(keys[ki], dim)); ki += 1
        params["up"].append(_init_gcn(keys[ki], dim)); ki += 1
        params["off"].append(_init_gcn(keys[ki], dim)); ki += 1   # GCN11 == same shapes
        params["pool"].append(_init_pool(keys[ki], dim)); ki += 1
    return params


# ---------------------------------------------------------------------------
# lane-padding + stacking (feature dim -> LANE; zero padding is exactly
# preserved through BN / Linear / LeakyReLU / propagation / pool / unpool)
# ---------------------------------------------------------------------------
def _pad2(x, rows, cols, cval=0.0):
    return jnp.pad(x, ((0, rows - x.shape[0]), (0, cols - x.shape[1])),
                   constant_values=cval)


def _pad_gcn(p):
    return {"w": _pad2(p["w"], LANE, LANE),
            "b": _pad2(p["b"], 1, LANE),
            "bn_w": _pad2(p["bn_w"], 1, LANE, 1.0),
            "bn_b": _pad2(p["bn_b"], 1, LANE)}


def _pad_pool(p):
    # (dim,1) -> (LANE,LANE) with the real weight in column 0; bias stays scalar.
    return {"w": _pad2(p["w"], LANE, LANE), "b": p["b"]}


def pad_params(params):
    return {"bottom": _pad_gcn(params["bottom"]),
            "down": [_pad_gcn(p) for p in params["down"]],
            "up": [_pad_gcn(p) for p in params["up"]],
            "off": [_pad_gcn(p) for p in params["off"]],
            "pool": [_pad_pool(p) for p in params["pool"]]}


def stack_params(params_pad):
    # One stacked tensor per param kind -> 8 kernel inputs total.
    gcn_list = (params_pad["down"] + [params_pad["bottom"]]
                + params_pad["up"] + params_pad["off"])
    gw = jnp.stack([p["w"] for p in gcn_list])          # (3*l_n+1, LANE, LANE)
    gb = jnp.stack([p["b"] for p in gcn_list])          # (3*l_n+1, 1, LANE)
    gbnw = jnp.stack([p["bn_w"] for p in gcn_list])
    gbnb = jnp.stack([p["bn_b"] for p in gcn_list])
    pw = jnp.stack([p["w"] for p in params_pad["pool"]])          # (l_n, LANE, LANE)
    pb = jnp.stack([p["b"][0, 0] for p in params_pad["pool"]])    # (l_n,) scalars -> SMEM
    return gw, gb, gbnw, gbnb, pw, pb


# ---------------------------------------------------------------------------
if __name__ == "__main__":
    key = jax.random.PRNGKey(0)
    N, DIM = 32, 16
    ks = [0.5, 0.5]            # pooled node counts: 32 -> 16 -> 8 (static)

    k_g, k_h, k_p = jax.random.split(key, 3)
    # random symmetric 0/1 adjacency, zero diagonal (GCN adds I itself)
    a = (jax.random.uniform(k_g, (N, N)) > 0.7).astype(jnp.float32)
    g0 = jnp.maximum(a, a.T) * (1.0 - jnp.eye(N, dtype=jnp.float32))
    h0 = jax.random.normal(k_h, (N, DIM), jnp.float32)

    params = init_params(k_p, DIM, len(ks))

    # lane-padded, stacked kernel-side inputs
    h0_pad = _pad2(h0, N, LANE)
    stacked = stack_params(pad_params(params))

    # TODO(synk): nn.Dropout with p>0 is stochastic; run with drop_p=0 (Identity),
    # matching the module's `nn.Identity()` branch.
    out_h_pad, hs, out_g = graph_unet_forward(stacked, ks, g0, h0_pad)
    jax.block_until_ready(out_h_pad)
    jax.block_until_ready(out_g)
    out_h = out_h_pad[:, :DIM]

    ref_h, _, ref_g = graph_unet_ref(params, ks, g0, h0)
    assert out_h.shape == (N, DIM) and out_g.shape == (N, N)
    assert bool(jnp.all(jnp.isfinite(out_h)))
    assert bool(jnp.all(out_h_pad[:, DIM:] == 0.0)), "lane padding leaked"
    assert bool(jnp.allclose(out_h, ref_h, rtol=1e-2, atol=1e-2)), "mismatch vs reference"
    assert bool(jnp.allclose(out_g, ref_g, rtol=1e-2, atol=1e-2)), "adjacency mismatch"

    print("KERNEL_OK")
</pallas_src>

<mosaic_0001>
module attributes {stable_mosaic.version = 11 : i64} {
  func.func @kernel(%arg0: memref<32x32xf32, #tpu.memory_space<vmem>>, %arg1: memref<32x128xf32, #tpu.memory_space<vmem>>, %arg2: memref<7x128x128xf32, #tpu.memory_space<vmem>>, %arg3: memref<7x1x128xf32, #tpu.memory_space<vmem>>, %arg4: memref<7x1x128xf32, #tpu.memory_space<vmem>>, %arg5: memref<7x1x128xf32, #tpu.memory_space<vmem>>, %arg6: memref<2x128x128xf32, #tpu.memory_space<vmem>>, %arg7: memref<2xf32, #tpu.memory_space<smem>>, %arg8: memref<32x128xf32, #tpu.memory_space<vmem>>) attributes {dimension_semantics = [], scalar_prefetch = 0 : i64, scratch_operands = 0 : i64, tpu.core_type = #tpu.core_type<tc>} {
    %c0 = arith.constant 0 : index
    %c0_0 = arith.constant 0 : index
    %0 = vector.load %arg0[%c0, %c0_0] : memref<32x32xf32, #tpu.memory_space<vmem>>, vector<32x32xf32>
    %c0_1 = arith.constant 0 : index
    %c0_2 = arith.constant 0 : index
    %1 = vector.load %arg1[%c0_1, %c0_2] : memref<32x128xf32, #tpu.memory_space<vmem>>, vector<32x128xf32>
    %cst = arith.constant dense<0.000000e+00> : vector<32xf32>
    %2 = vector.multi_reduction <add>, %0, %cst [1] : vector<32x32xf32> to vector<32xf32>
    %3 = vector.shape_cast %2 : vector<32xf32> to vector<32x1xf32>
    %cst_3 = arith.constant 1.000000e+00 : f32
    %4 = vector.broadcast %cst_3 : f32 to vector<32x1xf32>
    %5 = arith.addf %3, %4 : vector<32x1xf32>
    %6 = math.rsqrt %5 : vector<32x1xf32>
    %c0_4 = arith.constant 0 : index
    %c0_5 = arith.constant 0 : index
    %c0_6 = arith.constant 0 : index
    %7 = vector.load %arg4[%c0_4, %c0_5, %c0_6] : memref<7x1x128xf32, #tpu.memory_space<vmem>>, vector<1x1x128xf32>
    %8 = vector.shape_cast %7 : vector<1x1x128xf32> to vector<1x128xf32>
    %c0_7 = arith.constant 0 : index
    %c0_8 = arith.constant 0 : index
    %c0_9 = arith.constant 0 : index
    %9 = vector.load %arg5[%c0_7, %c0_8, %c0_9] : memref<7x1x128xf32, #tpu.memory_space<vmem>>, vector<1x1x128xf32>
    %10 = vector.shape_cast %9 : vector<1x1x128xf32> to vector<1x128xf32>
    %cst_10 = arith.constant dense<0.000000e+00> : vector<128xf32>
    %11 = vector.multi_reduction <add>, %1, %cst_10 [0] : vector<32x128xf32> to vector<128xf32>
    %12 = vector.shape_cast %11 : vector<128xf32> to vector<1x128xf32>
    %cst_11 = arith.constant 3.200000e+01 : f32
    %13 = vector.broadcast %cst_11 : f32 to vector<1x128xf32>
    %14 = arith.divf %12, %13 : vector<1x128xf32>
    %15 = vector.broadcast %14 : vector<1x128xf32> to vector<32x128xf32>
    %16 = arith.subf %1, %15 : vector<32x128xf32>
    %17 = arith.mulf %16, %16 : vector<32x128xf32>
    %cst_12 = arith.constant dense<0.000000e+00> : vector<128xf32>
    %18 = vector.multi_reduction <add>, %17, %cst_12 [0] : vector<32x128xf32> to vector<128xf32>
    %19 = vector.shape_cast %18 : vector<128xf32> to vector<1x128xf32>
    %cst_13 = arith.constant 3.200000e+01 : f32
    %20 = vector.broadcast %cst_13 : f32 to vector<1x128xf32>
    %21 = arith.divf %19, %20 : vector<1x128xf32>
    %22 = vector.broadcast %14 : vector<1x128xf32> to vector<32x128xf32>
    %23 = arith.subf %1, %22 : vector<32x128xf32>
    %cst_14 = arith.constant 9.99999974E-6 : f32
    %24 = vector.broadcast %cst_14 : f32 to vector<1x128xf32>
    %25 = arith.addf %21, %24 : vector<1x128xf32>
    %26 = math.rsqrt %25 : vector<1x128xf32>
    %27 = vector.broadcast %26 : vector<1x128xf32> to vector<32x128xf32>
    %28 = arith.mulf %23, %27 : vector<32x128xf32>
    %29 = vector.broadcast %8 : vector<1x128xf32> to vector<32x128xf32>
    %30 = arith.mulf %28, %29 : vector<32x128xf32>
    %31 = vector.broadcast %10 : vector<1x128xf32> to vector<32x128xf32>
    %32 = arith.addf %30, %31 : vector<32x128xf32>
    %c0_15 = arith.constant 0 : index
    %c0_16 = arith.constant 0 : index
    %c0_17 = arith.constant 0 : index
    %33 = vector.load %arg2[%c0_15, %c0_16, %c0_17] : memref<7x128x128xf32, #tpu.memory_space<vmem>>, vector<1x128x128xf32>
    %34 = vector.shape_cast %33 : vector<1x128x128xf32> to vector<128x128xf32>
    %cst_18 = arith.constant dense<0.000000e+00> : vector<32x128xf32>
    %35 = tpu.matmul %32, %34, %cst_18 {dimension_numbers = #tpu.dot_dimension_numbers<[1], [0], [0], [1], [0, 0, 1, 1], [], []>} : vector<32x128xf32>, vector<128x128xf32>, vector<32x128xf32> -> vector<32x128xf32>
    %c0_19 = arith.constant 0 : index
    %c0_20 = arith.constant 0 : index
    %c0_21 = arith.constant 0 : index
    %36 = vector.load %arg3[%c0_19, %c0_20, %c0_21] : memref<7x1x128xf32, #tpu.memory_space<vmem>>, vector<1x1x128xf32>
    %37 = vector.shape_cast %36 : vector<1x1x128xf32> to vector<1x128xf32>
    %38 = vector.broadcast %37 : vector<1x128xf32> to vector<32x128xf32>
    %39 = arith.addf %35, %38 : vector<32x128xf32>
    %40 = vector.broadcast %6 : vector<32x1xf32> to vector<32x128xf32>
    %41 = arith.mulf %40, %39 : vector<32x128xf32>
    %cst_22 = arith.constant dense<0.000000e+00> : vector<32x128xf32>
    %42 = tpu.matmul %0, %41, %cst_22 {dimension_numbers = #tpu.dot_dimension_numbers<[1], [0], [0], [1], [0, 0, 1, 1], [], []>} : vector<32x32xf32>, vector<32x128xf32>, vector<32x128xf32> -> vector<32x128xf32>
    %43 = arith.addf %42, %41 : vector<32x128xf32>
    %44 = vector.broadcast %6 : vector<32x1xf32> to vector<32x128xf32>
    %45 = arith.mulf %44, %43 : vector<32x128xf32>
    %cst_23 = arith.constant 0.000000e+00 : f32
    %46 = vector.broadcast %cst_23 : f32 to vector<32x128xf32>
    %47 = arith.cmpf ogt, %45, %46 : vector<32x128xf32>
    %cst_24 = arith.constant 0.00999999977 : f32
    %48 = vector.broadcast %cst_24 : f32 to vector<32x128xf32>
    %49 = arith.mulf %48, %45 : vector<32x128xf32>
    %50 = arith.select %47, %45, %49 : vector<32x128xi1>, vector<32x128xf32>
    %c0_25 = arith.constant 0 : index
    %c0_26 = arith.constant 0 : index
    %c0_27 = arith.constant 0 : index
    %51 = vector.load %arg6[%c0_25, %c0_26, %c0_27] : memref<2x128x128xf32, #tpu.memory_space<vmem>>, vector<1x128x128xf32>
    %52 = vector.shape_cast %51 : vector<1x128x128xf32> to vector<128x128xf32>
    %cst_28 = arith.constant dense<0.000000e+00> : vector<32x128xf32>
    %53 = tpu.matmul %50, %52, %cst_28 {dimension_numbers = #tpu.dot_dimension_numbers<[1], [0], [0], [1], [0, 0, 1, 1], [], []>} : vector<32x128xf32>, vector<128x128xf32>, vector<32x128xf32> -> vector<32x128xf32>
    %54 = vector.extract_strided_slice %53 {offsets = [0, 0], sizes = [32, 1], strides = [1, 1]} : vector<32x128xf32> to vector<32x1xf32>
    %c0_29 = arith.constant 0 : index
    %55 = memref.load %arg7[%c0_29] : memref<2xf32, #tpu.memory_space<smem>>
    %56 = vector.broadcast %55 : f32 to vector<32x1xf32>
    %57 = arith.addf %54, %56 : vector<32x1xf32>
    %58 = tpu.iota {dimensions = array<i32: 0>} : vector<32x1xi32>
    %59 = arith.sitofp %58 : vector<32x1xi32> to vector<32x1xf32>
    %60 = tpu.iota {dimensions = array<i32: 1>} : vector<1x32xi32>
    %61 = arith.sitofp %60 : vector<1x32xi32> to vector<1x32xf32>
    %cst_30 = arith.constant 0.000000e+00 : f32
    %62 = vector.broadcast %cst_30 : f32 to vector<16x32xf32>
    %cst_31 = arith.constant 0.000000e+00 : f32
    %63 = vector.broadcast %cst_31 : f32 to vector<32x16xf32>
    %cst_32 = arith.constant 0.000000e+00 : f32
    %64 = vector.broadcast %cst_32 : f32 to vector<16x1xf32>
    %cst_33 = arith.constant dense<0xFF800000> : vector<1xf32>
    %65 = vector.multi_reduction <maximumf>, %57, %cst_33 [0] : vector<32x1xf32> to vector<1xf32>
    %66 = vector.shape_cast %65 : vector<1xf32> to vector<1x1xf32>
    %67 = vector.broadcast %66 : vector<1x1xf32> to vector<32x1xf32>
    %68 = arith.cmpf oeq, %57, %67 : vector<32x1xf32>
    %cst_34 = arith.constant 3.200000e+01 : f32
    %69 = vector.broadcast %cst_34 : f32 to vector<32x1xf32>
    %70 = arith.select %68, %59, %69 : vector<32x1xi1>, vector<32x1xf32>
    %cst_35 = arith.constant dense<0x7F800000> : vector<1xf32>
    %71 = vector.multi_reduction <minimumf>, %70, %cst_35 [0] : vector<32x1xf32> to vector<1xf32>
    %72 = vector.shape_cast %71 : vector<1xf32> to vector<1x1xf32>
    %73 = vector.broadcast %72 : vector<1x1xf32> to vector<32x1xf32>
    %74 = arith.cmpf oeq, %59, %73 : vector<32x1xf32>
    %75 = vector.broadcast %72 : vector<1x1xf32> to vector<1x32xf32>
    %76 = arith.cmpf oeq, %61, %75 : vector<1x32xf32>
    %77 = tpu.iota {dimensions = array<i32: 0>} : vector<16x1xi32>
    %c0_i32 = arith.constant 0 : i32
    %78 = vector.broadcast %c0_i32 : i32 to vector<16x1xi32>
    %79 = arith.cmpi eq, %77, %78 : vector<16x1xi32>
    %80 = arith.extui %79 : vector<16x1xi1> to vector<16x1xi32>
    %81 = arith.sitofp %80 : vector<16x1xi32> to vector<16x1xf32>
    %82 = tpu.iota {dimensions = array<i32: 1>} : vector<1x16xi32>
    %c0_i32_36 = arith.constant 0 : i32
    %83 = vector.broadcast %c0_i32_36 : i32 to vector<1x16xi32>
    %84 = arith.cmpi eq, %82, %83 : vector<1x16xi32>
    %85 = arith.extui %84 : vector<1x16xi1> to vector<1x16xi32>
    %86 = arith.sitofp %85 : vector<1x16xi32> to vector<1x16xf32>
    %87 = arith.extui %76 : vector<1x32xi1> to vector<1x32xi32>
    %88 = arith.sitofp %87 : vector<1x32xi32> to vector<1x32xf32>
    %89 = vector.broadcast %81 : vector<16x1xf32> to vector<16x32xf32>
    %90 = vector.broadcast %88 : vector<1x32xf32> to vector<16x32xf32>
    %91 = arith.mulf %89, %90 : vector<16x32xf32>
    %92 = arith.addf %62, %91 : vector<16x32xf32>
    %93 = arith.extui %74 : vector<32x1xi1> to vector<32x1xi32>
    %94 = arith.sitofp %93 : vector<32x1xi32> to vector<32x1xf32>
    %95 = vector.broadcast %94 : vector<32x1xf32> to vector<32x16xf32>
    %96 = vector.broadcast %86 : vector<1x16xf32> to vector<32x16xf32>
    %97 = arith.mulf %95, %96 : vector<32x16xf32>
    %98 = arith.addf %63, %97 : vector<32x16xf32>
    %cst_37 = arith.constant 0.000000e+00 : f32
    %99 = vector.broadcast %cst_37 : f32 to vector<1x1xf32>
    %100 = arith.subf %99, %66 : vector<1x1xf32>
    %101 = math.exp %100 : vector<1x1xf32>
    %cst_38 = arith.constant 1.000000e+00 : f32
    %102 = vector.broadcast %cst_38 : f32 to vector<1x1xf32>
    %103 = arith.addf %102, %101 : vector<1x1xf32>
    %cst_39 = arith.constant 1.000000e+00 : f32
    %104 = vector.broadcast %cst_39 : f32 to vector<1x1xf32>
    %105 = arith.divf %104, %103 : vector<1x1xf32>
    %106 = vector.broadcast %105 : vector<1x1xf32> to vector<16x1xf32>
    %107 = arith.mulf %81, %106 : vector<16x1xf32>
    %108 = arith.addf %64, %107 : vector<16x1xf32>
    %cst_40 = arith.constant 0xFF800000 : f32
    %109 = vector.broadcast %cst_40 : f32 to vector<32x1xf32>
    %110 = arith.select %74, %109, %57 : vector<32x1xi1>, vector<32x1xf32>
    %cst_41 = arith.constant dense<0xFF800000> : vector<1xf32>
    %111 = vector.multi_reduction <maximumf>, %110, %cst_41 [0] : vector<32x1xf32> to vector<1xf32>
    %112 = vector.shape_cast %111 : vector<1xf32> to vector<1x1xf32>
    %113 = vector.broadcast %112 : vector<1x1xf32> to vector<32x1xf32>
    %114 = arith.cmpf oeq, %110, %113 : vector<32x1xf32>
    %cst_42 = arith.constant 3.200000e+01 : f32
    %115 = vector.broadcast %cst_42 : f32 to vector<32x1xf32>
    %116 = arith.select %114, %59, %115 : vector<32x1xi1>, vector<32x1xf32>
    %cst_43 = arith.constant dense<0x7F800000> : vector<1xf32>
    %117 = vector.multi_reduction <minimumf>, %116, %cst_43 [0] : vector<32x1xf32> to vector<1xf32>
    %118 = vector.shape_cast %117 : vector<1xf32> to vector<1x1xf32>
    %119 = vector.broadcast %118 : vector<1x1xf32> to vector<32x1xf32>
    %120 = arith.cmpf oeq, %59, %119 : vector<32x1xf32>
    %121 = vector.broadcast %118 : vector<1x1xf32> to vector<1x32xf32>
    %122 = arith.cmpf oeq, %61, %121 : vector<1x32xf32>
    %123 = tpu.iota {dimensions = array<i32: 0>} : vector<16x1xi32>
    %c1_i32 = arith.constant 1 : i32
    %124 = vector.broadcast %c1_i32 : i32 to vector<16x1xi32>
    %125 = arith.cmpi eq, %123, %124 : vector<16x1xi32>
    %126 = arith.extui %125 : vector<16x1xi1> to vector<16x1xi32>
    %127 = arith.sitofp %126 : vector<16x1xi32> to vector<16x1xf32>
    %128 = tpu.iota {dimensions = array<i32: 1>} : vector<1x16xi32>
    %c1_i32_44 = arith.constant 1 : i32
    %129 = vector.broadcast %c1_i32_44 : i32 to vector<1x16xi32>
    %130 = arith.cmpi eq, %128, %129 : vector<1x16xi32>
    %131 = arith.extui %130 : vector<1x16xi1> to vector<1x16xi32>
    %132 = arith.sitofp %131 : vector<1x16xi32> to vector<1x16xf32>
    %133 = arith.extui %122 : vector<1x32xi1> to vector<1x32xi32>
    %134 = arith.sitofp %133 : vector<1x32xi32> to vector<1x32xf32>
    %135 = vector.broadcast %127 : vector<16x1xf32> to vector<16x32xf32>
    %136 = vector.broadcast %134 : vector<1x32xf32> to vector<16x32xf32>
    %137 = arith.mulf %135, %136 : vector<16x32xf32>
    %138 = arith.addf %92, %137 : vector<16x32xf32>
    %139 = arith.extui %120 : vector<32x1xi1> to vector<32x1xi32>
    %140 = arith.sitofp %139 : vector<32x1xi32> to vector<32x1xf32>
    %141 = vector.broadcast %140 : vector<32x1xf32> to vector<32x16xf32>
    %142 = vector.broadcast %132 : vector<1x16xf32> to vector<32x16xf32>
    %143 = arith.mulf %141, %142 : vector<32x16xf32>
    %144 = arith.addf %98, %143 : vector<32x16xf32>
    %cst_45 = arith.constant 0.000000e+00 : f32
    %145 = vector.broadcast %cst_45 : f32 to vector<1x1xf32>
    %146 = arith.subf %145, %112 : vector<1x1xf32>
    %147 = math.exp %146 : vector<1x1xf32>
    %cst_46 = arith.constant 1.000000e+00 : f32
    %148 = vector.broadcast %cst_46 : f32 to vector<1x1xf32>
    %149 = arith.addf %148, %147 : vector<1x1xf32>
    %cst_47 = arith.constant 1.000000e+00 : f32
    %150 = vector.broadcast %cst_47 : f32 to vector<1x1xf32>
    %151 = arith.divf %150, %149 : vector<1x1xf32>
    %152 = vector.broadcast %151 : vector<1x1xf32> to vector<16x1xf32>
    %153 = arith.mulf %127, %152 : vector<16x1xf32>
    %154 = arith.addf %108, %153 : vector<16x1xf32>
    %cst_48 = arith.constant 0xFF800000 : f32
    %155 = vector.broadcast %cst_48 : f32 to vector<32x1xf32>
    %156 = arith.select %120, %155, %110 : vector<32x1xi1>, vector<32x1xf32>
    %cst_49 = arith.constant dense<0xFF800000> : vector<1xf32>
    %157 = vector.multi_reduction <maximumf>, %156, %cst_49 [0] : vector<32x1xf32> to vector<1xf32>
    %158 = vector.shape_cast %157 : vector<1xf32> to vector<1x1xf32>
    %159 = vector.broadcast %158 : vector<1x1xf32> to vector<32x1xf32>
    %160 = arith.cmpf oeq, %156, %159 : vector<32x1xf32>
    %cst_50 = arith.constant 3.200000e+01 : f32
    %161 = vector.broadcast %cst_50 : f32 to vector<32x1xf32>
    %162 = arith.select %160, %59, %161 : vector<32x1xi1>, vector<32x1xf32>
    %cst_51 = arith.constant dense<0x7F800000> : vector<1xf32>
    %163 = vector.multi_reduction <minimumf>, %162, %cst_51 [0] : vector<32x1xf32> to vector<1xf32>
    %164 = vector.shape_cast %163 : vector<1xf32> to vector<1x1xf32>
    %165 = vector.broadcast %164 : vector<1x1xf32> to vector<32x1xf32>
    %166 = arith.cmpf oeq, %59, %165 : vector<32x1xf32>
    %167 = vector.broadcast %164 : vector<1x1xf32> to vector<1x32xf32>
    %168 = arith.cmpf oeq, %61, %167 : vector<1x32xf32>
    %169 = tpu.iota {dimensions = array<i32: 0>} : vector<16x1xi32>
    %c2_i32 = arith.constant 2 : i32
    %170 = vector.broadcast %c2_i32 : i32 to vector<16x1xi32>
    %171 = arith.cmpi eq, %169, %170 : vector<16x1xi32>
    %172 = arith.extui %171 : vector<16x1xi1> to vector<16x1xi32>
    %173 = arith.sitofp %172 : vector<16x1xi32> to vector<16x1xf32>
    %174 = tpu.iota {dimensions = array<i32: 1>} : vector<1x16xi32>
    %c2_i32_52 = arith.constant 2 : i32
    %175 = vector.broadcast %c2_i32_52 : i32 to vector<1x16xi32>
    %176 = arith.cmpi eq, %174, %175 : vector<1x16xi32>
    %177 = arith.extui %176 : vector<1x16xi1> to vector<1x16xi32>
    %178 = arith.sitofp %177 : vector<1x16xi32> to vector<1x16xf32>
    %179 = arith.extui %168 : vector<1x32xi1> to vector<1x32xi32>
    %180 = arith.sitofp %179 : vector<1x32xi32> to vector<1x32xf32>
    %181 = vector.broadcast %173 : vector<16x1xf32> to vector<16x32xf32>
    %182 = vector.broadcast %180 : vector<1x32xf32> to vector<16x32xf32>
    %183 = arith.mulf %181, %182 : vector<16x32xf32>
    %184 = arith.addf %138, %183 : vector<16x32xf32>
    %185 = arith.extui %166 : vector<32x1xi1> to vector<32x1xi32>
    %186 = arith.sitofp %185 : vector<32x1xi32> to vector<32x1xf32>
    %187 = vector.broadcast %186 : vector<32x1xf32> to vector<32x16xf32>
    %188 = vector.broadcast %178 : vector<1x16xf32> to vector<32x16xf32>
    %189 = arith.mulf %187, %188 : vector<32x16xf32>
    %190 = arith.addf %144, %189 : vector<32x16xf32>
    %cst_53 = arith.constant 0.000000e+00 : f32
    %191 = vector.broadcast %cst_53 : f32 to vector<1x1xf32>
    %192 = arith.subf %191, %158 : vector<1x1xf32>
    %193 = math.exp %192 : vector<1x1xf32>
    %cst_54 = arith.constant 1.000000e+00 : f32
    %194 = vector.broadcast %cst_54 : f32 to vector<1x1xf32>
    %195 = arith.addf %194, %193 : vector<1x1xf32>
    %cst_55 = arith.constant 1.000000e+00 : f32
    %196 = vector.broadcast %cst_55 : f32 to vector<1x1xf32>
    %197 = arith.divf %196, %195 : vector<1x1xf32>
    %198 = vector.broadcast %197 : vector<1x1xf32> to vector<16x1xf32>
    %199 = arith.mulf %173, %198 : vector<16x1xf32>
    %200 = arith.addf %154, %199 : vector<16x1xf32>
    %cst_56 = arith.constant 0xFF800000 : f32
    %201 = vector.broadcast %cst_56 : f32 to vector<32x1xf32>
    %202 = arith.select %166, %201, %156 : vector<32x1xi1>, vector<32x1xf32>
    %cst_57 = arith.constant dense<0xFF800000> : vector<1xf32>
    %203 = vector.multi_reduction <maximumf>, %202, %cst_57 [0] : vector<32x1xf32> to vector<1xf32>
    %204 = vector.shape_cast %203 : vector<1xf32> to vector<1x1xf32>
    %205 = vector.broadcast %204 : vector<1x1xf32> to vector<32x1xf32>
    %206 = arith.cmpf oeq, %202, %205 : vector<32x1xf32>
    %cst_58 = arith.constant 3.200000e+01 : f32
    %207 = vector.broadcast %cst_58 : f32 to vector<32x1xf32>
    %208 = arith.select %206, %59, %207 : vector<32x1xi1>, vector<32x1xf32>
    %cst_59 = arith.constant dense<0x7F800000> : vector<1xf32>
    %209 = vector.multi_reduction <minimumf>, %208, %cst_59 [0] : vector<32x1xf32> to vector<1xf32>
    %210 = vector.shape_cast %209 : vector<1xf32> to vector<1x1xf32>
    %211 = vector.broadcast %210 : vector<1x1xf32> to vector<32x1xf32>
    %212 = arith.cmpf oeq, %59, %211 : vector<32x1xf32>
    %213 = vector.broadcast %210 : vector<1x1xf32> to vector<1x32xf32>
    %214 = arith.cmpf oeq, %61, %213 : vector<1x32xf32>
    %215 = tpu.iota {dimensions = array<i32: 0>} : vector<16x1xi32>
    %c3_i32 = arith.constant 3 : i32
    %216 = vector.broadcast %c3_i32 : i32 to vector<16x1xi32>
    %217 = arith.cmpi eq, %215, %216 : vector<16x1xi32>
    %218 = arith.extui %217 : vector<16x1xi1> to vector<16x1xi32>
    %219 = arith.sitofp %218 : vector<16x1xi32> to vector<16x1xf32>
    %220 = tpu.iota {dimensions = array<i32: 1>} : vector<1x16xi32>
    %c3_i32_60 = arith.constant 3 : i32
    %221 = vector.broadcast %c3_i32_60 : i32 to vector<1x16xi32>
    %222 = arith.cmpi eq, %220, %221 : vector<1x16xi32>
    %223 = arith.extui %222 : vector<1x16xi1> to vector<1x16xi32>
    %224 = arith.sitofp %223 : vector<1x16xi32> to vector<1x16xf32>
    %225 = arith.extui %214 : vector<1x32xi1> to vector<1x32xi32>
    %226 = arith.sitofp %225 : vector<1x32xi32> to vector<1x32xf32>
    %227 = vector.broadcast %219 : vector<16x1xf32> to vector<16x32xf32>
    %228 = vector.broadcast %226 : vector<1x32xf32> to vector<16x32xf32>
    %229 = arith.mulf %227, %228 : vector<16x32xf32>
    %230 = arith.addf %184, %229 : vector<16x32xf32>
    %231 = arith.extui %212 : vector<32x1xi1> to vector<32x1xi32>
    %232 = arith.sitofp %231 : vector<32x1xi32> to vector<32x1xf32>
    %233 = vector.broadcast %232 : vector<32x1xf32> to vector<32x16xf32>
    %234 = vector.broadcast %224 : vector<1x16xf32> to vector<32x16xf32>
    %235 = arith.mulf %233, %234 : vector<32x16xf32>
    %236 = arith.addf %190, %235 : vector<32x16xf32>
    %cst_61 = arith.constant 0.000000e+00 : f32
    %237 = vector.broadcast %cst_61 : f32 to vector<1x1xf32>
    %238 = arith.subf %237, %204 : vector<1x1xf32>
    %239 = math.exp %238 : vector<1x1xf32>
    %cst_62 = arith.constant 1.000000e+00 : f32
    %240 = vector.broadcast %cst_62 : f32 to vector<1x1xf32>
    %241 = arith.addf %240, %239 : vector<1x1xf32>
    %cst_63 = arith.constant 1.000000e+00 : f32
    %242 = vector.broadcast %cst_63 : f32 to vector<1x1xf32>
    %243 = arith.divf %242, %241 : vector<1x1xf32>
    %244 = vector.broadcast %243 : vector<1x1xf32> to vector<16x1xf32>
    %245 = arith.mulf %219, %244 : vector<16x1xf32>
    %246 = arith.addf %200, %245 : vector<16x1xf32>
    %cst_64 = arith.constant 0xFF800000 : f32
    %247 = vector.broadcast %cst_64 : f32 to vector<32x1xf32>
    %248 = arith.select %212, %247, %202 : vector<32x1xi1>, vector<32x1xf32>
    %cst_65 = arith.constant dense<0xFF800000> : vector<1xf32>
    %249 = vector.multi_reduction <maximumf>, %248, %cst_65 [0] : vector<32x1xf32> to vector<1xf32>
    %250 = vector.shape_cast %249 : vector<1xf32> to vector<1x1xf32>
    %251 = vector.broadcast %250 : vector<1x1xf32> to vector<32x1xf32>
    %252 = arith.cmpf oeq, %248, %251 : vector<32x1xf32>
    %cst_66 = arith.constant 3.200000e+01 : f32
    %253 = vector.broadcast %cst_66 : f32 to vector<32x1xf32>
    %254 = arith.select %252, %59, %253 : vector<32x1xi1>, vector<32x1xf32>
    %cst_67 = arith.constant dense<0x7F800000> : vector<1xf32>
    %255 = vector.multi_reduction <minimumf>, %254, %cst_67 [0] : vector<32x1xf32> to vector<1xf32>
    %256 = vector.shape_cast %255 : vector<1xf32> to vector<1x1xf32>
    %257 = vector.broadcast %256 : vector<1x1xf32> to vector<32x1xf32>
    %258 = arith.cmpf oeq, %59, %257 : vector<32x1xf32>
    %259 = vector.broadcast %256 : vector<1x1xf32> to vector<1x32xf32>
    %260 = arith.cmpf oeq, %61, %259 : vector<1x32xf32>
    %261 = tpu.iota {dimensions = array<i32: 0>} : vector<16x1xi32>
    %c4_i32 = arith.constant 4 : i32
    %262 = vector.broadcast %c4_i32 : i32 to vector<16x1xi32>
    %263 = arith.cmpi eq, %261, %262 : vector<16x1xi32>
    %264 = arith.extui %263 : vector<16x1xi1> to vector<16x1xi32>
    %265 = arith.sitofp %264 : vector<16x1xi32> to vector<16x1xf32>
    %266 = tpu.iota {dimensions = array<i32: 1>} : vector<1x16xi32>
    %c4_i32_68 = arith.constant 4 : i32
    %267 = vector.broadcast %c4_i32_68 : i32 to vector<1x16xi32>
    %268 = arith.cmpi eq, %266, %267 : vector<1x16xi32>
    %269 = arith.extui %268 : vector<1x16xi1> to vector<1x16xi32>
    %270 = arith.sitofp %269 : vector<1x16xi32> to vector<1x16xf32>
    %271 = arith.extui %260 : vector<1x32xi1> to vector<1x32xi32>
    %272 = arith.sitofp %271 : vector<1x32xi32> to vector<1x32xf32>
    %273 = vector.broadcast %265 : vector<16x1xf32> to vector<16x32xf32>
    %274 = vector.broadcast %272 : vector<1x32xf32> to vector<16x32xf32>
    %275 = arith.mulf %273, %274 : vector<16x32xf32>
    %276 = arith.addf %230, %275 : vector<16x32xf32>
    %277 = arith.extui %258 : vector<32x1xi1> to vector<32x1xi32>
    %278 = arith.sitofp %277 : vector<32x1xi32> to vector<32x1xf32>
    %279 = vector.broadcast %278 : vector<32x1xf32> to vector<32x16xf32>
    %280 = vector.broadcast %270 : vector<1x16xf32> to vector<32x16xf32>
    %281 = arith.mulf %279, %280 : vector<32x16xf32>
    %282 = arith.addf %236, %281 : vector<32x16xf32>
    %cst_69 = arith.constant 0.000000e+00 : f32
    %283 = vector.broadcast %cst_69 : f32 to vector<1x1xf32>
    %284 = arith.subf %283, %250 : vector<1x1xf32>
    %285 = math.exp %284 : vector<1x1xf32>
    %cst_70 = arith.constant 1.000000e+00 : f32
    %286 = vector.broadcast %cst_70 : f32 to vector<1x1xf32>
    %287 = arith.addf %286, %285 : vector<1x1xf32>
    %cst_71 = arith.constant 1.000000e+00 : f32
    %288 = vector.broadcast %cst_71 : f32 to vector<1x1xf32>
    %289 = arith.divf %288, %287 : vector<1x1xf32>
    %290 = vector.broadcast %289 : vector<1x1xf32> to vector<16x1xf32>
    %291 = arith.mulf %265, %290 : vector<16x1xf32>
    %292 = arith.addf %246, %291 : vector<16x1xf32>
    %cst_72 = arith.constant 0xFF800000 : f32
    %293 = vector.broadcast %cst_72 : f32 to vector<32x1xf32>
    %294 = arith.select %258, %293, %248 : vector<32x1xi1>, vector<32x1xf32>
    %cst_73 = arith.constant dense<0xFF800000> : vector<1xf32>
    %295 = vector.multi_reduction <maximumf>, %294, %cst_73 [0] : vector<32x1xf32> to vector<1xf32>
    %296 = vector.shape_cast %295 : vector<1xf32> to vector<1x1xf32>
    %297 = vector.broadcast %296 : vector<1x1xf32> to vector<32x1xf32>
    %298 = arith.cmpf oeq, %294, %297 : vector<32x1xf32>
    %cst_74 = arith.constant 3.200000e+01 : f32
    %299 = vector.broadcast %cst_74 : f32 to vector<32x1xf32>
    %300 = arith.select %298, %59, %299 : vector<32x1xi1>, vector<32x1xf32>
    %cst_75 = arith.constant dense<0x7F800000> : vector<1xf32>
    %301 = vector.multi_reduction <minimumf>, %300, %cst_75 [0] : vector<32x1xf32> to vector<1xf32>
    %302 = vector.shape_cast %301 : vector<1xf32> to vector<1x1xf32>
    %303 = vector.broadcast %302 : vector<1x1xf32> to vector<32x1xf32>
    %304 = arith.cmpf oeq, %59, %303 : vector<32x1xf32>
    %305 = vector.broadcast %302 : vector<1x1xf32> to vector<1x32xf32>
    %306 = arith.cmpf oeq, %61, %305 : vector<1x32xf32>
    %307 = tpu.iota {dimensions = array<i32: 0>} : vector<16x1xi32>
    %c5_i32 = arith.constant 5 : i32
    %308 = vector.broadcast %c5_i32 : i32 to vector<16x1xi32>
    %309 = arith.cmpi eq, %307, %308 : vector<16x1xi32>
    %310 = arith.extui %309 : vector<16x1xi1> to vector<16x1xi32>
    %311 = arith.sitofp %310 : vector<16x1xi32> to vector<16x1xf32>
    %312 = tpu.iota {dimensions = array<i32: 1>} : vector<1x16xi32>
    %c5_i32_76 = arith.constant 5 : i32
    %313 = vector.broadcast %c5_i32_76 : i32 to vector<1x16xi32>
    %314 = arith.cmpi eq, %312, %313 : vector<1x16xi32>
    %315 = arith.extui %314 : vector<1x16xi1> to vector<1x16xi32>
    %316 = arith.sitofp %315 : vector<1x16xi32> to vector<1x16xf32>
    %317 = arith.extui %306 : vector<1x32xi1> to vector<1x32xi32>
    %318 = arith.sitofp %317 : vector<1x32xi32> to vector<1x32xf32>
    %319 = vector.broadcast %311 : vector<16x1xf32> to vector<16x32xf32>
    %320 = vector.broadcast %318 : vector<1x32xf32> to vector<16x32xf32>
    %321 = arith.mulf %319, %320 : vector<16x32xf32>
    %322 = arith.addf %276, %321 : vector<16x32xf32>
    %323 = arith.extui %304 : vector<32x1xi1> to vector<32x1xi32>
    %324 = arith.sitofp %323 : vector<32x1xi32> to vector<32x1xf32>
    %325 = vector.broadcast %324 : vector<32x1xf32> to vector<32x16xf32>
    %326 = vector.broadcast %316 : vector<1x16xf32> to vector<32x16xf32>
    %327 = arith.mulf %325, %326 : vector<32x16xf32>
    %328 = arith.addf %282, %327 : vector<32x16xf32>
    %cst_77 = arith.constant 0.000000e+00 : f32
    %329 = vector.broadcast %cst_77 : f32 to vector<1x1xf32>
    %330 = arith.subf %329, %296 : vector<1x1xf32>
    %331 = math.exp %330 : vector<1x1xf32>
    %cst_78 = arith.constant 1.000000e+00 : f32
    %332 = vector.broadcast %cst_78 : f32 to vector<1x1xf32>
    %333 = arith.addf %332, %331 : vector<1x1xf32>
    %cst_79 = arith.constant 1.000000e+00 : f32
    %334 = vector.broadcast %cst_79 : f32 to vector<1x1xf32>
    %335 = arith.divf %334, %333 : vector<1x1xf32>
    %336 = vector.broadcast %335 : vector<1x1xf32> to vector<16x1xf32>
    %337 = arith.mulf %311, %336 : vector<16x1xf32>
    %338 = arith.addf %292, %337 : vector<16x1xf32>
    %cst_80 = arith.constant 0xFF800000 : f32
    %339 = vector.broadcast %cst_80 : f32 to vector<32x1xf32>
    %340 = arith.select %304, %339, %294 : vector<32x1xi1>, vector<32x1xf32>
    %cst_81 = arith.constant dense<0xFF800000> : vector<1xf32>
    %341 = vector.multi_reduction <maximumf>, %340, %cst_81 [0] : vector<32x1xf32> to vector<1xf32>
    %342 = vector.shape_cast %341 : vector<1xf32> to vector<1x1xf32>
    %343 = vector.broadcast %342 : vector<1x1xf32> to vector<32x1xf32>
    %344 = arith.cmpf oeq, %340, %343 : vector<32x1xf32>
    %cst_82 = arith.constant 3.200000e+01 : f32
    %345 = vector.broadcast %cst_82 : f32 to vector<32x1xf32>
    %346 = arith.select %344, %59, %345 : vector<32x1xi1>, vector<32x1xf32>
    %cst_83 = arith.constant dense<0x7F800000> : vector<1xf32>
    %347 = vector.multi_reduction <minimumf>, %346, %cst_83 [0] : vector<32x1xf32> to vector<1xf32>
    %348 = vector.shape_cast %347 : vector<1xf32> to vector<1x1xf32>
    %349 = vector.broadcast %348 : vector<1x1xf32> to vector<32x1xf32>
    %350 = arith.cmpf oeq, %59, %349 : vector<32x1xf32>
    %351 = vector.broadcast %348 : vector<1x1xf32> to vector<1x32xf32>
    %352 = arith.cmpf oeq, %61, %351 : vector<1x32xf32>
    %353 = tpu.iota {dimensions = array<i32: 0>} : vector<16x1xi32>
    %c6_i32 = arith.constant 6 : i32
    %354 = vector.broadcast %c6_i32 : i32 to vector<16x1xi32>
    %355 = arith.cmpi eq, %353, %354 : vector<16x1xi32>
    %356 = arith.extui %355 : vector<16x1xi1> to vector<16x1xi32>
    %357 = arith.sitofp %356 : vector<16x1xi32> to vector<16x1xf32>
    %358 = tpu.iota {dimensions = array<i32: 1>} : vector<1x16xi32>
    %c6_i32_84 = arith.constant 6 : i32
    %359 = vector.broadcast %c6_i32_84 : i32 to vector<1x16xi32>
    %360 = arith.cmpi eq, %358, %359 : vector<1x16xi32>
    %361 = arith.extui %360 : vector<1x16xi1> to vector<1x16xi32>
    %362 = arith.sitofp %361 : vector<1x16xi32> to vector<1x16xf32>
    %363 = arith.extui %352 : vector<1x32xi1> to vector<1x32xi32>
    %364 = arith.sitofp %363 : vector<1x32xi32> to vector<1x32xf32>
    %365 = vector.broadcast %357 : vector<16x1xf32> to vector<16x32xf32>
    %366 = vector.broadcast %364 : vector<1x32xf32> to vector<16x32xf32>
    %367 = arith.mulf %365, %366 : vector<16x32xf32>
    %368 = arith.addf %322, %367 : vector<16x32xf32>
    %369 = arith.extui %350 : vector<32x1xi1> to vector<32x1xi32>
    %370 = arith.sitofp %369 : vector<32x1xi32> to vector<32x1xf32>
    %371 = vector.broadcast %370 : vector<32x1xf32> to vector<32x16xf32>
    %372 = vector.broadcast %362 : vector<1x16xf32> to vector<32x16xf32>
    %373 = arith.mulf %371, %372 : vector<32x16xf32>
    %374 = arith.addf %328, %373 : vector<32x16xf32>
    %cst_85 = arith.constant 0.000000e+00 : f32
    %375 = vector.broadcast %cst_85 : f32 to vector<1x1xf32>
    %376 = arith.subf %375, %342 : vector<1x1xf32>
    %377 = math.exp %376 : vector<1x1xf32>
    %cst_86 = arith.constant 1.000000e+00 : f32
    %378 = vector.broadcast %cst_86 : f32 to vector<1x1xf32>
    %379 = arith.addf %378, %377 : vector<1x1xf32>
    %cst_87 = arith.constant 1.000000e+00 : f32
    %380 = vector.broadcast %cst_87 : f32 to vector<1x1xf32>
    %381 = arith.divf %380, %379 : vector<1x1xf32>
    %382 = vector.broadcast %381 : vector<1x1xf32> to vector<16x1xf32>
    %383 = arith.mulf %357, %382 : vector<16x1xf32>
    %384 = arith.addf %338, %383 : vector<16x1xf32>
    %cst_88 = arith.constant 0xFF800000 : f32
    %385 = vector.broadcast %cst_88 : f32 to vector<32x1xf32>
    %386 = arith.select %350, %385, %340 : vector<32x1xi1>, vector<32x1xf32>
    %cst_89 = arith.constant dense<0xFF800000> : vector<1xf32>
    %387 = vector.multi_reduction <maximumf>, %386, %cst_89 [0] : vector<32x1xf32> to vector<1xf32>
    %388 = vector.shape_cast %387 : vector<1xf32> to vector<1x1xf32>
    %389 = vector.broadcast %388 : vector<1x1xf32> to vector<32x1xf32>
    %390 = arith.cmpf oeq, %386, %389 : vector<32x1xf32>
    %cst_90 = arith.constant 3.200000e+01 : f32
    %391 = vector.broadcast %cst_90 : f32 to vector<32x1xf32>
    %392 = arith.select %390, %59, %391 : vector<32x1xi1>, vector<32x1xf32>
    %cst_91 = arith.constant dense<0x7F800000> : vector<1xf32>
    %393 = vector.multi_reduction <minimumf>, %392, %cst_91 [0] : vector<32x1xf32> to vector<1xf32>
    %394 = vector.shape_cast %393 : vector<1xf32> to vector<1x1xf32>
    %395 = vector.broadcast %394 : vector<1x1xf32> to vector<32x1xf32>
    %396 = arith.cmpf oeq, %59, %395 : vector<32x1xf32>
    %397 = vector.broadcast %394 : vector<1x1xf32> to vector<1x32xf32>
    %398 = arith.cmpf oeq, %61, %397 : vector<1x32xf32>
    %399 = tpu.iota {dimensions = array<i32: 0>} : vector<16x1xi32>
    %c7_i32 = arith.constant 7 : i32
    %400 = vector.broadcast %c7_i32 : i32 to vector<16x1xi32>
    %401 = arith.cmpi eq, %399, %400 : vector<16x1xi32>
    %402 = arith.extui %401 : vector<16x1xi1> to vector<16x1xi32>
    %403 = arith.sitofp %402 : vector<16x1xi32> to vector<16x1xf32>
    %404 = tpu.iota {dimensions = array<i32: 1>} : vector<1x16xi32>
    %c7_i32_92 = arith.constant 7 : i32
    %405 = vector.broadcast %c7_i32_92 : i32 to vector<1x16xi32>
    %406 = arith.cmpi eq, %404, %405 : vector<1x16xi32>
    %407 = arith.extui %406 : vector<1x16xi1> to vector<1x16xi32>
    %408 = arith.sitofp %407 : vector<1x16xi32> to vector<1x16xf32>
    %409 = arith.extui %398 : vector<1x32xi1> to vector<1x32xi32>
    %410 = arith.sitofp %409 : vector<1x32xi32> to vector<1x32xf32>
    %411 = vector.broadcast %403 : vector<16x1xf32> to vector<16x32xf32>
    %412 = vector.broadcast %410 : vector<1x32xf32> to vector<16x32xf32>
    %413 = arith.mulf %411, %412 : vector<16x32xf32>
    %414 = arith.addf %368, %413 : vector<16x32xf32>
    %415 = arith.extui %396 : vector<32x1xi1> to vector<32x1xi32>
    %416 = arith.sitofp %415 : vector<32x1xi32> to vector<32x1xf32>
    %417 = vector.broadcast %416 : vector<32x1xf32> to vector<32x16xf32>
    %418 = vector.broadcast %408 : vector<1x16xf32> to vector<32x16xf32>
    %419 = arith.mulf %417, %418 : vector<32x16xf32>
    %420 = arith.addf %374, %419 : vector<32x16xf32>
    %cst_93 = arith.constant 0.000000e+00 : f32
    %421 = vector.broadcast %cst_93 : f32 to vector<1x1xf32>
    %422 = arith.subf %421, %388 : vector<1x1xf32>
    %423 = math.exp %422 : vector<1x1xf32>
    %cst_94 = arith.constant 1.000000e+00 : f32
    %424 = vector.broadcast %cst_94 : f32 to vector<1x1xf32>
    %425 = arith.addf %424, %423 : vector<1x1xf32>
    %cst_95 = arith.constant 1.000000e+00 : f32
    %426 = vector.broadcast %cst_95 : f32 to vector<1x1xf32>
    %427 = arith.divf %426, %425 : vector<1x1xf32>
    %428 = vector.broadcast %427 : vector<1x1xf32> to vector<16x1xf32>
    %429 = arith.mulf %403, %428 : vector<16x1xf32>
    %430 = arith.addf %384, %429 : vector<16x1xf32>
    %cst_96 = arith.constant 0xFF800000 : f32
    %431 = vector.broadcast %cst_96 : f32 to vector<32x1xf32>
    %432 = arith.select %396, %431, %386 : vector<32x1xi1>, vector<32x1xf32>
    %cst_97 = arith.constant dense<0xFF800000> : vector<1xf32>
    %433 = vector.multi_reduction <maximumf>, %432, %cst_97 [0] : vector<32x1xf32> to vector<1xf32>
    %434 = vector.shape_cast %433 : vector<1xf32> to vector<1x1xf32>
    %435 = vector.broadcast %434 : vector<1x1xf32> to vector<32x1xf32>
    %436 = arith.cmpf oeq, %432, %435 : vector<32x1xf32>
    %cst_98 = arith.constant 3.200000e+01 : f32
    %437 = vector.broadcast %cst_98 : f32 to vector<32x1xf32>
    %438 = arith.select %436, %59, %437 : vector<32x1xi1>, vector<32x1xf32>
    %cst_99 = arith.constant dense<0x7F800000> : vector<1xf32>
    %439 = vector.multi_reduction <minimumf>, %438, %cst_99 [0] : vector<32x1xf32> to vector<1xf32>
    %440 = vector.shape_cast %439 : vector<1xf32> to vector<1x1xf32>
    %441 = vector.broadcast %440 : vector<1x1xf32> to vector<32x1xf32>
    %442 = arith.cmpf oeq, %59, %441 : vector<32x1xf32>
    %443 = vector.broadcast %440 : vector<1x1xf32> to vector<1x32xf32>
    %444 = arith.cmpf oeq, %61, %443 : vector<1x32xf32>
    %445 = tpu.iota {dimensions = array<i32: 0>} : vector<16x1xi32>
    %c8_i32 = arith.constant 8 : i32
    %446 = vector.broadcast %c8_i32 : i32 to vector<16x1xi32>
    %447 = arith.cmpi eq, %445, %446 : vector<16x1xi32>
    %448 = arith.extui %447 : vector<16x1xi1> to vector<16x1xi32>
    %449 = arith.sitofp %448 : vector<16x1xi32> to vector<16x1xf32>
    %450 = tpu.iota {dimensions = array<i32: 1>} : vector<1x16xi32>
    %c8_i32_100 = arith.constant 8 : i32
    %451 = vector.broadcast %c8_i32_100 : i32 to vector<1x16xi32>
    %452 = arith.cmpi eq, %450, %451 : vector<1x16xi32>
    %453 = arith.extui %452 : vector<1x16xi1> to vector<1x16xi32>
    %454 = arith.sitofp %453 : vector<1x16xi32> to vector<1x16xf32>
    %455 = arith.extui %444 : vector<1x32xi1> to vector<1x32xi32>
    %456 = arith.sitofp %455 : vector<1x32xi32> to vector<1x32xf32>
    %457 = vector.broadcast %449 : vector<16x1xf32> to vector<16x32xf32>
    %458 = vector.broadcast %456 : vector<1x32xf32> to vector<16x32xf32>
    %459 = arith.mulf %457, %458 : vector<16x32xf32>
    %460 = arith.addf %414, %459 : vector<16x32xf32>
    %461 = arith.extui %442 : vector<32x1xi1> to vector<32x1xi32>
    %462 = arith.sitofp %461 : vector<32x1xi32> to vector<32x1xf32>
    %463 = vector.broadcast %462 : vector<32x1xf32> to vector<32x16xf32>
    %464 = vector.broadcast %454 : vector<1x16xf32> to vector<32x16xf32>
    %465 = arith.mulf %463, %464 : vector<32x16xf32>
    %466 = arith.addf %420, %465 : vector<32x16xf32>
    %cst_101 = arith.constant 0.000000e+00 : f32
    %467 = vector.broadcast %cst_101 : f32 to vector<1x1xf32>
    %468 = arith.subf %467, %434 : vector<1x1xf32>
    %469 = math.exp %468 : vector<1x1xf32>
    %cst_102 = arith.constant 1.000000e+00 : f32
    %470 = vector.broadcast %cst_102 : f32 to vector<1x1xf32>
    %471 = arith.addf %470, %469 : vector<1x1xf32>
    %cst_103 = arith.constant 1.000000e+00 : f32
    %472 = vector.broadcast %cst_103 : f32 to vector<1x1xf32>
    %473 = arith.divf %472, %471 : vector<1x1xf32>
    %474 = vector.broadcast %473 : vector<1x1xf32> to vector<16x1xf32>
    %475 = arith.mulf %449, %474 : vector<16x1xf32>
    %476 = arith.addf %430, %475 : vector<16x1xf32>
    %cst_104 = arith.constant 0xFF800000 : f32
    %477 = vector.broadcast %cst_104 : f32 to vector<32x1xf32>
    %478 = arith.select %442, %477, %432 : vector<32x1xi1>, vector<32x1xf32>
    %cst_105 = arith.constant dense<0xFF800000> : vector<1xf32>
    %479 = vector.multi_reduction <maximumf>, %478, %cst_105 [0] : vector<32x1xf32> to vector<1xf32>
    %480 = vector.shape_cast %479 : vector<1xf32> to vector<1x1xf32>
    %481 = vector.broadcast %480 : vector<1x1xf32> to vector<32x1xf32>
    %482 = arith.cmpf oeq, %478, %481 : vector<32x1xf32>
    %cst_106 = arith.constant 3.200000e+01 : f32
    %483 = vector.broadcast %cst_106 : f32 to vector<32x1xf32>
    %484 = arith.select %482, %59, %483 : vector<32x1xi1>, vector<32x1xf32>
    %cst_107 = arith.constant dense<0x7F800000> : vector<1xf32>
    %485 = vector.multi_reduction <minimumf>, %484, %cst_107 [0] : vector<32x1xf32> to vector<1xf32>
    %486 = vector.shape_cast %485 : vector<1xf32> to vector<1x1xf32>
    %487 = vector.broadcast %486 : vector<1x1xf32> to vector<32x1xf32>
    %488 = arith.cmpf oeq, %59, %487 : vector<32x1xf32>
    %489 = vector.broadcast %486 : vector<1x1xf32> to vector<1x32xf32>
    %490 = arith.cmpf oeq, %61, %489 : vector<1x32xf32>
    %491 = tpu.iota {dimensions = array<i32: 0>} : vector<16x1xi32>
    %c9_i32 = arith.constant 9 : i32
    %492 = vector.broadcast %c9_i32 : i32 to vector<16x1xi32>
    %493 = arith.cmpi eq, %491, %492 : vector<16x1xi32>
    %494 = arith.extui %493 : vector<16x1xi1> to vector<16x1xi32>
    %495 = arith.sitofp %494 : vector<16x1xi32> to vector<16x1xf32>
    %496 = tpu.iota {dimensions = array<i32: 1>} : vector<1x16xi32>
    %c9_i32_108 = arith.constant 9 : i32
    %497 = vector.broadcast %c9_i32_108 : i32 to vector<1x16xi32>
    %498 = arith.cmpi eq, %496, %497 : vector<1x16xi32>
    %499 = arith.extui %498 : vector<1x16xi1> to vector<1x16xi32>
    %500 = arith.sitofp %499 : vector<1x16xi32> to vector<1x16xf32>
    %501 = arith.extui %490 : vector<1x32xi1> to vector<1x32xi32>
    %502 = arith.sitofp %501 : vector<1x32xi32> to vector<1x32xf32>
    %503 = vector.broadcast %495 : vector<16x1xf32> to vector<16x32xf32>
    %504 = vector.broadcast %502 : vector<1x32xf32> to vector<16x32xf32>
    %505 = arith.mulf %503, %504 : vector<16x32xf32>
    %506 = arith.addf %460, %505 : vector<16x32xf32>
    %507 = arith.extui %488 : vector<32x1xi1> to vector<32x1xi32>
    %508 = arith.sitofp %507 : vector<32x1xi32> to vector<32x1xf32>
    %509 = vector.broadcast %508 : vector<32x1xf32> to vector<32x16xf32>
    %510 = vector.broadcast %500 : vector<1x16xf32> to vector<32x16xf32>
    %511 = arith.mulf %509, %510 : vector<32x16xf32>
    %512 = arith.addf %466, %511 : vector<32x16xf32>
    %cst_109 = arith.constant 0.000000e+00 : f32
    %513 = vector.broadcast %cst_109 : f32 to vector<1x1xf32>
    %514 = arith.subf %513, %480 : vector<1x1xf32>
    %515 = math.exp %514 : vector<1x1xf32>
    %cst_110 = arith.constant 1.000000e+00 : f32
    %516 = vector.broadcast %cst_110 : f32 to vector<1x1xf32>
    %517 = arith.addf %516, %515 : vector<1x1xf32>
    %cst_111 = arith.constant 1.000000e+00 : f32
    %518 = vector.broadcast %cst_111 : f32 to vector<1x1xf32>
    %519 = arith.divf %518, %517 : vector<1x1xf32>
    %520 = vector.broadcast %519 : vector<1x1xf32> to vector<16x1xf32>
    %521 = arith.mulf %495, %520 : vector<16x1xf32>
    %522 = arith.addf %476, %521 : vector<16x1xf32>
    %cst_112 = arith.constant 0xFF800000 : f32
    %523 = vector.broadcast %cst_112 : f32 to vector<32x1xf32>
    %524 = arith.select %488, %523, %478 : vector<32x1xi1>, vector<32x1xf32>
    %cst_113 = arith.constant dense<0xFF800000> : vector<1xf32>
    %525 = vector.multi_reduction <maximumf>, %524, %cst_113 [0] : vector<32x1xf32> to vector<1xf32>
    %526 = vector.shape_cast %525 : vector<1xf32> to vector<1x1xf32>
    %527 = vector.broadcast %526 : vector<1x1xf32> to vector<32x1xf32>
    %528 = arith.cmpf oeq, %524, %527 : vector<32x1xf32>
    %cst_114 = arith.constant 3.200000e+01 : f32
    %529 = vector.broadcast %cst_114 : f32 to vector<32x1xf32>
    %530 = arith.select %528, %59, %529 : vector<32x1xi1>, vector<32x1xf32>
    %cst_115 = arith.constant dense<0x7F800000> : vector<1xf32>
    %531 = vector.multi_reduction <minimumf>, %530, %cst_115 [0] : vector<32x1xf32> to vector<1xf32>
    %532 = vector.shape_cast %531 : vector<1xf32> to vector<1x1xf32>
    %533 = vector.broadcast %532 : vector<1x1xf32> to vector<32x1xf32>
    %534 = arith.cmpf oeq, %59, %533 : vector<32x1xf32>
    %535 = vector.broadcast %532 : vector<1x1xf32> to vector<1x32xf32>
    %536 = arith.cmpf oeq, %61, %535 : vector<1x32xf32>
    %537 = tpu.iota {dimensions = array<i32: 0>} : vector<16x1xi32>
    %c10_i32 = arith.constant 10 : i32
    %538 = vector.broadcast %c10_i32 : i32 to vector<16x1xi32>
    %539 = arith.cmpi eq, %537, %538 : vector<16x1xi32>
    %540 = arith.extui %539 : vector<16x1xi1> to vector<16x1xi32>
    %541 = arith.sitofp %540 : vector<16x1xi32> to vector<16x1xf32>
    %542 = tpu.iota {dimensions = array<i32: 1>} : vector<1x16xi32>
    %c10_i32_116 = arith.constant 10 : i32
    %543 = vector.broadcast %c10_i32_116 : i32 to vector<1x16xi32>
    %544 = arith.cmpi eq, %542, %543 : vector<1x16xi32>
    %545 = arith.extui %544 : vector<1x16xi1> to vector<1x16xi32>
    %546 = arith.sitofp %545 : vector<1x16xi32> to vector<1x16xf32>
    %547 = arith.extui %536 : vector<1x32xi1> to vector<1x32xi32>
    %548 = arith.sitofp %547 : vector<1x32xi32> to vector<1x32xf32>
    %549 = vector.broadcast %541 : vector<16x1xf32> to vector<16x32xf32>
    %550 = vector.broadcast %548 : vector<1x32xf32> to vector<16x32xf32>
    %551 = arith.mulf %549, %550 : vector<16x32xf32>
    %552 = arith.addf %506, %551 : vector<16x32xf32>
    %553 = arith.extui %534 : vector<32x1xi1> to vector<32x1xi32>
    %554 = arith.sitofp %553 : vector<32x1xi32> to vector<32x1xf32>
    %555 = vector.broadcast %554 : vector<32x1xf32> to vector<32x16xf32>
    %556 = vector.broadcast %546 : vector<1x16xf32> to vector<32x16xf32>
    %557 = arith.mulf %555, %556 : vector<32x16xf32>
    %558 = arith.addf %512, %557 : vector<32x16xf32>
    %cst_117 = arith.constant 0.000000e+00 : f32
    %559 = vector.broadcast %cst_117 : f32 to vector<1x1xf32>
    %560 = arith.subf %559, %526 : vector<1x1xf32>
    %561 = math.exp %560 : vector<1x1xf32>
    %cst_118 = arith.constant 1.000000e+00 : f32
    %562 = vector.broadcast %cst_118 : f32 to vector<1x1xf32>
    %563 = arith.addf %562, %561 : vector<1x1xf32>
    %cst_119 = arith.constant 1.000000e+00 : f32
    %564 = vector.broadcast %cst_119 : f32 to vector<1x1xf32>
    %565 = arith.divf %564, %563 : vector<1x1xf32>
    %566 = vector.broadcast %565 : vector<1x1xf32> to vector<16x1xf32>
    %567 = arith.mulf %541, %566 : vector<16x1xf32>
    %568 = arith.addf %522, %567 : vector<16x1xf32>
    %cst_120 = arith.constant 0xFF800000 : f32
    %569 = vector.broadcast %cst_120 : f32 to vector<32x1xf32>
    %570 = arith.select %534, %569, %524 : vector<32x1xi1>, vector<32x1xf32>
    %cst_121 = arith.constant dense<0xFF800000> : vector<1xf32>
    %571 = vector.multi_reduction <maximumf>, %570, %cst_121 [0] : vector<32x1xf32> to vector<1xf32>
    %572 = vector.shape_cast %571 : vector<1xf32> to vector<1x1xf32>
    %573 = vector.broadcast %572 : vector<1x1xf32> to vector<32x1xf32>
    %574 = arith.cmpf oeq, %570, %573 : vector<32x1xf32>
    %cst_122 = arith.constant 3.200000e+01 : f32
    %575 = vector.broadcast %cst_122 : f32 to vector<32x1xf32>
    %576 = arith.select %574, %59, %575 : vector<32x1xi1>, vector<32x1xf32>
    %cst_123 = arith.constant dense<0x7F800000> : vector<1xf32>
    %577 = vector.multi_reduction <minimumf>, %576, %cst_123 [0] : vector<32x1xf32> to vector<1xf32>
    %578 = vector.shape_cast %577 : vector<1xf32> to vector<1x1xf32>
    %579 = vector.broadcast %578 : vector<1x1xf32> to vector<32x1xf32>
    %580 = arith.cmpf oeq, %59, %579 : vector<32x1xf32>
    %581 = vector.broadcast %578 : vector<1x1xf32> to vector<1x32xf32>
    %582 = arith.cmpf oeq, %61, %581 : vector<1x32xf32>
    %583 = tpu.iota {dimensions = array<i32: 0>} : vector<16x1xi32>
    %c11_i32 = arith.constant 11 : i32
    %584 = vector.broadcast %c11_i32 : i32 to vector<16x1xi32>
    %585 = arith.cmpi eq, %583, %584 : vector<16x1xi32>
    %586 = arith.extui %585 : vector<16x1xi1> to vector<16x1xi32>
    %587 = arith.sitofp %586 : vector<16x1xi32> to vector<16x1xf32>
    %588 = tpu.iota {dimensions = array<i32: 1>} : vector<1x16xi32>
    %c11_i32_124 = arith.constant 11 : i32
    %589 = vector.broadcast %c11_i32_124 : i32 to vector<1x16xi32>
    %590 = arith.cmpi eq, %588, %589 : vector<1x16xi32>
    %591 = arith.extui %590 : vector<1x16xi1> to vector<1x16xi32>
    %592 = arith.sitofp %591 : vector<1x16xi32> to vector<1x16xf32>
    %593 = arith.extui %582 : vector<1x32xi1> to vector<1x32xi32>
    %594 = arith.sitofp %593 : vector<1x32xi32> to vector<1x32xf32>
    %595 = vector.broadcast %587 : vector<16x1xf32> to vector<16x32xf32>
    %596 = vector.broadcast %594 : vector<1x32xf32> to vector<16x32xf32>
    %597 = arith.mulf %595, %596 : vector<16x32xf32>
    %598 = arith.addf %552, %597 : vector<16x32xf32>
    %599 = arith.extui %580 : vector<32x1xi1> to vector<32x1xi32>
    %600 = arith.sitofp %599 : vector<32x1xi32> to vector<32x1xf32>
    %601 = vector.broadcast %600 : vector<32x1xf32> to vector<32x16xf32>
    %602 = vector.broadcast %592 : vector<1x16xf32> to vector<32x16xf32>
    %603 = arith.mulf %601, %602 : vector<32x16xf32>
    %604 = arith.addf %558, %603 : vector<32x16xf32>
    %cst_125 = arith.constant 0.000000e+00 : f32
    %605 = vector.broadcast %cst_125 : f32 to vector<1x1xf32>
    %606 = arith.subf %605, %572 : vector<1x1xf32>
    %607 = math.exp %606 : vector<1x1xf32>
    %cst_126 = arith.constant 1.000000e+00 : f32
    %608 = vector.broadcast %cst_126 : f32 to vector<1x1xf32>
    %609 = arith.addf %608, %607 : vector<1x1xf32>
    %cst_127 = arith.constant 1.000000e+00 : f32
    %610 = vector.broadcast %cst_127 : f32 to vector<1x1xf32>
    %611 = arith.divf %610, %609 : vector<1x1xf32>
    %612 = vector.broadcast %611 : vector<1x1xf32> to vector<16x1xf32>
    %613 = arith.mulf %587, %612 : vector<16x1xf32>
    %614 = arith.addf %568, %613 : vector<16x1xf32>
    %cst_128 = arith.constant 0xFF800000 : f32
    %615 = vector.broadcast %cst_128 : f32 to vector<32x1xf32>
    %616 = arith.select %580, %615, %570 : vector<32x1xi1>, vector<32x1xf32>
    %cst_129 = arith.constant dense<0xFF800000> : vector<1xf32>
    %617 = vector.multi_reduction <maximumf>, %616, %cst_129 [0] : vector<32x1xf32> to vector<1xf32>
    %618 = vector.shape_cast %617 : vector<1xf32> to vector<1x1xf32>
    %619 = vector.broadcast %618 : vector<1x1xf32> to vector<32x1xf32>
    %620 = arith.cmpf oeq, %616, %619 : vector<32x1xf32>
    %cst_130 = arith.constant 3.200000e+01 : f32
    %621 = vector.broadcast %cst_130 : f32 to vector<32x1xf32>
    %622 = arith.select %620, %59, %621 : vector<32x1xi1>, vector<32x1xf32>
    %cst_131 = arith.constant dense<0x7F800000> : vector<1xf32>
    %623 = vector.multi_reduction <minimumf>, %622, %cst_131 [0] : vector<32x1xf32> to vector<1xf32>
    %624 = vector.shape_cast %623 : vector<1xf32> to vector<1x1xf32>
    %625 = vector.broadcast %624 : vector<1x1xf32> to vector<32x1xf32>
    %626 = arith.cmpf oeq, %59, %625 : vector<32x1xf32>
    %627 = vector.broadcast %624 : vector<1x1xf32> to vector<1x32xf32>
    %628 = arith.cmpf oeq, %61, %627 : vector<1x32xf32>
    %629 = tpu.iota {dimensions = array<i32: 0>} : vector<16x1xi32>
    %c12_i32 = arith.constant 12 : i32
    %630 = vector.broadcast %c12_i32 : i32 to vector<16x1xi32>
    %631 = arith.cmpi eq, %629, %630 : vector<16x1xi32>
    %632 = arith.extui %631 : vector<16x1xi1> to vector<16x1xi32>
    %633 = arith.sitofp %632 : vector<16x1xi32> to vector<16x1xf32>
    %634 = tpu.iota {dimensions = array<i32: 1>} : vector<1x16xi32>
    %c12_i32_132 = arith.constant 12 : i32
    %635 = vector.broadcast %c12_i32_132 : i32 to vector<1x16xi32>
    %636 = arith.cmpi eq, %634, %635 : vector<1x16xi32>
    %637 = arith.extui %636 : vector<1x16xi1> to vector<1x16xi32>
    %638 = arith.sitofp %637 : vector<1x16xi32> to vector<1x16xf32>
    %639 = arith.extui %628 : vector<1x32xi1> to vector<1x32xi32>
    %640 = arith.sitofp %639 : vector<1x32xi32> to vector<1x32xf32>
    %641 = vector.broadcast %633 : vector<16x1xf32> to vector<16x32xf32>
    %642 = vector.broadcast %640 : vector<1x32xf32> to vector<16x32xf32>
    %643 = arith.mulf %641, %642 : vector<16x32xf32>
    %644 = arith.addf %598, %643 : vector<16x32xf32>
    %645 = arith.extui %626 : vector<32x1xi1> to vector<32x1xi32>
    %646 = arith.sitofp %645 : vector<32x1xi32> to vector<32x1xf32>
    %647 = vector.broadcast %646 : vector<32x1xf32> to vector<32x16xf32>
    %648 = vector.broadcast %638 : vector<1x16xf32> to vector<32x16xf32>
    %649 = arith.mulf %647, %648 : vector<32x16xf32>
    %650 = arith.addf %604, %649 : vector<32x16xf32>
    %cst_133 = arith.constant 0.000000e+00 : f32
    %651 = vector.broadcast %cst_133 : f32 to vector<1x1xf32>
    %652 = arith.subf %651, %618 : vector<1x1xf32>
    %653 = math.exp %652 : vector<1x1xf32>
    %cst_134 = arith.constant 1.000000e+00 : f32
    %654 = vector.broadcast %cst_134 : f32 to vector<1x1xf32>
    %655 = arith.addf %654, %653 : vector<1x1xf32>
    %cst_135 = arith.constant 1.000000e+00 : f32
    %656 = vector.broadcast %cst_135 : f32 to vector<1x1xf32>
    %657 = arith.divf %656, %655 : vector<1x1xf32>
    %658 = vector.broadcast %657 : vector<1x1xf32> to vector<16x1xf32>
    %659 = arith.mulf %633, %658 : vector<16x1xf32>
    %660 = arith.addf %614, %659 : vector<16x1xf32>
    %cst_136 = arith.constant 0xFF800000 : f32
    %661 = vector.broadcast %cst_136 : f32 to vector<32x1xf32>
    %662 = arith.select %626, %661, %616 : vector<32x1xi1>, vector<32x1xf32>
    %cst_137 = arith.constant dense<0xFF800000> : vector<1xf32>
    %663 = vector.multi_reduction <maximumf>, %662, %cst_137 [0] : vector<32x1xf32> to vector<1xf32>
    %664 = vector.shape_cast %663 : vector<1xf32> to vector<1x1xf32>
    %665 = vector.broadcast %664 : vector<1x1xf32> to vector<32x1xf32>
    %666 = arith.cmpf oeq, %662, %665 : vector<32x1xf32>
    %cst_138 = arith.constant 3.200000e+01 : f32
    %667 = vector.broadcast %cst_138 : f32 to vector<32x1xf32>
    %668 = arith.select %666, %59, %667 : vector<32x1xi1>, vector<32x1xf32>
    %cst_139 = arith.constant dense<0x7F800000> : vector<1xf32>
    %669 = vector.multi_reduction <minimumf>, %668, %cst_139 [0] : vector<32x1xf32> to vector<1xf32>
    %670 = vector.shape_cast %669 : vector<1xf32> to vector<1x1xf32>
    %671 = vector.broadcast %670 : vector<1x1xf32> to vector<32x1xf32>
    %672 = arith.cmpf oeq, %59, %671 : vector<32x1xf32>
    %673 = vector.broadcast %670 : vector<1x1xf32> to vector<1x32xf32>
    %674 = arith.cmpf oeq, %61, %673 : vector<1x32xf32>
    %675 = tpu.iota {dimensions = array<i32: 0>} : vector<16x1xi32>
    %c13_i32 = arith.constant 13 : i32
    %676 = vector.broadcast %c13_i32 : i32 to vector<16x1xi32>
    %677 = arith.cmpi eq, %675, %676 : vector<16x1xi32>
    %678 = arith.extui %677 : vector<16x1xi1> to vector<16x1xi32>
    %679 = arith.sitofp %678 : vector<16x1xi32> to vector<16x1xf32>
    %680 = tpu.iota {dimensions = array<i32: 1>} : vector<1x16xi32>
    %c13_i32_140 = arith.constant 13 : i32
    %681 = vector.broadcast %c13_i32_140 : i32 to vector<1x16xi32>
    %682 = arith.cmpi eq, %680, %681 : vector<1x16xi32>
    %683 = arith.extui %682 : vector<1x16xi1> to vector<1x16xi32>
    %684 = arith.sitofp %683 : vector<1x16xi32> to vector<1x16xf32>
    %685 = arith.extui %674 : vector<1x32xi1> to vector<1x32xi32>
    %686 = arith.sitofp %685 : vector<1x32xi32> to vector<1x32xf32>
    %687 = vector.broadcast %679 : vector<16x1xf32> to vector<16x32xf32>
    %688 = vector.broadcast %686 : vector<1x32xf32> to vector<16x32xf32>
    %689 = arith.mulf %687, %688 : vector<16x32xf32>
    %690 = arith.addf %644, %689 : vector<16x32xf32>
    %691 = arith.extui %672 : vector<32x1xi1> to vector<32x1xi32>
    %692 = arith.sitofp %691 : vector<32x1xi32> to vector<32x1xf32>
    %693 = vector.broadcast %692 : vector<32x1xf32> to vector<32x16xf32>
    %694 = vector.broadcast %684 : vector<1x16xf32> to vector<32x16xf32>
    %695 = arith.mulf %693, %694 : vector<32x16xf32>
    %696 = arith.addf %650, %695 : vector<32x16xf32>
    %cst_141 = arith.constant 0.000000e+00 : f32
    %697 = vector.broadcast %cst_141 : f32 to vector<1x1xf32>
    %698 = arith.subf %697, %664 : vector<1x1xf32>
    %699 = math.exp %698 : vector<1x1xf32>
    %cst_142 = arith.constant 1.000000e+00 : f32
    %700 = vector.broadcast %cst_142 : f32 to vector<1x1xf32>
    %701 = arith.addf %700, %699 : vector<1x1xf32>
    %cst_143 = arith.constant 1.000000e+00 : f32
    %702 = vector.broadcast %cst_143 : f32 to vector<1x1xf32>
    %703 = arith.divf %702, %701 : vector<1x1xf32>
    %704 = vector.broadcast %703 : vector<1x1xf32> to vector<16x1xf32>
    %705 = arith.mulf %679, %704 : vector<16x1xf32>
    %706 = arith.addf %660, %705 : vector<16x1xf32>
    %cst_144 = arith.constant 0xFF800000 : f32
    %707 = vector.broadcast %cst_144 : f32 to vector<32x1xf32>
    %708 = arith.select %672, %707, %662 : vector<32x1xi1>, vector<32x1xf32>
    %cst_145 = arith.constant dense<0xFF800000> : vector<1xf32>
    %709 = vector.multi_reduction <maximumf>, %708, %cst_145 [0] : vector<32x1xf32> to vector<1xf32>
    %710 = vector.shape_cast %709 : vector<1xf32> to vector<1x1xf32>
    %711 = vector.broadcast %710 : vector<1x1xf32> to vector<32x1xf32>
    %712 = arith.cmpf oeq, %708, %711 : vector<32x1xf32>
    %cst_146 = arith.constant 3.200000e+01 : f32
    %713 = vector.broadcast %cst_146 : f32 to vector<32x1xf32>
    %714 = arith.select %712, %59, %713 : vector<32x1xi1>, vector<32x1xf32>
    %cst_147 = arith.constant dense<0x7F800000> : vector<1xf32>
    %715 = vector.multi_reduction <minimumf>, %714, %cst_147 [0] : vector<32x1xf32> to vector<1xf32>
    %716 = vector.shape_cast %715 : vector<1xf32> to vector<1x1xf32>
    %717 = vector.broadcast %716 : vector<1x1xf32> to vector<32x1xf32>
    %718 = arith.cmpf oeq, %59, %717 : vector<32x1xf32>
    %719 = vector.broadcast %716 : vector<1x1xf32> to vector<1x32xf32>
    %720 = arith.cmpf oeq, %61, %719 : vector<1x32xf32>
    %721 = tpu.iota {dimensions = array<i32: 0>} : vector<16x1xi32>
    %c14_i32 = arith.constant 14 : i32
    %722 = vector.broadcast %c14_i32 : i32 to vector<16x1xi32>
    %723 = arith.cmpi eq, %721, %722 : vector<16x1xi32>
    %724 = arith.extui %723 : vector<16x1xi1> to vector<16x1xi32>
    %725 = arith.sitofp %724 : vector<16x1xi32> to vector<16x1xf32>
    %726 = tpu.iota {dimensions = array<i32: 1>} : vector<1x16xi32>
    %c14_i32_148 = arith.constant 14 : i32
    %727 = vector.broadcast %c14_i32_148 : i32 to vector<1x16xi32>
    %728 = arith.cmpi eq, %726, %727 : vector<1x16xi32>
    %729 = arith.extui %728 : vector<1x16xi1> to vector<1x16xi32>
    %730 = arith.sitofp %729 : vector<1x16xi32> to vector<1x16xf32>
    %731 = arith.extui %720 : vector<1x32xi1> to vector<1x32xi32>
    %732 = arith.sitofp %731 : vector<1x32xi32> to vector<1x32xf32>
    %733 = vector.broadcast %725 : vector<16x1xf32> to vector<16x32xf32>
    %734 = vector.broadcast %732 : vector<1x32xf32> to vector<16x32xf32>
    %735 = arith.mulf %733, %734 : vector<16x32xf32>
    %736 = arith.addf %690, %735 : vector<16x32xf32>
    %737 = arith.extui %718 : vector<32x1xi1> to vector<32x1xi32>
    %738 = arith.sitofp %737 : vector<32x1xi32> to vector<32x1xf32>
    %739 = vector.broadcast %738 : vector<32x1xf32> to vector<32x16xf32>
    %740 = vector.broadcast %730 : vector<1x16xf32> to vector<32x16xf32>
    %741 = arith.mulf %739, %740 : vector<32x16xf32>
    %742 = arith.addf %696, %741 : vector<32x16xf32>
    %cst_149 = arith.constant 0.000000e+00 : f32
    %743 = vector.broadcast %cst_149 : f32 to vector<1x1xf32>
    %744 = arith.subf %743, %710 : vector<1x1xf32>
    %745 = math.exp %744 : vector<1x1xf32>
    %cst_150 = arith.constant 1.000000e+00 : f32
    %746 = vector.broadcast %cst_150 : f32 to vector<1x1xf32>
    %747 = arith.addf %746, %745 : vector<1x1xf32>
    %cst_151 = arith.constant 1.000000e+00 : f32
    %748 = vector.broadcast %cst_151 : f32 to vector<1x1xf32>
    %749 = arith.divf %748, %747 : vector<1x1xf32>
    %750 = vector.broadcast %749 : vector<1x1xf32> to vector<16x1xf32>
    %751 = arith.mulf %725, %750 : vector<16x1xf32>
    %752 = arith.addf %706, %751 : vector<16x1xf32>
    %cst_152 = arith.constant 0xFF800000 : f32
    %753 = vector.broadcast %cst_152 : f32 to vector<32x1xf32>
    %754 = arith.select %718, %753, %708 : vector<32x1xi1>, vector<32x1xf32>
    %cst_153 = arith.constant dense<0xFF800000> : vector<1xf32>
    %755 = vector.multi_reduction <maximumf>, %754, %cst_153 [0] : vector<32x1xf32> to vector<1xf32>
    %756 = vector.shape_cast %755 : vector<1xf32> to vector<1x1xf32>
    %757 = vector.broadcast %756 : vector<1x1xf32> to vector<32x1xf32>
    %758 = arith.cmpf oeq, %754, %757 : vector<32x1xf32>
    %cst_154 = arith.constant 3.200000e+01 : f32
    %759 = vector.broadcast %cst_154 : f32 to vector<32x1xf32>
    %760 = arith.select %758, %59, %759 : vector<32x1xi1>, vector<32x1xf32>
    %cst_155 = arith.constant dense<0x7F800000> : vector<1xf32>
    %761 = vector.multi_reduction <minimumf>, %760, %cst_155 [0] : vector<32x1xf32> to vector<1xf32>
    %762 = vector.shape_cast %761 : vector<1xf32> to vector<1x1xf32>
    %763 = vector.broadcast %762 : vector<1x1xf32> to vector<32x1xf32>
    %764 = arith.cmpf oeq, %59, %763 : vector<32x1xf32>
    %765 = vector.broadcast %762 : vector<1x1xf32> to vector<1x32xf32>
    %766 = arith.cmpf oeq, %61, %765 : vector<1x32xf32>
    %767 = tpu.iota {dimensions = array<i32: 0>} : vector<16x1xi32>
    %c15_i32 = arith.constant 15 : i32
    %768 = vector.broadcast %c15_i32 : i32 to vector<16x1xi32>
    %769 = arith.cmpi eq, %767, %768 : vector<16x1xi32>
    %770 = arith.extui %769 : vector<16x1xi1> to vector<16x1xi32>
    %771 = arith.sitofp %770 : vector<16x1xi32> to vector<16x1xf32>
    %772 = tpu.iota {dimensions = array<i32: 1>} : vector<1x16xi32>
    %c15_i32_156 = arith.constant 15 : i32
    %773 = vector.broadcast %c15_i32_156 : i32 to vector<1x16xi32>
    %774 = arith.cmpi eq, %772, %773 : vector<1x16xi32>
    %775 = arith.extui %774 : vector<1x16xi1> to vector<1x16xi32>
    %776 = arith.sitofp %775 : vector<1x16xi32> to vector<1x16xf32>
    %777 = arith.extui %766 : vector<1x32xi1> to vector<1x32xi32>
    %778 = arith.sitofp %777 : vector<1x32xi32> to vector<1x32xf32>
    %779 = vector.broadcast %771 : vector<16x1xf32> to vector<16x32xf32>
    %780 = vector.broadcast %778 : vector<1x32xf32> to vector<16x32xf32>
    %781 = arith.mulf %779, %780 : vector<16x32xf32>
    %782 = arith.addf %736, %781 : vector<16x32xf32>
    %783 = arith.extui %764 : vector<32x1xi1> to vector<32x1xi32>
    %784 = arith.sitofp %783 : vector<32x1xi32> to vector<32x1xf32>
    %785 = vector.broadcast %784 : vector<32x1xf32> to vector<32x16xf32>
    %786 = vector.broadcast %776 : vector<1x16xf32> to vector<32x16xf32>
    %787 = arith.mulf %785, %786 : vector<32x16xf32>
    %788 = arith.addf %742, %787 : vector<32x16xf32>
    %cst_157 = arith.constant 0.000000e+00 : f32
    %789 = vector.broadcast %cst_157 : f32 to vector<1x1xf32>
    %790 = arith.subf %789, %756 : vector<1x1xf32>
    %791 = math.exp %790 : vector<1x1xf32>
    %cst_158 = arith.constant 1.000000e+00 : f32
    %792 = vector.broadcast %cst_158 : f32 to vector<1x1xf32>
    %793 = arith.addf %792, %791 : vector<1x1xf32>
    %cst_159 = arith.constant 1.000000e+00 : f32
    %794 = vector.broadcast %cst_159 : f32 to vector<1x1xf32>
    %795 = arith.divf %794, %793 : vector<1x1xf32>
    %796 = vector.broadcast %795 : vector<1x1xf32> to vector<16x1xf32>
    %797 = arith.mulf %771, %796 : vector<16x1xf32>
    %798 = arith.addf %752, %797 : vector<16x1xf32>
    %cst_160 = arith.constant dense<0.000000e+00> : vector<16x128xf32>
    %799 = tpu.matmul %782, %50, %cst_160 {dimension_numbers = #tpu.dot_dimension_numbers<[1], [0], [0], [1], [0, 0, 1, 1], [], []>} : vector<16x32xf32>, vector<32x128xf32>, vector<16x128xf32> -> vector<16x128xf32>
    %800 = vector.broadcast %798 : vector<16x1xf32> to vector<16x128xf32>
    %801 = arith.mulf %799, %800 : vector<16x128xf32>
    %cst_161 = arith.constant 0.000000e+00 : f32
    %802 = vector.broadcast %cst_161 : f32 to vector<32x32xf32>
    %803 = arith.cmpf one, %0, %802 : vector<32x32xf32>
    %804 = arith.extui %803 : vector<32x32xi1> to vector<32x32xi32>
    %805 = arith.sitofp %804 : vector<32x32xi32> to vector<32x32xf32>
    %cst_162 = arith.constant dense<0.000000e+00> : vector<32x32xf32>
    %806 = tpu.matmul %805, %805, %cst_162 {dimension_numbers = #tpu.dot_dimension_numbers<[1], [0], [0], [1], [0, 0, 1, 1], [], []>} : vector<32x32xf32>, vector<32x32xf32>, vector<32x32xf32> -> vector<32x32xf32>
    %cst_163 = arith.constant 0.000000e+00 : f32
    %807 = vector.broadcast %cst_163 : f32 to vector<32x32xf32>
    %808 = arith.cmpf one, %806, %807 : vector<32x32xf32>
    %809 = arith.extui %808 : vector<32x32xi1> to vector<32x32xi32>
    %810 = arith.sitofp %809 : vector<32x32xi32> to vector<32x32xf32>
    %cst_164 = arith.constant dense<0.000000e+00> : vector<16x32xf32>
    %811 = tpu.matmul %782, %810, %cst_164 {dimension_numbers = #tpu.dot_dimension_numbers<[1], [0], [0], [1], [0, 0, 1, 1], [], []>} : vector<16x32xf32>, vector<32x32xf32>, vector<16x32xf32> -> vector<16x32xf32>
    %cst_165 = arith.constant dense<0.000000e+00> : vector<16x16xf32>
    %812 = tpu.matmul %811, %788, %cst_165 {dimension_numbers = #tpu.dot_dimension_numbers<[1], [0], [0], [1], [0, 0, 1, 1], [], []>} : vector<16x32xf32>, vector<32x16xf32>, vector<16x16xf32> -> vector<16x16xf32>
    %cst_166 = arith.constant dense<0.000000e+00> : vector<16xf32>
    %813 = vector.multi_reduction <add>, %812, %cst_166 [1] : vector<16x16xf32> to vector<16xf32>
    %814 = vector.shape_cast %813 : vector<16xf32> to vector<16x1xf32>
    %815 = tpu.iota {dimensions = array<i32: 0>} : vector<16x16xi32>
    %816 = tpu.iota {dimensions = array<i32: 1>} : vector<16x16xi32>
    %817 = arith.cmpi eq, %815, %816 : vector<16x16xi32>
    %cst_167 = arith.constant 0.000000e+00 : f32
    %818 = vector.shape_cast %814 : vector<16x1xf32> to vector<16x1xf32>
    %819 = vector.broadcast %818 : vector<16x1xf32> to vector<16x16xf32>
    %820 = vector.broadcast %cst_167 : f32 to vector<16x16xf32>
    %821 = arith.select %817, %819, %820 : vector<16x16xi1>, vector<16x16xf32>
    %cst_168 = arith.constant dense<0.000000e+00> : vector<16xf32>
    %822 = vector.multi_reduction <add>, %821, %cst_168 [0] : vector<16x16xf32> to vector<16xf32>
    %823 = vector.shape_cast %822 : vector<16xf32> to vector<1x16xf32>
    %824 = vector.broadcast %823 : vector<1x16xf32> to vector<16x16xf32>
    %825 = arith.divf %812, %824 : vector<16x16xf32>
    %cst_169 = arith.constant dense<0.000000e+00> : vector<16xf32>
    %826 = vector.multi_reduction <add>, %825, %cst_169 [1] : vector<16x16xf32> to vector<16xf32>
    %827 = vector.shape_cast %826 : vector<16xf32> to vector<16x1xf32>
    %cst_170 = arith.constant 1.000000e+00 : f32
    %828 = vector.broadcast %cst_170 : f32 to vector<16x1xf32>
    %829 = arith.addf %827, %828 : vector<16x1xf32>
    %830 = math.rsqrt %829 : vector<16x1xf32>
    %c1 = arith.constant 1 : index
    %c0_171 = arith.constant 0 : index
    %c0_172 = arith.constant 0 : index
    %831 = vector.load %arg4[%c1, %c0_171, %c0_172] : memref<7x1x128xf32, #tpu.memory_space<vmem>>, vector<1x1x128xf32>
    %832 = vector.shape_cast %831 : vector<1x1x128xf32> to vector<1x128xf32>
    %c1_173 = arith.constant 1 : index
    %c0_174 = arith.constant 0 : index
    %c0_175 = arith.constant 0 : index
    %833 = vector.load %arg5[%c1_173, %c0_174, %c0_175] : memref<7x1x128xf32, #tpu.memory_space<vmem>>, vector<1x1x128xf32>
    %834 = vector.shape_cast %833 : vector<1x1x128xf32> to vector<1x128xf32>
    %cst_176 = arith.constant dense<0.000000e+00> : vector<128xf32>
    %835 = vector.multi_reduction <add>, %801, %cst_176 [0] : vector<16x128xf32> to vector<128xf32>
    %836 = vector.shape_cast %835 : vector<128xf32> to vector<1x128xf32>
    %cst_177 = arith.constant 1.600000e+01 : f32
    %837 = vector.broadcast %cst_177 : f32 to vector<1x128xf32>
    %838 = arith.divf %836, %837 : vector<1x128xf32>
    %839 = vector.broadcast %838 : vector<1x128xf32> to vector<16x128xf32>
    %840 = arith.subf %801, %839 : vector<16x128xf32>
    %841 = arith.mulf %840, %840 : vector<16x128xf32>
    %cst_178 = arith.constant dense<0.000000e+00> : vector<128xf32>
    %842 = vector.multi_reduction <add>, %841, %cst_178 [0] : vector<16x128xf32> to vector<128xf32>
    %843 = vector.shape_cast %842 : vector<128xf32> to vector<1x128xf32>
    %cst_179 = arith.constant 1.600000e+01 : f32
    %844 = vector.broadcast %cst_179 : f32 to vector<1x128xf32>
    %845 = arith.divf %843, %844 : vector<1x128xf32>
    %846 = vector.broadcast %838 : vector<1x128xf32> to vector<16x128xf32>
    %847 = arith.subf %801, %846 : vector<16x128xf32>
    %cst_180 = arith.constant 9.99999974E-6 : f32
    %848 = vector.broadcast %cst_180 : f32 to vector<1x128xf32>
    %849 = arith.addf %845, %848 : vector<1x128xf32>
    %850 = math.rsqrt %849 : vector<1x128xf32>
    %851 = vector.broadcast %850 : vector<1x128xf32> to vector<16x128xf32>
    %852 = arith.mulf %847, %851 : vector<16x128xf32>
    %853 = vector.broadcast %832 : vector<1x128xf32> to vector<16x128xf32>
    %854 = arith.mulf %852, %853 : vector<16x128xf32>
    %855 = vector.broadcast %834 : vector<1x128xf32> to vector<16x128xf32>
    %856 = arith.addf %854, %855 : vector<16x128xf32>
    %c1_181 = arith.constant 1 : index
    %c0_182 = arith.constant 0 : index
    %c0_183 = arith.constant 0 : index
    %857 = vector.load %arg2[%c1_181, %c0_182, %c0_183] : memref<7x128x128xf32, #tpu.memory_space<vmem>>, vector<1x128x128xf32>
    %858 = vector.shape_cast %857 : vector<1x128x128xf32> to vector<128x128xf32>
    %cst_184 = arith.constant dense<0.000000e+00> : vector<16x128xf32>
    %859 = tpu.matmul %856, %858, %cst_184 {dimension_numbers = #tpu.dot_dimension_numbers<[1], [0], [0], [1], [0, 0, 1, 1], [], []>} : vector<16x128xf32>, vector<128x128xf32>, vector<16x128xf32> -> vector<16x128xf32>
    %c1_185 = arith.constant 1 : index
    %c0_186 = arith.constant 0 : index
    %c0_187 = arith.constant 0 : index
    %860 = vector.load %arg3[%c1_185, %c0_186, %c0_187] : memref<7x1x128xf32, #tpu.memory_space<vmem>>, vector<1x1x128xf32>
    %861 = vector.shape_cast %860 : vector<1x1x128xf32> to vector<1x128xf32>
    %862 = vector.broadcast %861 : vector<1x128xf32> to vector<16x128xf32>
    %863 = arith.addf %859, %862 : vector<16x128xf32>
    %864 = vector.broadcast %830 : vector<16x1xf32> to vector<16x128xf32>
    %865 = arith.mulf %864, %863 : vector<16x128xf32>
    %cst_188 = arith.constant dense<0.000000e+00> : vector<16x128xf32>
    %866 = tpu.matmul %825, %865, %cst_188 {dimension_numbers = #tpu.dot_dimension_numbers<[1], [0], [0], [1], [0, 0, 1, 1], [], []>} : vector<16x16xf32>, vector<16x128xf32>, vector<16x128xf32> -> vector<16x128xf32>
    %867 = arith.addf %866, %865 : vector<16x128xf32>
    %868 = vector.broadcast %830 : vector<16x1xf32> to vector<16x128xf32>
    %869 = arith.mulf %868, %867 : vector<16x128xf32>
    %cst_189 = arith.constant 0.000000e+00 : f32
    %870 = vector.broadcast %cst_189 : f32 to vector<16x128xf32>
    %871 = arith.cmpf ogt, %869, %870 : vector<16x128xf32>
    %cst_190 = arith.constant 0.00999999977 : f32
    %872 = vector.broadcast %cst_190 : f32 to vector<16x128xf32>
    %873 = arith.mulf %872, %869 : vector<16x128xf32>
    %874 = arith.select %871, %869, %873 : vector<16x128xi1>, vector<16x128xf32>
    %c1_191 = arith.constant 1 : index
    %c0_192 = arith.constant 0 : index
    %c0_193 = arith.constant 0 : index
    %875 = vector.load %arg6[%c1_191, %c0_192, %c0_193] : memref<2x128x128xf32, #tpu.memory_space<vmem>>, vector<1x128x128xf32>
    %876 = vector.shape_cast %875 : vector<1x128x128xf32> to vector<128x128xf32>
    %cst_194 = arith.constant dense<0.000000e+00> : vector<16x128xf32>
    %877 = tpu.matmul %874, %876, %cst_194 {dimension_numbers = #tpu.dot_dimension_numbers<[1], [0], [0], [1], [0, 0, 1, 1], [], []>} : vector<16x128xf32>, vector<128x128xf32>, vector<16x128xf32> -> vector<16x128xf32>
    %878 = vector.extract_strided_slice %877 {offsets = [0, 0], sizes = [16, 1], strides = [1, 1]} : vector<16x128xf32> to vector<16x1xf32>
    %c1_195 = arith.constant 1 : index
    %879 = memref.load %arg7[%c1_195] : memref<2xf32, #tpu.memory_space<smem>>
    %880 = vector.broadcast %879 : f32 to vector<16x1xf32>
    %881 = arith.addf %878, %880 : vector<16x1xf32>
    %882 = tpu.iota {dimensions = array<i32: 0>} : vector<16x1xi32>
    %883 = arith.sitofp %882 : vector<16x1xi32> to vector<16x1xf32>
    %884 = tpu.iota {dimensions = array<i32: 1>} : vector<1x16xi32>
    %885 = arith.sitofp %884 : vector<1x16xi32> to vector<1x16xf32>
    %cst_196 = arith.constant 0.000000e+00 : f32
    %886 = vector.broadcast %cst_196 : f32 to vector<8x16xf32>
    %cst_197 = arith.constant 0.000000e+00 : f32
    %887 = vector.broadcast %cst_197 : f32 to vector<16x8xf32>
    %cst_198 = arith.constant 0.000000e+00 : f32
    %888 = vector.broadcast %cst_198 : f32 to vector<8x1xf32>
    %cst_199 = arith.constant dense<0xFF800000> : vector<1xf32>
    %889 = vector.multi_reduction <maximumf>, %881, %cst_199 [0] : vector<16x1xf32> to vector<1xf32>
    %890 = vector.shape_cast %889 : vector<1xf32> to vector<1x1xf32>
    %891 = vector.broadcast %890 : vector<1x1xf32> to vector<16x1xf32>
    %892 = arith.cmpf oeq, %881, %891 : vector<16x1xf32>
    %cst_200 = arith.constant 1.600000e+01 : f32
    %893 = vector.broadcast %cst_200 : f32 to vector<16x1xf32>
    %894 = arith.select %892, %883, %893 : vector<16x1xi1>, vector<16x1xf32>
    %cst_201 = arith.constant dense<0x7F800000> : vector<1xf32>
    %895 = vector.multi_reduction <minimumf>, %894, %cst_201 [0] : vector<16x1xf32> to vector<1xf32>
    %896 = vector.shape_cast %895 : vector<1xf32> to vector<1x1xf32>
    %897 = vector.broadcast %896 : vector<1x1xf32> to vector<16x1xf32>
    %898 = arith.cmpf oeq, %883, %897 : vector<16x1xf32>
    %899 = vector.broadcast %896 : vector<1x1xf32> to vector<1x16xf32>
    %900 = arith.cmpf oeq, %885, %899 : vector<1x16xf32>
    %901 = tpu.iota {dimensions = array<i32: 0>} : vector<8x1xi32>
    %c0_i32_202 = arith.constant 0 : i32
    %902 = vector.broadcast %c0_i32_202 : i32 to vector<8x1xi32>
    %903 = arith.cmpi eq, %901, %902 : vector<8x1xi32>
    %904 = arith.extui %903 : vector<8x1xi1> to vector<8x1xi32>
    %905 = arith.sitofp %904 : vector<8x1xi32> to vector<8x1xf32>
    %906 = tpu.iota {dimensions = array<i32: 1>} : vector<1x8xi32>
    %c0_i32_203 = arith.constant 0 : i32
    %907 = vector.broadcast %c0_i32_203 : i32 to vector<1x8xi32>
    %908 = arith.cmpi eq, %906, %907 : vector<1x8xi32>
    %909 = arith.extui %908 : vector<1x8xi1> to vector<1x8xi32>
    %910 = arith.sitofp %909 : vector<1x8xi32> to vector<1x8xf32>
    %911 = arith.extui %900 : vector<1x16xi1> to vector<1x16xi32>
    %912 = arith.sitofp %911 : vector<1x16xi32> to vector<1x16xf32>
    %913 = vector.broadcast %905 : vector<8x1xf32> to vector<8x16xf32>
    %914 = vector.broadcast %912 : vector<1x16xf32> to vector<8x16xf32>
    %915 = arith.mulf %913, %914 : vector<8x16xf32>
    %916 = arith.addf %886, %915 : vector<8x16xf32>
    %917 = arith.extui %898 : vector<16x1xi1> to vector<16x1xi32>
    %918 = arith.sitofp %917 : vector<16x1xi32> to vector<16x1xf32>
    %919 = vector.broadcast %918 : vector<16x1xf32> to vector<16x8xf32>
    %920 = vector.broadcast %910 : vector<1x8xf32> to vector<16x8xf32>
    %921 = arith.mulf %919, %920 : vector<16x8xf32>
    %922 = arith.addf %887, %921 : vector<16x8xf32>
    %cst_204 = arith.constant 0.000000e+00 : f32
    %923 = vector.broadcast %cst_204 : f32 to vector<1x1xf32>
    %924 = arith.subf %923, %890 : vector<1x1xf32>
    %925 = math.exp %924 : vector<1x1xf32>
    %cst_205 = arith.constant 1.000000e+00 : f32
    %926 = vector.broadcast %cst_205 : f32 to vector<1x1xf32>
    %927 = arith.addf %926, %925 : vector<1x1xf32>
    %cst_206 = arith.constant 1.000000e+00 : f32
    %928 = vector.broadcast %cst_206 : f32 to vector<1x1xf32>
    %929 = arith.divf %928, %927 : vector<1x1xf32>
    %930 = vector.broadcast %929 : vector<1x1xf32> to vector<8x1xf32>
    %931 = arith.mulf %905, %930 : vector<8x1xf32>
    %932 = arith.addf %888, %931 : vector<8x1xf32>
    %cst_207 = arith.constant 0xFF800000 : f32
    %933 = vector.broadcast %cst_207 : f32 to vector<16x1xf32>
    %934 = arith.select %898, %933, %881 : vector<16x1xi1>, vector<16x1xf32>
    %cst_208 = arith.constant dense<0xFF800000> : vector<1xf32>
    %935 = vector.multi_reduction <maximumf>, %934, %cst_208 [0] : vector<16x1xf32> to vector<1xf32>
    %936 = vector.shape_cast %935 : vector<1xf32> to vector<1x1xf32>
    %937 = vector.broadcast %936 : vector<1x1xf32> to vector<16x1xf32>
    %938 = arith.cmpf oeq, %934, %937 : vector<16x1xf32>
    %cst_209 = arith.constant 1.600000e+01 : f32
    %939 = vector.broadcast %cst_209 : f32 to vector<16x1xf32>
    %940 = arith.select %938, %883, %939 : vector<16x1xi1>, vector<16x1xf32>
    %cst_210 = arith.constant dense<0x7F800000> : vector<1xf32>
    %941 = vector.multi_reduction <minimumf>, %940, %cst_210 [0] : vector<16x1xf32> to vector<1xf32>
    %942 = vector.shape_cast %941 : vector<1xf32> to vector<1x1xf32>
    %943 = vector.broadcast %942 : vector<1x1xf32> to vector<16x1xf32>
    %944 = arith.cmpf oeq, %883, %943 : vector<16x1xf32>
    %945 = vector.broadcast %942 : vector<1x1xf32> to vector<1x16xf32>
    %946 = arith.cmpf oeq, %885, %945 : vector<1x16xf32>
    %947 = tpu.iota {dimensions = array<i32: 0>} : vector<8x1xi32>
    %c1_i32_211 = arith.constant 1 : i32
    %948 = vector.broadcast %c1_i32_211 : i32 to vector<8x1xi32>
    %949 = arith.cmpi eq, %947, %948 : vector<8x1xi32>
    %950 = arith.extui %949 : vector<8x1xi1> to vector<8x1xi32>
    %951 = arith.sitofp %950 : vector<8x1xi32> to vector<8x1xf32>
    %952 = tpu.iota {dimensions = array<i32: 1>} : vector<1x8xi32>
    %c1_i32_212 = arith.constant 1 : i32
    %953 = vector.broadcast %c1_i32_212 : i32 to vector<1x8xi32>
    %954 = arith.cmpi eq, %952, %953 : vector<1x8xi32>
    %955 = arith.extui %954 : vector<1x8xi1> to vector<1x8xi32>
    %956 = arith.sitofp %955 : vector<1x8xi32> to vector<1x8xf32>
    %957 = arith.extui %946 : vector<1x16xi1> to vector<1x16xi32>
    %958 = arith.sitofp %957 : vector<1x16xi32> to vector<1x16xf32>
    %959 = vector.broadcast %951 : vector<8x1xf32> to vector<8x16xf32>
    %960 = vector.broadcast %958 : vector<1x16xf32> to vector<8x16xf32>
    %961 = arith.mulf %959, %960 : vector<8x16xf32>
    %962 = arith.addf %916, %961 : vector<8x16xf32>
    %963 = arith.extui %944 : vector<16x1xi1> to vector<16x1xi32>
    %964 = arith.sitofp %963 : vector<16x1xi32> to vector<16x1xf32>
    %965 = vector.broadcast %964 : vector<16x1xf32> to vector<16x8xf32>
    %966 = vector.broadcast %956 : vector<1x8xf32> to vector<16x8xf32>
    %967 = arith.mulf %965, %966 : vector<16x8xf32>
    %968 = arith.addf %922, %967 : vector<16x8xf32>
    %cst_213 = arith.constant 0.000000e+00 : f32
    %969 = vector.broadcast %cst_213 : f32 to vector<1x1xf32>
    %970 = arith.subf %969, %936 : vector<1x1xf32>
    %971 = math.exp %970 : vector<1x1xf32>
    %cst_214 = arith.constant 1.000000e+00 : f32
    %972 = vector.broadcast %cst_214 : f32 to vector<1x1xf32>
    %973 = arith.addf %972, %971 : vector<1x1xf32>
    %cst_215 = arith.constant 1.000000e+00 : f32
    %974 = vector.broadcast %cst_215 : f32 to vector<1x1xf32>
    %975 = arith.divf %974, %973 : vector<1x1xf32>
    %976 = vector.broadcast %975 : vector<1x1xf32> to vector<8x1xf32>
    %977 = arith.mulf %951, %976 : vector<8x1xf32>
    %978 = arith.addf %932, %977 : vector<8x1xf32>
    %cst_216 = arith.constant 0xFF800000 : f32
    %979 = vector.broadcast %cst_216 : f32 to vector<16x1xf32>
    %980 = arith.select %944, %979, %934 : vector<16x1xi1>, vector<16x1xf32>
    %cst_217 = arith.constant dense<0xFF800000> : vector<1xf32>
    %981 = vector.multi_reduction <maximumf>, %980, %cst_217 [0] : vector<16x1xf32> to vector<1xf32>
    %982 = vector.shape_cast %981 : vector<1xf32> to vector<1x1xf32>
    %983 = vector.broadcast %982 : vector<1x1xf32> to vector<16x1xf32>
    %984 = arith.cmpf oeq, %980, %983 : vector<16x1xf32>
    %cst_218 = arith.constant 1.600000e+01 : f32
    %985 = vector.broadcast %cst_218 : f32 to vector<16x1xf32>
    %986 = arith.select %984, %883, %985 : vector<16x1xi1>, vector<16x1xf32>
    %cst_219 = arith.constant dense<0x7F800000> : vector<1xf32>
    %987 = vector.multi_reduction <minimumf>, %986, %cst_219 [0] : vector<16x1xf32> to vector<1xf32>
    %988 = vector.shape_cast %987 : vector<1xf32> to vector<1x1xf32>
    %989 = vector.broadcast %988 : vector<1x1xf32> to vector<16x1xf32>
    %990 = arith.cmpf oeq, %883, %989 : vector<16x1xf32>
    %991 = vector.broadcast %988 : vector<1x1xf32> to vector<1x16xf32>
    %992 = arith.cmpf oeq, %885, %991 : vector<1x16xf32>
    %993 = tpu.iota {dimensions = array<i32: 0>} : vector<8x1xi32>
    %c2_i32_220 = arith.constant 2 : i32
    %994 = vector.broadcast %c2_i32_220 : i32 to vector<8x1xi32>
    %995 = arith.cmpi eq, %993, %994 : vector<8x1xi32>
    %996 = arith.extui %995 : vector<8x1xi1> to vector<8x1xi32>
    %997 = arith.sitofp %996 : vector<8x1xi32> to vector<8x1xf32>
    %998 = tpu.iota {dimensions = array<i32: 1>} : vector<1x8xi32>
    %c2_i32_221 = arith.constant 2 : i32
    %999 = vector.broadcast %c2_i32_221 : i32 to vector<1x8xi32>
    %1000 = arith.cmpi eq, %998, %999 : vector<1x8xi32>
    %1001 = arith.extui %1000 : vector<1x8xi1> to vector<1x8xi32>
    %1002 = arith.sitofp %1001 : vector<1x8xi32> to vector<1x8xf32>
    %1003 = arith.extui %992 : vector<1x16xi1> to vector<1x16xi32>
    %1004 = arith.sitofp %1003 : vector<1x16xi32> to vector<1x16xf32>
    %1005 = vector.broadcast %997 : vector<8x1xf32> to vector<8x16xf32>
    %1006 = vector.broadcast %1004 : vector<1x16xf32> to vector<8x16xf32>
    %1007 = arith.mulf %1005, %1006 : vector<8x16xf32>
    %1008 = arith.addf %962, %1007 : vector<8x16xf32>
    %1009 = arith.extui %990 : vector<16x1xi1> to vector<16x1xi32>
    %1010 = arith.sitofp %1009 : vector<16x1xi32> to vector<16x1xf32>
    %1011 = vector.broadcast %1010 : vector<16x1xf32> to vector<16x8xf32>
    %1012 = vector.broadcast %1002 : vector<1x8xf32> to vector<16x8xf32>
    %1013 = arith.mulf %1011, %1012 : vector<16x8xf32>
    %1014 = arith.addf %968, %1013 : vector<16x8xf32>
    %cst_222 = arith.constant 0.000000e+00 : f32
    %1015 = vector.broadcast %cst_222 : f32 to vector<1x1xf32>
    %1016 = arith.subf %1015, %982 : vector<1x1xf32>
    %1017 = math.exp %1016 : vector<1x1xf32>
    %cst_223 = arith.constant 1.000000e+00 : f32
    %1018 = vector.broadcast %cst_223 : f32 to vector<1x1xf32>
    %1019 = arith.addf %1018, %1017 : vector<1x1xf32>
    %cst_224 = arith.constant 1.000000e+00 : f32
    %1020 = vector.broadcast %cst_224 : f32 to vector<1x1xf32>
    %1021 = arith.divf %1020, %1019 : vector<1x1xf32>
    %1022 = vector.broadcast %1021 : vector<1x1xf32> to vector<8x1xf32>
    %1023 = arith.mulf %997, %1022 : vector<8x1xf32>
    %1024 = arith.addf %978, %1023 : vector<8x1xf32>
    %cst_225 = arith.constant 0xFF800000 : f32
    %1025 = vector.broadcast %cst_225 : f32 to vector<16x1xf32>
    %1026 = arith.select %990, %1025, %980 : vector<16x1xi1>, vector<16x1xf32>
    %cst_226 = arith.constant dense<0xFF800000> : vector<1xf32>
    %1027 = vector.multi_reduction <maximumf>, %1026, %cst_226 [0] : vector<16x1xf32> to vector<1xf32>
    %1028 = vector.shape_cast %1027 : vector<1xf32> to vector<1x1xf32>
    %1029 = vector.broadcast %1028 : vector<1x1xf32> to vector<16x1xf32>
    %1030 = arith.cmpf oeq, %1026, %1029 : vector<16x1xf32>
    %cst_227 = arith.constant 1.600000e+01 : f32
    %1031 = vector.broadcast %cst_227 : f32 to vector<16x1xf32>
    %1032 = arith.select %1030, %883, %1031 : vector<16x1xi1>, vector<16x1xf32>
    %cst_228 = arith.constant dense<0x7F800000> : vector<1xf32>
    %1033 = vector.multi_reduction <minimumf>, %1032, %cst_228 [0] : vector<16x1xf32> to vector<1xf32>
    %1034 = vector.shape_cast %1033 : vector<1xf32> to vector<1x1xf32>
    %1035 = vector.broadcast %1034 : vector<1x1xf32> to vector<16x1xf32>
    %1036 = arith.cmpf oeq, %883, %1035 : vector<16x1xf32>
    %1037 = vector.broadcast %1034 : vector<1x1xf32> to vector<1x16xf32>
    %1038 = arith.cmpf oeq, %885, %1037 : vector<1x16xf32>
    %1039 = tpu.iota {dimensions = array<i32: 0>} : vector<8x1xi32>
    %c3_i32_229 = arith.constant 3 : i32
    %1040 = vector.broadcast %c3_i32_229 : i32 to vector<8x1xi32>
    %1041 = arith.cmpi eq, %1039, %1040 : vector<8x1xi32>
    %1042 = arith.extui %1041 : vector<8x1xi1> to vector<8x1xi32>
    %1043 = arith.sitofp %1042 : vector<8x1xi32> to vector<8x1xf32>
    %1044 = tpu.iota {dimensions = array<i32: 1>} : vector<1x8xi32>
    %c3_i32_230 = arith.constant 3 : i32
    %1045 = vector.broadcast %c3_i32_230 : i32 to vector<1x8xi32>
    %1046 = arith.cmpi eq, %1044, %1045 : vector<1x8xi32>
    %1047 = arith.extui %1046 : vector<1x8xi1> to vector<1x8xi32>
    %1048 = arith.sitofp %1047 : vector<1x8xi32> to vector<1x8xf32>
    %1049 = arith.extui %1038 : vector<1x16xi1> to vector<1x16xi32>
    %1050 = arith.sitofp %1049 : vector<1x16xi32> to vector<1x16xf32>
    %1051 = vector.broadcast %1043 : vector<8x1xf32> to vector<8x16xf32>
    %1052 = vector.broadcast %1050 : vector<1x16xf32> to vector<8x16xf32>
    %1053 = arith.mulf %1051, %1052 : vector<8x16xf32>
    %1054 = arith.addf %1008, %1053 : vector<8x16xf32>
    %1055 = arith.extui %1036 : vector<16x1xi1> to vector<16x1xi32>
    %1056 = arith.sitofp %1055 : vector<16x1xi32> to vector<16x1xf32>
    %1057 = vector.broadcast %1056 : vector<16x1xf32> to vector<16x8xf32>
    %1058 = vector.broadcast %1048 : vector<1x8xf32> to vector<16x8xf32>
    %1059 = arith.mulf %1057, %1058 : vector<16x8xf32>
    %1060 = arith.addf %1014, %1059 : vector<16x8xf32>
    %cst_231 = arith.constant 0.000000e+00 : f32
    %1061 = vector.broadcast %cst_231 : f32 to vector<1x1xf32>
    %1062 = arith.subf %1061, %1028 : vector<1x1xf32>
    %1063 = math.exp %1062 : vector<1x1xf32>
    %cst_232 = arith.constant 1.000000e+00 : f32
    %1064 = vector.broadcast %cst_232 : f32 to vector<1x1xf32>
    %1065 = arith.addf %1064, %1063 : vector<1x1xf32>
    %cst_233 = arith.constant 1.000000e+00 : f32
    %1066 = vector.broadcast %cst_233 : f32 to vector<1x1xf32>
    %1067 = arith.divf %1066, %1065 : vector<1x1xf32>
    %1068 = vector.broadcast %1067 : vector<1x1xf32> to vector<8x1xf32>
    %1069 = arith.mulf %1043, %1068 : vector<8x1xf32>
    %1070 = arith.addf %1024, %1069 : vector<8x1xf32>
    %cst_234 = arith.constant 0xFF800000 : f32
    %1071 = vector.broadcast %cst_234 : f32 to vector<16x1xf32>
    %1072 = arith.select %1036, %1071, %1026 : vector<16x1xi1>, vector<16x1xf32>
    %cst_235 = arith.constant dense<0xFF800000> : vector<1xf32>
    %1073 = vector.multi_reduction <maximumf>, %1072, %cst_235 [0] : vector<16x1xf32> to vector<1xf32>
    %1074 = vector.shape_cast %1073 : vector<1xf32> to vector<1x1xf32>
    %1075 = vector.broadcast %1074 : vector<1x1xf32> to vector<16x1xf32>
    %1076 = arith.cmpf oeq, %1072, %1075 : vector<16x1xf32>
    %cst_236 = arith.constant 1.600000e+01 : f32
    %1077 = vector.broadcast %cst_236 : f32 to vector<16x1xf32>
    %1078 = arith.select %1076, %883, %1077 : vector<16x1xi1>, vector<16x1xf32>
    %cst_237 = arith.constant dense<0x7F800000> : vector<1xf32>
    %1079 = vector.multi_reduction <minimumf>, %1078, %cst_237 [0] : vector<16x1xf32> to vector<1xf32>
    %1080 = vector.shape_cast %1079 : vector<1xf32> to vector<1x1xf32>
    %1081 = vector.broadcast %1080 : vector<1x1xf32> to vector<16x1xf32>
    %1082 = arith.cmpf oeq, %883, %1081 : vector<16x1xf32>
    %1083 = vector.broadcast %1080 : vector<1x1xf32> to vector<1x16xf32>
    %1084 = arith.cmpf oeq, %885, %1083 : vector<1x16xf32>
    %1085 = tpu.iota {dimensions = array<i32: 0>} : vector<8x1xi32>
    %c4_i32_238 = arith.constant 4 : i32
    %1086 = vector.broadcast %c4_i32_238 : i32 to vector<8x1xi32>
    %1087 = arith.cmpi eq, %1085, %1086 : vector<8x1xi32>
    %1088 = arith.extui %1087 : vector<8x1xi1> to vector<8x1xi32>
    %1089 = arith.sitofp %1088 : vector<8x1xi32> to vector<8x1xf32>
    %1090 = tpu.iota {dimensions = array<i32: 1>} : vector<1x8xi32>
    %c4_i32_239 = arith.constant 4 : i32
    %1091 = vector.broadcast %c4_i32_239 : i32 to vector<1x8xi32>
    %1092 = arith.cmpi eq, %1090, %1091 : vector<1x8xi32>
    %1093 = arith.extui %1092 : vector<1x8xi1> to vector<1x8xi32>
    %1094 = arith.sitofp %1093 : vector<1x8xi32> to vector<1x8xf32>
    %1095 = arith.extui %1084 : vector<1x16xi1> to vector<1x16xi32>
    %1096 = arith.sitofp %1095 : vector<1x16xi32> to vector<1x16xf32>
    %1097 = vector.broadcast %1089 : vector<8x1xf32> to vector<8x16xf32>
    %1098 = vector.broadcast %1096 : vector<1x16xf32> to vector<8x16xf32>
    %1099 = arith.mulf %1097, %1098 : vector<8x16xf32>
    %1100 = arith.addf %1054, %1099 : vector<8x16xf32>
    %1101 = arith.extui %1082 : vector<16x1xi1> to vector<16x1xi32>
    %1102 = arith.sitofp %1101 : vector<16x1xi32> to vector<16x1xf32>
    %1103 = vector.broadcast %1102 : vector<16x1xf32> to vector<16x8xf32>
    %1104 = vector.broadcast %1094 : vector<1x8xf32> to vector<16x8xf32>
    %1105 = arith.mulf %1103, %1104 : vector<16x8xf32>
    %1106 = arith.addf %1060, %1105 : vector<16x8xf32>
    %cst_240 = arith.constant 0.000000e+00 : f32
    %1107 = vector.broadcast %cst_240 : f32 to vector<1x1xf32>
    %1108 = arith.subf %1107, %1074 : vector<1x1xf32>
    %1109 = math.exp %1108 : vector<1x1xf32>
    %cst_241 = arith.constant 1.000000e+00 : f32
    %1110 = vector.broadcast %cst_241 : f32 to vector<1x1xf32>
    %1111 = arith.addf %1110, %1109 : vector<1x1xf32>
    %cst_242 = arith.constant 1.000000e+00 : f32
    %1112 = vector.broadcast %cst_242 : f32 to vector<1x1xf32>
    %1113 = arith.divf %1112, %1111 : vector<1x1xf32>
    %1114 = vector.broadcast %1113 : vector<1x1xf32> to vector<8x1xf32>
    %1115 = arith.mulf %1089, %1114 : vector<8x1xf32>
    %1116 = arith.addf %1070, %1115 : vector<8x1xf32>
    %cst_243 = arith.constant 0xFF800000 : f32
    %1117 = vector.broadcast %cst_243 : f32 to vector<16x1xf32>
    %1118 = arith.select %1082, %1117, %1072 : vector<16x1xi1>, vector<16x1xf32>
    %cst_244 = arith.constant dense<0xFF800000> : vector<1xf32>
    %1119 = vector.multi_reduction <maximumf>, %1118, %cst_244 [0] : vector<16x1xf32> to vector<1xf32>
    %1120 = vector.shape_cast %1119 : vector<1xf32> to vector<1x1xf32>
    %1121 = vector.broadcast %1120 : vector<1x1xf32> to vector<16x1xf32>
    %1122 = arith.cmpf oeq, %1118, %1121 : vector<16x1xf32>
    %cst_245 = arith.constant 1.600000e+01 : f32
    %1123 = vector.broadcast %cst_245 : f32 to vector<16x1xf32>
    %1124 = arith.select %1122, %883, %1123 : vector<16x1xi1>, vector<16x1xf32>
    %cst_246 = arith.constant dense<0x7F800000> : vector<1xf32>
    %1125 = vector.multi_reduction <minimumf>, %1124, %cst_246 [0] : vector<16x1xf32> to vector<1xf32>
    %1126 = vector.shape_cast %1125 : vector<1xf32> to vector<1x1xf32>
    %1127 = vector.broadcast %1126 : vector<1x1xf32> to vector<16x1xf32>
    %1128 = arith.cmpf oeq, %883, %1127 : vector<16x1xf32>
    %1129 = vector.broadcast %1126 : vector<1x1xf32> to vector<1x16xf32>
    %1130 = arith.cmpf oeq, %885, %1129 : vector<1x16xf32>
    %1131 = tpu.iota {dimensions = array<i32: 0>} : vector<8x1xi32>
    %c5_i32_247 = arith.constant 5 : i32
    %1132 = vector.broadcast %c5_i32_247 : i32 to vector<8x1xi32>
    %1133 = arith.cmpi eq, %1131, %1132 : vector<8x1xi32>
    %1134 = arith.extui %1133 : vector<8x1xi1> to vector<8x1xi32>
    %1135 = arith.sitofp %1134 : vector<8x1xi32> to vector<8x1xf32>
    %1136 = tpu.iota {dimensions = array<i32: 1>} : vector<1x8xi32>
    %c5_i32_248 = arith.constant 5 : i32
    %1137 = vector.broadcast %c5_i32_248 : i32 to vector<1x8xi32>
    %1138 = arith.cmpi eq, %1136, %1137 : vector<1x8xi32>
    %1139 = arith.extui %1138 : vector<1x8xi1> to vector<1x8xi32>
    %1140 = arith.sitofp %1139 : vector<1x8xi32> to vector<1x8xf32>
    %1141 = arith.extui %1130 : vector<1x16xi1> to vector<1x16xi32>
    %1142 = arith.sitofp %1141 : vector<1x16xi32> to vector<1x16xf32>
    %1143 = vector.broadcast %1135 : vector<8x1xf32> to vector<8x16xf32>
    %1144 = vector.broadcast %1142 : vector<1x16xf32> to vector<8x16xf32>
    %1145 = arith.mulf %1143, %1144 : vector<8x16xf32>
    %1146 = arith.addf %1100, %1145 : vector<8x16xf32>
    %1147 = arith.extui %1128 : vector<16x1xi1> to vector<16x1xi32>
    %1148 = arith.sitofp %1147 : vector<16x1xi32> to vector<16x1xf32>
    %1149 = vector.broadcast %1148 : vector<16x1xf32> to vector<16x8xf32>
    %1150 = vector.broadcast %1140 : vector<1x8xf32> to vector<16x8xf32>
    %1151 = arith.mulf %1149, %1150 : vector<16x8xf32>
    %1152 = arith.addf %1106, %1151 : vector<16x8xf32>
    %cst_249 = arith.constant 0.000000e+00 : f32
    %1153 = vector.broadcast %cst_249 : f32 to vector<1x1xf32>
    %1154 = arith.subf %1153, %1120 : vector<1x1xf32>
    %1155 = math.exp %1154 : vector<1x1xf32>
    %cst_250 = arith.constant 1.000000e+00 : f32
    %1156 = vector.broadcast %cst_250 : f32 to vector<1x1xf32>
    %1157 = arith.addf %1156, %1155 : vector<1x1xf32>
    %cst_251 = arith.constant 1.000000e+00 : f32
    %1158 = vector.broadcast %cst_251 : f32 to vector<1x1xf32>
    %1159 = arith.divf %1158, %1157 : vector<1x1xf32>
    %1160 = vector.broadcast %1159 : vector<1x1xf32> to vector<8x1xf32>
    %1161 = arith.mulf %1135, %1160 : vector<8x1xf32>
    %1162 = arith.addf %1116, %1161 : vector<8x1xf32>
    %cst_252 = arith.constant 0xFF800000 : f32
    %1163 = vector.broadcast %cst_252 : f32 to vector<16x1xf32>
    %1164 = arith.select %1128, %1163, %1118 : vector<16x1xi1>, vector<16x1xf32>
    %cst_253 = arith.constant dense<0xFF800000> : vector<1xf32>
    %1165 = vector.multi_reduction <maximumf>, %1164, %cst_253 [0] : vector<16x1xf32> to vector<1xf32>
    %1166 = vector.shape_cast %1165 : vector<1xf32> to vector<1x1xf32>
    %1167 = vector.broadcast %1166 : vector<1x1xf32> to vector<16x1xf32>
    %1168 = arith.cmpf oeq, %1164, %1167 : vector<16x1xf32>
    %cst_254 = arith.constant 1.600000e+01 : f32
    %1169 = vector.broadcast %cst_254 : f32 to vector<16x1xf32>
    %1170 = arith.select %1168, %883, %1169 : vector<16x1xi1>, vector<16x1xf32>
    %cst_255 = arith.constant dense<0x7F800000> : vector<1xf32>
    %1171 = vector.multi_reduction <minimumf>, %1170, %cst_255 [0] : vector<16x1xf32> to vector<1xf32>
    %1172 = vector.shape_cast %1171 : vector<1xf32> to vector<1x1xf32>
    %1173 = vector.broadcast %1172 : vector<1x1xf32> to vector<16x1xf32>
    %1174 = arith.cmpf oeq, %883, %1173 : vector<16x1xf32>
    %1175 = vector.broadcast %1172 : vector<1x1xf32> to vector<1x16xf32>
    %1176 = arith.cmpf oeq, %885, %1175 : vector<1x16xf32>
    %1177 = tpu.iota {dimensions = array<i32: 0>} : vector<8x1xi32>
    %c6_i32_256 = arith.constant 6 : i32
    %1178 = vector.broadcast %c6_i32_256 : i32 to vector<8x1xi32>
    %1179 = arith.cmpi eq, %1177, %1178 : vector<8x1xi32>
    %1180 = arith.extui %1179 : vector<8x1xi1> to vector<8x1xi32>
    %1181 = arith.sitofp %1180 : vector<8x1xi32> to vector<8x1xf32>
    %1182 = tpu.iota {dimensions = array<i32: 1>} : vector<1x8xi32>
    %c6_i32_257 = arith.constant 6 : i32
    %1183 = vector.broadcast %c6_i32_257 : i32 to vector<1x8xi32>
    %1184 = arith.cmpi eq, %1182, %1183 : vector<1x8xi32>
    %1185 = arith.extui %1184 : vector<1x8xi1> to vector<1x8xi32>
    %1186 = arith.sitofp %1185 : vector<1x8xi32> to vector<1x8xf32>
    %1187 = arith.extui %1176 : vector<1x16xi1> to vector<1x16xi32>
    %1188 = arith.sitofp %1187 : vector<1x16xi32> to vector<1x16xf32>
    %1189 = vector.broadcast %1181 : vector<8x1xf32> to vector<8x16xf32>
    %1190 = vector.broadcast %1188 : vector<1x16xf32> to vector<8x16xf32>
    %1191 = arith.mulf %1189, %1190 : vector<8x16xf32>
    %1192 = arith.addf %1146, %1191 : vector<8x16xf32>
    %1193 = arith.extui %1174 : vector<16x1xi1> to vector<16x1xi32>
    %1194 = arith.sitofp %1193 : vector<16x1xi32> to vector<16x1xf32>
    %1195 = vector.broadcast %1194 : vector<16x1xf32> to vector<16x8xf32>
    %1196 = vector.broadcast %1186 : vector<1x8xf32> to vector<16x8xf32>
    %1197 = arith.mulf %1195, %1196 : vector<16x8xf32>
    %1198 = arith.addf %1152, %1197 : vector<16x8xf32>
    %cst_258 = arith.constant 0.000000e+00 : f32
    %1199 = vector.broadcast %cst_258 : f32 to vector<1x1xf32>
    %1200 = arith.subf %1199, %1166 : vector<1x1xf32>
    %1201 = math.exp %1200 : vector<1x1xf32>
    %cst_259 = arith.constant 1.000000e+00 : f32
    %1202 = vector.broadcast %cst_259 : f32 to vector<1x1xf32>
    %1203 = arith.addf %1202, %1201 : vector<1x1xf32>
    %cst_260 = arith.constant 1.000000e+00 : f32
    %1204 = vector.broadcast %cst_260 : f32 to vector<1x1xf32>
    %1205 = arith.divf %1204, %1203 : vector<1x1xf32>
    %1206 = vector.broadcast %1205 : vector<1x1xf32> to vector<8x1xf32>
    %1207 = arith.mulf %1181, %1206 : vector<8x1xf32>
    %1208 = arith.addf %1162, %1207 : vector<8x1xf32>
    %cst_261 = arith.constant 0xFF800000 : f32
    %1209 = vector.broadcast %cst_261 : f32 to vector<16x1xf32>
    %1210 = arith.select %1174, %1209, %1164 : vector<16x1xi1>, vector<16x1xf32>
    %cst_262 = arith.constant dense<0xFF800000> : vector<1xf32>
    %1211 = vector.multi_reduction <maximumf>, %1210, %cst_262 [0] : vector<16x1xf32> to vector<1xf32>
    %1212 = vector.shape_cast %1211 : vector<1xf32> to vector<1x1xf32>
    %1213 = vector.broadcast %1212 : vector<1x1xf32> to vector<16x1xf32>
    %1214 = arith.cmpf oeq, %1210, %1213 : vector<16x1xf32>
    %cst_263 = arith.constant 1.600000e+01 : f32
    %1215 = vector.broadcast %cst_263 : f32 to vector<16x1xf32>
    %1216 = arith.select %1214, %883, %1215 : vector<16x1xi1>, vector<16x1xf32>
    %cst_264 = arith.constant dense<0x7F800000> : vector<1xf32>
    %1217 = vector.multi_reduction <minimumf>, %1216, %cst_264 [0] : vector<16x1xf32> to vector<1xf32>
    %1218 = vector.shape_cast %1217 : vector<1xf32> to vector<1x1xf32>
    %1219 = vector.broadcast %1218 : vector<1x1xf32> to vector<16x1xf32>
    %1220 = arith.cmpf oeq, %883, %1219 : vector<16x1xf32>
    %1221 = vector.broadcast %1218 : vector<1x1xf32> to vector<1x16xf32>
    %1222 = arith.cmpf oeq, %885, %1221 : vector<1x16xf32>
    %1223 = tpu.iota {dimensions = array<i32: 0>} : vector<8x1xi32>
    %c7_i32_265 = arith.constant 7 : i32
    %1224 = vector.broadcast %c7_i32_265 : i32 to vector<8x1xi32>
    %1225 = arith.cmpi eq, %1223, %1224 : vector<8x1xi32>
    %1226 = arith.extui %1225 : vector<8x1xi1> to vector<8x1xi32>
    %1227 = arith.sitofp %1226 : vector<8x1xi32> to vector<8x1xf32>
    %1228 = tpu.iota {dimensions = array<i32: 1>} : vector<1x8xi32>
    %c7_i32_266 = arith.constant 7 : i32
    %1229 = vector.broadcast %c7_i32_266 : i32 to vector<1x8xi32>
    %1230 = arith.cmpi eq, %1228, %1229 : vector<1x8xi32>
    %1231 = arith.extui %1230 : vector<1x8xi1> to vector<1x8xi32>
    %1232 = arith.sitofp %1231 : vector<1x8xi32> to vector<1x8xf32>
    %1233 = arith.extui %1222 : vector<1x16xi1> to vector<1x16xi32>
    %1234 = arith.sitofp %1233 : vector<1x16xi32> to vector<1x16xf32>
    %1235 = vector.broadcast %1227 : vector<8x1xf32> to vector<8x16xf32>
    %1236 = vector.broadcast %1234 : vector<1x16xf32> to vector<8x16xf32>
    %1237 = arith.mulf %1235, %1236 : vector<8x16xf32>
    %1238 = arith.addf %1192, %1237 : vector<8x16xf32>
    %1239 = arith.extui %1220 : vector<16x1xi1> to vector<16x1xi32>
    %1240 = arith.sitofp %1239 : vector<16x1xi32> to vector<16x1xf32>
    %1241 = vector.broadcast %1240 : vector<16x1xf32> to vector<16x8xf32>
    %1242 = vector.broadcast %1232 : vector<1x8xf32> to vector<16x8xf32>
    %1243 = arith.mulf %1241, %1242 : vector<16x8xf32>
    %1244 = arith.addf %1198, %1243 : vector<16x8xf32>
    %cst_267 = arith.constant 0.000000e+00 : f32
    %1245 = vector.broadcast %cst_267 : f32 to vector<1x1xf32>
    %1246 = arith.subf %1245, %1212 : vector<1x1xf32>
    %1247 = math.exp %1246 : vector<1x1xf32>
    %cst_268 = arith.constant 1.000000e+00 : f32
    %1248 = vector.broadcast %cst_268 : f32 to vector<1x1xf32>
    %1249 = arith.addf %1248, %1247 : vector<1x1xf32>
    %cst_269 = arith.constant 1.000000e+00 : f32
    %1250 = vector.broadcast %cst_269 : f32 to vector<1x1xf32>
    %1251 = arith.divf %1250, %1249 : vector<1x1xf32>
    %1252 = vector.broadcast %1251 : vector<1x1xf32> to vector<8x1xf32>
    %1253 = arith.mulf %1227, %1252 : vector<8x1xf32>
    %1254 = arith.addf %1208, %1253 : vector<8x1xf32>
    %cst_270 = arith.constant dense<0.000000e+00> : vector<8x128xf32>
    %1255 = tpu.matmul %1238, %874, %cst_270 {dimension_numbers = #tpu.dot_dimension_numbers<[1], [0], [0], [1], [0, 0, 1, 1], [], []>} : vector<8x16xf32>, vector<16x128xf32>, vector<8x128xf32> -> vector<8x128xf32>
    %1256 = vector.broadcast %1254 : vector<8x1xf32> to vector<8x128xf32>
    %1257 = arith.mulf %1255, %1256 : vector<8x128xf32>
    %cst_271 = arith.constant 0.000000e+00 : f32
    %1258 = vector.broadcast %cst_271 : f32 to vector<16x16xf32>
    %1259 = arith.cmpf one, %825, %1258 : vector<16x16xf32>
    %1260 = arith.extui %1259 : vector<16x16xi1> to vector<16x16xi32>
    %1261 = arith.sitofp %1260 : vector<16x16xi32> to vector<16x16xf32>
    %cst_272 = arith.constant dense<0.000000e+00> : vector<16x16xf32>
    %1262 = tpu.matmul %1261, %1261, %cst_272 {dimension_numbers = #tpu.dot_dimension_numbers<[1], [0], [0], [1], [0, 0, 1, 1], [], []>} : vector<16x16xf32>, vector<16x16xf32>, vector<16x16xf32> -> vector<16x16xf32>
    %cst_273 = arith.constant 0.000000e+00 : f32
    %1263 = vector.broadcast %cst_273 : f32 to vector<16x16xf32>
    %1264 = arith.cmpf one, %1262, %1263 : vector<16x16xf32>
    %1265 = arith.extui %1264 : vector<16x16xi1> to vector<16x16xi32>
    %1266 = arith.sitofp %1265 : vector<16x16xi32> to vector<16x16xf32>
    %cst_274 = arith.constant dense<0.000000e+00> : vector<8x16xf32>
    %1267 = tpu.matmul %1238, %1266, %cst_274 {dimension_numbers = #tpu.dot_dimension_numbers<[1], [0], [0], [1], [0, 0, 1, 1], [], []>} : vector<8x16xf32>, vector<16x16xf32>, vector<8x16xf32> -> vector<8x16xf32>
    %cst_275 = arith.constant dense<0.000000e+00> : vector<8x8xf32>
    %1268 = tpu.matmul %1267, %1244, %cst_275 {dimension_numbers = #tpu.dot_dimension_numbers<[1], [0], [0], [1], [0, 0, 1, 1], [], []>} : vector<8x16xf32>, vector<16x8xf32>, vector<8x8xf32> -> vector<8x8xf32>
    %cst_276 = arith.constant dense<0.000000e+00> : vector<8xf32>
    %1269 = vector.multi_reduction <add>, %1268, %cst_276 [1] : vector<8x8xf32> to vector<8xf32>
    %1270 = vector.shape_cast %1269 : vector<8xf32> to vector<8x1xf32>
    %1271 = tpu.iota {dimensions = array<i32: 0>} : vector<8x8xi32>
    %1272 = tpu.iota {dimensions = array<i32: 1>} : vector<8x8xi32>
    %1273 = arith.cmpi eq, %1271, %1272 : vector<8x8xi32>
    %cst_277 = arith.constant 0.000000e+00 : f32
    %1274 = vector.shape_cast %1270 : vector<8x1xf32> to vector<8x1xf32>
    %1275 = vector.broadcast %1274 : vector<8x1xf32> to vector<8x8xf32>
    %1276 = vector.broadcast %cst_277 : f32 to vector<8x8xf32>
    %1277 = arith.select %1273, %1275, %1276 : vector<8x8xi1>, vector<8x8xf32>
    %cst_278 = arith.constant dense<0.000000e+00> : vector<8xf32>
    %1278 = vector.multi_reduction <add>, %1277, %cst_278 [0] : vector<8x8xf32> to vector<8xf32>
    %1279 = vector.shape_cast %1278 : vector<8xf32> to vector<1x8xf32>
    %1280 = vector.broadcast %1279 : vector<1x8xf32> to vector<8x8xf32>
    %1281 = arith.divf %1268, %1280 : vector<8x8xf32>
    %cst_279 = arith.constant dense<0.000000e+00> : vector<8xf32>
    %1282 = vector.multi_reduction <add>, %1281, %cst_279 [1] : vector<8x8xf32> to vector<8xf32>
    %1283 = vector.shape_cast %1282 : vector<8xf32> to vector<8x1xf32>
    %cst_280 = arith.constant 1.000000e+00 : f32
    %1284 = vector.broadcast %cst_280 : f32 to vector<8x1xf32>
    %1285 = arith.addf %1283, %1284 : vector<8x1xf32>
    %1286 = math.rsqrt %1285 : vector<8x1xf32>
    %c2 = arith.constant 2 : index
    %c0_281 = arith.constant 0 : index
    %c0_282 = arith.constant 0 : index
    %1287 = vector.load %arg4[%c2, %c0_281, %c0_282] : memref<7x1x128xf32, #tpu.memory_space<vmem>>, vector<1x1x128xf32>
    %1288 = vector.shape_cast %1287 : vector<1x1x128xf32> to vector<1x128xf32>
    %c2_283 = arith.constant 2 : index
    %c0_284 = arith.constant 0 : index
    %c0_285 = arith.constant 0 : index
    %1289 = vector.load %arg5[%c2_283, %c0_284, %c0_285] : memref<7x1x128xf32, #tpu.memory_space<vmem>>, vector<1x1x128xf32>
    %1290 = vector.shape_cast %1289 : vector<1x1x128xf32> to vector<1x128xf32>
    %cst_286 = arith.constant dense<0.000000e+00> : vector<128xf32>
    %1291 = vector.multi_reduction <add>, %1257, %cst_286 [0] : vector<8x128xf32> to vector<128xf32>
    %1292 = vector.shape_cast %1291 : vector<128xf32> to vector<1x128xf32>
    %cst_287 = arith.constant 8.000000e+00 : f32
    %1293 = vector.broadcast %cst_287 : f32 to vector<1x128xf32>
    %1294 = arith.divf %1292, %1293 : vector<1x128xf32>
    %1295 = vector.broadcast %1294 : vector<1x128xf32> to vector<8x128xf32>
    %1296 = arith.subf %1257, %1295 : vector<8x128xf32>
    %1297 = arith.mulf %1296, %1296 : vector<8x128xf32>
    %cst_288 = arith.constant dense<0.000000e+00> : vector<128xf32>
    %1298 = vector.multi_reduction <add>, %1297, %cst_288 [0] : vector<8x128xf32> to vector<128xf32>
    %1299 = vector.shape_cast %1298 : vector<128xf32> to vector<1x128xf32>
    %cst_289 = arith.constant 8.000000e+00 : f32
    %1300 = vector.broadcast %cst_289 : f32 to vector<1x128xf32>
    %1301 = arith.divf %1299, %1300 : vector<1x128xf32>
    %1302 = vector.broadcast %1294 : vector<1x128xf32> to vector<8x128xf32>
    %1303 = arith.subf %1257, %1302 : vector<8x128xf32>
    %cst_290 = arith.constant 9.99999974E-6 : f32
    %1304 = vector.broadcast %cst_290 : f32 to vector<1x128xf32>
    %1305 = arith.addf %1301, %1304 : vector<1x128xf32>
    %1306 = math.rsqrt %1305 : vector<1x128xf32>
    %1307 = vector.broadcast %1306 : vector<1x128xf32> to vector<8x128xf32>
    %1308 = arith.mulf %1303, %1307 : vector<8x128xf32>
    %1309 = vector.broadcast %1288 : vector<1x128xf32> to vector<8x128xf32>
    %1310 = arith.mulf %1308, %1309 : vector<8x128xf32>
    %1311 = vector.broadcast %1290 : vector<1x128xf32> to vector<8x128xf32>
    %1312 = arith.addf %1310, %1311 : vector<8x128xf32>
    %c2_291 = arith.constant 2 : index
    %c0_292 = arith.constant 0 : index
    %c0_293 = arith.constant 0 : index
    %1313 = vector.load %arg2[%c2_291, %c0_292, %c0_293] : memref<7x128x128xf32, #tpu.memory_space<vmem>>, vector<1x128x128xf32>
    %1314 = vector.shape_cast %1313 : vector<1x128x128xf32> to vector<128x128xf32>
    %cst_294 = arith.constant dense<0.000000e+00> : vector<8x128xf32>
    %1315 = tpu.matmul %1312, %1314, %cst_294 {dimension_numbers = #tpu.dot_dimension_numbers<[1], [0], [0], [1], [0, 0, 1, 1], [], []>} : vector<8x128xf32>, vector<128x128xf32>, vector<8x128xf32> -> vector<8x128xf32>
    %c2_295 = arith.constant 2 : index
    %c0_296 = arith.constant 0 : index
    %c0_297 = arith.constant 0 : index
    %1316 = vector.load %arg3[%c2_295, %c0_296, %c0_297] : memref<7x1x128xf32, #tpu.memory_space<vmem>>, vector<1x1x128xf32>
    %1317 = vector.shape_cast %1316 : vector<1x1x128xf32> to vector<1x128xf32>
    %1318 = vector.broadcast %1317 : vector<1x128xf32> to vector<8x128xf32>
    %1319 = arith.addf %1315, %1318 : vector<8x128xf32>
    %1320 = vector.broadcast %1286 : vector<8x1xf32> to vector<8x128xf32>
    %1321 = arith.mulf %1320, %1319 : vector<8x128xf32>
    %cst_298 = arith.constant dense<0.000000e+00> : vector<8x128xf32>
    %1322 = tpu.matmul %1281, %1321, %cst_298 {dimension_numbers = #tpu.dot_dimension_numbers<[1], [0], [0], [1], [0, 0, 1, 1], [], []>} : vector<8x8xf32>, vector<8x128xf32>, vector<8x128xf32> -> vector<8x128xf32>
    %1323 = arith.addf %1322, %1321 : vector<8x128xf32>
    %1324 = vector.broadcast %1286 : vector<8x1xf32> to vector<8x128xf32>
    %1325 = arith.mulf %1324, %1323 : vector<8x128xf32>
    %cst_299 = arith.constant 0.000000e+00 : f32
    %1326 = vector.broadcast %cst_299 : f32 to vector<8x128xf32>
    %1327 = arith.cmpf ogt, %1325, %1326 : vector<8x128xf32>
    %cst_300 = arith.constant 0.00999999977 : f32
    %1328 = vector.broadcast %cst_300 : f32 to vector<8x128xf32>
    %1329 = arith.mulf %1328, %1325 : vector<8x128xf32>
    %1330 = arith.select %1327, %1325, %1329 : vector<8x128xi1>, vector<8x128xf32>
    %cst_301 = arith.constant dense<0.000000e+00> : vector<16x128xf32>
    %1331 = tpu.matmul %1244, %1330, %cst_301 {dimension_numbers = #tpu.dot_dimension_numbers<[1], [0], [0], [1], [0, 0, 1, 1], [], []>} : vector<16x8xf32>, vector<8x128xf32>, vector<16x128xf32> -> vector<16x128xf32>
    %1332 = arith.subf %1331, %874 : vector<16x128xf32>
    %c5 = arith.constant 5 : index
    %c0_302 = arith.constant 0 : index
    %c0_303 = arith.constant 0 : index
    %1333 = vector.load %arg4[%c5, %c0_302, %c0_303] : memref<7x1x128xf32, #tpu.memory_space<vmem>>, vector<1x1x128xf32>
    %1334 = vector.shape_cast %1333 : vector<1x1x128xf32> to vector<1x128xf32>
    %c5_304 = arith.constant 5 : index
    %c0_305 = arith.constant 0 : index
    %c0_306 = arith.constant 0 : index
    %1335 = vector.load %arg5[%c5_304, %c0_305, %c0_306] : memref<7x1x128xf32, #tpu.memory_space<vmem>>, vector<1x1x128xf32>
    %1336 = vector.shape_cast %1335 : vector<1x1x128xf32> to vector<1x128xf32>
    %cst_307 = arith.constant dense<0.000000e+00> : vector<128xf32>
    %1337 = vector.multi_reduction <add>, %1332, %cst_307 [0] : vector<16x128xf32> to vector<128xf32>
    %1338 = vector.shape_cast %1337 : vector<128xf32> to vector<1x128xf32>
    %cst_308 = arith.constant 1.600000e+01 : f32
    %1339 = vector.broadcast %cst_308 : f32 to vector<1x128xf32>
    %1340 = arith.divf %1338, %1339 : vector<1x128xf32>
    %1341 = vector.broadcast %1340 : vector<1x128xf32> to vector<16x128xf32>
    %1342 = arith.subf %1332, %1341 : vector<16x128xf32>
    %1343 = arith.mulf %1342, %1342 : vector<16x128xf32>
    %cst_309 = arith.constant dense<0.000000e+00> : vector<128xf32>
    %1344 = vector.multi_reduction <add>, %1343, %cst_309 [0] : vector<16x128xf32> to vector<128xf32>
    %1345 = vector.shape_cast %1344 : vector<128xf32> to vector<1x128xf32>
    %cst_310 = arith.constant 1.600000e+01 : f32
    %1346 = vector.broadcast %cst_310 : f32 to vector<1x128xf32>
    %1347 = arith.divf %1345, %1346 : vector<1x128xf32>
    %1348 = vector.broadcast %1340 : vector<1x128xf32> to vector<16x128xf32>
    %1349 = arith.subf %1332, %1348 : vector<16x128xf32>
    %cst_311 = arith.constant 9.99999974E-6 : f32
    %1350 = vector.broadcast %cst_311 : f32 to vector<1x128xf32>
    %1351 = arith.addf %1347, %1350 : vector<1x128xf32>
    %1352 = math.rsqrt %1351 : vector<1x128xf32>
    %1353 = vector.broadcast %1352 : vector<1x128xf32> to vector<16x128xf32>
    %1354 = arith.mulf %1349, %1353 : vector<16x128xf32>
    %1355 = vector.broadcast %1334 : vector<1x128xf32> to vector<16x128xf32>
    %1356 = arith.mulf %1354, %1355 : vector<16x128xf32>
    %1357 = vector.broadcast %1336 : vector<1x128xf32> to vector<16x128xf32>
    %1358 = arith.addf %1356, %1357 : vector<16x128xf32>
    %c5_312 = arith.constant 5 : index
    %c0_313 = arith.constant 0 : index
    %c0_314 = arith.constant 0 : index
    %1359 = vector.load %arg2[%c5_312, %c0_313, %c0_314] : memref<7x128x128xf32, #tpu.memory_space<vmem>>, vector<1x128x128xf32>
    %1360 = vector.shape_cast %1359 : vector<1x128x128xf32> to vector<128x128xf32>
    %cst_315 = arith.constant dense<0.000000e+00> : vector<16x128xf32>
    %1361 = tpu.matmul %1358, %1360, %cst_315 {dimension_numbers = #tpu.dot_dimension_numbers<[1], [0], [0], [1], [0, 0, 1, 1], [], []>} : vector<16x128xf32>, vector<128x128xf32>, vector<16x128xf32> -> vector<16x128xf32>
    %c5_316 = arith.constant 5 : index
    %c0_317 = arith.constant 0 : index
    %c0_318 = arith.constant 0 : index
    %1362 = vector.load %arg3[%c5_316, %c0_317, %c0_318] : memref<7x1x128xf32, #tpu.memory_space<vmem>>, vector<1x1x128xf32>
    %1363 = vector.shape_cast %1362 : vector<1x1x128xf32> to vector<1x128xf32>
    %1364 = vector.broadcast %1363 : vector<1x128xf32> to vector<16x128xf32>
    %1365 = arith.addf %1361, %1364 : vector<16x128xf32>
    %cst_319 = arith.constant 0.000000e+00 : f32
    %1366 = vector.broadcast %cst_319 : f32 to vector<16x128xf32>
    %1367 = arith.cmpf ogt, %1365, %1366 : vector<16x128xf32>
    %cst_320 = arith.constant 0.00999999977 : f32
    %1368 = vector.broadcast %cst_320 : f32 to vector<16x128xf32>
    %1369 = arith.mulf %1368, %1365 : vector<16x128xf32>
    %1370 = arith.select %1367, %1365, %1369 : vector<16x128xi1>, vector<16x128xf32>
    %1371 = arith.mulf %1370, %1331 : vector<16x128xf32>
    %1372 = arith.addf %1371, %874 : vector<16x128xf32>
    %c3 = arith.constant 3 : index
    %c0_321 = arith.constant 0 : index
    %c0_322 = arith.constant 0 : index
    %1373 = vector.load %arg4[%c3, %c0_321, %c0_322] : memref<7x1x128xf32, #tpu.memory_space<vmem>>, vector<1x1x128xf32>
    %1374 = vector.shape_cast %1373 : vector<1x1x128xf32> to vector<1x128xf32>
    %c3_323 = arith.constant 3 : index
    %c0_324 = arith.constant 0 : index
    %c0_325 = arith.constant 0 : index
    %1375 = vector.load %arg5[%c3_323, %c0_324, %c0_325] : memref<7x1x128xf32, #tpu.memory_space<vmem>>, vector<1x1x128xf32>
    %1376 = vector.shape_cast %1375 : vector<1x1x128xf32> to vector<1x128xf32>
    %cst_326 = arith.constant dense<0.000000e+00> : vector<128xf32>
    %1377 = vector.multi_reduction <add>, %1372, %cst_326 [0] : vector<16x128xf32> to vector<128xf32>
    %1378 = vector.shape_cast %1377 : vector<128xf32> to vector<1x128xf32>
    %cst_327 = arith.constant 1.600000e+01 : f32
    %1379 = vector.broadcast %cst_327 : f32 to vector<1x128xf32>
    %1380 = arith.divf %1378, %1379 : vector<1x128xf32>
    %1381 = vector.broadcast %1380 : vector<1x128xf32> to vector<16x128xf32>
    %1382 = arith.subf %1372, %1381 : vector<16x128xf32>
    %1383 = arith.mulf %1382, %1382 : vector<16x128xf32>
    %cst_328 = arith.constant dense<0.000000e+00> : vector<128xf32>
    %1384 = vector.multi_reduction <add>, %1383, %cst_328 [0] : vector<16x128xf32> to vector<128xf32>
    %1385 = vector.shape_cast %1384 : vector<128xf32> to vector<1x128xf32>
    %cst_329 = arith.constant 1.600000e+01 : f32
    %1386 = vector.broadcast %cst_329 : f32 to vector<1x128xf32>
    %1387 = arith.divf %1385, %1386 : vector<1x128xf32>
    %1388 = vector.broadcast %1380 : vector<1x128xf32> to vector<16x128xf32>
    %1389 = arith.subf %1372, %1388 : vector<16x128xf32>
    %cst_330 = arith.constant 9.99999974E-6 : f32
    %1390 = vector.broadcast %cst_330 : f32 to vector<1x128xf32>
    %1391 = arith.addf %1387, %1390 : vector<1x128xf32>
    %1392 = math.rsqrt %1391 : vector<1x128xf32>
    %1393 = vector.broadcast %1392 : vector<1x128xf32> to vector<16x128xf32>
    %1394 = arith.mulf %1389, %1393 : vector<16x128xf32>
    %1395 = vector.broadcast %1374 : vector<1x128xf32> to vector<16x128xf32>
    %1396 = arith.mulf %1394, %1395 : vector<16x128xf32>
    %1397 = vector.broadcast %1376 : vector<1x128xf32> to vector<16x128xf32>
    %1398 = arith.addf %1396, %1397 : vector<16x128xf32>
    %c3_331 = arith.constant 3 : index
    %c0_332 = arith.constant 0 : index
    %c0_333 = arith.constant 0 : index
    %1399 = vector.load %arg2[%c3_331, %c0_332, %c0_333] : memref<7x128x128xf32, #tpu.memory_space<vmem>>, vector<1x128x128xf32>
    %1400 = vector.shape_cast %1399 : vector<1x128x128xf32> to vector<128x128xf32>
    %cst_334 = arith.constant dense<0.000000e+00> : vector<16x128xf32>
    %1401 = tpu.matmul %1398, %1400, %cst_334 {dimension_numbers = #tpu.dot_dimension_numbers<[1], [0], [0], [1], [0, 0, 1, 1], [], []>} : vector<16x128xf32>, vector<128x128xf32>, vector<16x128xf32> -> vector<16x128xf32>
    %c3_335 = arith.constant 3 : index
    %c0_336 = arith.constant 0 : index
    %c0_337 = arith.constant 0 : index
    %1402 = vector.load %arg3[%c3_335, %c0_336, %c0_337] : memref<7x1x128xf32, #tpu.memory_space<vmem>>, vector<1x1x128xf32>
    %1403 = vector.shape_cast %1402 : vector<1x1x128xf32> to vector<1x128xf32>
    %1404 = vector.broadcast %1403 : vector<1x128xf32> to vector<16x128xf32>
    %1405 = arith.addf %1401, %1404 : vector<16x128xf32>
    %1406 = vector.broadcast %830 : vector<16x1xf32> to vector<16x128xf32>
    %1407 = arith.mulf %1406, %1405 : vector<16x128xf32>
    %cst_338 = arith.constant dense<0.000000e+00> : vector<16x128xf32>
    %1408 = tpu.matmul %825, %1407, %cst_338 {dimension_numbers = #tpu.dot_dimension_numbers<[1], [0], [0], [1], [0, 0, 1, 1], [], []>} : vector<16x16xf32>, vector<16x128xf32>, vector<16x128xf32> -> vector<16x128xf32>
    %1409 = arith.addf %1408, %1407 : vector<16x128xf32>
    %1410 = vector.broadcast %830 : vector<16x1xf32> to vector<16x128xf32>
    %1411 = arith.mulf %1410, %1409 : vector<16x128xf32>
    %cst_339 = arith.constant 0.000000e+00 : f32
    %1412 = vector.broadcast %cst_339 : f32 to vector<16x128xf32>
    %1413 = arith.cmpf ogt, %1411, %1412 : vector<16x128xf32>
    %cst_340 = arith.constant 0.00999999977 : f32
    %1414 = vector.broadcast %cst_340 : f32 to vector<16x128xf32>
    %1415 = arith.mulf %1414, %1411 : vector<16x128xf32>
    %1416 = arith.select %1413, %1411, %1415 : vector<16x128xi1>, vector<16x128xf32>
    %cst_341 = arith.constant dense<0.000000e+00> : vector<32x128xf32>
    %1417 = tpu.matmul %788, %1416, %cst_341 {dimension_numbers = #tpu.dot_dimension_numbers<[1], [0], [0], [1], [0, 0, 1, 1], [], []>} : vector<32x16xf32>, vector<16x128xf32>, vector<32x128xf32> -> vector<32x128xf32>
    %1418 = arith.subf %1417, %50 : vector<32x128xf32>
    %c6 = arith.constant 6 : index
    %c0_342 = arith.constant 0 : index
    %c0_343 = arith.constant 0 : index
    %1419 = vector.load %arg4[%c6, %c0_342, %c0_343] : memref<7x1x128xf32, #tpu.memory_space<vmem>>, vector<1x1x128xf32>
    %1420 = vector.shape_cast %1419 : vector<1x1x128xf32> to vector<1x128xf32>
    %c6_344 = arith.constant 6 : index
    %c0_345 = arith.constant 0 : index
    %c0_346 = arith.constant 0 : index
    %1421 = vector.load %arg5[%c6_344, %c0_345, %c0_346] : memref<7x1x128xf32, #tpu.memory_space<vmem>>, vector<1x1x128xf32>
    %1422 = vector.shape_cast %1421 : vector<1x1x128xf32> to vector<1x128xf32>
    %cst_347 = arith.constant dense<0.000000e+00> : vector<128xf32>
    %1423 = vector.multi_reduction <add>, %1418, %cst_347 [0] : vector<32x128xf32> to vector<128xf32>
    %1424 = vector.shape_cast %1423 : vector<128xf32> to vector<1x128xf32>
    %cst_348 = arith.constant 3.200000e+01 : f32
    %1425 = vector.broadcast %cst_348 : f32 to vector<1x128xf32>
    %1426 = arith.divf %1424, %1425 : vector<1x128xf32>
    %1427 = vector.broadcast %1426 : vector<1x128xf32> to vector<32x128xf32>
    %1428 = arith.subf %1418, %1427 : vector<32x128xf32>
    %1429 = arith.mulf %1428, %1428 : vector<32x128xf32>
    %cst_349 = arith.constant dense<0.000000e+00> : vector<128xf32>
    %1430 = vector.multi_reduction <add>, %1429, %cst_349 [0] : vector<32x128xf32> to vector<128xf32>
    %1431 = vector.shape_cast %1430 : vector<128xf32> to vector<1x128xf32>
    %cst_350 = arith.constant 3.200000e+01 : f32
    %1432 = vector.broadcast %cst_350 : f32 to vector<1x128xf32>
    %1433 = arith.divf %1431, %1432 : vector<1x128xf32>
    %1434 = vector.broadcast %1426 : vector<1x128xf32> to vector<32x128xf32>
    %1435 = arith.subf %1418, %1434 : vector<32x128xf32>
    %cst_351 = arith.constant 9.99999974E-6 : f32
    %1436 = vector.broadcast %cst_351 : f32 to vector<1x128xf32>
    %1437 = arith.addf %1433, %1436 : vector<1x128xf32>
    %1438 = math.rsqrt %1437 : vector<1x128xf32>
    %1439 = vector.broadcast %1438 : vector<1x128xf32> to vector<32x128xf32>
    %1440 = arith.mulf %1435, %1439 : vector<32x128xf32>
    %1441 = vector.broadcast %1420 : vector<1x128xf32> to vector<32x128xf32>
    %1442 = arith.mulf %1440, %1441 : vector<32x128xf32>
    %1443 = vector.broadcast %1422 : vector<1x128xf32> to vector<32x128xf32>
    %1444 = arith.addf %1442, %1443 : vector<32x128xf32>
    %c6_352 = arith.constant 6 : index
    %c0_353 = arith.constant 0 : index
    %c0_354 = arith.constant 0 : index
    %1445 = vector.load %arg2[%c6_352, %c0_353, %c0_354] : memref<7x128x128xf32, #tpu.memory_space<vmem>>, vector<1x128x128xf32>
    %1446 = vector.shape_cast %1445 : vector<1x128x128xf32> to vector<128x128xf32>
    %cst_355 = arith.constant dense<0.000000e+00> : vector<32x128xf32>
    %1447 = tpu.matmul %1444, %1446, %cst_355 {dimension_numbers = #tpu.dot_dimension_numbers<[1], [0], [0], [1], [0, 0, 1, 1], [], []>} : vector<32x128xf32>, vector<128x128xf32>, vector<32x128xf32> -> vector<32x128xf32>
    %c6_356 = arith.constant 6 : index
    %c0_357 = arith.constant 0 : index
    %c0_358 = arith.constant 0 : index
    %1448 = vector.load %arg3[%c6_356, %c0_357, %c0_358] : memref<7x1x128xf32, #tpu.memory_space<vmem>>, vector<1x1x128xf32>
    %1449 = vector.shape_cast %1448 : vector<1x1x128xf32> to vector<1x128xf32>
    %1450 = vector.broadcast %1449 : vector<1x128xf32> to vector<32x128xf32>
    %1451 = arith.addf %1447, %1450 : vector<32x128xf32>
    %cst_359 = arith.constant 0.000000e+00 : f32
    %1452 = vector.broadcast %cst_359 : f32 to vector<32x128xf32>
    %1453 = arith.cmpf ogt, %1451, %1452 : vector<32x128xf32>
    %cst_360 = arith.constant 0.00999999977 : f32
    %1454 = vector.broadcast %cst_360 : f32 to vector<32x128xf32>
    %1455 = arith.mulf %1454, %1451 : vector<32x128xf32>
    %1456 = arith.select %1453, %1451, %1455 : vector<32x128xi1>, vector<32x128xf32>
    %1457 = arith.mulf %1456, %1417 : vector<32x128xf32>
    %1458 = arith.addf %1457, %50 : vector<32x128xf32>
    %c4 = arith.constant 4 : index
    %c0_361 = arith.constant 0 : index
    %c0_362 = arith.constant 0 : index
    %1459 = vector.load %arg4[%c4, %c0_361, %c0_362] : memref<7x1x128xf32, #tpu.memory_space<vmem>>, vector<1x1x128xf32>
    %1460 = vector.shape_cast %1459 : vector<1x1x128xf32> to vector<1x128xf32>
    %c4_363 = arith.constant 4 : index
    %c0_364 = arith.constant 0 : index
    %c0_365 = arith.constant 0 : index
    %1461 = vector.load %arg5[%c4_363, %c0_364, %c0_365] : memref<7x1x128xf32, #tpu.memory_space<vmem>>, vector<1x1x128xf32>
    %1462 = vector.shape_cast %1461 : vector<1x1x128xf32> to vector<1x128xf32>
    %cst_366 = arith.constant dense<0.000000e+00> : vector<128xf32>
    %1463 = vector.multi_reduction <add>, %1458, %cst_366 [0] : vector<32x128xf32> to vector<128xf32>
    %1464 = vector.shape_cast %1463 : vector<128xf32> to vector<1x128xf32>
    %cst_367 = arith.constant 3.200000e+01 : f32
    %1465 = vector.broadcast %cst_367 : f32 to vector<1x128xf32>
    %1466 = arith.divf %1464, %1465 : vector<1x128xf32>
    %1467 = vector.broadcast %1466 : vector<1x128xf32> to vector<32x128xf32>
    %1468 = arith.subf %1458, %1467 : vector<32x128xf32>
    %1469 = arith.mulf %1468, %1468 : vector<32x128xf32>
    %cst_368 = arith.constant dense<0.000000e+00> : vector<128xf32>
    %1470 = vector.multi_reduction <add>, %1469, %cst_368 [0] : vector<32x128xf32> to vector<128xf32>
    %1471 = vector.shape_cast %1470 : vector<128xf32> to vector<1x128xf32>
    %cst_369 = arith.constant 3.200000e+01 : f32
    %1472 = vector.broadcast %cst_369 : f32 to vector<1x128xf32>
    %1473 = arith.divf %1471, %1472 : vector<1x128xf32>
    %1474 = vector.broadcast %1466 : vector<1x128xf32> to vector<32x128xf32>
    %1475 = arith.subf %1458, %1474 : vector<32x128xf32>
    %cst_370 = arith.constant 9.99999974E-6 : f32
    %1476 = vector.broadcast %cst_370 : f32 to vector<1x128xf32>
    %1477 = arith.addf %1473, %1476 : vector<1x128xf32>
    %1478 = math.rsqrt %1477 : vector<1x128xf32>
    %1479 = vector.broadcast %1478 : vector<1x128xf32> to vector<32x128xf32>
    %1480 = arith.mulf %1475, %1479 : vector<32x128xf32>
    %1481 = vector.broadcast %1460 : vector<1x128xf32> to vector<32x128xf32>
    %1482 = arith.mulf %1480, %1481 : vector<32x128xf32>
    %1483 = vector.broadcast %1462 : vector<1x128xf32> to vector<32x128xf32>
    %1484 = arith.addf %1482, %1483 : vector<32x128xf32>
    %c4_371 = arith.constant 4 : index
    %c0_372 = arith.constant 0 : index
    %c0_373 = arith.constant 0 : index
    %1485 = vector.load %arg2[%c4_371, %c0_372, %c0_373] : memref<7x128x128xf32, #tpu.memory_space<vmem>>, vector<1x128x128xf32>
    %1486 = vector.shape_cast %1485 : vector<1x128x128xf32> to vector<128x128xf32>
    %cst_374 = arith.constant dense<0.000000e+00> : vector<32x128xf32>
    %1487 = tpu.matmul %1484, %1486, %cst_374 {dimension_numbers = #tpu.dot_dimension_numbers<[1], [0], [0], [1], [0, 0, 1, 1], [], []>} : vector<32x128xf32>, vector<128x128xf32>, vector<32x128xf32> -> vector<32x128xf32>
    %c4_375 = arith.constant 4 : index
    %c0_376 = arith.constant 0 : index
    %c0_377 = arith.constant 0 : index
    %1488 = vector.load %arg3[%c4_375, %c0_376, %c0_377] : memref<7x1x128xf32, #tpu.memory_space<vmem>>, vector<1x1x128xf32>
    %1489 = vector.shape_cast %1488 : vector<1x1x128xf32> to vector<1x128xf32>
    %1490 = vector.broadcast %1489 : vector<1x128xf32> to vector<32x128xf32>
    %1491 = arith.addf %1487, %1490 : vector<32x128xf32>
    %1492 = vector.broadcast %6 : vector<32x1xf32> to vector<32x128xf32>
    %1493 = arith.mulf %1492, %1491 : vector<32x128xf32>
    %cst_378 = arith.constant dense<0.000000e+00> : vector<32x128xf32>
    %1494 = tpu.matmul %0, %1493, %cst_378 {dimension_numbers = #tpu.dot_dimension_numbers<[1], [0], [0], [1], [0, 0, 1, 1], [], []>} : vector<32x32xf32>, vector<32x128xf32>, vector<32x128xf32> -> vector<32x128xf32>
    %1495 = arith.addf %1494, %1493 : vector<32x128xf32>
    %1496 = vector.broadcast %6 : vector<32x1xf32> to vector<32x128xf32>
    %1497 = arith.mulf %1496, %1495 : vector<32x128xf32>
    %cst_379 = arith.constant 0.000000e+00 : f32
    %1498 = vector.broadcast %cst_379 : f32 to vector<32x128xf32>
    %1499 = arith.cmpf ogt, %1497, %1498 : vector<32x128xf32>
    %cst_380 = arith.constant 0.00999999977 : f32
    %1500 = vector.broadcast %cst_380 : f32 to vector<32x128xf32>
    %1501 = arith.mulf %1500, %1497 : vector<32x128xf32>
    %1502 = arith.select %1499, %1497, %1501 : vector<32x128xi1>, vector<32x128xf32>
    %1503 = arith.addf %1502, %1 : vector<32x128xf32>
    %c0_381 = arith.constant 0 : index
    %c0_382 = arith.constant 0 : index
    %1504 = vector.load %arg8[%c0_381, %c0_382] : memref<32x128xf32, #tpu.memory_space<vmem>>, vector<32x128xf32>
    tpu.vector_store %arg8[%c0_381, %c0_382], %1503 {strides = array<i32>} : memref<32x128xf32, #tpu.memory_space<vmem>>, vector<32x128xf32>,
    return
  }
}

</mosaic_0001>

<llo_original>
// kernel: tpu_custom_call.1
$region0: #{tpu_custom_call.1}
  #allocation0 [shape = 'u32[]', space=smem, size = 0x4, offset = 0x4, fixed_abs, tag = 'smem constant byte address 0x4 - core index']
  #allocation1 [shape = 'u32[72,128]{1,0:T(1,128)}', space=vmem, size = 0x9000, scoped, tag = 'internal scratch']
  %s0 = inlined_call_operand.hbm [shape: f32[32,32], index: 0, kind: input, shape index: {}]
  %s1 = inlined_call_operand.hbm [shape: f32[32,128], index: 1, kind: input, shape index: {}]
  %s2 = inlined_call_operand.hbm [shape: f32[7,128,128], index: 2, kind: input, shape index: {}]
  %s3 = inlined_call_operand.hbm [shape: f32[7,1,128], index: 3, kind: input, shape index: {}]
  %s4 = inlined_call_operand.hbm [shape: f32[7,1,128], index: 4, kind: input, shape index: {}]
  %s5 = inlined_call_operand.hbm [shape: f32[7,1,128], index: 5, kind: input, shape index: {}]
  %s6 = inlined_call_operand.hbm [shape: f32[2,128,128], index: 6, kind: input, shape index: {}]
  %s7 = inlined_call_operand.vmem [shape: f32[2], index: 7, kind: input, shape index: {}]
  %s8 = inlined_call_operand.hbm [shape: f32[32,128], index: 8, kind: output, shape index: {}]
  %s9 = sld [smem:[#allocation0]]
  $region74: #{tpu_custom_call.1} parent=0
    _
  %s11 = ssub.s32 1, %s9
  %s12 = scalar_select 0, %s11, %s9
  $region1: #{tpu_custom_call.1} parent=0
    #allocation2 [shape = 'u8[16384]{0}', space=vmem, size = 0x4000, scoped, tag = 'input window, operand 0, single buffered']
    #allocation3 [shape = 's32[1]{0}', space=sflag, size = 0x4, scoped, tag = 'scoped memory for tpu_custom_call.1']
    #allocation4 [shape = 's32[1]{0}', space=sflag, size = 0x4, scoped, tag = 'scoped memory for tpu_custom_call.1']
    #allocation5 [shape = 's32[1]{0}', space=sflag, size = 0x4, scoped, tag = 'scoped memory for tpu_custom_call.1']
    #allocation6 [shape = 'u8[16384]{0}', space=vmem, size = 0x4000, scoped, tag = 'input window, operand 1, single buffered']
    #allocation7 [shape = 's32[1]{0}', space=sflag, size = 0x4, scoped, tag = 'scoped memory for tpu_custom_call.1']
    #allocation8 [shape = 'u8[458752]{0}', space=vmem, size = 0x70000, scoped, tag = 'input window, operand 2, single buffered']
    #allocation9 [shape = 'u8[3584]{0}', space=vmem, size = 0x1000, scoped, tag = 'input window, operand 3, single buffered']
    #allocation10 [shape = 's32[1]{0}', space=sflag, size = 0x4, scoped, tag = 'scoped memory for tpu_custom_call.1']
    #allocation11 [shape = 'u8[3584]{0}', space=vmem, size = 0x1000, scoped, tag = 'input window, operand 4, single buffered']
    #allocation12 [shape = 'u8[3584]{0}', space=vmem, size = 0x1000, scoped, tag = 'input window, operand 5, single buffered']
    #allocation13 [shape = 's32[1]{0}', space=sflag, size = 0x4, scoped, tag = 'scoped memory for tpu_custom_call.1']
    #allocation14 [shape = 'u8[131072]{0}', space=vmem, size = 0x20000, scoped, tag = 'input window, operand 6, single buffered']
    #allocation15 [shape = 'u8[512]{0}', space=smem, size = 0x200, scoped, tag = 'input window, operand 7, single buffered']
    #allocation16 [shape = 'u8[16384]{0}', space=vmem, size = 0x4000, scoped, tag = 'output window, operand 0, single buffered']
    %13 = vsyncpa [#allocation3], 0
    %14 = vsyncpa [#allocation7], 0
    %15 = vsyncpa [#allocation10], 0
    %16 = vsyncpa [#allocation13], 0
    %17 = vsyncpa [#allocation5], 0
    %18 = vsyncpa [#allocation4], 0
    // Predicated region
    $region2: #{tpu_custom_call.1} parent=1 // pred_check
      _
    $region3: #{tpu_custom_call.1} parent=1 // pred_check_branch
      %20 = sbr.rel (0) target = $region5
    $region4: #{tpu_custom_call.1} parent=1 // pred_region
      %22 = vsyncadd [#allocation3], 0
      %s23 = sshll.u32 %s0, 4
      %s24 = int_to_ptr.hbm [resolvable:$true] %s23
      %s25 = sshll.u32 [#allocation2], 4
      %s26 = int_to_ptr.vmem [resolvable:$true] %s25
      %31 = dma.hbm_to_vmem [thread:$0]  %s24, 512, %s26, [#allocation3], 128, 128, 8
    $region5: #{tpu_custom_call.1} parent=1 // pred_fallthru
      _
    // Predicated region
    $region6: #{tpu_custom_call.1} parent=1 // pred_check
      _
    $region7: #{tpu_custom_call.1} parent=1 // pred_check_branch
      %33 = sbr.rel (0) target = $region9
    $region8: #{tpu_custom_call.1} parent=1 // pred_region
      %35 = vsyncadd [#allocation7], 0
      %s36 = sshll.u32 %s1, 4
      %s37 = int_to_ptr.hbm [resolvable:$true] %s36
      %s38 = sshll.u32 [#allocation6], 4
      %s39 = int_to_ptr.vmem [resolvable:$true] %s38
      %44 = dma.hbm_to_vmem [thread:$0]  %s37, 512, %s39, [#allocation7], 128, 128, 8
    $region9: #{tpu_custom_call.1} parent=1 // pred_fallthru
      _
    // Predicated region
    $region10: #{tpu_custom_call.1} parent=1 // pred_check
      _
    $region11: #{tpu_custom_call.1} parent=1 // pred_check_branch
      %46 = sbr.rel (0) target = $region13
    $region12: #{tpu_custom_call.1} parent=1 // pred_region
      %48 = vsyncadd [#allocation7], 0
      %s49 = sshll.u32 %s2, 4
      %s50 = int_to_ptr.hbm [resolvable:$true] %s49
      %s51 = sshll.u32 [#allocation8], 4
      %s52 = int_to_ptr.vmem [resolvable:$true] %s51
      %57 = dma.hbm_to_vmem [thread:$0]  %s50, 14336, %s52, [#allocation7], 128, 128, 8
    $region13: #{tpu_custom_call.1} parent=1 // pred_fallthru
      _
    // Predicated region
    $region14: #{tpu_custom_call.1} parent=1 // pred_check
      _
    $region15: #{tpu_custom_call.1} parent=1 // pred_check_branch
      %59 = sbr.rel (0) target = $region17
    $region16: #{tpu_custom_call.1} parent=1 // pred_region
      %61 = vsyncadd [#allocation10], 0
      %s62 = sshll.u32 %s3, 4
      %s63 = int_to_ptr.hbm [resolvable:$true] %s62
      %s64 = sshll.u32 [#allocation9], 4
      %s65 = int_to_ptr.vmem [resolvable:$true] %s64
      %70 = dma.hbm_to_vmem [thread:$0]  %s63, 112, %s65, [#allocation10], 16, 16, 1
    $region17: #{tpu_custom_call.1} parent=1 // pred_fallthru
      _
    // Predicated region
    $region18: #{tpu_custom_call.1} parent=1 // pred_check
      _
    $region19: #{tpu_custom_call.1} parent=1 // pred_check_branch
      %72 = sbr.rel (0) target = $region21
    $region20: #{tpu_custom_call.1} parent=1 // pred_region
      %74 = vsyncadd [#allocation10], 0
      %s75 = sshll.u32 %s4, 4
      %s76 = int_to_ptr.hbm [resolvable:$true] %s75
      %s77 = sshll.u32 [#allocation11], 4
      %s78 = int_to_ptr.vmem [resolvable:$true] %s77
      %83 = dma.hbm_to_vmem [thread:$0]  %s76, 112, %s78, [#allocation10], 16, 16, 1
    $region21: #{tpu_custom_call.1} parent=1 // pred_fallthru
      _
    // Predicated region
    $region22: #{tpu_custom_call.1} parent=1 // pred_check
      _
    $region23: #{tpu_custom_call.1} parent=1 // pred_check_branch
      %85 = sbr.rel (0) target = $region25
    $region24: #{tpu_custom_call.1} parent=1 // pred_region
      %87 = vsyncadd [#allocation13], 0
      %s88 = sshll.u32 %s5, 4
      %s89 = int_to_ptr.hbm [resolvable:$true] %s88
      %s90 = sshll.u32 [#allocation12], 4
      %s91 = int_to_ptr.vmem [resolvable:$true] %s90
      %96 = dma.hbm_to_vmem [thread:$0]  %s89, 112, %s91, [#allocation13], 16, 16, 1
    $region25: #{tpu_custom_call.1} parent=1 // pred_fallthru
      _
    // Predicated region
    $region26: #{tpu_custom_call.1} parent=1 // pred_check
      _
    $region27: #{tpu_custom_call.1} parent=1 // pred_check_branch
      %98 = sbr.rel (0) target = $region29
    $region28: #{tpu_custom_call.1} parent=1 // pred_region
      %100 = vsyncadd [#allocation13], 0
      %s101 = sshll.u32 %s6, 4
      %s102 = int_to_ptr.hbm [resolvable:$true] %s101
      %s103 = sshll.u32 [#allocation14], 4
      %s104 = int_to_ptr.vmem [resolvable:$true] %s103
      %109 = dma.hbm_to_vmem [thread:$0]  %s102, 4096, %s104, [#allocation13], 128, 128, 8
    $region29: #{tpu_custom_call.1} parent=1 // pred_fallthru
      _
    // Predicated region
    $region30: #{tpu_custom_call.1} parent=1 // pred_check
      _
    $region31: #{tpu_custom_call.1} parent=1 // pred_check_branch
      %111 = sbr.rel (0) target = $region33
    $region32: #{tpu_custom_call.1} parent=1 // pred_region
      %113 = vsyncadd [#allocation5], 0
      %s115 = sshll.u32 %s7, 4
      %s116 = int_to_ptr.vmem [resolvable:$true] %s115
      %118 = dma.vmem_to_smem %s116, 16, [#allocation15], [#allocation5]
    $region33: #{tpu_custom_call.1} parent=1 // pred_fallthru
      _
    // Predicated region
    $region34: #{tpu_custom_call.1} parent=1 // pred_check
      _
    $region35: #{tpu_custom_call.1} parent=1 // pred_check_branch
      %120 = sbr.rel (0) target = $region37
    $region36: #{tpu_custom_call.1} parent=1 // pred_region
      %122 = dma.done [#allocation3], 512
    $region37: #{tpu_custom_call.1} parent=1 // pred_fallthru
      _
    // Predicated region
    $region38: #{tpu_custom_call.1} parent=1 // pred_check
      _
    $region39: #{tpu_custom_call.1} parent=1 // pred_check_branch
      %124 = sbr.rel (0) target = $region41
    $region40: #{tpu_custom_call.1} parent=1 // pred_region
      %126 = dma.done [#allocation7], 512
    $region41: #{tpu_custom_call.1} parent=1 // pred_fallthru
      _
    // Predicated region
    $region42: #{tpu_custom_call.1} parent=1 // pred_check
      _
    $region43: #{tpu_custom_call.1} parent=1 // pred_check_branch
      %128 = sbr.rel (0) target = $region45
    $region44: #{tpu_custom_call.1} parent=1 // pred_region
      %130 = dma.done [#allocation7], 14336
    $region45: #{tpu_custom_call.1} parent=1 // pred_fallthru
      _
    // Predicated region
    $region46: #{tpu_custom_call.1} parent=1 // pred_check
      _
    $region47: #{tpu_custom_call.1} parent=1 // pred_check_branch
      %132 = sbr.rel (0) target = $region49
    $region48: #{tpu_custom_call.1} parent=1 // pred_region
      %134 = dma.done [#allocation10], 112
    $region49: #{tpu_custom_call.1} parent=1 // pred_fallthru
      _
    // Predicated region
    $region50: #{tpu_custom_call.1} parent=1 // pred_check
      _
    $region51: #{tpu_custom_call.1} parent=1 // pred_check_branch
      %136 = sbr.rel (0) target = $region53
    $region52: #{tpu_custom_call.1} parent=1 // pred_region
      %138 = dma.done [#allocation10], 112
    $region53: #{tpu_custom_call.1} parent=1 // pred_fallthru
      _
    // Predicated region
    $region54: #{tpu_custom_call.1} parent=1 // pred_check
      _
    $region55: #{tpu_custom_call.1} parent=1 // pred_check_branch
      %140 = sbr.rel (0) target = $region57
    $region56: #{tpu_custom_call.1} parent=1 // pred_region
      %142 = dma.done [#allocation13], 112
    $region57: #{tpu_custom_call.1} parent=1 // pred_fallthru
      _
    // Predicated region
    $region58: #{tpu_custom_call.1} parent=1 // pred_check
      _
    $region59: #{tpu_custom_call.1} parent=1 // pred_check_branch
      %144 = sbr.rel (0) target = $region61
    $region60: #{tpu_custom_call.1} parent=1 // pred_region
      %146 = dma.done [#allocation13], 4096
    $region61: #{tpu_custom_call.1} parent=1 // pred_fallthru
      _
    // Predicated region
    $region62: #{tpu_custom_call.1} parent=1 // pred_check
      _
    $region63: #{tpu_custom_call.1} parent=1 // pred_check_branch
      %148 = sbr.rel (0) target = $region65
    $region64: #{tpu_custom_call.1} parent=1 // pred_region
      %150 = dma.done [#allocation5], 16
    $region65: #{tpu_custom_call.1} parent=1 // pred_fallthru
      _
    %151 = sfence
    %v152 = vld [vmem:[#allocation2] sm:$0xff]
    %v153 = vld [vmem:[#allocation2 + $0x8] sm:$0xff]
    %v154 = vld [vmem:[#allocation2 + $0x10] sm:$0xff]
    %v155 = vld [vmem:[#allocation2 + $0x18] sm:$0xff]
    %v156 = vld [vmem:[#allocation6] sm:$0xff]
    %v157 = vld [vmem:[#allocation6 + $0x8] sm:$0xff]
    %v158 = vld [vmem:[#allocation6 + $0x10] sm:$0xff]
    %v159 = vld [vmem:[#allocation6 + $0x18] sm:$0xff]
    %vm160 = vcmask 261120
    %v161 = vsel %vm160, %v152, 0.0
    %162 = vadd.xlane.f32.xlu0 %v161
    %v163 = vpop.xlane.xlu0 %162
    %v164 = vsel %vm160, %v153, 0.0
    %165 = vadd.xlane.f32.xlu0 %v164
    %v166 = vpop.xlane.xlu0 %165
    %v167 = vsel %vm160, %v154, 0.0
    %168 = vadd.xlane.f32.xlu0 %v167
    %v169 = vpop.xlane.xlu0 %168
    %v170 = vsel %vm160, %v155, 0.0
    %171 = vadd.xlane.f32.xlu0 %v170
    %v172 = vpop.xlane.xlu0 %171
    %v173 = vadd.f32 %v163, 1.0
    %v174 = vadd.f32 %v166, 1.0
    %v175 = vadd.f32 %v169, 1.0
    %v176 = vadd.f32 %v172, 1.0
    %v177 = vrsqrt.pop %v173
    %v178 = vmul.f32 %v177, %v173
    %v179 = vmul.f32 %v178, %v177
    %v180 = vmul.f32 0.5, %v179
    %v181 = vsub.f32 1.5, %v180
    %v182 = vmul.f32 %v177, %v181
    %vm183 = vweird.f32 %v173
    %vm184 = vweird.f32 %v177
    %vm185 = vmor %vm183, %vm184
    %v186 = vsel %vm185, %v177, %v182
    %v187 = vrsqrt.pop %v174
    %v188 = vmul.f32 %v187, %v174
    %v189 = vmul.f32 %v188, %v187
    %v190 = vmul.f32 0.5, %v189
    %v191 = vsub.f32 1.5, %v190
    %v192 = vmul.f32 %v187, %v191
    %vm193 = vweird.f32 %v174
    %vm194 = vweird.f32 %v187
    %vm195 = vmor %vm193, %vm194
    %v196 = vsel %vm195, %v187, %v192
    %v197 = vrsqrt.pop %v175
    %v198 = vmul.f32 %v197, %v175
    %v199 = vmul.f32 %v198, %v197
    %v200 = vmul.f32 0.5, %v199
    %v201 = vsub.f32 1.5, %v200
    %v202 = vmul.f32 %v197, %v201
    %vm203 = vweird.f32 %v175
    %vm204 = vweird.f32 %v197
    %vm205 = vmor %vm203, %vm204
    %v206 = vsel %vm205, %v197, %v202
    %v207 = vrsqrt.pop %v176
    %v208 = vmul.f32 %v207, %v176
    %v209 = vmul.f32 %v208, %v207
    %v210 = vmul.f32 0.5, %v209
    %v211 = vsub.f32 1.5, %v210
    %v212 = vmul.f32 %v207, %v211
    %vm213 = vweird.f32 %v176
    %vm214 = vweird.f32 %v207
    %vm215 = vmor %vm213, %vm214
    %v216 = vsel %vm215, %v207, %v212
    %v217 = vld [vmem:[#allocation11] sm:$0x1]
    %v218 = vld [vmem:[#allocation12] sm:$0x1]
    %v219 = vadd.f32 %v156, %v157
    %v220 = vadd.f32 %v219, %v158
    %v221 = vadd.f32 %v220, %v159
    %v222 = vrot.slane %v221, 4
    %v223 = vadd.f32 %v221, %v222
    %v224 = vrot.slane %v223, 2
    %v225 = vadd.f32 %v223, %v224
    %v226 = vrot.slane %v225, 1
    %v227 = vadd.f32 %v225, %v226
    %v228 = vrcp.pop 32.0
    %v229 = vmul.f32 32.0, %v228
    %v230 = vsub.f32 1.0, %v229
    %v231 = vmul.f32 %v228, %v230
    %v232 = vadd.f32 %v228, %v231
    %vm233 = vweird.f32 %v228
    %v234 = vsel %vm233, %v228, %v232
    %v235 = vmul.f32 %v227, %v234
    %v236 = vsub.f32 %v156, %v235
    %v237 = vsub.f32 %v157, %v235
    %v238 = vsub.f32 %v158, %v235
    %v239 = vsub.f32 %v159, %v235
    %v240 = vmul.f32 %v236, %v236
    %v241 = vmul.f32 %v237, %v237
    %v242 = vmul.f32 %v238, %v238
    %v243 = vmul.f32 %v239, %v239
    %v244 = vadd.f32 %v240, %v241
    %v245 = vadd.f32 %v244, %v242
    %v246 = vadd.f32 %v245, %v243
    %v247 = vrot.slane %v246, 4
    %v248 = vadd.f32 %v246, %v247
    %v249 = vrot.slane %v248, 2
    %v250 = vadd.f32 %v248, %v249
    %v251 = vrot.slane %v250, 1
    %v252 = vadd.f32 %v250, %v251
    %v253 = vmul.f32 %v252, %v234
    %v254 = vadd.f32 %v253, 1e-05
    %v255 = vrsqrt.pop %v254
    %v256 = vmul.f32 %v255, %v254
    %v257 = vmul.f32 %v256, %v255
    %v258 = vmul.f32 0.5, %v257
    %v259 = vsub.f32 1.5, %v258
    %v260 = vmul.f32 %v255, %v259
    %vm261 = vweird.f32 %v254
    %vm262 = vweird.f32 %v255
    %vm263 = vmor %vm261, %vm262
    %v264 = vsel %vm263, %v255, %v260
    %v265 = vmul.f32 %v236, %v264
    %v266 = vmul.f32 %v237, %v264
    %v267 = vmul.f32 %v238, %v264
    %v268 = vmul.f32 %v239, %v264
    %v270 = vperm.slane %v217, 0
    %v272 = vmul.f32 %v265, %v270
    %v273 = vmul.f32 %v266, %v270
    %v274 = vmul.f32 %v267, %v270
    %v275 = vmul.f32 %v268, %v270
    %v277 = vperm.slane %v218, 0
    %v279 = vadd.f32 %v272, %v277
    %v280 = vadd.f32 %v273, %v277
    %v281 = vadd.f32 %v274, %v277
    %v282 = vadd.f32 %v275, %v277
    %v283 = vld [vmem:[#allocation8] sm:$0xff]
    %v284 = vld [vmem:[#allocation8 + $0x8] sm:$0xff]
    %v285 = vld [vmem:[#allocation8 + $0x10] sm:$0xff]
    %v286 = vld [vmem:[#allocation8 + $0x18] sm:$0xff]
    %v287 = vld [vmem:[#allocation8 + $0x20] sm:$0xff]
    %v288 = vld [vmem:[#allocation8 + $0x28] sm:$0xff]
    %v289 = vld [vmem:[#allocation8 + $0x30] sm:$0xff]
    %v290 = vld [vmem:[#allocation8 + $0x38] sm:$0xff]
    %v291 = vld [vmem:[#allocation8 + $0x40] sm:$0xff]
    %v292 = vld [vmem:[#allocation8 + $0x48] sm:$0xff]
    %v293 = vld [vmem:[#allocation8 + $0x50] sm:$0xff]
    %v294 = vld [vmem:[#allocation8 + $0x58] sm:$0xff]
    %v295 = vld [vmem:[#allocation8 + $0x60] sm:$0xff]
    %v296 = vld [vmem:[#allocation8 + $0x68] sm:$0xff]
    %v297 = vld [vmem:[#allocation8 + $0x70] sm:$0xff]
    %v298 = vld [vmem:[#allocation8 + $0x78] sm:$0xff]
    %v299 = vld [vmem:[#allocation9] sm:$0x1]
    %v301 = vperm.slane %v299, 0
    %303 = vmatpush.msra.mxu0 %v298
    %304 = vmatpush.msra.mxu0 %v297
    %305 = vmatpush.msra.mxu0 %v296
    %306 = vmatpush.msra.mxu0 %v295
    %307 = vmatpush.msra.mxu0 %v294
    %308 = vmatpush.msra.mxu0 %v293
    %309 = vmatpush.msra.mxu0 %v292
    %310 = vmatpush.msra.mxu0 %v291
    %311 = vmatpush.msra.mxu0 %v290
    %312 = vmatpush.msra.mxu0 %v289
    %313 = vmatpush.msra.mxu0 %v288
    %314 = vmatpush.msra.mxu0 %v287
    %315 = vmatpush.msra.mxu0 %v286
    %316 = vmatpush.msra.mxu0 %v285
    %317 = vmatpush.msra.mxu0 %v284
    %318 = vmatpush.msra.mxu0 %v283
    %319 = vmatmul.f32.gmra.mxu0 %v279
    %v320 = vpop.f32.mrf.mxu0
    %v321 = vadd.f32 %v301, %v320
    %322 = vmatmul.f32.gmra.mxu0 %v280
    %v323 = vpop.f32.mrf.mxu0
    %v324 = vadd.f32 %v301, %v323
    %325 = vmatmul.f32.gmra.mxu0 %v281
    %v326 = vpop.f32.mrf.mxu0
    %v327 = vadd.f32 %v301, %v326
    %328 = vmatmul.f32.gmra.mxu0 %v282
    %v329 = vpop.f32.mrf.mxu0
    %v330 = vadd.f32 %v301, %v329
    %331 = vdwg.mxu0
    %v332 = vmul.f32 %v186, %v321
    %v333 = vmul.f32 %v196, %v324
    %v334 = vmul.f32 %v206, %v327
    %v335 = vmul.f32 %v216, %v330
    %v337 = vsel %vm160, %v152, 0
    %v340 = vsel %vm160, %v153, 0
    %v343 = vsel %vm160, %v154, 0
    %v346 = vsel %vm160, %v155, 0
    %348 = vmatpush.msra.mxu0 0.0
    %349 = vmatpush.msra.mxu0 0.0
    %350 = vmatpush.msra.mxu0 0.0
    %351 = vmatpush.msra.mxu0 0.0
    %352 = vmatpush.msra.mxu0 0.0
    %353 = vmatpush.msra.mxu0 0.0
    %354 = vmatpush.msra.mxu0 0.0
    %355 = vmatpush.msra.mxu0 0.0
    %356 = vmatpush.msra.mxu0 0.0
    %357 = vmatpush.msra.mxu0 0.0
    %358 = vmatpush.msra.mxu0 0.0
    %359 = vmatpush.msra.mxu0 0.0
    %360 = vmatpush.msra.mxu0 %v335
    %361 = vmatpush.msra.mxu0 %v334
    %362 = vmatpush.msra.mxu0 %v333
    %363 = vmatpush.msra.mxu0 %v332
    %364 = vmatmul.f32.gmra.mxu0 %v337
    %v365 = vpop.f32.mrf.mxu0
    %v366 = vadd.f32 %v332, %v365
    %367 = vmatmul.f32.gmra.mxu0 %v340
    %v368 = vpop.f32.mrf.mxu0
    %v369 = vadd.f32 %v333, %v368
    %370 = vmatmul.f32.gmra.mxu0 %v343
    %v371 = vpop.f32.mrf.mxu0
    %v372 = vadd.f32 %v334, %v371
    %373 = vmatmul.f32.gmra.mxu0 %v346
    %v374 = vpop.f32.mrf.mxu0
    %v375 = vadd.f32 %v335, %v374
    %376 = vdwg.mxu0
    %v377 = vmul.f32 %v186, %v366
    %v378 = vmul.f32 %v196, %v369
    %v379 = vmul.f32 %v206, %v372
    %v380 = vmul.f32 %v216, %v375
    %vm381 = vcmp.gt.f32.partialorder %v377, 0.0
    %vm382 = vcmp.gt.f32.partialorder %v378, 0.0
    %vm383 = vcmp.gt.f32.partialorder %v379, 0.0
    %vm384 = vcmp.gt.f32.partialorder %v380, 0.0
    %v385 = vmul.f32 %v377, 0.01
    %v386 = vmul.f32 %v378, 0.01
    %v387 = vmul.f32 %v379, 0.01
    %v388 = vmul.f32 %v380, 0.01
    %v389 = vsel %vm381, %v377, %v385
    %v390 = vsel %vm382, %v378, %v386
    %v391 = vsel %vm383, %v379, %v387
    %v392 = vsel %vm384, %v380, %v388
    %v393 = vld [vmem:[#allocation14] sm:$0xff]
    %v394 = vld [vmem:[#allocation14 + $0x8] sm:$0xff]
    %v395 = vld [vmem:[#allocation14 + $0x10] sm:$0xff]
    %v396 = vld [vmem:[#allocation14 + $0x18] sm:$0xff]
    %v397 = vld [vmem:[#allocation14 + $0x20] sm:$0xff]
    %v398 = vld [vmem:[#allocation14 + $0x28] sm:$0xff]
    %v399 = vld [vmem:[#allocation14 + $0x30] sm:$0xff]
    %v400 = vld [vmem:[#allocation14 + $0x38] sm:$0xff]
    %v401 = vld [vmem:[#allocation14 + $0x40] sm:$0xff]
    %v402 = vld [vmem:[#allocation14 + $0x48] sm:$0xff]
    %v403 = vld [vmem:[#allocation14 + $0x50] sm:$0xff]
    %v404 = vld [vmem:[#allocation14 + $0x58] sm:$0xff]
    %v405 = vld [vmem:[#allocation14 + $0x60] sm:$0xff]
    %v406 = vld [vmem:[#allocation14 + $0x68] sm:$0xff]
    %v407 = vld [vmem:[#allocation14 + $0x70] sm:$0xff]
    %v408 = vld [vmem:[#allocation14 + $0x78] sm:$0xff]
    %409 = vmatpush.msra.mxu0 %v408
    %410 = vmatpush.msra.mxu0 %v407
    %411 = vmatpush.msra.mxu0 %v406
    %412 = vmatpush.msra.mxu0 %v405
    %413 = vmatpush.msra.mxu0 %v404
    %414 = vmatpush.msra.mxu0 %v403
    %415 = vmatpush.msra.mxu0 %v402
    %416 = vmatpush.msra.mxu0 %v401
    %417 = vmatpush.msra.mxu0 %v400
    %418 = vmatpush.msra.mxu0 %v399
    %419 = vmatpush.msra.mxu0 %v398
    %420 = vmatpush.msra.mxu0 %v397
    %421 = vmatpush.msra.mxu0 %v396
    %422 = vmatpush.msra.mxu0 %v395
    %423 = vmatpush.msra.mxu0 %v394
    %424 = vmatpush.msra.mxu0 %v393
    %425 = vmatmul.f32.gmra.mxu0 %v389
    %v426 = vpop.f32.mrf.mxu0
    %v427 = vadd.f32 0.0, %v426
    %428 = vmatmul.f32.gmra.mxu0 %v390
    %v429 = vpop.f32.mrf.mxu0
    %v430 = vadd.f32 0.0, %v429
    %431 = vmatmul.f32.gmra.mxu0 %v391
    %v432 = vpop.f32.mrf.mxu0
    %v433 = vadd.f32 0.0, %v432
    %434 = vmatmul.f32.gmra.mxu0 %v392
    %v435 = vpop.f32.mrf.mxu0
    %v436 = vadd.f32 0.0, %v435
    %437 = vdwg.mxu0
    %s438 = sld [smem:[#allocation15]]
    %v439 = vstv %s438
    %v440 = vadd.f32 %v427, %v439
    %v441 = vadd.f32 %v430, %v439
    %v442 = vadd.f32 %v433, %v439
    %v443 = vadd.f32 %v436, %v439
    %v444 = vlaneseq
    %v445 = vshrl.u32 %v444, 7
    %v446 = vadd.s32 %v445, 8
    %v447 = vadd.s32 %v445, 16
    %v448 = vadd.s32 %v445, 24
    %v449 = vcvt.s32.f32 %v445
    %v450 = vcvt.s32.f32 %v446
    %v451 = vcvt.s32.f32 %v447
    %v452 = vcvt.s32.f32 %v448
    %v453 = vlaneseq
    %v454 = vand.u32 %v453, 127
    %v455 = vcvt.s32.f32 %v454
    %vm456 = vcmask 7168
    %v457 = vsel %vm456, %v440, -inf
    %v458 = vsel %vm456, %v441, -inf
    %v459 = vsel %vm456, %v442, -inf
    %v460 = vsel %vm456, %v443, -inf
    %v461 = vmax.f32 %v457, %v458
    %v462 = vmax.f32 %v459, %v460
    %v463 = vmax.f32 %v461, %v462
    %v464 = vrot.slane %v463, 4
    %v465 = vmax.f32 %v463, %v464
    %v466 = vrot.slane %v465, 2
    %v467 = vmax.f32 %v465, %v466
    %v468 = vrot.slane %v467, 1
    %v469 = vmax.f32 %v467, %v468
    %vm470 = vcmp.eq.f32.partialorder %v440, %v469
    %vm471 = vcmp.eq.f32.partialorder %v441, %v469
    %vm472 = vcmp.eq.f32.partialorder %v442, %v469
    %vm473 = vcmp.eq.f32.partialorder %v443, %v469
    %v474 = vsel %vm470, %v449, 32.0
    %v475 = vsel %vm471, %v450, 32.0
    %v476 = vsel %vm472, %v451, 32.0
    %v477 = vsel %vm473, %v452, 32.0
    %v478 = vsel %vm456, %v474, inf
    %v479 = vsel %vm456, %v475, inf
    %v480 = vsel %vm456, %v476, inf
    %v481 = vsel %vm456, %v477, inf
    %v482 = vmin.f32 %v478, %v479
    %v483 = vmin.f32 %v480, %v481
    %v484 = vmin.f32 %v482, %v483
    %v485 = vrot.slane %v484, 4
    %v486 = vmin.f32 %v484, %v485
    %v487 = vrot.slane %v486, 2
    %v488 = vmin.f32 %v486, %v487
    %v489 = vrot.slane %v488, 1
    %v490 = vmin.f32 %v488, %v489
    %vm491 = vcmp.eq.f32.partialorder %v449, %v490
    %vm492 = vcmp.eq.f32.partialorder %v450, %v490
    %vm493 = vcmp.eq.f32.partialorder %v451, %v490
    %vm494 = vcmp.eq.f32.partialorder %v452, %v490
    %496 = vset.pattern.permute.xlu0 0
    %497 = vperm.xlu0 %496, %v490
    %v498 = vpop.permute.xlu0 %497
    %vm500 = vcmp.eq.f32.partialorder %v455, %v498
    %vm501 = vcmp.eq.s32.totalorder %v445, 0
    %vm502 = vcmp.eq.s32.totalorder %v446, 0
    %v503 = vsel %vm501, 1, 0
    %v504 = vsel %vm502, 1, 0
    %v505 = vcvt.s32.f32 %v503
    %v506 = vcvt.s32.f32 %v504
    %vm507 = vcmp.eq.s32.totalorder %v454, 0
    %v508 = vsel %vm507, 1, 0
    %v509 = vcvt.s32.f32 %v508
    %v510 = vsel %vm500, 1, 0
    %v511 = vcvt.s32.f32 %v510
    %v512 = vmul.f32 %v505, %v511
    %v513 = vmul.f32 %v506, %v511
    %v514 = vadd.f32 %v512, 0.0
    %v515 = vadd.f32 %v513, 0.0
    %v516 = vsel %vm491, 1, 0
    %v517 = vsel %vm492, 1, 0
    %v518 = vsel %vm493, 1, 0
    %v519 = vsel %vm494, 1, 0
    %v520 = vcvt.s32.f32 %v516
    %v521 = vcvt.s32.f32 %v517
    %v522 = vcvt.s32.f32 %v518
    %v523 = vcvt.s32.f32 %v519
    %525 = vset.pattern.permute.xlu0 0
    %526 = vperm.xlu0 %525, %v520
    %v527 = vpop.permute.xlu0 %526
    %530 = vset.pattern.permute.xlu0 0
    %531 = vperm.xlu0 %530, %v521
    %v532 = vpop.permute.xlu0 %531
    %535 = vset.pattern.permute.xlu0 0
    %536 = vperm.xlu0 %535, %v522
    %v537 = vpop.permute.xlu0 %536
    %540 = vset.pattern.permute.xlu0 0
    %541 = vperm.xlu0 %540, %v523
    %v542 = vpop.permute.xlu0 %541
    %v544 = vmul.f32 %v527, %v509
    %v545 = vmul.f32 %v532, %v509
    %v546 = vmul.f32 %v537, %v509
    %v547 = vmul.f32 %v542, %v509
    %v548 = vadd.f32 %v544, 0.0
    %v549 = vadd.f32 %v545, 0.0
    %v550 = vadd.f32 %v546, 0.0
    %v551 = vadd.f32 %v547, 0.0
    %v552 = vsub.f32 0.0, %v469
    %v553 = vmul.f32 %v552, 1.442695
    %v554 = vpow.pop %v553
    %v555 = vadd.f32 %v554, 1.0
    %v556 = vrcp.pop %v555
    %v557 = vmul.f32 %v555, %v556
    %v558 = vsub.f32 1.0, %v557
    %v559 = vmul.f32 %v556, %v558
    %v560 = vadd.f32 %v556, %v559
    %vm561 = vweird.f32 %v555
    %vm562 = vweird.f32 %v556
    %vm563 = vmor %vm561, %vm562
    %v564 = vsel %vm563, %v556, %v560
    %v565 = vand.u32 2147483647, %v555
    %vm566 = vcmp.eq.f32.partialorder %v565, 8.507059e+37
    %v567 = vand.u32 %v555, 2147483648
    %v568 = vor.u32 1.1754944e-38, %v567
    %v569 = vsel %vm566, %v568, %v564
    %v570 = vmul.f32 1.0, %v569
    %v571 = vmul.f32 %v505, %v570
    %v572 = vmul.f32 %v506, %v570
    %v573 = vadd.f32 %v571, 0.0
    %v574 = vadd.f32 %v572, 0.0
    %v575 = vsel %vm491, -inf, %v440
    %v576 = vsel %vm492, -inf, %v441
    %v577 = vsel %vm493, -inf, %v442
    %v578 = vsel %vm494, -inf, %v443
    %v579 = vsel %vm456, %v575, -inf
    %v580 = vsel %vm456, %v576, -inf
    %v581 = vsel %vm456, %v577, -inf
    %v582 = vsel %vm456, %v578, -inf
    %v583 = vmax.f32 %v579, %v580
    %v584 = vmax.f32 %v581, %v582
    %v585 = vmax.f32 %v583, %v584
    %v586 = vrot.slane %v585, 4
    %v587 = vmax.f32 %v585, %v586
    %v588 = vrot.slane %v587, 2
    %v589 = vmax.f32 %v587, %v588
    %v590 = vrot.slane %v589, 1
    %v591 = vmax.f32 %v589, %v590
    %vm592 = vcmp.eq.f32.partialorder %v575, %v591
    %vm593 = vcmp.eq.f32.partialorder %v576, %v591
    %vm594 = vcmp.eq.f32.partialorder %v577, %v591
    %vm595 = vcmp.eq.f32.partialorder %v578, %v591
    %v596 = vsel %vm592, %v449, 32.0
    %v597 = vsel %vm593, %v450, 32.0
    %v598 = vsel %vm594, %v451, 32.0
    %v599 = vsel %vm595, %v452, 32.0
    %v600 = vsel %vm456, %v596, inf
    %v601 = vsel %vm456, %v597, inf
    %v602 = vsel %vm456, %v598, inf
    %v603 = vsel %vm456, %v599, inf
    %v604 = vmin.f32 %v600, %v601
    %v605 = vmin.f32 %v602, %v603
    %v606 = vmin.f32 %v604, %v605
    %v607 = vrot.slane %v606, 4
    %v608 = vmin.f32 %v606, %v607
    %v609 = vrot.slane %v608, 2
    %v610 = vmin.f32 %v608, %v609
    %v611 = vrot.slane %v610, 1
    %v612 = vmin.f32 %v610, %v611
    %vm613 = vcmp.eq.f32.partialorder %v449, %v612
    %vm614 = vcmp.eq.f32.partialorder %v450, %v612
    %vm615 = vcmp.eq.f32.partialorder %v451, %v612
    %vm616 = vcmp.eq.f32.partialorder %v452, %v612
    %618 = vset.pattern.permute.xlu0 0
    %619 = vperm.xlu0 %618, %v612
    %v620 = vpop.permute.xlu0 %619
    %vm622 = vcmp.eq.f32.partialorder %v455, %v620
    %vm623 = vcmp.eq.s32.totalorder %v445, 1
    %vm624 = vcmp.eq.s32.totalorder %v446, 1
    %v625 = vsel %vm623, 1, 0
    %v626 = vsel %vm624, 1, 0
    %v627 = vcvt.s32.f32 %v625
    %v628 = vcvt.s32.f32 %v626
    %vm629 = vcmp.eq.s32.totalorder %v454, 1
    %v630 = vsel %vm629, 1, 0
    %v631 = vcvt.s32.f32 %v630
    %v632 = vsel %vm622, 1, 0
    %v633 = vcvt.s32.f32 %v632
    %v634 = vmul.f32 %v627, %v633
    %v635 = vmul.f32 %v628, %v633
    %v636 = vadd.f32 %v514, %v634
    %v637 = vadd.f32 %v515, %v635
    %v638 = vsel %vm613, 1, 0
    %v639 = vsel %vm614, 1, 0
    %v640 = vsel %vm615, 1, 0
    %v641 = vsel %vm616, 1, 0
    %v642 = vcvt.s32.f32 %v638
    %v643 = vcvt.s32.f32 %v639
    %v644 = vcvt.s32.f32 %v640
    %v645 = vcvt.s32.f32 %v641
    %647 = vset.pattern.permute.xlu0 0
    %648 = vperm.xlu0 %647, %v642
    %v649 = vpop.permute.xlu0 %648
    %652 = vset.pattern.permute.xlu0 0
    %653 = vperm.xlu0 %652, %v643
    %v654 = vpop.permute.xlu0 %653
    %657 = vset.pattern.permute.xlu0 0
    %658 = vperm.xlu0 %657, %v644
    %v659 = vpop.permute.xlu0 %658
    %662 = vset.pattern.permute.xlu0 0
    %663 = vperm.xlu0 %662, %v645
    %v664 = vpop.permute.xlu0 %663
    %v666 = vmul.f32 %v649, %v631
    %v667 = vmul.f32 %v654, %v631
    %v668 = vmul.f32 %v659, %v631
    %v669 = vmul.f32 %v664, %v631
    %v670 = vadd.f32 %v548, %v666
    %v671 = vadd.f32 %v549, %v667
    %v672 = vadd.f32 %v550, %v668
    %v673 = vadd.f32 %v551, %v669
    %v674 = vsub.f32 0.0, %v591
    %v675 = vmul.f32 %v674, 1.442695
    %v676 = vpow.pop %v675
    %v677 = vadd.f32 %v676, 1.0
    %v678 = vrcp.pop %v677
    %v679 = vmul.f32 %v677, %v678
    %v680 = vsub.f32 1.0, %v679
    %v681 = vmul.f32 %v678, %v680
    %v682 = vadd.f32 %v678, %v681
    %vm683 = vweird.f32 %v677
    %vm684 = vweird.f32 %v678
    %vm685 = vmor %vm683, %vm684
    %v686 = vsel %vm685, %v678, %v682
    %v687 = vand.u32 2147483647, %v677
    %vm688 = vcmp.eq.f32.partialorder %v687, 8.507059e+37
    %v689 = vand.u32 %v677, 2147483648
    %v690 = vor.u32 1.1754944e-38, %v689
    %v691 = vsel %vm688, %v690, %v686
    %v692 = vmul.f32 1.0, %v691
    %v693 = vmul.f32 %v627, %v692
    %v694 = vmul.f32 %v628, %v692
    %v695 = vadd.f32 %v573, %v693
    %v696 = vadd.f32 %v574, %v694
    %v697 = vsel %vm613, -inf, %v575
    %v698 = vsel %vm614, -inf, %v576
    %v699 = vsel %vm615, -inf, %v577
    %v700 = vsel %vm616, -inf, %v578
    %v701 = vsel %vm456, %v697, -inf
    %v702 = vsel %vm456, %v698, -inf
    %v703 = vsel %vm456, %v699, -inf
    %v704 = vsel %vm456, %v700, -inf
    %v705 = vmax.f32 %v701, %v702
    %v706 = vmax.f32 %v703, %v704
    %v707 = vmax.f32 %v705, %v706
    %v708 = vrot.slane %v707, 4
    %v709 = vmax.f32 %v707, %v708
    %v710 = vrot.slane %v709, 2
    %v711 = vmax.f32 %v709, %v710
    %v712 = vrot.slane %v711, 1
    %v713 = vmax.f32 %v711, %v712
    %vm714 = vcmp.eq.f32.partialorder %v697, %v713
    %vm715 = vcmp.eq.f32.partialorder %v698, %v713
    %vm716 = vcmp.eq.f32.partialorder %v699, %v713
    %vm717 = vcmp.eq.f32.partialorder %v700, %v713
    %v718 = vsel %vm714, %v449, 32.0
    %v719 = vsel %vm715, %v450, 32.0
    %v720 = vsel %vm716, %v451, 32.0
    %v721 = vsel %vm717, %v452, 32.0
    %v722 = vsel %vm456, %v718, inf
    %v723 = vsel %vm456, %v719, inf
    %v724 = vsel %vm456, %v720, inf
    %v725 = vsel %vm456, %v721, inf
    %v726 = vmin.f32 %v722, %v723
    %v727 = vmin.f32 %v724, %v725
    %v728 = vmin.f32 %v726, %v727
    %v729 = vrot.slane %v728, 4
    %v730 = vmin.f32 %v728, %v729
    %v731 = vrot.slane %v730, 2
    %v732 = vmin.f32 %v730, %v731
    %v733 = vrot.slane %v732, 1
    %v734 = vmin.f32 %v732, %v733
    %vm735 = vcmp.eq.f32.partialorder %v449, %v734
    %vm736 = vcmp.eq.f32.partialorder %v450, %v734
    %vm737 = vcmp.eq.f32.partialorder %v451, %v734
    %vm738 = vcmp.eq.f32.partialorder %v452, %v734
    %740 = vset.pattern.permute.xlu0 0
    %741 = vperm.xlu0 %740, %v734
    %v742 = vpop.permute.xlu0 %741
    %vm744 = vcmp.eq.f32.partialorder %v455, %v742
    %vm745 = vcmp.eq.s32.totalorder %v445, 2
    %vm746 = vcmp.eq.s32.totalorder %v446, 2
    %v747 = vsel %vm745, 1, 0
    %v748 = vsel %vm746, 1, 0
    %v749 = vcvt.s32.f32 %v747
    %v750 = vcvt.s32.f32 %v748
    %vm751 = vcmp.eq.s32.totalorder %v454, 2
    %v752 = vsel %vm751, 1, 0
    %v753 = vcvt.s32.f32 %v752
    %v754 = vsel %vm744, 1, 0
    %v755 = vcvt.s32.f32 %v754
    %v756 = vmul.f32 %v749, %v755
    %v757 = vmul.f32 %v750, %v755
    %v758 = vadd.f32 %v636, %v756
    %v759 = vadd.f32 %v637, %v757
    %v760 = vsel %vm735, 1, 0
    %v761 = vsel %vm736, 1, 0
    %v762 = vsel %vm737, 1, 0
    %v763 = vsel %vm738, 1, 0
    %v764 = vcvt.s32.f32 %v760
    %v765 = vcvt.s32.f32 %v761
    %v766 = vcvt.s32.f32 %v762
    %v767 = vcvt.s32.f32 %v763
    %769 = vset.pattern.permute.xlu0 0
    %770 = vperm.xlu0 %769, %v764
    %v771 = vpop.permute.xlu0 %770
    %774 = vset.pattern.permute.xlu0 0
    %775 = vperm.xlu0 %774, %v765
    %v776 = vpop.permute.xlu0 %775
    %779 = vset.pattern.permute.xlu0 0
    %780 = vperm.xlu0 %779, %v766
    %v781 = vpop.permute.xlu0 %780
    %784 = vset.pattern.permute.xlu0 0
    %785 = vperm.xlu0 %784, %v767
    %v786 = vpop.permute.xlu0 %785
    %v788 = vmul.f32 %v771, %v753
    %v789 = vmul.f32 %v776, %v753
    %v790 = vmul.f32 %v781, %v753
    %v791 = vmul.f32 %v786, %v753
    %v792 = vadd.f32 %v670, %v788
    %v793 = vadd.f32 %v671, %v789
    %v794 = vadd.f32 %v672, %v790
    %v795 = vadd.f32 %v673, %v791
    %v796 = vsub.f32 0.0, %v713
    %v797 = vmul.f32 %v796, 1.442695
    %v798 = vpow.pop %v797
    %v799 = vadd.f32 %v798, 1.0
    %v800 = vrcp.pop %v799
    %v801 = vmul.f32 %v799, %v800
    %v802 = vsub.f32 1.0, %v801
    %v803 = vmul.f32 %v800, %v802
    %v804 = vadd.f32 %v800, %v803
    %vm805 = vweird.f32 %v799
    %vm806 = vweird.f32 %v800
    %vm807 = vmor %vm805, %vm806
    %v808 = vsel %vm807, %v800, %v804
    %v809 = vand.u32 2147483647, %v799
    %vm810 = vcmp.eq.f32.partialorder %v809, 8.507059e+37
    %v811 = vand.u32 %v799, 2147483648
    %v812 = vor.u32 1.1754944e-38, %v811
    %v813 = vsel %vm810, %v812, %v808
    %v814 = vmul.f32 1.0, %v813
    %v815 = vmul.f32 %v749, %v814
    %v816 = vmul.f32 %v750, %v814
    %v817 = vadd.f32 %v695, %v815
    %v818 = vadd.f32 %v696, %v816
    %v819 = vsel %vm735, -inf, %v697
    %v820 = vsel %vm736, -inf, %v698
    %v821 = vsel %vm737, -inf, %v699
    %v822 = vsel %vm738, -inf, %v700
    %v823 = vsel %vm456, %v819, -inf
    %v824 = vsel %vm456, %v820, -inf
    %v825 = vsel %vm456, %v821, -inf
    %v826 = vsel %vm456, %v822, -inf
    %v827 = vmax.f32 %v823, %v824
    %v828 = vmax.f32 %v825, %v826
    %v829 = vmax.f32 %v827, %v828
    %v830 = vrot.slane %v829, 4
    %v831 = vmax.f32 %v829, %v830
    %v832 = vrot.slane %v831, 2
    %v833 = vmax.f32 %v831, %v832
    %v834 = vrot.slane %v833, 1
    %v835 = vmax.f32 %v833, %v834
    %vm836 = vcmp.eq.f32.partialorder %v819, %v835
    %vm837 = vcmp.eq.f32.partialorder %v820, %v835
    %vm838 = vcmp.eq.f32.partialorder %v821, %v835
    %vm839 = vcmp.eq.f32.partialorder %v822, %v835
    %v840 = vsel %vm836, %v449, 32.0
    %v841 = vsel %vm837, %v450, 32.0
    %v842 = vsel %vm838, %v451, 32.0
    %v843 = vsel %vm839, %v452, 32.0
    %v844 = vsel %vm456, %v840, inf
    %v845 = vsel %vm456, %v841, inf
    %v846 = vsel %vm456, %v842, inf
    %v847 = vsel %vm456, %v843, inf
    %v848 = vmin.f32 %v844, %v845
    %v849 = vmin.f32 %v846, %v847
    %v850 = vmin.f32 %v848, %v849
    %v851 = vrot.slane %v850, 4
    %v852 = vmin.f32 %v850, %v851
    %v853 = vrot.slane %v852, 2
    %v854 = vmin.f32 %v852, %v853
    %v855 = vrot.slane %v854, 1
    %v856 = vmin.f32 %v854, %v855
    %vm857 = vcmp.eq.f32.partialorder %v449, %v856
    %vm858 = vcmp.eq.f32.partialorder %v450, %v856
    %vm859 = vcmp.eq.f32.partialorder %v451, %v856
    %vm860 = vcmp.eq.f32.partialorder %v452, %v856
    %862 = vset.pattern.permute.xlu0 0
    %863 = vperm.xlu0 %862, %v856
    %v864 = vpop.permute.xlu0 %863
    %vm866 = vcmp.eq.f32.partialorder %v455, %v864
    %vm867 = vcmp.eq.s32.totalorder %v445, 3
    %vm868 = vcmp.eq.s32.totalorder %v446, 3
    %v869 = vsel %vm867, 1, 0
    %v870 = vsel %vm868, 1, 0
    %v871 = vcvt.s32.f32 %v869
    %v872 = vcvt.s32.f32 %v870
    %vm873 = vcmp.eq.s32.totalorder %v454, 3
    %v874 = vsel %vm873, 1, 0
    %v875 = vcvt.s32.f32 %v874
    %v876 = vsel %vm866, 1, 0
    %v877 = vcvt.s32.f32 %v876
    %v878 = vmul.f32 %v871, %v877
    %v879 = vmul.f32 %v872, %v877
    %v880 = vadd.f32 %v758, %v878
    %v881 = vadd.f32 %v759, %v879
    %v882 = vsel %vm857, 1, 0
    %v883 = vsel %vm858, 1, 0
    %v884 = vsel %vm859, 1, 0
    %v885 = vsel %vm860, 1, 0
    %v886 = vcvt.s32.f32 %v882
    %v887 = vcvt.s32.f32 %v883
    %v888 = vcvt.s32.f32 %v884
    %v889 = vcvt.s32.f32 %v885
    %891 = vset.pattern.permute.xlu0 0
    %892 = vperm.xlu0 %891, %v886
    %v893 = vpop.permute.xlu0 %892
    %896 = vset.pattern.permute.xlu0 0
    %897 = vperm.xlu0 %896, %v887
    %v898 = vpop.permute.xlu0 %897
    %901 = vset.pattern.permute.xlu0 0
    %902 = vperm.xlu0 %901, %v888
    %v903 = vpop.permute.xlu0 %902
    %906 = vset.pattern.permute.xlu0 0
    %907 = vperm.xlu0 %906, %v889
    %v908 = vpop.permute.xlu0 %907
    %v910 = vmul.f32 %v893, %v875
    %v911 = vmul.f32 %v898, %v875
    %v912 = vmul.f32 %v903, %v875
    %v913 = vmul.f32 %v908, %v875
    %v914 = vadd.f32 %v792, %v910
    %v915 = vadd.f32 %v793, %v911
    %v916 = vadd.f32 %v794, %v912
    %v917 = vadd.f32 %v795, %v913
    %v918 = vsub.f32 0.0, %v835
    %v919 = vmul.f32 %v918, 1.442695
    %v920 = vpow.pop %v919
    %v921 = vadd.f32 %v920, 1.0
    %v922 = vrcp.pop %v921
    %v923 = vmul.f32 %v921, %v922
    %v924 = vsub.f32 1.0, %v923
    %v925 = vmul.f32 %v922, %v924
    %v926 = vadd.f32 %v922, %v925
    %vm927 = vweird.f32 %v921
    %vm928 = vweird.f32 %v922
    %vm929 = vmor %vm927, %vm928
    %v930 = vsel %vm929, %v922, %v926
    %v931 = vand.u32 2147483647, %v921
    %vm932 = vcmp.eq.f32.partialorder %v931, 8.507059e+37
    %v933 = vand.u32 %v921, 2147483648
    %v934 = vor.u32 1.1754944e-38, %v933
    %v935 = vsel %vm932, %v934, %v930
    %v936 = vmul.f32 1.0, %v935
    %v937 = vmul.f32 %v871, %v936
    %v938 = vmul.f32 %v872, %v936
    %v939 = vadd.f32 %v817, %v937
    %v940 = vadd.f32 %v818, %v938
    %v941 = vsel %vm857, -inf, %v819
    %v942 = vsel %vm858, -inf, %v820
    %v943 = vsel %vm859, -inf, %v821
    %v944 = vsel %vm860, -inf, %v822
    %v945 = vsel %vm456, %v941, -inf
    %v946 = vsel %vm456, %v942, -inf
    %v947 = vsel %vm456, %v943, -inf
    %v948 = vsel %vm456, %v944, -inf
    %v949 = vmax.f32 %v945, %v946
    %v950 = vmax.f32 %v947, %v948
    %v951 = vmax.f32 %v949, %v950
    %v952 = vrot.slane %v951, 4
    %v953 = vmax.f32 %v951, %v952
    %v954 = vrot.slane %v953, 2
    %v955 = vmax.f32 %v953, %v954
    %v956 = vrot.slane %v955, 1
    %v957 = vmax.f32 %v955, %v956
    %vm958 = vcmp.eq.f32.partialorder %v941, %v957
    %vm959 = vcmp.eq.f32.partialorder %v942, %v957
    %vm960 = vcmp.eq.f32.partialorder %v943, %v957
    %vm961 = vcmp.eq.f32.partialorder %v944, %v957
    %v962 = vsel %vm958, %v449, 32.0
    %v963 = vsel %vm959, %v450, 32.0
    %v964 = vsel %vm960, %v451, 32.0
    %v965 = vsel %vm961, %v452, 32.0
    %v966 = vsel %vm456, %v962, inf
    %v967 = vsel %vm456, %v963, inf
    %v968 = vsel %vm456, %v964, inf
    %v969 = vsel %vm456, %v965, inf
    %v970 = vmin.f32 %v966, %v967
    %v971 = vmin.f32 %v968, %v969
    %v972 = vmin.f32 %v970, %v971
    %v973 = vrot.slane %v972, 4
    %v974 = vmin.f32 %v972, %v973
    %v975 = vrot.slane %v974, 2
    %v976 = vmin.f32 %v974, %v975
    %v977 = vrot.slane %v976, 1
    %v978 = vmin.f32 %v976, %v977
    %vm979 = vcmp.eq.f32.partialorder %v449, %v978
    %vm980 = vcmp.eq.f32.partialorder %v450, %v978
    %vm981 = vcmp.eq.f32.partialorder %v451, %v978
    %vm982 = vcmp.eq.f32.partialorder %v452, %v978
    %984 = vset.pattern.permute.xlu0 0
    %985 = vperm.xlu0 %984, %v978
    %v986 = vpop.permute.xlu0 %985
    %vm988 = vcmp.eq.f32.partialorder %v455, %v986
    %vm989 = vcmp.eq.s32.totalorder %v445, 4
    %vm990 = vcmp.eq.s32.totalorder %v446, 4
    %v991 = vsel %vm989, 1, 0
    %v992 = vsel %vm990, 1, 0
    %v993 = vcvt.s32.f32 %v991
    %v994 = vcvt.s32.f32 %v992
    %vm995 = vcmp.eq.s32.totalorder %v454, 4
    %v996 = vsel %vm995, 1, 0
    %v997 = vcvt.s32.f32 %v996
    %v998 = vsel %vm988, 1, 0
    %v999 = vcvt.s32.f32 %v998
    %v1000 = vmul.f32 %v993, %v999
    %v1001 = vmul.f32 %v994, %v999
    %v1002 = vadd.f32 %v880, %v1000
    %v1003 = vadd.f32 %v881, %v1001
    %v1004 = vsel %vm979, 1, 0
    %v1005 = vsel %vm980, 1, 0
    %v1006 = vsel %vm981, 1, 0
    %v1007 = vsel %vm982, 1, 0
    %v1008 = vcvt.s32.f32 %v1004
    %v1009 = vcvt.s32.f32 %v1005
    %v1010 = vcvt.s32.f32 %v1006
    %v1011 = vcvt.s32.f32 %v1007
    %1013 = vset.pattern.permute.xlu0 0
    %1014 = vperm.xlu0 %1013, %v1008
    %v1015 = vpop.permute.xlu0 %1014
    %1018 = vset.pattern.permute.xlu0 0
    %1019 = vperm.xlu0 %1018, %v1009
    %v1020 = vpop.permute.xlu0 %1019
    %1023 = vset.pattern.permute.xlu0 0
    %1024 = vperm.xlu0 %1023, %v1010
    %v1025 = vpop.permute.xlu0 %1024
    %1028 = vset.pattern.permute.xlu0 0
    %1029 = vperm.xlu0 %1028, %v1011
    %v1030 = vpop.permute.xlu0 %1029
    %v1032 = vmul.f32 %v1015, %v997
    %v1033 = vmul.f32 %v1020, %v997
    %v1034 = vmul.f32 %v1025, %v997
    %v1035 = vmul.f32 %v1030, %v997
    %v1036 = vadd.f32 %v914, %v1032
    %v1037 = vadd.f32 %v915, %v1033
    %v1038 = vadd.f32 %v916, %v1034
    %v1039 = vadd.f32 %v917, %v1035
    %v1040 = vsub.f32 0.0, %v957
    %v1041 = vmul.f32 %v1040, 1.442695
    %v1042 = vpow.pop %v1041
    %v1043 = vadd.f32 %v1042, 1.0
    %v1044 = vrcp.pop %v1043
    %v1045 = vmul.f32 %v1043, %v1044
    %v1046 = vsub.f32 1.0, %v1045
    %v1047 = vmul.f32 %v1044, %v1046
    %v1048 = vadd.f32 %v1044, %v1047
    %vm1049 = vweird.f32 %v1043
    %vm1050 = vweird.f32 %v1044
    %vm1051 = vmor %vm1049, %vm1050
    %v1052 = vsel %vm1051, %v1044, %v1048
    %v1053 = vand.u32 2147483647, %v1043
    %vm1054 = vcmp.eq.f32.partialorder %v1053, 8.507059e+37
    %v1055 = vand.u32 %v1043, 2147483648
    %v1056 = vor.u32 1.1754944e-38, %v1055
    %v1057 = vsel %vm1054, %v1056, %v1052
    %v1058 = vmul.f32 1.0, %v1057
    %v1059 = vmul.f32 %v993, %v1058
    %v1060 = vmul.f32 %v994, %v1058
    %v1061 = vadd.f32 %v939, %v1059
    %v1062 = vadd.f32 %v940, %v1060
    %v1063 = vsel %vm979, -inf, %v941
    %v1064 = vsel %vm980, -inf, %v942
    %v1065 = vsel %vm981, -inf, %v943
    %v1066 = vsel %vm982, -inf, %v944
    %v1067 = vsel %vm456, %v1063, -inf
    %v1068 = vsel %vm456, %v1064, -inf
    %v1069 = vsel %vm456, %v1065, -inf
    %v1070 = vsel %vm456, %v1066, -inf
    %v1071 = vmax.f32 %v1067, %v1068
    %v1072 = vmax.f32 %v1069, %v1070
    %v1073 = vmax.f32 %v1071, %v1072
    %v1074 = vrot.slane %v1073, 4
    %v1075 = vmax.f32 %v1073, %v1074
    %v1076 = vrot.slane %v1075, 2
    %v1077 = vmax.f32 %v1075, %v1076
    %v1078 = vrot.slane %v1077, 1
    %v1079 = vmax.f32 %v1077, %v1078
    %vm1080 = vcmp.eq.f32.partialorder %v1063, %v1079
    %vm1081 = vcmp.eq.f32.partialorder %v1064, %v1079
    %vm1082 = vcmp.eq.f32.partialorder %v1065, %v1079
    %vm1083 = vcmp.eq.f32.partialorder %v1066, %v1079
    %v1084 = vsel %vm1080, %v449, 32.0
    %v1085 = vsel %vm1081, %v450, 32.0
    %v1086 = vsel %vm1082, %v451, 32.0
    %v1087 = vsel %vm1083, %v452, 32.0
    %v1088 = vsel %vm456, %v1084, inf
    %v1089 = vsel %vm456, %v1085, inf
    %v1090 = vsel %vm456, %v1086, inf
    %v1091 = vsel %vm456, %v1087, inf
    %v1092 = vmin.f32 %v1088, %v1089
    %v1093 = vmin.f32 %v1090, %v1091
    %v1094 = vmin.f32 %v1092, %v1093
    %v1095 = vrot.slane %v1094, 4
    %v1096 = vmin.f32 %v1094, %v1095
    %v1097 = vrot.slane %v1096, 2
    %v1098 = vmin.f32 %v1096, %v1097
    %v1099 = vrot.slane %v1098, 1
    %v1100 = vmin.f32 %v1098, %v1099
    %vm1101 = vcmp.eq.f32.partialorder %v449, %v1100
    %vm1102 = vcmp.eq.f32.partialorder %v450, %v1100
    %vm1103 = vcmp.eq.f32.partialorder %v451, %v1100
    %vm1104 = vcmp.eq.f32.partialorder %v452, %v1100
    %1106 = vset.pattern.permute.xlu0 0
    %1107 = vperm.xlu0 %1106, %v1100
    %v1108 = vpop.permute.xlu0 %1107
    %vm1110 = vcmp.eq.f32.partialorder %v455, %v1108
    %vm1111 = vcmp.eq.s32.totalorder %v445, 5
    %vm1112 = vcmp.eq.s32.totalorder %v446, 5
    %v1113 = vsel %vm1111, 1, 0
    %v1114 = vsel %vm1112, 1, 0
    %v1115 = vcvt.s32.f32 %v1113
    %v1116 = vcvt.s32.f32 %v1114
    %vm1117 = vcmp.eq.s32.totalorder %v454, 5
    %v1118 = vsel %vm1117, 1, 0
    %v1119 = vcvt.s32.f32 %v1118
    %v1120 = vsel %vm1110, 1, 0
    %v1121 = vcvt.s32.f32 %v1120
    %v1122 = vmul.f32 %v1115, %v1121
    %v1123 = vmul.f32 %v1116, %v1121
    %v1124 = vadd.f32 %v1002, %v1122
    %v1125 = vadd.f32 %v1003, %v1123
    %v1126 = vsel %vm1101, 1, 0
    %v1127 = vsel %vm1102, 1, 0
    %v1128 = vsel %vm1103, 1, 0
    %v1129 = vsel %vm1104, 1, 0
    %v1130 = vcvt.s32.f32 %v1126
    %v1131 = vcvt.s32.f32 %v1127
    %v1132 = vcvt.s32.f32 %v1128
    %v1133 = vcvt.s32.f32 %v1129
    %1135 = vset.pattern.permute.xlu0 0
    %1136 = vperm.xlu0 %1135, %v1130
    %v1137 = vpop.permute.xlu0 %1136
    %1140 = vset.pattern.permute.xlu0 0
    %1141 = vperm.xlu0 %1140, %v1131
    %v1142 = vpop.permute.xlu0 %1141
    %1145 = vset.pattern.permute.xlu0 0
    %1146 = vperm.xlu0 %1145, %v1132
    %v1147 = vpop.permute.xlu0 %1146
    %1150 = vset.pattern.permute.xlu0 0
    %1151 = vperm.xlu0 %1150, %v1133
    %v1152 = vpop.permute.xlu0 %1151
    %v1154 = vmul.f32 %v1137, %v1119
    %v1155 = vmul.f32 %v1142, %v1119
    %v1156 = vmul.f32 %v1147, %v1119
    %v1157 = vmul.f32 %v1152, %v1119
    %v1158 = vadd.f32 %v1036, %v1154
    %v1159 = vadd.f32 %v1037, %v1155
    %v1160 = vadd.f32 %v1038, %v1156
    %v1161 = vadd.f32 %v1039, %v1157
    %v1162 = vsub.f32 0.0, %v1079
    %v1163 = vmul.f32 %v1162, 1.442695
    %v1164 = vpow.pop %v1163
    %v1165 = vadd.f32 %v1164, 1.0
    %v1166 = vrcp.pop %v1165
    %v1167 = vmul.f32 %v1165, %v1166
    %v1168 = vsub.f32 1.0, %v1167
    %v1169 = vmul.f32 %v1166, %v1168
    %v1170 = vadd.f32 %v1166, %v1169
    %vm1171 = vweird.f32 %v1165
    %vm1172 = vweird.f32 %v1166
    %vm1173 = vmor %vm1171, %vm1172
    %v1174 = vsel %vm1173, %v1166, %v1170
    %v1175 = vand.u32 2147483647, %v1165
    %vm1176 = vcmp.eq.f32.partialorder %v1175, 8.507059e+37
    %v1177 = vand.u32 %v1165, 2147483648
    %v1178 = vor.u32 1.1754944e-38, %v1177
    %v1179 = vsel %vm1176, %v1178, %v1174
    %v1180 = vmul.f32 1.0, %v1179
    %v1181 = vmul.f32 %v1115, %v1180
    %v1182 = vmul.f32 %v1116, %v1180
    %v1183 = vadd.f32 %v1061, %v1181
    %v1184 = vadd.f32 %v1062, %v1182
    %v1185 = vsel %vm1101, -inf, %v1063
    %v1186 = vsel %vm1102, -inf, %v1064
    %v1187 = vsel %vm1103, -inf, %v1065
    %v1188 = vsel %vm1104, -inf, %v1066
    %v1189 = vsel %vm456, %v1185, -inf
    %v1190 = vsel %vm456, %v1186, -inf
    %v1191 = vsel %vm456, %v1187, -inf
    %v1192 = vsel %vm456, %v1188, -inf
    %v1193 = vmax.f32 %v1189, %v1190
    %v1194 = vmax.f32 %v1191, %v1192
    %v1195 = vmax.f32 %v1193, %v1194
    %v1196 = vrot.slane %v1195, 4
    %v1197 = vmax.f32 %v1195, %v1196
    %v1198 = vrot.slane %v1197, 2
    %v1199 = vmax.f32 %v1197, %v1198
    %v1200 = vrot.slane %v1199, 1
    %v1201 = vmax.f32 %v1199, %v1200
    %vm1202 = vcmp.eq.f32.partialorder %v1185, %v1201
    %vm1203 = vcmp.eq.f32.partialorder %v1186, %v1201
    %vm1204 = vcmp.eq.f32.partialorder %v1187, %v1201
    %vm1205 = vcmp.eq.f32.partialorder %v1188, %v1201
    %v1206 = vsel %vm1202, %v449, 32.0
    %v1207 = vsel %vm1203, %v450, 32.0
    %v1208 = vsel %vm1204, %v451, 32.0
    %v1209 = vsel %vm1205, %v452, 32.0
    %v1210 = vsel %vm456, %v1206, inf
    %v1211 = vsel %vm456, %v1207, inf
    %v1212 = vsel %vm456, %v1208, inf
    %v1213 = vsel %vm456, %v1209, inf
    %v1214 = vmin.f32 %v1210, %v1211
    %v1215 = vmin.f32 %v1212, %v1213
    %v1216 = vmin.f32 %v1214, %v1215
    %v1217 = vrot.slane %v1216, 4
    %v1218 = vmin.f32 %v1216, %v1217
    %v1219 = vrot.slane %v1218, 2
    %v1220 = vmin.f32 %v1218, %v1219
    %v1221 = vrot.slane %v1220, 1
    %v1222 = vmin.f32 %v1220, %v1221
    %vm1223 = vcmp.eq.f32.partialorder %v449, %v1222
    %vm1224 = vcmp.eq.f32.partialorder %v450, %v1222
    %vm1225 = vcmp.eq.f32.partialorder %v451, %v1222
    %vm1226 = vcmp.eq.f32.partialorder %v452, %v1222
    %1228 = vset.pattern.permute.xlu0 0
    %1229 = vperm.xlu0 %1228, %v1222
    %v1230 = vpop.permute.xlu0 %1229
    %vm1232 = vcmp.eq.f32.partialorder %v455, %v1230
    %vm1233 = vcmp.eq.s32.totalorder %v445, 6
    %vm1234 = vcmp.eq.s32.totalorder %v446, 6
    %v1235 = vsel %vm1233, 1, 0
    %v1236 = vsel %vm1234, 1, 0
    %v1237 = vcvt.s32.f32 %v1235
    %v1238 = vcvt.s32.f32 %v1236
    %vm1239 = vcmp.eq.s32.totalorder %v454, 6
    %v1240 = vsel %vm1239, 1, 0
    %v1241 = vcvt.s32.f32 %v1240
    %v1242 = vsel %vm1232, 1, 0
    %v1243 = vcvt.s32.f32 %v1242
    %v1244 = vmul.f32 %v1237, %v1243
    %v1245 = vmul.f32 %v1238, %v1243
    %v1246 = vadd.f32 %v1124, %v1244
    %v1247 = vadd.f32 %v1125, %v1245
    %v1248 = vsel %vm1223, 1, 0
    %v1249 = vsel %vm1224, 1, 0
    %v1250 = vsel %vm1225, 1, 0
    %v1251 = vsel %vm1226, 1, 0
    %v1252 = vcvt.s32.f32 %v1248
    %v1253 = vcvt.s32.f32 %v1249
    %v1254 = vcvt.s32.f32 %v1250
    %v1255 = vcvt.s32.f32 %v1251
    %1257 = vset.pattern.permute.xlu0 0
    %1258 = vperm.xlu0 %1257, %v1252
    %v1259 = vpop.permute.xlu0 %1258
    %1262 = vset.pattern.permute.xlu0 0
    %1263 = vperm.xlu0 %1262, %v1253
    %v1264 = vpop.permute.xlu0 %1263
    %1267 = vset.pattern.permute.xlu0 0
    %1268 = vperm.xlu0 %1267, %v1254
    %v1269 = vpop.permute.xlu0 %1268
    %1272 = vset.pattern.permute.xlu0 0
    %1273 = vperm.xlu0 %1272, %v1255
    %v1274 = vpop.permute.xlu0 %1273
    %v1276 = vmul.f32 %v1259, %v1241
    %v1277 = vmul.f32 %v1264, %v1241
    %v1278 = vmul.f32 %v1269, %v1241
    %v1279 = vmul.f32 %v1274, %v1241
    %v1280 = vadd.f32 %v1158, %v1276
    %v1281 = vadd.f32 %v1159, %v1277
    %v1282 = vadd.f32 %v1160, %v1278
    %v1283 = vadd.f32 %v1161, %v1279
    %v1284 = vsub.f32 0.0, %v1201
    %v1285 = vmul.f32 %v1284, 1.442695
    %v1286 = vpow.pop %v1285
    %v1287 = vadd.f32 %v1286, 1.0
    %v1288 = vrcp.pop %v1287
    %v1289 = vmul.f32 %v1287, %v1288
    %v1290 = vsub.f32 1.0, %v1289
    %v1291 = vmul.f32 %v1288, %v1290
    %v1292 = vadd.f32 %v1288, %v1291
    %vm1293 = vweird.f32 %v1287
    %vm1294 = vweird.f32 %v1288
    %vm1295 = vmor %vm1293, %vm1294
    %v1296 = vsel %vm1295, %v1288, %v1292
    %v1297 = vand.u32 2147483647, %v1287
    %vm1298 = vcmp.eq.f32.partialorder %v1297, 8.507059e+37
    %v1299 = vand.u32 %v1287, 2147483648
    %v1300 = vor.u32 1.1754944e-38, %v1299
    %v1301 = vsel %vm1298, %v1300, %v1296
    %v1302 = vmul.f32 1.0, %v1301
    %v1303 = vmul.f32 %v1237, %v1302
    %v1304 = vmul.f32 %v1238, %v1302
    %v1305 = vadd.f32 %v1183, %v1303
    %v1306 = vadd.f32 %v1184, %v1304
    %v1307 = vsel %vm1223, -inf, %v1185
    %v1308 = vsel %vm1224, -inf, %v1186
    %v1309 = vsel %vm1225, -inf, %v1187
    %v1310 = vsel %vm1226, -inf, %v1188
    %v1311 = vsel %vm456, %v1307, -inf
    %v1312 = vsel %vm456, %v1308, -inf
    %v1313 = vsel %vm456, %v1309, -inf
    %v1314 = vsel %vm456, %v1310, -inf
    %v1315 = vmax.f32 %v1311, %v1312
    %v1316 = vmax.f32 %v1313, %v1314
    %v1317 = vmax.f32 %v1315, %v1316
    %v1318 = vrot.slane %v1317, 4
    %v1319 = vmax.f32 %v1317, %v1318
    %v1320 = vrot.slane %v1319, 2
    %v1321 = vmax.f32 %v1319, %v1320
    %v1322 = vrot.slane %v1321, 1
    %v1323 = vmax.f32 %v1321, %v1322
    %vm1324 = vcmp.eq.f32.partialorder %v1307, %v1323
    %vm1325 = vcmp.eq.f32.partialorder %v1308, %v1323
    %vm1326 = vcmp.eq.f32.partialorder %v1309, %v1323
    %vm1327 = vcmp.eq.f32.partialorder %v1310, %v1323
    %v1328 = vsel %vm1324, %v449, 32.0
    %v1329 = vsel %vm1325, %v450, 32.0
    %v1330 = vsel %vm1326, %v451, 32.0
    %v1331 = vsel %vm1327, %v452, 32.0
    %v1332 = vsel %vm456, %v1328, inf
    %v1333 = vsel %vm456, %v1329, inf
    %v1334 = vsel %vm456, %v1330, inf
    %v1335 = vsel %vm456, %v1331, inf
    %v1336 = vmin.f32 %v1332, %v1333
    %v1337 = vmin.f32 %v1334, %v1335
    %v1338 = vmin.f32 %v1336, %v1337
    %v1339 = vrot.slane %v1338, 4
    %v1340 = vmin.f32 %v1338, %v1339
    %v1341 = vrot.slane %v1340, 2
    %v1342 = vmin.f32 %v1340, %v1341
    %v1343 = vrot.slane %v1342, 1
    %v1344 = vmin.f32 %v1342, %v1343
    %vm1345 = vcmp.eq.f32.partialorder %v449, %v1344
    %vm1346 = vcmp.eq.f32.partialorder %v450, %v1344
    %vm1347 = vcmp.eq.f32.partialorder %v451, %v1344
    %vm1348 = vcmp.eq.f32.partialorder %v452, %v1344
    %1350 = vset.pattern.permute.xlu0 0
    %1351 = vperm.xlu0 %1350, %v1344
    %v1352 = vpop.permute.xlu0 %1351
    %vm1354 = vcmp.eq.f32.partialorder %v455, %v1352
    %vm1355 = vcmp.eq.s32.totalorder %v445, 7
    %vm1356 = vcmp.eq.s32.totalorder %v446, 7
    %v1357 = vsel %vm1355, 1, 0
    %v1358 = vsel %vm1356, 1, 0
    %v1359 = vcvt.s32.f32 %v1357
    %v1360 = vcvt.s32.f32 %v1358
    %vm1361 = vcmp.eq.s32.totalorder %v454, 7
    %v1362 = vsel %vm1361, 1, 0
    %v1363 = vcvt.s32.f32 %v1362
    %v1364 = vsel %vm1354, 1, 0
    %v1365 = vcvt.s32.f32 %v1364
    %v1366 = vmul.f32 %v1359, %v1365
    %v1367 = vmul.f32 %v1360, %v1365
    %v1368 = vadd.f32 %v1246, %v1366
    %v1369 = vadd.f32 %v1247, %v1367
    %v1370 = vsel %vm1345, 1, 0
    %v1371 = vsel %vm1346, 1, 0
    %v1372 = vsel %vm1347, 1, 0
    %v1373 = vsel %vm1348, 1, 0
    %v1374 = vcvt.s32.f32 %v1370
    %v1375 = vcvt.s32.f32 %v1371
    %v1376 = vcvt.s32.f32 %v1372
    %v1377 = vcvt.s32.f32 %v1373
    %1379 = vset.pattern.permute.xlu0 0
    %1380 = vperm.xlu0 %1379, %v1374
    %v1381 = vpop.permute.xlu0 %1380
    %1384 = vset.pattern.permute.xlu0 0
    %1385 = vperm.xlu0 %1384, %v1375
    %v1386 = vpop.permute.xlu0 %1385
    %1389 = vset.pattern.permute.xlu0 0
    %1390 = vperm.xlu0 %1389, %v1376
    %v1391 = vpop.permute.xlu0 %1390
    %1394 = vset.pattern.permute.xlu0 0
    %1395 = vperm.xlu0 %1394, %v1377
    %v1396 = vpop.permute.xlu0 %1395
    %v1398 = vmul.f32 %v1381, %v1363
    %v1399 = vmul.f32 %v1386, %v1363
    %v1400 = vmul.f32 %v1391, %v1363
    %v1401 = vmul.f32 %v1396, %v1363
    %v1402 = vadd.f32 %v1280, %v1398
    %v1403 = vadd.f32 %v1281, %v1399
    %v1404 = vadd.f32 %v1282, %v1400
    %v1405 = vadd.f32 %v1283, %v1401
    %v1406 = vsub.f32 0.0, %v1323
    %v1407 = vmul.f32 %v1406, 1.442695
    %v1408 = vpow.pop %v1407
    %v1409 = vadd.f32 %v1408, 1.0
    %v1410 = vrcp.pop %v1409
    %v1411 = vmul.f32 %v1409, %v1410
    %v1412 = vsub.f32 1.0, %v1411
    %v1413 = vmul.f32 %v1410, %v1412
    %v1414 = vadd.f32 %v1410, %v1413
    %vm1415 = vweird.f32 %v1409
    %vm1416 = vweird.f32 %v1410
    %vm1417 = vmor %vm1415, %vm1416
    %v1418 = vsel %vm1417, %v1410, %v1414
    %v1419 = vand.u32 2147483647, %v1409
    %vm1420 = vcmp.eq.f32.partialorder %v1419, 8.507059e+37
    %v1421 = vand.u32 %v1409, 2147483648
    %v1422 = vor.u32 1.1754944e-38, %v1421
    %v1423 = vsel %vm1420, %v1422, %v1418
    %v1424 = vmul.f32 1.0, %v1423
    %v1425 = vmul.f32 %v1359, %v1424
    %v1426 = vmul.f32 %v1360, %v1424
    %v1427 = vadd.f32 %v1305, %v1425
    %v1428 = vadd.f32 %v1306, %v1426
    %v1429 = vsel %vm1345, -inf, %v1307
    %v1430 = vsel %vm1346, -inf, %v1308
    %v1431 = vsel %vm1347, -inf, %v1309
    %v1432 = vsel %vm1348, -inf, %v1310
    %v1433 = vsel %vm456, %v1429, -inf
    %v1434 = vsel %vm456, %v1430, -inf
    %v1435 = vsel %vm456, %v1431, -inf
    %v1436 = vsel %vm456, %v1432, -inf
    %v1437 = vmax.f32 %v1433, %v1434
    %v1438 = vmax.f32 %v1435, %v1436
    %v1439 = vmax.f32 %v1437, %v1438
    %v1440 = vrot.slane %v1439, 4
    %v1441 = vmax.f32 %v1439, %v1440
    %v1442 = vrot.slane %v1441, 2
    %v1443 = vmax.f32 %v1441, %v1442
    %v1444 = vrot.slane %v1443, 1
    %v1445 = vmax.f32 %v1443, %v1444
    %vm1446 = vcmp.eq.f32.partialorder %v1429, %v1445
    %vm1447 = vcmp.eq.f32.partialorder %v1430, %v1445
    %vm1448 = vcmp.eq.f32.partialorder %v1431, %v1445
    %vm1449 = vcmp.eq.f32.partialorder %v1432, %v1445
    %v1450 = vsel %vm1446, %v449, 32.0
    %v1451 = vsel %vm1447, %v450, 32.0
    %v1452 = vsel %vm1448, %v451, 32.0
    %v1453 = vsel %vm1449, %v452, 32.0
    %v1454 = vsel %vm456, %v1450, inf
    %v1455 = vsel %vm456, %v1451, inf
    %v1456 = vsel %vm456, %v1452, inf
    %v1457 = vsel %vm456, %v1453, inf
    %v1458 = vmin.f32 %v1454, %v1455
    %v1459 = vmin.f32 %v1456, %v1457
    %v1460 = vmin.f32 %v1458, %v1459
    %v1461 = vrot.slane %v1460, 4
    %v1462 = vmin.f32 %v1460, %v1461
    %v1463 = vrot.slane %v1462, 2
    %v1464 = vmin.f32 %v1462, %v1463
    %v1465 = vrot.slane %v1464, 1
    %v1466 = vmin.f32 %v1464, %v1465
    %vm1467 = vcmp.eq.f32.partialorder %v449, %v1466
    %vm1468 = vcmp.eq.f32.partialorder %v450, %v1466
    %vm1469 = vcmp.eq.f32.partialorder %v451, %v1466
    %vm1470 = vcmp.eq.f32.partialorder %v452, %v1466
    %1472 = vset.pattern.permute.xlu0 0
    %1473 = vperm.xlu0 %1472, %v1466
    %v1474 = vpop.permute.xlu0 %1473
    %vm1476 = vcmp.eq.f32.partialorder %v455, %v1474
    %vm1477 = vcmp.eq.s32.totalorder %v445, 8
    %vm1478 = vcmp.eq.s32.totalorder %v446, 8
    %v1479 = vsel %vm1477, 1, 0
    %v1480 = vsel %vm1478, 1, 0
    %v1481 = vcvt.s32.f32 %v1479
    %v1482 = vcvt.s32.f32 %v1480
    %vm1483 = vcmp.eq.s32.totalorder %v454, 8
    %v1484 = vsel %vm1483, 1, 0
    %v1485 = vcvt.s32.f32 %v1484
    %v1486 = vsel %vm1476, 1, 0
    %v1487 = vcvt.s32.f32 %v1486
    %v1488 = vmul.f32 %v1481, %v1487
    %v1489 = vmul.f32 %v1482, %v1487
    %v1490 = vadd.f32 %v1368, %v1488
    %v1491 = vadd.f32 %v1369, %v1489
    %v1492 = vsel %vm1467, 1, 0
    %v1493 = vsel %vm1468, 1, 0
    %v1494 = vsel %vm1469, 1, 0
    %v1495 = vsel %vm1470, 1, 0
    %v1496 = vcvt.s32.f32 %v1492
    %v1497 = vcvt.s32.f32 %v1493
    %v1498 = vcvt.s32.f32 %v1494
    %v1499 = vcvt.s32.f32 %v1495
    %1501 = vset.pattern.permute.xlu0 0
    %1502 = vperm.xlu0 %1501, %v1496
    %v1503 = vpop.permute.xlu0 %1502
    %1506 = vset.pattern.permute.xlu0 0
    %1507 = vperm.xlu0 %1506, %v1497
    %v1508 = vpop.permute.xlu0 %1507
    %1511 = vset.pattern.permute.xlu0 0
    %1512 = vperm.xlu0 %1511, %v1498
    %v1513 = vpop.permute.xlu0 %1512
    %1516 = vset.pattern.permute.xlu0 0
    %1517 = vperm.xlu0 %1516, %v1499
    %v1518 = vpop.permute.xlu0 %1517
    %v1520 = vmul.f32 %v1503, %v1485
    %v1521 = vmul.f32 %v1508, %v1485
    %v1522 = vmul.f32 %v1513, %v1485
    %v1523 = vmul.f32 %v1518, %v1485
    %v1524 = vadd.f32 %v1402, %v1520
    %v1525 = vadd.f32 %v1403, %v1521
    %v1526 = vadd.f32 %v1404, %v1522
    %v1527 = vadd.f32 %v1405, %v1523
    %v1528 = vsub.f32 0.0, %v1445
    %v1529 = vmul.f32 %v1528, 1.442695
    %v1530 = vpow.pop %v1529
    %v1531 = vadd.f32 %v1530, 1.0
    %v1532 = vrcp.pop %v1531
    %v1533 = vmul.f32 %v1531, %v1532
    %v1534 = vsub.f32 1.0, %v1533
    %v1535 = vmul.f32 %v1532, %v1534
    %v1536 = vadd.f32 %v1532, %v1535
    %vm1537 = vweird.f32 %v1531
    %vm1538 = vweird.f32 %v1532
    %vm1539 = vmor %vm1537, %vm1538
    %v1540 = vsel %vm1539, %v1532, %v1536
    %v1541 = vand.u32 2147483647, %v1531
    %vm1542 = vcmp.eq.f32.partialorder %v1541, 8.507059e+37
    %v1543 = vand.u32 %v1531, 2147483648
    %v1544 = vor.u32 1.1754944e-38, %v1543
    %v1545 = vsel %vm1542, %v1544, %v1540
    %v1546 = vmul.f32 1.0, %v1545
    %v1547 = vmul.f32 %v1481, %v1546
    %v1548 = vmul.f32 %v1482, %v1546
    %v1549 = vadd.f32 %v1427, %v1547
    %v1550 = vadd.f32 %v1428, %v1548
    %v1551 = vsel %vm1467, -inf, %v1429
    %v1552 = vsel %vm1468, -inf, %v1430
    %v1553 = vsel %vm1469, -inf, %v1431
    %v1554 = vsel %vm1470, -inf, %v1432
    %v1555 = vsel %vm456, %v1551, -inf
    %v1556 = vsel %vm456, %v1552, -inf
    %v1557 = vsel %vm456, %v1553, -inf
    %v1558 = vsel %vm456, %v1554, -inf
    %v1559 = vmax.f32 %v1555, %v1556
    %v1560 = vmax.f32 %v1557, %v1558
    %v1561 = vmax.f32 %v1559, %v1560
    %v1562 = vrot.slane %v1561, 4
    %v1563 = vmax.f32 %v1561, %v1562
    %v1564 = vrot.slane %v1563, 2
    %v1565 = vmax.f32 %v1563, %v1564
    %v1566 = vrot.slane %v1565, 1
    %v1567 = vmax.f32 %v1565, %v1566
    %vm1568 = vcmp.eq.f32.partialorder %v1551, %v1567
    %vm1569 = vcmp.eq.f32.partialorder %v1552, %v1567
    %vm1570 = vcmp.eq.f32.partialorder %v1553, %v1567
    %vm1571 = vcmp.eq.f32.partialorder %v1554, %v1567
    %v1572 = vsel %vm1568, %v449, 32.0
    %v1573 = vsel %vm1569, %v450, 32.0
    %v1574 = vsel %vm1570, %v451, 32.0
    %v1575 = vsel %vm1571, %v452, 32.0
    %v1576 = vsel %vm456, %v1572, inf
    %v1577 = vsel %vm456, %v1573, inf
    %v1578 = vsel %vm456, %v1574, inf
    %v1579 = vsel %vm456, %v1575, inf
    %v1580 = vmin.f32 %v1576, %v1577
    %v1581 = vmin.f32 %v1578, %v1579
    %v1582 = vmin.f32 %v1580, %v1581
    %v1583 = vrot.slane %v1582, 4
    %v1584 = vmin.f32 %v1582, %v1583
    %v1585 = vrot.slane %v1584, 2
    %v1586 = vmin.f32 %v1584, %v1585
    %v1587 = vrot.slane %v1586, 1
    %v1588 = vmin.f32 %v1586, %v1587
    %vm1589 = vcmp.eq.f32.partialorder %v449, %v1588
    %vm1590 = vcmp.eq.f32.partialorder %v450, %v1588
    %vm1591 = vcmp.eq.f32.partialorder %v451, %v1588
    %vm1592 = vcmp.eq.f32.partialorder %v452, %v1588
    %1594 = vset.pattern.permute.xlu0 0
    %1595 = vperm.xlu0 %1594, %v1588
    %v1596 = vpop.permute.xlu0 %1595
    %vm1598 = vcmp.eq.f32.partialorder %v455, %v1596
    %vm1599 = vcmp.eq.s32.totalorder %v445, 9
    %vm1600 = vcmp.eq.s32.totalorder %v446, 9
    %v1601 = vsel %vm1599, 1, 0
    %v1602 = vsel %vm1600, 1, 0
    %v1603 = vcvt.s32.f32 %v1601
    %v1604 = vcvt.s32.f32 %v1602
    %vm1605 = vcmp.eq.s32.totalorder %v454, 9
    %v1606 = vsel %vm1605, 1, 0
    %v1607 = vcvt.s32.f32 %v1606
    %v1608 = vsel %vm1598, 1, 0
    %v1609 = vcvt.s32.f32 %v1608
    %v1610 = vmul.f32 %v1603, %v1609
    %v1611 = vmul.f32 %v1604, %v1609
    %v1612 = vadd.f32 %v1490, %v1610
    %v1613 = vadd.f32 %v1491, %v1611
    %v1614 = vsel %vm1589, 1, 0
    %v1615 = vsel %vm1590, 1, 0
    %v1616 = vsel %vm1591, 1, 0
    %v1617 = vsel %vm1592, 1, 0
    %v1618 = vcvt.s32.f32 %v1614
    %v1619 = vcvt.s32.f32 %v1615
    %v1620 = vcvt.s32.f32 %v1616
    %v1621 = vcvt.s32.f32 %v1617
    %1623 = vset.pattern.permute.xlu0 0
    %1624 = vperm.xlu0 %1623, %v1618
    %v1625 = vpop.permute.xlu0 %1624
    %1628 = vset.pattern.permute.xlu0 0
    %1629 = vperm.xlu0 %1628, %v1619
    %v1630 = vpop.permute.xlu0 %1629
    %1633 = vset.pattern.permute.xlu0 0
    %1634 = vperm.xlu0 %1633, %v1620
    %v1635 = vpop.permute.xlu0 %1634
    %1638 = vset.pattern.permute.xlu0 0
    %1639 = vperm.xlu0 %1638, %v1621
    %v1640 = vpop.permute.xlu0 %1639
    %v1642 = vmul.f32 %v1625, %v1607
    %v1643 = vmul.f32 %v1630, %v1607
    %v1644 = vmul.f32 %v1635, %v1607
    %v1645 = vmul.f32 %v1640, %v1607
    %v1646 = vadd.f32 %v1524, %v1642
    %v1647 = vadd.f32 %v1525, %v1643
    %v1648 = vadd.f32 %v1526, %v1644
    %v1649 = vadd.f32 %v1527, %v1645
    %v1650 = vsub.f32 0.0, %v1567
    %v1651 = vmul.f32 %v1650, 1.442695
    %v1652 = vpow.pop %v1651
    %v1653 = vadd.f32 %v1652, 1.0
    %v1654 = vrcp.pop %v1653
    %v1655 = vmul.f32 %v1653, %v1654
    %v1656 = vsub.f32 1.0, %v1655
    %v1657 = vmul.f32 %v1654, %v1656
    %v1658 = vadd.f32 %v1654, %v1657
    %vm1659 = vweird.f32 %v1653
    %vm1660 = vweird.f32 %v1654
    %vm1661 = vmor %vm1659, %vm1660
    %v1662 = vsel %vm1661, %v1654, %v1658
    %v1663 = vand.u32 2147483647, %v1653
    %vm1664 = vcmp.eq.f32.partialorder %v1663, 8.507059e+37
    %v1665 = vand.u32 %v1653, 2147483648
    %v1666 = vor.u32 1.1754944e-38, %v1665
    %v1667 = vsel %vm1664, %v1666, %v1662
    %v1668 = vmul.f32 1.0, %v1667
    %v1669 = vmul.f32 %v1603, %v1668
    %v1670 = vmul.f32 %v1604, %v1668
    %v1671 = vadd.f32 %v1549, %v1669
    %v1672 = vadd.f32 %v1550, %v1670
    %v1673 = vsel %vm1589, -inf, %v1551
    %v1674 = vsel %vm1590, -inf, %v1552
    %v1675 = vsel %vm1591, -inf, %v1553
    %v1676 = vsel %vm1592, -inf, %v1554
    %v1677 = vsel %vm456, %v1673, -inf
    %v1678 = vsel %vm456, %v1674, -inf
    %v1679 = vsel %vm456, %v1675, -inf
    %v1680 = vsel %vm456, %v1676, -inf
    %v1681 = vmax.f32 %v1677, %v1678
    %v1682 = vmax.f32 %v1679, %v1680
    %v1683 = vmax.f32 %v1681, %v1682
    %v1684 = vrot.slane %v1683, 4
    %v1685 = vmax.f32 %v1683, %v1684
    %v1686 = vrot.slane %v1685, 2
    %v1687 = vmax.f32 %v1685, %v1686
    %v1688 = vrot.slane %v1687, 1
    %v1689 = vmax.f32 %v1687, %v1688
    %vm1690 = vcmp.eq.f32.partialorder %v1673, %v1689
    %vm1691 = vcmp.eq.f32.partialorder %v1674, %v1689
    %vm1692 = vcmp.eq.f32.partialorder %v1675, %v1689
    %vm1693 = vcmp.eq.f32.partialorder %v1676, %v1689
    %v1694 = vsel %vm1690, %v449, 32.0
    %v1695 = vsel %vm1691, %v450, 32.0
    %v1696 = vsel %vm1692, %v451, 32.0
    %v1697 = vsel %vm1693, %v452, 32.0
    %v1698 = vsel %vm456, %v1694, inf
    %v1699 = vsel %vm456, %v1695, inf
    %v1700 = vsel %vm456, %v1696, inf
    %v1701 = vsel %vm456, %v1697, inf
    %v1702 = vmin.f32 %v1698, %v1699
    %v1703 = vmin.f32 %v1700, %v1701
    %v1704 = vmin.f32 %v1702, %v1703
    %v1705 = vrot.slane %v1704, 4
    %v1706 = vmin.f32 %v1704, %v1705
    %v1707 = vrot.slane %v1706, 2
    %v1708 = vmin.f32 %v1706, %v1707
    %v1709 = vrot.slane %v1708, 1
    %v1710 = vmin.f32 %v1708, %v1709
    %vm1711 = vcmp.eq.f32.partialorder %v449, %v1710
    %vm1712 = vcmp.eq.f32.partialorder %v450, %v1710
    %vm1713 = vcmp.eq.f32.partialorder %v451, %v1710
    %vm1714 = vcmp.eq.f32.partialorder %v452, %v1710
    %1716 = vset.pattern.permute.xlu0 0
    %1717 = vperm.xlu0 %1716, %v1710
    %v1718 = vpop.permute.xlu0 %1717
    %vm1720 = vcmp.eq.f32.partialorder %v455, %v1718
    %vm1721 = vcmp.eq.s32.totalorder %v445, 10
    %vm1722 = vcmp.eq.s32.totalorder %v446, 10
    %v1723 = vsel %vm1721, 1, 0
    %v1724 = vsel %vm1722, 1, 0
    %v1725 = vcvt.s32.f32 %v1723
    %v1726 = vcvt.s32.f32 %v1724
    %vm1727 = vcmp.eq.s32.totalorder %v454, 10
    %v1728 = vsel %vm1727, 1, 0
    %v1729 = vcvt.s32.f32 %v1728
    %v1730 = vsel %vm1720, 1, 0
    %v1731 = vcvt.s32.f32 %v1730
    %v1732 = vmul.f32 %v1725, %v1731
    %v1733 = vmul.f32 %v1726, %v1731
    %v1734 = vadd.f32 %v1612, %v1732
    %v1735 = vadd.f32 %v1613, %v1733
    %v1736 = vsel %vm1711, 1, 0
    %v1737 = vsel %vm1712, 1, 0
    %v1738 = vsel %vm1713, 1, 0
    %v1739 = vsel %vm1714, 1, 0
    %v1740 = vcvt.s32.f32 %v1736
    %v1741 = vcvt.s32.f32 %v1737
    %v1742 = vcvt.s32.f32 %v1738
    %v1743 = vcvt.s32.f32 %v1739
    %1745 = vset.pattern.permute.xlu0 0
    %1746 = vperm.xlu0 %1745, %v1740
    %v1747 = vpop.permute.xlu0 %1746
    %1750 = vset.pattern.permute.xlu0 0
    %1751 = vperm.xlu0 %1750, %v1741
    %v1752 = vpop.permute.xlu0 %1751
    %1755 = vset.pattern.permute.xlu0 0
    %1756 = vperm.xlu0 %1755, %v1742
    %v1757 = vpop.permute.xlu0 %1756
    %1760 = vset.pattern.permute.xlu0 0
    %1761 = vperm.xlu0 %1760, %v1743
    %v1762 = vpop.permute.xlu0 %1761
    %v1764 = vmul.f32 %v1747, %v1729
    %v1765 = vmul.f32 %v1752, %v1729
    %v1766 = vmul.f32 %v1757, %v1729
    %v1767 = vmul.f32 %v1762, %v1729
    %v1768 = vadd.f32 %v1646, %v1764
    %v1769 = vadd.f32 %v1647, %v1765
    %v1770 = vadd.f32 %v1648, %v1766
    %v1771 = vadd.f32 %v1649, %v1767
    %v1772 = vsub.f32 0.0, %v1689
    %v1773 = vmul.f32 %v1772, 1.442695
    %v1774 = vpow.pop %v1773
    %v1775 = vadd.f32 %v1774, 1.0
    %v1776 = vrcp.pop %v1775
    %v1777 = vmul.f32 %v1775, %v1776
    %v1778 = vsub.f32 1.0, %v1777
    %v1779 = vmul.f32 %v1776, %v1778
    %v1780 = vadd.f32 %v1776, %v1779
    %vm1781 = vweird.f32 %v1775
    %vm1782 = vweird.f32 %v1776
    %vm1783 = vmor %vm1781, %vm1782
    %v1784 = vsel %vm1783, %v1776, %v1780
    %v1785 = vand.u32 2147483647, %v1775
    %vm1786 = vcmp.eq.f32.partialorder %v1785, 8.507059e+37
    %v1787 = vand.u32 %v1775, 2147483648
    %v1788 = vor.u32 1.1754944e-38, %v1787
    %v1789 = vsel %vm1786, %v1788, %v1784
    %v1790 = vmul.f32 1.0, %v1789
    %v1791 = vmul.f32 %v1725, %v1790
    %v1792 = vmul.f32 %v1726, %v1790
    %v1793 = vadd.f32 %v1671, %v1791
    %v1794 = vadd.f32 %v1672, %v1792
    %v1795 = vsel %vm1711, -inf, %v1673
    %v1796 = vsel %vm1712, -inf, %v1674
    %v1797 = vsel %vm1713, -inf, %v1675
    %v1798 = vsel %vm1714, -inf, %v1676
    %v1799 = vsel %vm456, %v1795, -inf
    %v1800 = vsel %vm456, %v1796, -inf
    %v1801 = vsel %vm456, %v1797, -inf
    %v1802 = vsel %vm456, %v1798, -inf
    %v1803 = vmax.f32 %v1799, %v1800
    %v1804 = vmax.f32 %v1801, %v1802
    %v1805 = vmax.f32 %v1803, %v1804
    %v1806 = vrot.slane %v1805, 4
    %v1807 = vmax.f32 %v1805, %v1806
    %v1808 = vrot.slane %v1807, 2
    %v1809 = vmax.f32 %v1807, %v1808
    %v1810 = vrot.slane %v1809, 1
    %v1811 = vmax.f32 %v1809, %v1810
    %vm1812 = vcmp.eq.f32.partialorder %v1795, %v1811
    %vm1813 = vcmp.eq.f32.partialorder %v1796, %v1811
    %vm1814 = vcmp.eq.f32.partialorder %v1797, %v1811
    %vm1815 = vcmp.eq.f32.partialorder %v1798, %v1811
    %v1816 = vsel %vm1812, %v449, 32.0
    %v1817 = vsel %vm1813, %v450, 32.0
    %v1818 = vsel %vm1814, %v451, 32.0
    %v1819 = vsel %vm1815, %v452, 32.0
    %v1820 = vsel %vm456, %v1816, inf
    %v1821 = vsel %vm456, %v1817, inf
    %v1822 = vsel %vm456, %v1818, inf
    %v1823 = vsel %vm456, %v1819, inf
    %v1824 = vmin.f32 %v1820, %v1821
    %v1825 = vmin.f32 %v1822, %v1823
    %v1826 = vmin.f32 %v1824, %v1825
    %v1827 = vrot.slane %v1826, 4
    %v1828 = vmin.f32 %v1826, %v1827
    %v1829 = vrot.slane %v1828, 2
    %v1830 = vmin.f32 %v1828, %v1829
    %v1831 = vrot.slane %v1830, 1
    %v1832 = vmin.f32 %v1830, %v1831
    %vm1833 = vcmp.eq.f32.partialorder %v449, %v1832
    %vm1834 = vcmp.eq.f32.partialorder %v450, %v1832
    %vm1835 = vcmp.eq.f32.partialorder %v451, %v1832
    %vm1836 = vcmp.eq.f32.partialorder %v452, %v1832
    %1838 = vset.pattern.permute.xlu0 0
    %1839 = vperm.xlu0 %1838, %v1832
    %v1840 = vpop.permute.xlu0 %1839
    %vm1842 = vcmp.eq.f32.partialorder %v455, %v1840
    %vm1843 = vcmp.eq.s32.totalorder %v445, 11
    %vm1844 = vcmp.eq.s32.totalorder %v446, 11
    %v1845 = vsel %vm1843, 1, 0
    %v1846 = vsel %vm1844, 1, 0
    %v1847 = vcvt.s32.f32 %v1845
    %v1848 = vcvt.s32.f32 %v1846
    %vm1849 = vcmp.eq.s32.totalorder %v454, 11
    %v1850 = vsel %vm1849, 1, 0
    %v1851 = vcvt.s32.f32 %v1850
    %v1852 = vsel %vm1842, 1, 0
    %v1853 = vcvt.s32.f32 %v1852
    %v1854 = vmul.f32 %v1847, %v1853
    %v1855 = vmul.f32 %v1848, %v1853
    %v1856 = vadd.f32 %v1734, %v1854
    %v1857 = vadd.f32 %v1735, %v1855
    %v1858 = vsel %vm1833, 1, 0
    %v1859 = vsel %vm1834, 1, 0
    %v1860 = vsel %vm1835, 1, 0
    %v1861 = vsel %vm1836, 1, 0
    %v1862 = vcvt.s32.f32 %v1858
    %v1863 = vcvt.s32.f32 %v1859
    %v1864 = vcvt.s32.f32 %v1860
    %v1865 = vcvt.s32.f32 %v1861
    %1867 = vset.pattern.permute.xlu0 0
    %1868 = vperm.xlu0 %1867, %v1862
    %v1869 = vpop.permute.xlu0 %1868
    %1872 = vset.pattern.permute.xlu0 0
    %1873 = vperm.xlu0 %1872, %v1863
    %v1874 = vpop.permute.xlu0 %1873
    %1877 = vset.pattern.permute.xlu0 0
    %1878 = vperm.xlu0 %1877, %v1864
    %v1879 = vpop.permute.xlu0 %1878
    %1882 = vset.pattern.permute.xlu0 0
    %1883 = vperm.xlu0 %1882, %v1865
    %v1884 = vpop.permute.xlu0 %1883
    %v1886 = vmul.f32 %v1869, %v1851
    %v1887 = vmul.f32 %v1874, %v1851
    %v1888 = vmul.f32 %v1879, %v1851
    %v1889 = vmul.f32 %v1884, %v1851
    %v1890 = vadd.f32 %v1768, %v1886
    %v1891 = vadd.f32 %v1769, %v1887
    %v1892 = vadd.f32 %v1770, %v1888
    %v1893 = vadd.f32 %v1771, %v1889
    %v1894 = vsub.f32 0.0, %v1811
    %v1895 = vmul.f32 %v1894, 1.442695
    %v1896 = vpow.pop %v1895
    %v1897 = vadd.f32 %v1896, 1.0
    %v1898 = vrcp.pop %v1897
    %v1899 = vmul.f32 %v1897, %v1898
    %v1900 = vsub.f32 1.0, %v1899
    %v1901 = vmul.f32 %v1898, %v1900
    %v1902 = vadd.f32 %v1898, %v1901
    %vm1903 = vweird.f32 %v1897
    %vm1904 = vweird.f32 %v1898
    %vm1905 = vmor %vm1903, %vm1904
    %v1906 = vsel %vm1905, %v1898, %v1902
    %v1907 = vand.u32 2147483647, %v1897
    %vm1908 = vcmp.eq.f32.partialorder %v1907, 8.507059e+37
    %v1909 = vand.u32 %v1897, 2147483648
    %v1910 = vor.u32 1.1754944e-38, %v1909
    %v1911 = vsel %vm1908, %v1910, %v1906
    %v1912 = vmul.f32 1.0, %v1911
    %v1913 = vmul.f32 %v1847, %v1912
    %v1914 = vmul.f32 %v1848, %v1912
    %v1915 = vadd.f32 %v1793, %v1913
    %v1916 = vadd.f32 %v1794, %v1914
    %v1917 = vsel %vm1833, -inf, %v1795
    %v1918 = vsel %vm1834, -inf, %v1796
    %v1919 = vsel %vm1835, -inf, %v1797
    %v1920 = vsel %vm1836, -inf, %v1798
    %v1921 = vsel %vm456, %v1917, -inf
    %v1922 = vsel %vm456, %v1918, -inf
    %v1923 = vsel %vm456, %v1919, -inf
    %v1924 = vsel %vm456, %v1920, -inf
    %v1925 = vmax.f32 %v1921, %v1922
    %v1926 = vmax.f32 %v1923, %v1924
    %v1927 = vmax.f32 %v1925, %v1926
    %v1928 = vrot.slane %v1927, 4
    %v1929 = vmax.f32 %v1927, %v1928
    %v1930 = vrot.slane %v1929, 2
    %v1931 = vmax.f32 %v1929, %v1930
    %v1932 = vrot.slane %v1931, 1
    %v1933 = vmax.f32 %v1931, %v1932
    %vm1934 = vcmp.eq.f32.partialorder %v1917, %v1933
    %vm1935 = vcmp.eq.f32.partialorder %v1918, %v1933
    %vm1936 = vcmp.eq.f32.partialorder %v1919, %v1933
    %vm1937 = vcmp.eq.f32.partialorder %v1920, %v1933
    %v1938 = vsel %vm1934, %v449, 32.0
    %v1939 = vsel %vm1935, %v450, 32.0
    %v1940 = vsel %vm1936, %v451, 32.0
    %v1941 = vsel %vm1937, %v452, 32.0
    %v1942 = vsel %vm456, %v1938, inf
    %v1943 = vsel %vm456, %v1939, inf
    %v1944 = vsel %vm456, %v1940, inf
    %v1945 = vsel %vm456, %v1941, inf
    %v1946 = vmin.f32 %v1942, %v1943
    %v1947 = vmin.f32 %v1944, %v1945
    %v1948 = vmin.f32 %v1946, %v1947
    %v1949 = vrot.slane %v1948, 4
    %v1950 = vmin.f32 %v1948, %v1949
    %v1951 = vrot.slane %v1950, 2
    %v1952 = vmin.f32 %v1950, %v1951
    %v1953 = vrot.slane %v1952, 1
    %v1954 = vmin.f32 %v1952, %v1953
    %vm1955 = vcmp.eq.f32.partialorder %v449, %v1954
    %vm1956 = vcmp.eq.f32.partialorder %v450, %v1954
    %vm1957 = vcmp.eq.f32.partialorder %v451, %v1954
    %vm1958 = vcmp.eq.f32.partialorder %v452, %v1954
    %1960 = vset.pattern.permute.xlu0 0
    %1961 = vperm.xlu0 %1960, %v1954
    %v1962 = vpop.permute.xlu0 %1961
    %vm1964 = vcmp.eq.f32.partialorder %v455, %v1962
    %vm1965 = vcmp.eq.s32.totalorder %v445, 12
    %vm1966 = vcmp.eq.s32.totalorder %v446, 12
    %v1967 = vsel %vm1965, 1, 0
    %v1968 = vsel %vm1966, 1, 0
    %v1969 = vcvt.s32.f32 %v1967
    %v1970 = vcvt.s32.f32 %v1968
    %vm1971 = vcmp.eq.s32.totalorder %v454, 12
    %v1972 = vsel %vm1971, 1, 0
    %v1973 = vcvt.s32.f32 %v1972
    %v1974 = vsel %vm1964, 1, 0
    %v1975 = vcvt.s32.f32 %v1974
    %v1976 = vmul.f32 %v1969, %v1975
    %v1977 = vmul.f32 %v1970, %v1975
    %v1978 = vadd.f32 %v1856, %v1976
    %v1979 = vadd.f32 %v1857, %v1977
    %v1980 = vsel %vm1955, 1, 0
    %v1981 = vsel %vm1956, 1, 0
    %v1982 = vsel %vm1957, 1, 0
    %v1983 = vsel %vm1958, 1, 0
    %v1984 = vcvt.s32.f32 %v1980
    %v1985 = vcvt.s32.f32 %v1981
    %v1986 = vcvt.s32.f32 %v1982
    %v1987 = vcvt.s32.f32 %v1983
    %1989 = vset.pattern.permute.xlu0 0
    %1990 = vperm.xlu0 %1989, %v1984
    %v1991 = vpop.permute.xlu0 %1990
    %1994 = vset.pattern.permute.xlu0 0
    %1995 = vperm.xlu0 %1994, %v1985
    %v1996 = vpop.permute.xlu0 %1995
    %1999 = vset.pattern.permute.xlu0 0
    %2000 = vperm.xlu0 %1999, %v1986
    %v2001 = vpop.permute.xlu0 %2000
    %2004 = vset.pattern.permute.xlu0 0
    %2005 = vperm.xlu0 %2004, %v1987
    %v2006 = vpop.permute.xlu0 %2005
    %v2008 = vmul.f32 %v1991, %v1973
    %v2009 = vmul.f32 %v1996, %v1973
    %v2010 = vmul.f32 %v2001, %v1973
    %v2011 = vmul.f32 %v2006, %v1973
    %v2012 = vadd.f32 %v1890, %v2008
    %v2013 = vadd.f32 %v1891, %v2009
    %v2014 = vadd.f32 %v1892, %v2010
    %v2015 = vadd.f32 %v1893, %v2011
    %v2016 = vsub.f32 0.0, %v1933
    %v2017 = vmul.f32 %v2016, 1.442695
    %v2018 = vpow.pop %v2017
    %v2019 = vadd.f32 %v2018, 1.0
    %v2020 = vrcp.pop %v2019
    %v2021 = vmul.f32 %v2019, %v2020
    %v2022 = vsub.f32 1.0, %v2021
    %v2023 = vmul.f32 %v2020, %v2022
    %v2024 = vadd.f32 %v2020, %v2023
    %vm2025 = vweird.f32 %v2019
    %vm2026 = vweird.f32 %v2020
    %vm2027 = vmor %vm2025, %vm2026
    %v2028 = vsel %vm2027, %v2020, %v2024
    %v2029 = vand.u32 2147483647, %v2019
    %vm2030 = vcmp.eq.f32.partialorder %v2029, 8.507059e+37
    %v2031 = vand.u32 %v2019, 2147483648
    %v2032 = vor.u32 1.1754944e-38, %v2031
    %v2033 = vsel %vm2030, %v2032, %v2028
    %v2034 = vmul.f32 1.0, %v2033
    %v2035 = vmul.f32 %v1969, %v2034
    %v2036 = vmul.f32 %v1970, %v2034
    %v2037 = vadd.f32 %v1915, %v2035
    %v2038 = vadd.f32 %v1916, %v2036
    %v2039 = vsel %vm1955, -inf, %v1917
    %v2040 = vsel %vm1956, -inf, %v1918
    %v2041 = vsel %vm1957, -inf, %v1919
    %v2042 = vsel %vm1958, -inf, %v1920
    %v2043 = vsel %vm456, %v2039, -inf
    %v2044 = vsel %vm456, %v2040, -inf
    %v2045 = vsel %vm456, %v2041, -inf
    %v2046 = vsel %vm456, %v2042, -inf
    %v2047 = vmax.f32 %v2043, %v2044
    %v2048 = vmax.f32 %v2045, %v2046
    %v2049 = vmax.f32 %v2047, %v2048
    %v2050 = vrot.slane %v2049, 4
    %v2051 = vmax.f32 %v2049, %v2050
    %v2052 = vrot.slane %v2051, 2
    %v2053 = vmax.f32 %v2051, %v2052
    %v2054 = vrot.slane %v2053, 1
    %v2055 = vmax.f32 %v2053, %v2054
    %vm2056 = vcmp.eq.f32.partialorder %v2039, %v2055
    %vm2057 = vcmp.eq.f32.partialorder %v2040, %v2055
    %vm2058 = vcmp.eq.f32.partialorder %v2041, %v2055
    %vm2059 = vcmp.eq.f32.partialorder %v2042, %v2055
    %v2060 = vsel %vm2056, %v449, 32.0
    %v2061 = vsel %vm2057, %v450, 32.0
    %v2062 = vsel %vm2058, %v451, 32.0
    %v2063 = vsel %vm2059, %v452, 32.0
    %v2064 = vsel %vm456, %v2060, inf
    %v2065 = vsel %vm456, %v2061, inf
    %v2066 = vsel %vm456, %v2062, inf
    %v2067 = vsel %vm456, %v2063, inf
    %v2068 = vmin.f32 %v2064, %v2065
    %v2069 = vmin.f32 %v2066, %v2067
    %v2070 = vmin.f32 %v2068, %v2069
    %v2071 = vrot.slane %v2070, 4
    %v2072 = vmin.f32 %v2070, %v2071
    %v2073 = vrot.slane %v2072, 2
    %v2074 = vmin.f32 %v2072, %v2073
    %v2075 = vrot.slane %v2074, 1
    %v2076 = vmin.f32 %v2074, %v2075
    %vm2077 = vcmp.eq.f32.partialorder %v449, %v2076
    %vm2078 = vcmp.eq.f32.partialorder %v450, %v2076
    %vm2079 = vcmp.eq.f32.partialorder %v451, %v2076
    %vm2080 = vcmp.eq.f32.partialorder %v452, %v2076
    %2082 = vset.pattern.permute.xlu0 0
    %2083 = vperm.xlu0 %2082, %v2076
    %v2084 = vpop.permute.xlu0 %2083
    %vm2086 = vcmp.eq.f32.partialorder %v455, %v2084
    %vm2087 = vcmp.eq.s32.totalorder %v445, 13
    %vm2088 = vcmp.eq.s32.totalorder %v446, 13
    %v2089 = vsel %vm2087, 1, 0
    %v2090 = vsel %vm2088, 1, 0
    %v2091 = vcvt.s32.f32 %v2089
    %v2092 = vcvt.s32.f32 %v2090
    %vm2093 = vcmp.eq.s32.totalorder %v454, 13
    %v2094 = vsel %vm2093, 1, 0
    %v2095 = vcvt.s32.f32 %v2094
    %v2096 = vsel %vm2086, 1, 0
    %v2097 = vcvt.s32.f32 %v2096
    %v2098 = vmul.f32 %v2091, %v2097
    %v2099 = vmul.f32 %v2092, %v2097
    %v2100 = vadd.f32 %v1978, %v2098
    %v2101 = vadd.f32 %v1979, %v2099
    %v2102 = vsel %vm2077, 1, 0
    %v2103 = vsel %vm2078, 1, 0
    %v2104 = vsel %vm2079, 1, 0
    %v2105 = vsel %vm2080, 1, 0
    %v2106 = vcvt.s32.f32 %v2102
    %v2107 = vcvt.s32.f32 %v2103
    %v2108 = vcvt.s32.f32 %v2104
    %v2109 = vcvt.s32.f32 %v2105
    %2111 = vset.pattern.permute.xlu0 0
    %2112 = vperm.xlu0 %2111, %v2106
    %v2113 = vpop.permute.xlu0 %2112
    %2116 = vset.pattern.permute.xlu0 0
    %2117 = vperm.xlu0 %2116, %v2107
    %v2118 = vpop.permute.xlu0 %2117
    %2121 = vset.pattern.permute.xlu0 0
    %2122 = vperm.xlu0 %2121, %v2108
    %v2123 = vpop.permute.xlu0 %2122
    %2126 = vset.pattern.permute.xlu0 0
    %2127 = vperm.xlu0 %2126, %v2109
    %v2128 = vpop.permute.xlu0 %2127
    %v2130 = vmul.f32 %v2113, %v2095
    %v2131 = vmul.f32 %v2118, %v2095
    %v2132 = vmul.f32 %v2123, %v2095
    %v2133 = vmul.f32 %v2128, %v2095
    %v2134 = vadd.f32 %v2012, %v2130
    %v2135 = vadd.f32 %v2013, %v2131
    %v2136 = vadd.f32 %v2014, %v2132
    %v2137 = vadd.f32 %v2015, %v2133
    %v2138 = vsub.f32 0.0, %v2055
    %v2139 = vmul.f32 %v2138, 1.442695
    %v2140 = vpow.pop %v2139
    %v2141 = vadd.f32 %v2140, 1.0
    %v2142 = vrcp.pop %v2141
    %v2143 = vmul.f32 %v2141, %v2142
    %v2144 = vsub.f32 1.0, %v2143
    %v2145 = vmul.f32 %v2142, %v2144
    %v2146 = vadd.f32 %v2142, %v2145
    %vm2147 = vweird.f32 %v2141
    %vm2148 = vweird.f32 %v2142
    %vm2149 = vmor %vm2147, %vm2148
    %v2150 = vsel %vm2149, %v2142, %v2146
    %v2151 = vand.u32 2147483647, %v2141
    %vm2152 = vcmp.eq.f32.partialorder %v2151, 8.507059e+37
    %v2153 = vand.u32 %v2141, 2147483648
    %v2154 = vor.u32 1.1754944e-38, %v2153
    %v2155 = vsel %vm2152, %v2154, %v2150
    %v2156 = vmul.f32 1.0, %v2155
    %v2157 = vmul.f32 %v2091, %v2156
    %v2158 = vmul.f32 %v2092, %v2156
    %v2159 = vadd.f32 %v2037, %v2157
    %v2160 = vadd.f32 %v2038, %v2158
    %v2161 = vsel %vm2077, -inf, %v2039
    %v2162 = vsel %vm2078, -inf, %v2040
    %v2163 = vsel %vm2079, -inf, %v2041
    %v2164 = vsel %vm2080, -inf, %v2042
    %v2165 = vsel %vm456, %v2161, -inf
    %v2166 = vsel %vm456, %v2162, -inf
    %v2167 = vsel %vm456, %v2163, -inf
    %v2168 = vsel %vm456, %v2164, -inf
    %v2169 = vmax.f32 %v2165, %v2166
    %v2170 = vmax.f32 %v2167, %v2168
    %v2171 = vmax.f32 %v2169, %v2170
    %v2172 = vrot.slane %v2171, 4
    %v2173 = vmax.f32 %v2171, %v2172
    %v2174 = vrot.slane %v2173, 2
    %v2175 = vmax.f32 %v2173, %v2174
    %v2176 = vrot.slane %v2175, 1
    %v2177 = vmax.f32 %v2175, %v2176
    %vm2178 = vcmp.eq.f32.partialorder %v2161, %v2177
    %vm2179 = vcmp.eq.f32.partialorder %v2162, %v2177
    %vm2180 = vcmp.eq.f32.partialorder %v2163, %v2177
    %vm2181 = vcmp.eq.f32.partialorder %v2164, %v2177
    %v2182 = vsel %vm2178, %v449, 32.0
    %v2183 = vsel %vm2179, %v450, 32.0
    %v2184 = vsel %vm2180, %v451, 32.0
    %v2185 = vsel %vm2181, %v452, 32.0
    %v2186 = vsel %vm456, %v2182, inf
    %v2187 = vsel %vm456, %v2183, inf
    %v2188 = vsel %vm456, %v2184, inf
    %v2189 = vsel %vm456, %v2185, inf
    %v2190 = vmin.f32 %v2186, %v2187
    %v2191 = vmin.f32 %v2188, %v2189
    %v2192 = vmin.f32 %v2190, %v2191
    %v2193 = vrot.slane %v2192, 4
    %v2194 = vmin.f32 %v2192, %v2193
    %v2195 = vrot.slane %v2194, 2
    %v2196 = vmin.f32 %v2194, %v2195
    %v2197 = vrot.slane %v2196, 1
    %v2198 = vmin.f32 %v2196, %v2197
    %vm2199 = vcmp.eq.f32.partialorder %v449, %v2198
    %vm2200 = vcmp.eq.f32.partialorder %v450, %v2198
    %vm2201 = vcmp.eq.f32.partialorder %v451, %v2198
    %vm2202 = vcmp.eq.f32.partialorder %v452, %v2198
    %2204 = vset.pattern.permute.xlu0 0
    %2205 = vperm.xlu0 %2204, %v2198
    %v2206 = vpop.permute.xlu0 %2205
    %vm2208 = vcmp.eq.f32.partialorder %v455, %v2206
    %vm2209 = vcmp.eq.s32.totalorder %v445, 14
    %vm2210 = vcmp.eq.s32.totalorder %v446, 14
    %v2211 = vsel %vm2209, 1, 0
    %v2212 = vsel %vm2210, 1, 0
    %v2213 = vcvt.s32.f32 %v2211
    %v2214 = vcvt.s32.f32 %v2212
    %vm2215 = vcmp.eq.s32.totalorder %v454, 14
    %v2216 = vsel %vm2215, 1, 0
    %v2217 = vcvt.s32.f32 %v2216
    %v2218 = vsel %vm2208, 1, 0
    %v2219 = vcvt.s32.f32 %v2218
    %v2220 = vmul.f32 %v2213, %v2219
    %v2221 = vmul.f32 %v2214, %v2219
    %v2222 = vadd.f32 %v2100, %v2220
    %v2223 = vadd.f32 %v2101, %v2221
    %v2224 = vsel %vm2199, 1, 0
    %v2225 = vsel %vm2200, 1, 0
    %v2226 = vsel %vm2201, 1, 0
    %v2227 = vsel %vm2202, 1, 0
    %v2228 = vcvt.s32.f32 %v2224
    %v2229 = vcvt.s32.f32 %v2225
    %v2230 = vcvt.s32.f32 %v2226
    %v2231 = vcvt.s32.f32 %v2227
    %2233 = vset.pattern.permute.xlu0 0
    %2234 = vperm.xlu0 %2233, %v2228
    %v2235 = vpop.permute.xlu0 %2234
    %2238 = vset.pattern.permute.xlu0 0
    %2239 = vperm.xlu0 %2238, %v2229
    %v2240 = vpop.permute.xlu0 %2239
    %2243 = vset.pattern.permute.xlu0 0
    %2244 = vperm.xlu0 %2243, %v2230
    %v2245 = vpop.permute.xlu0 %2244
    %2248 = vset.pattern.permute.xlu0 0
    %2249 = vperm.xlu0 %2248, %v2231
    %v2250 = vpop.permute.xlu0 %2249
    %v2252 = vmul.f32 %v2235, %v2217
    %v2253 = vmul.f32 %v2240, %v2217
    %v2254 = vmul.f32 %v2245, %v2217
    %v2255 = vmul.f32 %v2250, %v2217
    %v2256 = vadd.f32 %v2134, %v2252
    %v2257 = vadd.f32 %v2135, %v2253
    %v2258 = vadd.f32 %v2136, %v2254
    %v2259 = vadd.f32 %v2137, %v2255
    %v2260 = vsub.f32 0.0, %v2177
    %v2261 = vmul.f32 %v2260, 1.442695
    %v2262 = vpow.pop %v2261
    %v2263 = vadd.f32 %v2262, 1.0
    %v2264 = vrcp.pop %v2263
    %v2265 = vmul.f32 %v2263, %v2264
    %v2266 = vsub.f32 1.0, %v2265
    %v2267 = vmul.f32 %v2264, %v2266
    %v2268 = vadd.f32 %v2264, %v2267
    %vm2269 = vweird.f32 %v2263
    %vm2270 = vweird.f32 %v2264
    %vm2271 = vmor %vm2269, %vm2270
    %v2272 = vsel %vm2271, %v2264, %v2268
    %v2273 = vand.u32 2147483647, %v2263
    %vm2274 = vcmp.eq.f32.partialorder %v2273, 8.507059e+37
    %v2275 = vand.u32 %v2263, 2147483648
    %v2276 = vor.u32 1.1754944e-38, %v2275
    %v2277 = vsel %vm2274, %v2276, %v2272
    %v2278 = vmul.f32 1.0, %v2277
    %v2279 = vmul.f32 %v2213, %v2278
    %v2280 = vmul.f32 %v2214, %v2278
    %v2281 = vadd.f32 %v2159, %v2279
    %v2282 = vadd.f32 %v2160, %v2280
    %v2283 = vsel %vm2199, -inf, %v2161
    %v2284 = vsel %vm2200, -inf, %v2162
    %v2285 = vsel %vm2201, -inf, %v2163
    %v2286 = vsel %vm2202, -inf, %v2164
    %v2287 = vsel %vm456, %v2283, -inf
    %v2288 = vsel %vm456, %v2284, -inf
    %v2289 = vsel %vm456, %v2285, -inf
    %v2290 = vsel %vm456, %v2286, -inf
    %v2291 = vmax.f32 %v2287, %v2288
    %v2292 = vmax.f32 %v2289, %v2290
    %v2293 = vmax.f32 %v2291, %v2292
    %v2294 = vrot.slane %v2293, 4
    %v2295 = vmax.f32 %v2293, %v2294
    %v2296 = vrot.slane %v2295, 2
    %v2297 = vmax.f32 %v2295, %v2296
    %v2298 = vrot.slane %v2297, 1
    %v2299 = vmax.f32 %v2297, %v2298
    %vm2300 = vcmp.eq.f32.partialorder %v2283, %v2299
    %vm2301 = vcmp.eq.f32.partialorder %v2284, %v2299
    %vm2302 = vcmp.eq.f32.partialorder %v2285, %v2299
    %vm2303 = vcmp.eq.f32.partialorder %v2286, %v2299
    %v2304 = vsel %vm2300, %v449, 32.0
    %v2305 = vsel %vm2301, %v450, 32.0
    %v2306 = vsel %vm2302, %v451, 32.0
    %v2307 = vsel %vm2303, %v452, 32.0
    %v2308 = vsel %vm456, %v2304, inf
    %v2309 = vsel %vm456, %v2305, inf
    %v2310 = vsel %vm456, %v2306, inf
    %v2311 = vsel %vm456, %v2307, inf
    %v2312 = vmin.f32 %v2308, %v2309
    %v2313 = vmin.f32 %v2310, %v2311
    %v2314 = vmin.f32 %v2312, %v2313
    %v2315 = vrot.slane %v2314, 4
    %v2316 = vmin.f32 %v2314, %v2315
    %v2317 = vrot.slane %v2316, 2
    %v2318 = vmin.f32 %v2316, %v2317
    %v2319 = vrot.slane %v2318, 1
    %v2320 = vmin.f32 %v2318, %v2319
    %vm2321 = vcmp.eq.f32.partialorder %v449, %v2320
    %vm2322 = vcmp.eq.f32.partialorder %v450, %v2320
    %vm2323 = vcmp.eq.f32.partialorder %v451, %v2320
    %vm2324 = vcmp.eq.f32.partialorder %v452, %v2320
    %2326 = vset.pattern.permute.xlu0 0
    %2327 = vperm.xlu0 %2326, %v2320
    %v2328 = vpop.permute.xlu0 %2327
    %vm2330 = vcmp.eq.f32.partialorder %v455, %v2328
    %vm2331 = vcmp.eq.s32.totalorder %v445, 15
    %vm2332 = vcmp.eq.s32.totalorder %v446, 15
    %v2333 = vsel %vm2331, 1, 0
    %v2334 = vsel %vm2332, 1, 0
    %v2335 = vcvt.s32.f32 %v2333
    %v2336 = vcvt.s32.f32 %v2334
    %vm2337 = vcmp.eq.s32.totalorder %v454, 15
    %v2338 = vsel %vm2337, 1, 0
    %v2339 = vcvt.s32.f32 %v2338
    %v2340 = vsel %vm2330, 1, 0
    %v2341 = vcvt.s32.f32 %v2340
    %v2342 = vmul.f32 %v2335, %v2341
    %v2343 = vmul.f32 %v2336, %v2341
    %v2344 = vadd.f32 %v2222, %v2342
    %v2345 = vadd.f32 %v2223, %v2343
    %v2346 = vsel %vm2321, 1, 0
    %v2347 = vsel %vm2322, 1, 0
    %v2348 = vsel %vm2323, 1, 0
    %v2349 = vsel %vm2324, 1, 0
    %v2350 = vcvt.s32.f32 %v2346
    %v2351 = vcvt.s32.f32 %v2347
    %v2352 = vcvt.s32.f32 %v2348
    %v2353 = vcvt.s32.f32 %v2349
    %2355 = vset.pattern.permute.xlu0 0
    %2356 = vperm.xlu0 %2355, %v2350
    %v2357 = vpop.permute.xlu0 %2356
    %2360 = vset.pattern.permute.xlu0 0
    %2361 = vperm.xlu0 %2360, %v2351
    %v2362 = vpop.permute.xlu0 %2361
    %2365 = vset.pattern.permute.xlu0 0
    %2366 = vperm.xlu0 %2365, %v2352
    %v2367 = vpop.permute.xlu0 %2366
    %2370 = vset.pattern.permute.xlu0 0
    %2371 = vperm.xlu0 %2370, %v2353
    %v2372 = vpop.permute.xlu0 %2371
    %v2374 = vmul.f32 %v2357, %v2339
    %v2375 = vmul.f32 %v2362, %v2339
    %v2376 = vmul.f32 %v2367, %v2339
    %v2377 = vmul.f32 %v2372, %v2339
    %v2378 = vadd.f32 %v2256, %v2374
    %v2379 = vadd.f32 %v2257, %v2375
    %v2380 = vadd.f32 %v2258, %v2376
    %v2381 = vadd.f32 %v2259, %v2377
    %v2382 = vsub.f32 0.0, %v2299
    %v2383 = vmul.f32 %v2382, 1.442695
    %v2384 = vpow.pop %v2383
    %v2385 = vadd.f32 %v2384, 1.0
    %v2386 = vrcp.pop %v2385
    %v2387 = vmul.f32 %v2385, %v2386
    %v2388 = vsub.f32 1.0, %v2387
    %v2389 = vmul.f32 %v2386, %v2388
    %v2390 = vadd.f32 %v2386, %v2389
    %vm2391 = vweird.f32 %v2385
    %vm2392 = vweird.f32 %v2386
    %vm2393 = vmor %vm2391, %vm2392
    %v2394 = vsel %vm2393, %v2386, %v2390
    %v2395 = vand.u32 2147483647, %v2385
    %vm2396 = vcmp.eq.f32.partialorder %v2395, 8.507059e+37
    %v2397 = vand.u32 %v2385, 2147483648
    %v2398 = vor.u32 1.1754944e-38, %v2397
    %v2399 = vsel %vm2396, %v2398, %v2394
    %v2400 = vmul.f32 1.0, %v2399
    %v2401 = vmul.f32 %v2335, %v2400
    %v2402 = vmul.f32 %v2336, %v2400
    %v2403 = vadd.f32 %v2281, %v2401
    %v2404 = vadd.f32 %v2282, %v2402
    %v2406 = vsel %vm160, %v2344, 0
    %v2409 = vsel %vm160, %v2345, 0
    %2411 = vmatpush.msra.mxu0 0.0
    %2412 = vmatpush.msra.mxu0 0.0
    %2413 = vmatpush.msra.mxu0 0.0
    %2414 = vmatpush.msra.mxu0 0.0
    %2415 = vmatpush.msra.mxu0 0.0
    %2416 = vmatpush.msra.mxu0 0.0
    %2417 = vmatpush.msra.mxu0 0.0
    %2418 = vmatpush.msra.mxu0 0.0
    %2419 = vmatpush.msra.mxu0 0.0
    %2420 = vmatpush.msra.mxu0 0.0
    %2421 = vmatpush.msra.mxu0 0.0
    %2422 = vmatpush.msra.mxu0 0.0
    %2423 = vmatpush.msra.mxu0 %v392
    %2424 = vmatpush.msra.mxu0 %v391
    %2425 = vmatpush.msra.mxu0 %v390
    %2426 = vmatpush.msra.mxu0 %v389
    %2427 = vmatmul.f32.gmra.mxu0 %v2406
    %v2428 = vpop.f32.mrf.mxu0
    %v2429 = vadd.f32 0.0, %v2428
    %2430 = vmatmul.f32.gmra.mxu0 %v2409
    %v2431 = vpop.f32.mrf.mxu0
    %v2432 = vadd.f32 0.0, %v2431
    %2433 = vdwg.mxu0
    %2435 = vset.pattern.permute.xlu0 0
    %2436 = vperm.xlu0 %2435, %v2403
    %v2437 = vpop.permute.xlu0 %2436
    %2440 = vset.pattern.permute.xlu0 0
    %2441 = vperm.xlu0 %2440, %v2404
    %v2442 = vpop.permute.xlu0 %2441
    %v2444 = vmul.f32 %v2429, %v2437
    %v2445 = vmul.f32 %v2432, %v2442
    %vm2446 = vcmp.ne.f32.partialorder %v152, 0.0
    %vm2447 = vcmp.ne.f32.partialorder %v153, 0.0
    %vm2448 = vcmp.ne.f32.partialorder %v154, 0.0
    %vm2449 = vcmp.ne.f32.partialorder %v155, 0.0
    %v2450 = vsel %vm2446, 1, 0
    %v2451 = vsel %vm2447, 1, 0
    %v2452 = vsel %vm2448, 1, 0
    %v2453 = vsel %vm2449, 1, 0
    %v2454 = vcvt.s32.f32 %v2450
    %v2455 = vcvt.s32.f32 %v2451
    %v2456 = vcvt.s32.f32 %v2452
    %v2457 = vcvt.s32.f32 %v2453
    %v2459 = vsel %vm160, %v2454, 0
    %v2462 = vsel %vm160, %v2455, 0
    %v2465 = vsel %vm160, %v2456, 0
    %v2468 = vsel %vm160, %v2457, 0
    %2470 = vmatpush.msra.mxu0 0.0
    %2471 = vmatpush.msra.mxu0 0.0
    %2472 = vmatpush.msra.mxu0 0.0
    %2473 = vmatpush.msra.mxu0 0.0
    %2474 = vmatpush.msra.mxu0 0.0
    %2475 = vmatpush.msra.mxu0 0.0
    %2476 = vmatpush.msra.mxu0 0.0
    %2477 = vmatpush.msra.mxu0 0.0
    %2478 = vmatpush.msra.mxu0 0.0
    %2479 = vmatpush.msra.mxu0 0.0
    %2480 = vmatpush.msra.mxu0 0.0
    %2481 = vmatpush.msra.mxu0 0.0
    %2482 = vmatpush.msra.mxu0 %v2457
    %2483 = vmatpush.msra.mxu0 %v2456
    %2484 = vmatpush.msra.mxu0 %v2455
    %2485 = vmatpush.msra.mxu0 %v2454
    %2486 = vmatmul.f32.gmra.mxu0 %v2459
    %v2487 = vpop.f32.mrf.mxu0
    %v2488 = vadd.f32 0.0, %v2487
    %2489 = vmatmul.f32.gmra.mxu0 %v2462
    %v2490 = vpop.f32.mrf.mxu0
    %v2491 = vadd.f32 0.0, %v2490
    %2492 = vmatmul.f32.gmra.mxu0 %v2465
    %v2493 = vpop.f32.mrf.mxu0
    %v2494 = vadd.f32 0.0, %v2493
    %2495 = vmatmul.f32.gmra.mxu0 %v2468
    %v2496 = vpop.f32.mrf.mxu0
    %v2497 = vadd.f32 0.0, %v2496
    %2498 = vdwg.mxu0
    %vm2499 = vcmp.ne.f32.partialorder %v2488, 0.0
    %vm2500 = vcmp.ne.f32.partialorder %v2491, 0.0
    %vm2501 = vcmp.ne.f32.partialorder %v2494, 0.0
    %vm2502 = vcmp.ne.f32.partialorder %v2497, 0.0
    %v2503 = vsel %vm2499, 1, 0
    %v2504 = vsel %vm2500, 1, 0
    %v2505 = vsel %vm2501, 1, 0
    %v2506 = vsel %vm2502, 1, 0
    %v2507 = vcvt.s32.f32 %v2503
    %v2508 = vcvt.s32.f32 %v2504
    %v2509 = vcvt.s32.f32 %v2505
    %v2510 = vcvt.s32.f32 %v2506
    %2511 = vmatpush.msra.mxu0 0.0
    %2512 = vmatpush.msra.mxu0 0.0
    %2513 = vmatpush.msra.mxu0 0.0
    %2514 = vmatpush.msra.mxu0 0.0
    %2515 = vmatpush.msra.mxu0 0.0
    %2516 = vmatpush.msra.mxu0 0.0
    %2517 = vmatpush.msra.mxu0 0.0
    %2518 = vmatpush.msra.mxu0 0.0
    %2519 = vmatpush.msra.mxu0 0.0
    %2520 = vmatpush.msra.mxu0 0.0
    %2521 = vmatpush.msra.mxu0 0.0
    %2522 = vmatpush.msra.mxu0 0.0
    %2523 = vmatpush.msra.mxu0 %v2510
    %2524 = vmatpush.msra.mxu0 %v2509
    %2525 = vmatpush.msra.mxu0 %v2508
    %2526 = vmatpush.msra.mxu0 %v2507
    %2527 = vmatmul.f32.gmra.mxu0 %v2406
    %v2528 = vpop.f32.mrf.mxu0
    %v2529 = vadd.f32 0.0, %v2528
    %2530 = vmatmul.f32.gmra.mxu0 %v2409
    %v2531 = vpop.f32.mrf.mxu0
    %v2532 = vadd.f32 0.0, %v2531
    %2533 = vdwg.mxu0
    %v2535 = vsel %vm160, %v2529, 0
    %v2538 = vsel %vm160, %v2532, 0
    %2540 = vmatpush.msra.mxu0 0.0
    %2541 = vmatpush.msra.mxu0 0.0
    %2542 = vmatpush.msra.mxu0 0.0
    %2543 = vmatpush.msra.mxu0 0.0
    %2544 = vmatpush.msra.mxu0 0.0
    %2545 = vmatpush.msra.mxu0 0.0
    %2546 = vmatpush.msra.mxu0 0.0
    %2547 = vmatpush.msra.mxu0 0.0
    %2548 = vmatpush.msra.mxu0 0.0
    %2549 = vmatpush.msra.mxu0 0.0
    %2550 = vmatpush.msra.mxu0 0.0
    %2551 = vmatpush.msra.mxu0 0.0
    %2552 = vmatpush.msra.mxu0 %v2381
    %2553 = vmatpush.msra.mxu0 %v2380
    %2554 = vmatpush.msra.mxu0 %v2379
    %2555 = vmatpush.msra.mxu0 %v2378
    %2556 = vmatmul.f32.gmra.mxu0 %v2535
    %v2557 = vpop.f32.mrf.mxu0
    %v2558 = vadd.f32 0.0, %v2557
    %2559 = vmatmul.f32.gmra.mxu0 %v2538
    %v2560 = vpop.f32.mrf.mxu0
    %v2561 = vadd.f32 0.0, %v2560
    %2562 = vdwg.mxu0
    %vm2563 = vcmask 130048
    %v2564 = vsel %vm2563, %v2558, 0.0
    %2565 = vadd.xlane.f32.xlu0 %v2564
    %v2566 = vpop.xlane.xlu0 %2565
    %v2567 = vsel %vm2563, %v2561, 0.0
    %2568 = vadd.xlane.f32.xlu0 %v2567
    %v2569 = vpop.xlane.xlu0 %2568
    %vm2570 = vcmp.eq.s32.totalorder %v445, %v454
    %vm2571 = vcmp.eq.s32.totalorder %v446, %v454
    %v2572 = vsel %vm2570, %v2566, 0.0
    %v2573 = vsel %vm2571, %v2569, 0.0
    %v2574 = vsel %vm2563, %v2572, 0.0
    %v2575 = vsel %vm2563, %v2573, 0.0
    %v2576 = vadd.f32 %v2574, %v2575
    %v2577 = vrot.slane %v2576, 4
    %v2578 = vadd.f32 %v2576, %v2577
    %v2579 = vrot.slane %v2578, 2
    %v2580 = vadd.f32 %v2578, %v2579
    %v2581 = vrot.slane %v2580, 1
    %v2582 = vadd.f32 %v2580, %v2581
    %v2583 = vrcp.pop %v2582
    %v2584 = vmul.f32 %v2582, %v2583
    %v2585 = vsub.f32 1.0, %v2584
    %v2586 = vmul.f32 %v2583, %v2585
    %v2587 = vadd.f32 %v2583, %v2586
    %vm2588 = vweird.f32 %v2582
    %vm2589 = vweird.f32 %v2583
    %vm2590 = vmor %vm2588, %vm2589
    %v2591 = vsel %vm2590, %v2583, %v2587
    %v2592 = vand.u32 2147483647, %v2582
    %vm2593 = vcmp.eq.f32.partialorder %v2592, 8.507059e+37
    %v2594 = vand.u32 %v2582, 2147483648
    %v2595 = vor.u32 1.1754944e-38, %v2594
    %v2596 = vsel %vm2593, %v2595, %v2591
    %v2597 = vmul.f32 %v2558, %v2596
    %v2598 = vmul.f32 %v2561, %v2596
    %v2599 = vsel %vm2563, %v2597, 0.0
    %2600 = vadd.xlane.f32.xlu0 %v2599
    %v2601 = vpop.xlane.xlu0 %2600
    %v2602 = vsel %vm2563, %v2598, 0.0
    %2603 = vadd.xlane.f32.xlu0 %v2602
    %v2604 = vpop.xlane.xlu0 %2603
    %v2605 = vadd.f32 %v2601, 1.0
    %v2606 = vadd.f32 %v2604, 1.0
    %v2607 = vrsqrt.pop %v2605
    %v2608 = vmul.f32 %v2607, %v2605
    %v2609 = vmul.f32 %v2608, %v2607
    %v2610 = vmul.f32 0.5, %v2609
    %v2611 = vsub.f32 1.5, %v2610
    %v2612 = vmul.f32 %v2607, %v2611
    %vm2613 = vweird.f32 %v2605
    %vm2614 = vweird.f32 %v2607
    %vm2615 = vmor %vm2613, %vm2614
    %v2616 = vsel %vm2615, %v2607, %v2612
    %v2617 = vrsqrt.pop %v2606
    %v2618 = vmul.f32 %v2617, %v2606
    %v2619 = vmul.f32 %v2618, %v2617
    %v2620 = vmul.f32 0.5, %v2619
    %v2621 = vsub.f32 1.5, %v2620
    %v2622 = vmul.f32 %v2617, %v2621
    %vm2623 = vweird.f32 %v2606
    %vm2624 = vweird.f32 %v2617
    %vm2625 = vmor %vm2623, %vm2624
    %v2626 = vsel %vm2625, %v2617, %v2622
    %s2627 = scalar_lea.vmem [#allocation11], 1
    %v2628 = vld [vmem:[%s2627] sm:$0x1]
    %s2629 = scalar_lea.vmem [#allocation12], 1
    %v2630 = vld [vmem:[%s2629] sm:$0x1]
    %v2631 = vadd.f32 %v2444, %v2445
    %v2632 = vrot.slane %v2631, 4
    %v2633 = vadd.f32 %v2631, %v2632
    %v2634 = vrot.slane %v2633, 2
    %v2635 = vadd.f32 %v2633, %v2634
    %v2636 = vrot.slane %v2635, 1
    %v2637 = vadd.f32 %v2635, %v2636
    %v2638 = vrcp.pop 16.0
    %v2639 = vmul.f32 16.0, %v2638
    %v2640 = vsub.f32 1.0, %v2639
    %v2641 = vmul.f32 %v2638, %v2640
    %v2642 = vadd.f32 %v2638, %v2641
    %vm2643 = vweird.f32 %v2638
    %v2644 = vsel %vm2643, %v2638, %v2642
    %v2645 = vmul.f32 %v2637, %v2644
    %v2646 = vsub.f32 %v2444, %v2645
    %v2647 = vsub.f32 %v2445, %v2645
    %v2648 = vmul.f32 %v2646, %v2646
    %v2649 = vmul.f32 %v2647, %v2647
    %v2650 = vadd.f32 %v2648, %v2649
    %v2651 = vrot.slane %v2650, 4
    %v2652 = vadd.f32 %v2650, %v2651
    %v2653 = vrot.slane %v2652, 2
    %v2654 = vadd.f32 %v2652, %v2653
    %v2655 = vrot.slane %v2654, 1
    %v2656 = vadd.f32 %v2654, %v2655
    %v2657 = vmul.f32 %v2656, %v2644
    %v2658 = vadd.f32 %v2657, 1e-05
    %v2659 = vrsqrt.pop %v2658
    %v2660 = vmul.f32 %v2659, %v2658
    %v2661 = vmul.f32 %v2660, %v2659
    %v2662 = vmul.f32 0.5, %v2661
    %v2663 = vsub.f32 1.5, %v2662
    %v2664 = vmul.f32 %v2659, %v2663
    %vm2665 = vweird.f32 %v2658
    %vm2666 = vweird.f32 %v2659
    %vm2667 = vmor %vm2665, %vm2666
    %v2668 = vsel %vm2667, %v2659, %v2664
    %v2669 = vmul.f32 %v2646, %v2668
    %v2670 = vmul.f32 %v2647, %v2668
    %v2672 = vperm.slane %v2628, 0
    %v2674 = vmul.f32 %v2669, %v2672
    %v2675 = vmul.f32 %v2670, %v2672
    %v2677 = vperm.slane %v2630, 0
    %v2679 = vadd.f32 %v2674, %v2677
    %v2680 = vadd.f32 %v2675, %v2677
    %s2681 = scalar_lea.vmem [#allocation8], 128
    %v2682 = vld [vmem:[%s2681] sm:$0xff]
    %v2683 = vld [vmem:[%s2681 + $0x8] sm:$0xff]
    %v2684 = vld [vmem:[%s2681 + $0x10] sm:$0xff]
    %v2685 = vld [vmem:[%s2681 + $0x18] sm:$0xff]
    %v2686 = vld [vmem:[%s2681 + $0x20] sm:$0xff]
    %v2687 = vld [vmem:[%s2681 + $0x28] sm:$0xff]
    %v2688 = vld [vmem:[%s2681 + $0x30] sm:$0xff]
    %v2689 = vld [vmem:[%s2681 + $0x38] sm:$0xff]
    %v2690 = vld [vmem:[%s2681 + $0x40] sm:$0xff]
    %v2691 = vld [vmem:[%s2681 + $0x48] sm:$0xff]
    %v2692 = vld [vmem:[%s2681 + $0x50] sm:$0xff]
    %v2693 = vld [vmem:[%s2681 + $0x58] sm:$0xff]
    %v2694 = vld [vmem:[%s2681 + $0x60] sm:$0xff]
    %v2695 = vld [vmem:[%s2681 + $0x68] sm:$0xff]
    %v2696 = vld [vmem:[%s2681 + $0x70] sm:$0xff]
    %v2697 = vld [vmem:[%s2681 + $0x78] sm:$0xff]
    %s2698 = scalar_lea.vmem [#allocation9], 1
    %v2699 = vld [vmem:[%s2698] sm:$0x1]
    %v2701 = vperm.slane %v2699, 0
    %2703 = vmatpush.msra.mxu0 %v2697
    %2704 = vmatpush.msra.mxu0 %v2696
    %2705 = vmatpush.msra.mxu0 %v2695
    %2706 = vmatpush.msra.mxu0 %v2694
    %2707 = vmatpush.msra.mxu0 %v2693
    %2708 = vmatpush.msra.mxu0 %v2692
    %2709 = vmatpush.msra.mxu0 %v2691
    %2710 = vmatpush.msra.mxu0 %v2690
    %2711 = vmatpush.msra.mxu0 %v2689
    %2712 = vmatpush.msra.mxu0 %v2688
    %2713 = vmatpush.msra.mxu0 %v2687
    %2714 = vmatpush.msra.mxu0 %v2686
    %2715 = vmatpush.msra.mxu0 %v2685
    %2716 = vmatpush.msra.mxu0 %v2684
    %2717 = vmatpush.msra.mxu0 %v2683
    %2718 = vmatpush.msra.mxu0 %v2682
    %2719 = vmatmul.f32.gmra.mxu0 %v2679
    %v2720 = vpop.f32.mrf.mxu0
    %v2721 = vadd.f32 %v2701, %v2720
    %2722 = vmatmul.f32.gmra.mxu0 %v2680
    %v2723 = vpop.f32.mrf.mxu0
    %v2724 = vadd.f32 %v2701, %v2723
    %2725 = vdwg.mxu0
    %v2726 = vmul.f32 %v2616, %v2721
    %v2727 = vmul.f32 %v2626, %v2724
    %v2729 = vsel %vm2563, %v2597, 0
    %v2732 = vsel %vm2563, %v2598, 0
    %2734 = vmatpush.msra.mxu0 0.0
    %2735 = vmatpush.msra.mxu0 0.0
    %2736 = vmatpush.msra.mxu0 0.0
    %2737 = vmatpush.msra.mxu0 0.0
    %2738 = vmatpush.msra.mxu0 0.0
    %2739 = vmatpush.msra.mxu0 0.0
    %2740 = vmatpush.msra.mxu0 0.0
    %2741 = vmatpush.msra.mxu0 0.0
    %2742 = vmatpush.msra.mxu0 0.0
    %2743 = vmatpush.msra.mxu0 0.0
    %2744 = vmatpush.msra.mxu0 0.0
    %2745 = vmatpush.msra.mxu0 0.0
    %2746 = vmatpush.msra.mxu0 0.0
    %2747 = vmatpush.msra.mxu0 0.0
    %2748 = vmatpush.msra.mxu0 %v2727
    %2749 = vmatpush.msra.mxu0 %v2726
    %2750 = vmatmul.f32.gmra.mxu0 %v2729
    %v2751 = vpop.f32.mrf.mxu0
    %v2752 = vadd.f32 %v2726, %v2751
    %2753 = vmatmul.f32.gmra.mxu0 %v2732
    %v2754 = vpop.f32.mrf.mxu0
    %v2755 = vadd.f32 %v2727, %v2754
    %2756 = vdwg.mxu0
    %v2757 = vmul.f32 %v2616, %v2752
    %v2758 = vmul.f32 %v2626, %v2755
    %vm2759 = vcmp.gt.f32.partialorder %v2757, 0.0
    %vm2760 = vcmp.gt.f32.partialorder %v2758, 0.0
    %v2761 = vmul.f32 %v2757, 0.01
    %v2762 = vmul.f32 %v2758, 0.01
    %v2763 = vsel %vm2759, %v2757, %v2761
    %v2764 = vsel %vm2760, %v2758, %v2762
    %s2765 = scalar_lea.vmem [#allocation14], 128
    %v2766 = vld [vmem:[%s2765] sm:$0xff]
    %v2767 = vld [vmem:[%s2765 + $0x8] sm:$0xff]
    %v2768 = vld [vmem:[%s2765 + $0x10] sm:$0xff]
    %v2769 = vld [vmem:[%s2765 + $0x18] sm:$0xff]
    %v2770 = vld [vmem:[%s2765 + $0x20] sm:$0xff]
    %v2771 = vld [vmem:[%s2765 + $0x28] sm:$0xff]
    %v2772 = vld [vmem:[%s2765 + $0x30] sm:$0xff]
    %v2773 = vld [vmem:[%s2765 + $0x38] sm:$0xff]
    %v2774 = vld [vmem:[%s2765 + $0x40] sm:$0xff]
    %v2775 = vld [vmem:[%s2765 + $0x48] sm:$0xff]
    %v2776 = vld [vmem:[%s2765 + $0x50] sm:$0xff]
    %v2777 = vld [vmem:[%s2765 + $0x58] sm:$0xff]
    %v2778 = vld [vmem:[%s2765 + $0x60] sm:$0xff]
    %v2779 = vld [vmem:[%s2765 + $0x68] sm:$0xff]
    %v2780 = vld [vmem:[%s2765 + $0x70] sm:$0xff]
    %v2781 = vld [vmem:[%s2765 + $0x78] sm:$0xff]
    %2782 = vmatpush.msra.mxu0 %v2781
    %2783 = vmatpush.msra.mxu0 %v2780
    %2784 = vmatpush.msra.mxu0 %v2779
    %2785 = vmatpush.msra.mxu0 %v2778
    %2786 = vmatpush.msra.mxu0 %v2777
    %2787 = vmatpush.msra.mxu0 %v2776
    %2788 = vmatpush.msra.mxu0 %v2775
    %2789 = vmatpush.msra.mxu0 %v2774
    %2790 = vmatpush.msra.mxu0 %v2773
    %2791 = vmatpush.msra.mxu0 %v2772
    %2792 = vmatpush.msra.mxu0 %v2771
    %2793 = vmatpush.msra.mxu0 %v2770
    %2794 = vmatpush.msra.mxu0 %v2769
    %2795 = vmatpush.msra.mxu0 %v2768
    %2796 = vmatpush.msra.mxu0 %v2767
    %2797 = vmatpush.msra.mxu0 %v2766
    %2798 = vmatmul.f32.gmra.mxu0 %v2763
    %v2799 = vpop.f32.mrf.mxu0
    %v2800 = vadd.f32 0.0, %v2799
    %2801 = vmatmul.f32.gmra.mxu0 %v2764
    %v2802 = vpop.f32.mrf.mxu0
    %v2803 = vadd.f32 0.0, %v2802
    %2804 = vdwg.mxu0
    %s2805 = sld [smem:[#allocation15 + $0x1]]
    %v2806 = vstv %s2805
    %v2807 = vadd.f32 %v2800, %v2806
    %v2808 = vadd.f32 %v2803, %v2806
    %v2809 = vsel %vm456, %v2807, -inf
    %v2810 = vsel %vm456, %v2808, -inf
    %v2811 = vmax.f32 %v2809, %v2810
    %v2812 = vrot.slane %v2811, 4
    %v2813 = vmax.f32 %v2811, %v2812
    %v2814 = vrot.slane %v2813, 2
    %v2815 = vmax.f32 %v2813, %v2814
    %v2816 = vrot.slane %v2815, 1
    %v2817 = vmax.f32 %v2815, %v2816
    %vm2818 = vcmp.eq.f32.partialorder %v2807, %v2817
    %vm2819 = vcmp.eq.f32.partialorder %v2808, %v2817
    %v2820 = vsel %vm2818, %v449, 16.0
    %v2821 = vsel %vm2819, %v450, 16.0
    %v2822 = vsel %vm456, %v2820, inf
    %v2823 = vsel %vm456, %v2821, inf
    %v2824 = vmin.f32 %v2822, %v2823
    %v2825 = vrot.slane %v2824, 4
    %v2826 = vmin.f32 %v2824, %v2825
    %v2827 = vrot.slane %v2826, 2
    %v2828 = vmin.f32 %v2826, %v2827
    %v2829 = vrot.slane %v2828, 1
    %v2830 = vmin.f32 %v2828, %v2829
    %vm2831 = vcmp.eq.f32.partialorder %v449, %v2830
    %vm2832 = vcmp.eq.f32.partialorder %v450, %v2830
    %2834 = vset.pattern.permute.xlu0 0
    %2835 = vperm.xlu0 %2834, %v2830
    %v2836 = vpop.permute.xlu0 %2835
    %vm2838 = vcmp.eq.f32.partialorder %v455, %v2836
    %v2839 = vsel %vm2838, 1, 0
    %v2840 = vcvt.s32.f32 %v2839
    %v2841 = vmul.f32 %v505, %v2840
    %v2842 = vadd.f32 %v2841, 0.0
    %v2843 = vsel %vm2831, 1, 0
    %v2844 = vsel %vm2832, 1, 0
    %v2845 = vcvt.s32.f32 %v2843
    %v2846 = vcvt.s32.f32 %v2844
    %2848 = vset.pattern.permute.xlu0 0
    %2849 = vperm.xlu0 %2848, %v2845
    %v2850 = vpop.permute.xlu0 %2849
    %2853 = vset.pattern.permute.xlu0 0
    %2854 = vperm.xlu0 %2853, %v2846
    %v2855 = vpop.permute.xlu0 %2854
    %v2857 = vmul.f32 %v2850, %v509
    %v2858 = vmul.f32 %v2855, %v509
    %v2859 = vadd.f32 %v2857, 0.0
    %v2860 = vadd.f32 %v2858, 0.0
    %v2861 = vsub.f32 0.0, %v2817
    %v2862 = vmul.f32 %v2861, 1.442695
    %v2863 = vpow.pop %v2862
    %v2864 = vadd.f32 %v2863, 1.0
    %v2865 = vrcp.pop %v2864
    %v2866 = vmul.f32 %v2864, %v2865
    %v2867 = vsub.f32 1.0, %v2866
    %v2868 = vmul.f32 %v2865, %v2867
    %v2869 = vadd.f32 %v2865, %v2868
    %vm2870 = vweird.f32 %v2864
    %vm2871 = vweird.f32 %v2865
    %vm2872 = vmor %vm2870, %vm2871
    %v2873 = vsel %vm2872, %v2865, %v2869
    %v2874 = vand.u32 2147483647, %v2864
    %vm2875 = vcmp.eq.f32.partialorder %v2874, 8.507059e+37
    %v2876 = vand.u32 %v2864, 2147483648
    %v2877 = vor.u32 1.1754944e-38, %v2876
    %v2878 = vsel %vm2875, %v2877, %v2873
    %v2879 = vmul.f32 1.0, %v2878
    %v2880 = vmul.f32 %v505, %v2879
    %v2881 = vadd.f32 %v2880, 0.0
    %v2882 = vsel %vm2831, -inf, %v2807
    %v2883 = vsel %vm2832, -inf, %v2808
    %v2884 = vsel %vm456, %v2882, -inf
    %v2885 = vsel %vm456, %v2883, -inf
    %v2886 = vmax.f32 %v2884, %v2885
    %v2887 = vrot.slane %v2886, 4
    %v2888 = vmax.f32 %v2886, %v2887
    %v2889 = vrot.slane %v2888, 2
    %v2890 = vmax.f32 %v2888, %v2889
    %v2891 = vrot.slane %v2890, 1
    %v2892 = vmax.f32 %v2890, %v2891
    %vm2893 = vcmp.eq.f32.partialorder %v2882, %v2892
    %vm2894 = vcmp.eq.f32.partialorder %v2883, %v2892
    %v2895 = vsel %vm2893, %v449, 16.0
    %v2896 = vsel %vm2894, %v450, 16.0
    %v2897 = vsel %vm456, %v2895, inf
    %v2898 = vsel %vm456, %v2896, inf
    %v2899 = vmin.f32 %v2897, %v2898
    %v2900 = vrot.slane %v2899, 4
    %v2901 = vmin.f32 %v2899, %v2900
    %v2902 = vrot.slane %v2901, 2
    %v2903 = vmin.f32 %v2901, %v2902
    %v2904 = vrot.slane %v2903, 1
    %v2905 = vmin.f32 %v2903, %v2904
    %vm2906 = vcmp.eq.f32.partialorder %v449, %v2905
    %vm2907 = vcmp.eq.f32.partialorder %v450, %v2905
    %2909 = vset.pattern.permute.xlu0 0
    %2910 = vperm.xlu0 %2909, %v2905
    %v2911 = vpop.permute.xlu0 %2910
    %vm2913 = vcmp.eq.f32.partialorder %v455, %v2911
    %v2914 = vsel %vm2913, 1, 0
    %v2915 = vcvt.s32.f32 %v2914
    %v2916 = vmul.f32 %v627, %v2915
    %v2917 = vadd.f32 %v2842, %v2916
    %v2918 = vsel %vm2906, 1, 0
    %v2919 = vsel %vm2907, 1, 0
    %v2920 = vcvt.s32.f32 %v2918
    %v2921 = vcvt.s32.f32 %v2919
    %2923 = vset.pattern.permute.xlu0 0
    %2924 = vperm.xlu0 %2923, %v2920
    %v2925 = vpop.permute.xlu0 %2924
    %2928 = vset.pattern.permute.xlu0 0
    %2929 = vperm.xlu0 %2928, %v2921
    %v2930 = vpop.permute.xlu0 %2929
    %v2932 = vmul.f32 %v2925, %v631
    %v2933 = vmul.f32 %v2930, %v631
    %v2934 = vadd.f32 %v2859, %v2932
    %v2935 = vadd.f32 %v2860, %v2933
    %v2936 = vsub.f32 0.0, %v2892
    %v2937 = vmul.f32 %v2936, 1.442695
    %v2938 = vpow.pop %v2937
    %v2939 = vadd.f32 %v2938, 1.0
    %v2940 = vrcp.pop %v2939
    %v2941 = vmul.f32 %v2939, %v2940
    %v2942 = vsub.f32 1.0, %v2941
    %v2943 = vmul.f32 %v2940, %v2942
    %v2944 = vadd.f32 %v2940, %v2943
    %vm2945 = vweird.f32 %v2939
    %vm2946 = vweird.f32 %v2940
    %vm2947 = vmor %vm2945, %vm2946
    %v2948 = vsel %vm2947, %v2940, %v2944
    %v2949 = vand.u32 2147483647, %v2939
    %vm2950 = vcmp.eq.f32.partialorder %v2949, 8.507059e+37
    %v2951 = vand.u32 %v2939, 2147483648
    %v2952 = vor.u32 1.1754944e-38, %v2951
    %v2953 = vsel %vm2950, %v2952, %v2948
    %v2954 = vmul.f32 1.0, %v2953
    %v2955 = vmul.f32 %v627, %v2954
    %v2956 = vadd.f32 %v2881, %v2955
    %v2957 = vsel %vm2906, -inf, %v2882
    %v2958 = vsel %vm2907, -inf, %v2883
    %v2959 = vsel %vm456, %v2957, -inf
    %v2960 = vsel %vm456, %v2958, -inf
    %v2961 = vmax.f32 %v2959, %v2960
    %v2962 = vrot.slane %v2961, 4
    %v2963 = vmax.f32 %v2961, %v2962
    %v2964 = vrot.slane %v2963, 2
    %v2965 = vmax.f32 %v2963, %v2964
    %v2966 = vrot.slane %v2965, 1
    %v2967 = vmax.f32 %v2965, %v2966
    %vm2968 = vcmp.eq.f32.partialorder %v2957, %v2967
    %vm2969 = vcmp.eq.f32.partialorder %v2958, %v2967
    %v2970 = vsel %vm2968, %v449, 16.0
    %v2971 = vsel %vm2969, %v450, 16.0
    %v2972 = vsel %vm456, %v2970, inf
    %v2973 = vsel %vm456, %v2971, inf
    %v2974 = vmin.f32 %v2972, %v2973
    %v2975 = vrot.slane %v2974, 4
    %v2976 = vmin.f32 %v2974, %v2975
    %v2977 = vrot.slane %v2976, 2
    %v2978 = vmin.f32 %v2976, %v2977
    %v2979 = vrot.slane %v2978, 1
    %v2980 = vmin.f32 %v2978, %v2979
    %vm2981 = vcmp.eq.f32.partialorder %v449, %v2980
    %vm2982 = vcmp.eq.f32.partialorder %v450, %v2980
    %2984 = vset.pattern.permute.xlu0 0
    %2985 = vperm.xlu0 %2984, %v2980
    %v2986 = vpop.permute.xlu0 %2985
    %vm2988 = vcmp.eq.f32.partialorder %v455, %v2986
    %v2989 = vsel %vm2988, 1, 0
    %v2990 = vcvt.s32.f32 %v2989
    %v2991 = vmul.f32 %v749, %v2990
    %v2992 = vadd.f32 %v2917, %v2991
    %v2993 = vsel %vm2981, 1, 0
    %v2994 = vsel %vm2982, 1, 0
    %v2995 = vcvt.s32.f32 %v2993
    %v2996 = vcvt.s32.f32 %v2994
    %2998 = vset.pattern.permute.xlu0 0
    %2999 = vperm.xlu0 %2998, %v2995
    %v3000 = vpop.permute.xlu0 %2999
    %3003 = vset.pattern.permute.xlu0 0
    %3004 = vperm.xlu0 %3003, %v2996
    %v3005 = vpop.permute.xlu0 %3004
    %v3007 = vmul.f32 %v3000, %v753
    %v3008 = vmul.f32 %v3005, %v753
    %v3009 = vadd.f32 %v2934, %v3007
    %v3010 = vadd.f32 %v2935, %v3008
    %v3011 = vsub.f32 0.0, %v2967
    %v3012 = vmul.f32 %v3011, 1.442695
    %v3013 = vpow.pop %v3012
    %v3014 = vadd.f32 %v3013, 1.0
    %v3015 = vrcp.pop %v3014
    %v3016 = vmul.f32 %v3014, %v3015
    %v3017 = vsub.f32 1.0, %v3016
    %v3018 = vmul.f32 %v3015, %v3017
    %v3019 = vadd.f32 %v3015, %v3018
    %vm3020 = vweird.f32 %v3014
    %vm3021 = vweird.f32 %v3015
    %vm3022 = vmor %vm3020, %vm3021
    %v3023 = vsel %vm3022, %v3015, %v3019
    %v3024 = vand.u32 2147483647, %v3014
    %vm3025 = vcmp.eq.f32.partialorder %v3024, 8.507059e+37
    %v3026 = vand.u32 %v3014, 2147483648
    %v3027 = vor.u32 1.1754944e-38, %v3026
    %v3028 = vsel %vm3025, %v3027, %v3023
    %v3029 = vmul.f32 1.0, %v3028
    %v3030 = vmul.f32 %v749, %v3029
    %v3031 = vadd.f32 %v2956, %v3030
    %v3032 = vsel %vm2981, -inf, %v2957
    %v3033 = vsel %vm2982, -inf, %v2958
    %v3034 = vsel %vm456, %v3032, -inf
    %v3035 = vsel %vm456, %v3033, -inf
    %v3036 = vmax.f32 %v3034, %v3035
    %v3037 = vrot.slane %v3036, 4
    %v3038 = vmax.f32 %v3036, %v3037
    %v3039 = vrot.slane %v3038, 2
    %v3040 = vmax.f32 %v3038, %v3039
    %v3041 = vrot.slane %v3040, 1
    %v3042 = vmax.f32 %v3040, %v3041
    %vm3043 = vcmp.eq.f32.partialorder %v3032, %v3042
    %vm3044 = vcmp.eq.f32.partialorder %v3033, %v3042
    %v3045 = vsel %vm3043, %v449, 16.0
    %v3046 = vsel %vm3044, %v450, 16.0
    %v3047 = vsel %vm456, %v3045, inf
    %v3048 = vsel %vm456, %v3046, inf
    %v3049 = vmin.f32 %v3047, %v3048
    %v3050 = vrot.slane %v3049, 4
    %v3051 = vmin.f32 %v3049, %v3050
    %v3052 = vrot.slane %v3051, 2
    %v3053 = vmin.f32 %v3051, %v3052
    %v3054 = vrot.slane %v3053, 1
    %v3055 = vmin.f32 %v3053, %v3054
    %vm3056 = vcmp.eq.f32.partialorder %v449, %v3055
    %vm3057 = vcmp.eq.f32.partialorder %v450, %v3055
    %3059 = vset.pattern.permute.xlu0 0
    %3060 = vperm.xlu0 %3059, %v3055
    %v3061 = vpop.permute.xlu0 %3060
    %vm3063 = vcmp.eq.f32.partialorder %v455, %v3061
    %v3064 = vsel %vm3063, 1, 0
    %v3065 = vcvt.s32.f32 %v3064
    %v3066 = vmul.f32 %v871, %v3065
    %v3067 = vadd.f32 %v2992, %v3066
    %v3068 = vsel %vm3056, 1, 0
    %v3069 = vsel %vm3057, 1, 0
    %v3070 = vcvt.s32.f32 %v3068
    %v3071 = vcvt.s32.f32 %v3069
    %3073 = vset.pattern.permute.xlu0 0
    %3074 = vperm.xlu0 %3073, %v3070
    %v3075 = vpop.permute.xlu0 %3074
    %3078 = vset.pattern.permute.xlu0 0
    %3079 = vperm.xlu0 %3078, %v3071
    %v3080 = vpop.permute.xlu0 %3079
    %v3082 = vmul.f32 %v3075, %v875
    %v3083 = vmul.f32 %v3080, %v875
    %v3084 = vadd.f32 %v3009, %v3082
    %v3085 = vadd.f32 %v3010, %v3083
    %v3086 = vsub.f32 0.0, %v3042
    %v3087 = vmul.f32 %v3086, 1.442695
    %v3088 = vpow.pop %v3087
    %v3089 = vadd.f32 %v3088, 1.0
    %v3090 = vrcp.pop %v3089
    %v3091 = vmul.f32 %v3089, %v3090
    %v3092 = vsub.f32 1.0, %v3091
    %v3093 = vmul.f32 %v3090, %v3092
    %v3094 = vadd.f32 %v3090, %v3093
    %vm3095 = vweird.f32 %v3089
    %vm3096 = vweird.f32 %v3090
    %vm3097 = vmor %vm3095, %vm3096
    %v3098 = vsel %vm3097, %v3090, %v3094
    %v3099 = vand.u32 2147483647, %v3089
    %vm3100 = vcmp.eq.f32.partialorder %v3099, 8.507059e+37
    %v3101 = vand.u32 %v3089, 2147483648
    %v3102 = vor.u32 1.1754944e-38, %v3101
    %v3103 = vsel %vm3100, %v3102, %v3098
    %v3104 = vmul.f32 1.0, %v3103
    %v3105 = vmul.f32 %v871, %v3104
    %v3106 = vadd.f32 %v3031, %v3105
    %v3107 = vsel %vm3056, -inf, %v3032
    %v3108 = vsel %vm3057, -inf, %v3033
    %v3109 = vsel %vm456, %v3107, -inf
    %v3110 = vsel %vm456, %v3108, -inf
    %v3111 = vmax.f32 %v3109, %v3110
    %v3112 = vrot.slane %v3111, 4
    %v3113 = vmax.f32 %v3111, %v3112
    %v3114 = vrot.slane %v3113, 2
    %v3115 = vmax.f32 %v3113, %v3114
    %v3116 = vrot.slane %v3115, 1
    %v3117 = vmax.f32 %v3115, %v3116
    %vm3118 = vcmp.eq.f32.partialorder %v3107, %v3117
    %vm3119 = vcmp.eq.f32.partialorder %v3108, %v3117
    %v3120 = vsel %vm3118, %v449, 16.0
    %v3121 = vsel %vm3119, %v450, 16.0
    %v3122 = vsel %vm456, %v3120, inf
    %v3123 = vsel %vm456, %v3121, inf
    %v3124 = vmin.f32 %v3122, %v3123
    %v3125 = vrot.slane %v3124, 4
    %v3126 = vmin.f32 %v3124, %v3125
    %v3127 = vrot.slane %v3126, 2
    %v3128 = vmin.f32 %v3126, %v3127
    %v3129 = vrot.slane %v3128, 1
    %v3130 = vmin.f32 %v3128, %v3129
    %vm3131 = vcmp.eq.f32.partialorder %v449, %v3130
    %vm3132 = vcmp.eq.f32.partialorder %v450, %v3130
    %3134 = vset.pattern.permute.xlu0 0
    %3135 = vperm.xlu0 %3134, %v3130
    %v3136 = vpop.permute.xlu0 %3135
    %vm3138 = vcmp.eq.f32.partialorder %v455, %v3136
    %v3139 = vsel %vm3138, 1, 0
    %v3140 = vcvt.s32.f32 %v3139
    %v3141 = vmul.f32 %v993, %v3140
    %v3142 = vadd.f32 %v3067, %v3141
    %v3143 = vsel %vm3131, 1, 0
    %v3144 = vsel %vm3132, 1, 0
    %v3145 = vcvt.s32.f32 %v3143
    %v3146 = vcvt.s32.f32 %v3144
    %3148 = vset.pattern.permute.xlu0 0
    %3149 = vperm.xlu0 %3148, %v3145
    %v3150 = vpop.permute.xlu0 %3149
    %3153 = vset.pattern.permute.xlu0 0
    %3154 = vperm.xlu0 %3153, %v3146
    %v3155 = vpop.permute.xlu0 %3154
    %v3157 = vmul.f32 %v3150, %v997
    %v3158 = vmul.f32 %v3155, %v997
    %v3159 = vadd.f32 %v3084, %v3157
    %v3160 = vadd.f32 %v3085, %v3158
    %v3161 = vsub.f32 0.0, %v3117
    %v3162 = vmul.f32 %v3161, 1.442695
    %v3163 = vpow.pop %v3162
    %v3164 = vadd.f32 %v3163, 1.0
    %v3165 = vrcp.pop %v3164
    %v3166 = vmul.f32 %v3164, %v3165
    %v3167 = vsub.f32 1.0, %v3166
    %v3168 = vmul.f32 %v3165, %v3167
    %v3169 = vadd.f32 %v3165, %v3168
    %vm3170 = vweird.f32 %v3164
    %vm3171 = vweird.f32 %v3165
    %vm3172 = vmor %vm3170, %vm3171
    %v3173 = vsel %vm3172, %v3165, %v3169
    %v3174 = vand.u32 2147483647, %v3164
    %vm3175 = vcmp.eq.f32.partialorder %v3174, 8.507059e+37
    %v3176 = vand.u32 %v3164, 2147483648
    %v3177 = vor.u32 1.1754944e-38, %v3176
    %v3178 = vsel %vm3175, %v3177, %v3173
    %v3179 = vmul.f32 1.0, %v3178
    %v3180 = vmul.f32 %v993, %v3179
    %v3181 = vadd.f32 %v3106, %v3180
    %v3182 = vsel %vm3131, -inf, %v3107
    %v3183 = vsel %vm3132, -inf, %v3108
    %v3184 = vsel %vm456, %v3182, -inf
    %v3185 = vsel %vm456, %v3183, -inf
    %v3186 = vmax.f32 %v3184, %v3185
    %v3187 = vrot.slane %v3186, 4
    %v3188 = vmax.f32 %v3186, %v3187
    %v3189 = vrot.slane %v3188, 2
    %v3190 = vmax.f32 %v3188, %v3189
    %v3191 = vrot.slane %v3190, 1
    %v3192 = vmax.f32 %v3190, %v3191
    %vm3193 = vcmp.eq.f32.partialorder %v3182, %v3192
    %vm3194 = vcmp.eq.f32.partialorder %v3183, %v3192
    %v3195 = vsel %vm3193, %v449, 16.0
    %v3196 = vsel %vm3194, %v450, 16.0
    %v3197 = vsel %vm456, %v3195, inf
    %v3198 = vsel %vm456, %v3196, inf
    %v3199 = vmin.f32 %v3197, %v3198
    %v3200 = vrot.slane %v3199, 4
    %v3201 = vmin.f32 %v3199, %v3200
    %v3202 = vrot.slane %v3201, 2
    %v3203 = vmin.f32 %v3201, %v3202
    %v3204 = vrot.slane %v3203, 1
    %v3205 = vmin.f32 %v3203, %v3204
    %vm3206 = vcmp.eq.f32.partialorder %v449, %v3205
    %vm3207 = vcmp.eq.f32.partialorder %v450, %v3205
    %3209 = vset.pattern.permute.xlu0 0
    %3210 = vperm.xlu0 %3209, %v3205
    %v3211 = vpop.permute.xlu0 %3210
    %vm3213 = vcmp.eq.f32.partialorder %v455, %v3211
    %v3214 = vsel %vm3213, 1, 0
    %v3215 = vcvt.s32.f32 %v3214
    %v3216 = vmul.f32 %v1115, %v3215
    %v3217 = vadd.f32 %v3142, %v3216
    %v3218 = vsel %vm3206, 1, 0
    %v3219 = vsel %vm3207, 1, 0
    %v3220 = vcvt.s32.f32 %v3218
    %v3221 = vcvt.s32.f32 %v3219
    %3223 = vset.pattern.permute.xlu0 0
    %3224 = vperm.xlu0 %3223, %v3220
    %v3225 = vpop.permute.xlu0 %3224
    %3228 = vset.pattern.permute.xlu0 0
    %3229 = vperm.xlu0 %3228, %v3221
    %v3230 = vpop.permute.xlu0 %3229
    %v3232 = vmul.f32 %v3225, %v1119
    %v3233 = vmul.f32 %v3230, %v1119
    %v3234 = vadd.f32 %v3159, %v3232
    %v3235 = vadd.f32 %v3160, %v3233
    %v3236 = vsub.f32 0.0, %v3192
    %v3237 = vmul.f32 %v3236, 1.442695
    %v3238 = vpow.pop %v3237
    %v3239 = vadd.f32 %v3238, 1.0
    %v3240 = vrcp.pop %v3239
    %v3241 = vmul.f32 %v3239, %v3240
    %v3242 = vsub.f32 1.0, %v3241
    %v3243 = vmul.f32 %v3240, %v3242
    %v3244 = vadd.f32 %v3240, %v3243
    %vm3245 = vweird.f32 %v3239
    %vm3246 = vweird.f32 %v3240
    %vm3247 = vmor %vm3245, %vm3246
    %v3248 = vsel %vm3247, %v3240, %v3244
    %v3249 = vand.u32 2147483647, %v3239
    %vm3250 = vcmp.eq.f32.partialorder %v3249, 8.507059e+37
    %v3251 = vand.u32 %v3239, 2147483648
    %v3252 = vor.u32 1.1754944e-38, %v3251
    %v3253 = vsel %vm3250, %v3252, %v3248
    %v3254 = vmul.f32 1.0, %v3253
    %v3255 = vmul.f32 %v1115, %v3254
    %v3256 = vadd.f32 %v3181, %v3255
    %v3257 = vsel %vm3206, -inf, %v3182
    %v3258 = vsel %vm3207, -inf, %v3183
    %v3259 = vsel %vm456, %v3257, -inf
    %v3260 = vsel %vm456, %v3258, -inf
    %v3261 = vmax.f32 %v3259, %v3260
    %v3262 = vrot.slane %v3261, 4
    %v3263 = vmax.f32 %v3261, %v3262
    %v3264 = vrot.slane %v3263, 2
    %v3265 = vmax.f32 %v3263, %v3264
    %v3266 = vrot.slane %v3265, 1
    %v3267 = vmax.f32 %v3265, %v3266
    %vm3268 = vcmp.eq.f32.partialorder %v3257, %v3267
    %vm3269 = vcmp.eq.f32.partialorder %v3258, %v3267
    %v3270 = vsel %vm3268, %v449, 16.0
    %v3271 = vsel %vm3269, %v450, 16.0
    %v3272 = vsel %vm456, %v3270, inf
    %v3273 = vsel %vm456, %v3271, inf
    %v3274 = vmin.f32 %v3272, %v3273
    %v3275 = vrot.slane %v3274, 4
    %v3276 = vmin.f32 %v3274, %v3275
    %v3277 = vrot.slane %v3276, 2
    %v3278 = vmin.f32 %v3276, %v3277
    %v3279 = vrot.slane %v3278, 1
    %v3280 = vmin.f32 %v3278, %v3279
    %vm3281 = vcmp.eq.f32.partialorder %v449, %v3280
    %vm3282 = vcmp.eq.f32.partialorder %v450, %v3280
    %3284 = vset.pattern.permute.xlu0 0
    %3285 = vperm.xlu0 %3284, %v3280
    %v3286 = vpop.permute.xlu0 %3285
    %vm3288 = vcmp.eq.f32.partialorder %v455, %v3286
    %v3289 = vsel %vm3288, 1, 0
    %v3290 = vcvt.s32.f32 %v3289
    %v3291 = vmul.f32 %v1237, %v3290
    %v3292 = vadd.f32 %v3217, %v3291
    %v3293 = vsel %vm3281, 1, 0
    %v3294 = vsel %vm3282, 1, 0
    %v3295 = vcvt.s32.f32 %v3293
    %v3296 = vcvt.s32.f32 %v3294
    %3298 = vset.pattern.permute.xlu0 0
    %3299 = vperm.xlu0 %3298, %v3295
    %v3300 = vpop.permute.xlu0 %3299
    %3303 = vset.pattern.permute.xlu0 0
    %3304 = vperm.xlu0 %3303, %v3296
    %v3305 = vpop.permute.xlu0 %3304
    %v3307 = vmul.f32 %v3300, %v1241
    %v3308 = vmul.f32 %v3305, %v1241
    %v3309 = vadd.f32 %v3234, %v3307
    %v3310 = vadd.f32 %v3235, %v3308
    %v3311 = vsub.f32 0.0, %v3267
    %v3312 = vmul.f32 %v3311, 1.442695
    %v3313 = vpow.pop %v3312
    %v3314 = vadd.f32 %v3313, 1.0
    %v3315 = vrcp.pop %v3314
    %v3316 = vmul.f32 %v3314, %v3315
    %v3317 = vsub.f32 1.0, %v3316
    %v3318 = vmul.f32 %v3315, %v3317
    %v3319 = vadd.f32 %v3315, %v3318
    %vm3320 = vweird.f32 %v3314
    %vm3321 = vweird.f32 %v3315
    %vm3322 = vmor %vm3320, %vm3321
    %v3323 = vsel %vm3322, %v3315, %v3319
    %v3324 = vand.u32 2147483647, %v3314
    %vm3325 = vcmp.eq.f32.partialorder %v3324, 8.507059e+37
    %v3326 = vand.u32 %v3314, 2147483648
    %v3327 = vor.u32 1.1754944e-38, %v3326
    %v3328 = vsel %vm3325, %v3327, %v3323
    %v3329 = vmul.f32 1.0, %v3328
    %v3330 = vmul.f32 %v1237, %v3329
    %v3331 = vadd.f32 %v3256, %v3330
    %v3332 = vsel %vm3281, -inf, %v3257
    %v3333 = vsel %vm3282, -inf, %v3258
    %v3334 = vsel %vm456, %v3332, -inf
    %v3335 = vsel %vm456, %v3333, -inf
    %v3336 = vmax.f32 %v3334, %v3335
    %v3337 = vrot.slane %v3336, 4
    %v3338 = vmax.f32 %v3336, %v3337
    %v3339 = vrot.slane %v3338, 2
    %v3340 = vmax.f32 %v3338, %v3339
    %v3341 = vrot.slane %v3340, 1
    %v3342 = vmax.f32 %v3340, %v3341
    %vm3343 = vcmp.eq.f32.partialorder %v3332, %v3342
    %vm3344 = vcmp.eq.f32.partialorder %v3333, %v3342
    %v3345 = vsel %vm3343, %v449, 16.0
    %v3346 = vsel %vm3344, %v450, 16.0
    %v3347 = vsel %vm456, %v3345, inf
    %v3348 = vsel %vm456, %v3346, inf
    %v3349 = vmin.f32 %v3347, %v3348
    %v3350 = vrot.slane %v3349, 4
    %v3351 = vmin.f32 %v3349, %v3350
    %v3352 = vrot.slane %v3351, 2
    %v3353 = vmin.f32 %v3351, %v3352
    %v3354 = vrot.slane %v3353, 1
    %v3355 = vmin.f32 %v3353, %v3354
    %vm3356 = vcmp.eq.f32.partialorder %v449, %v3355
    %vm3357 = vcmp.eq.f32.partialorder %v450, %v3355
    %3359 = vset.pattern.permute.xlu0 0
    %3360 = vperm.xlu0 %3359, %v3355
    %v3361 = vpop.permute.xlu0 %3360
    %vm3363 = vcmp.eq.f32.partialorder %v455, %v3361
    %v3364 = vsel %vm3363, 1, 0
    %v3365 = vcvt.s32.f32 %v3364
    %v3366 = vmul.f32 %v1359, %v3365
    %v3367 = vadd.f32 %v3292, %v3366
    %v3368 = vsel %vm3356, 1, 0
    %v3369 = vsel %vm3357, 1, 0
    %v3370 = vcvt.s32.f32 %v3368
    %v3371 = vcvt.s32.f32 %v3369
    %3373 = vset.pattern.permute.xlu0 0
    %3374 = vperm.xlu0 %3373, %v3370
    %v3375 = vpop.permute.xlu0 %3374
    %3378 = vset.pattern.permute.xlu0 0
    %3379 = vperm.xlu0 %3378, %v3371
    %v3380 = vpop.permute.xlu0 %3379
    %v3382 = vmul.f32 %v3375, %v1363
    %v3383 = vmul.f32 %v3380, %v1363
    %v3384 = vadd.f32 %v3309, %v3382
    %v3385 = vadd.f32 %v3310, %v3383
    %v3386 = vsub.f32 0.0, %v3342
    %v3387 = vmul.f32 %v3386, 1.442695
    %v3388 = vpow.pop %v3387
    %v3389 = vadd.f32 %v3388, 1.0
    %v3390 = vrcp.pop %v3389
    %v3391 = vmul.f32 %v3389, %v3390
    %v3392 = vsub.f32 1.0, %v3391
    %v3393 = vmul.f32 %v3390, %v3392
    %v3394 = vadd.f32 %v3390, %v3393
    %vm3395 = vweird.f32 %v3389
    %vm3396 = vweird.f32 %v3390
    %vm3397 = vmor %vm3395, %vm3396
    %v3398 = vsel %vm3397, %v3390, %v3394
    %v3399 = vand.u32 2147483647, %v3389
    %vm3400 = vcmp.eq.f32.partialorder %v3399, 8.507059e+37
    %v3401 = vand.u32 %v3389, 2147483648
    %v3402 = vor.u32 1.1754944e-38, %v3401
    %v3403 = vsel %vm3400, %v3402, %v3398
    %v3404 = vmul.f32 1.0, %v3403
    %v3405 = vmul.f32 %v1359, %v3404
    %v3406 = vadd.f32 %v3331, %v3405
    %v3408 = vsel %vm2563, %v3367, 0
    %3410 = vmatpush.msra.mxu0 0.0
    %3411 = vmatpush.msra.mxu0 0.0
    %3412 = vmatpush.msra.mxu0 0.0
    %3413 = vmatpush.msra.mxu0 0.0
    %3414 = vmatpush.msra.mxu0 0.0
    %3415 = vmatpush.msra.mxu0 0.0
    %3416 = vmatpush.msra.mxu0 0.0
    %3417 = vmatpush.msra.mxu0 0.0
    %3418 = vmatpush.msra.mxu0 0.0
    %3419 = vmatpush.msra.mxu0 0.0
    %3420 = vmatpush.msra.mxu0 0.0
    %3421 = vmatpush.msra.mxu0 0.0
    %3422 = vmatpush.msra.mxu0 0.0
    %3423 = vmatpush.msra.mxu0 0.0
    %3424 = vmatpush.msra.mxu0 %v2764
    %3425 = vmatpush.msra.mxu0 %v2763
    %3426 = vmatmul.f32.gmra.mxu0 %v3408
    %v3427 = vpop.f32.mrf.mxu0
    %v3428 = vadd.f32 0.0, %v3427
    %3429 = vdwg.mxu0
    %3431 = vset.pattern.permute.xlu0 0
    %3432 = vperm.xlu0 %3431, %v3406
    %v3433 = vpop.permute.xlu0 %3432
    %v3435 = vmul.f32 %v3428, %v3433
    %vm3436 = vcmp.ne.f32.partialorder %v2597, 0.0
    %vm3437 = vcmp.ne.f32.partialorder %v2598, 0.0
    %v3438 = vsel %vm3436, 1, 0
    %v3439 = vsel %vm3437, 1, 0
    %v3440 = vcvt.s32.f32 %v3438
    %v3441 = vcvt.s32.f32 %v3439
    %v3443 = vsel %vm2563, %v3440, 0
    %v3446 = vsel %vm2563, %v3441, 0
    %3448 = vmatpush.msra.mxu0 0.0
    %3449 = vmatpush.msra.mxu0 0.0
    %3450 = vmatpush.msra.mxu0 0.0
    %3451 = vmatpush.msra.mxu0 0.0
    %3452 = vmatpush.msra.mxu0 0.0
    %3453 = vmatpush.msra.mxu0 0.0
    %3454 = vmatpush.msra.mxu0 0.0
    %3455 = vmatpush.msra.mxu0 0.0
    %3456 = vmatpush.msra.mxu0 0.0
    %3457 = vmatpush.msra.mxu0 0.0
    %3458 = vmatpush.msra.mxu0 0.0
    %3459 = vmatpush.msra.mxu0 0.0
    %3460 = vmatpush.msra.mxu0 0.0
    %3461 = vmatpush.msra.mxu0 0.0
    %3462 = vmatpush.msra.mxu0 %v3441
    %3463 = vmatpush.msra.mxu0 %v3440
    %3464 = vmatmul.f32.gmra.mxu0 %v3443
    %v3465 = vpop.f32.mrf.mxu0
    %v3466 = vadd.f32 0.0, %v3465
    %3467 = vmatmul.f32.gmra.mxu0 %v3446
    %v3468 = vpop.f32.mrf.mxu0
    %v3469 = vadd.f32 0.0, %v3468
    %3470 = vdwg.mxu0
    %vm3471 = vcmp.ne.f32.partialorder %v3466, 0.0
    %vm3472 = vcmp.ne.f32.partialorder %v3469, 0.0
    %v3473 = vsel %vm3471, 1, 0
    %v3474 = vsel %vm3472, 1, 0
    %v3475 = vcvt.s32.f32 %v3473
    %v3476 = vcvt.s32.f32 %v3474
    %3477 = vmatpush.msra.mxu0 0.0
    %3478 = vmatpush.msra.mxu0 0.0
    %3479 = vmatpush.msra.mxu0 0.0
    %3480 = vmatpush.msra.mxu0 0.0
    %3481 = vmatpush.msra.mxu0 0.0
    %3482 = vmatpush.msra.mxu0 0.0
    %3483 = vmatpush.msra.mxu0 0.0
    %3484 = vmatpush.msra.mxu0 0.0
    %3485 = vmatpush.msra.mxu0 0.0
    %3486 = vmatpush.msra.mxu0 0.0
    %3487 = vmatpush.msra.mxu0 0.0
    %3488 = vmatpush.msra.mxu0 0.0
    %3489 = vmatpush.msra.mxu0 0.0
    %3490 = vmatpush.msra.mxu0 0.0
    %3491 = vmatpush.msra.mxu0 %v3476
    %3492 = vmatpush.msra.mxu0 %v3475
    %3493 = vmatmul.f32.gmra.mxu0 %v3408
    %v3494 = vpop.f32.mrf.mxu0
    %v3495 = vadd.f32 0.0, %v3494
    %3496 = vdwg.mxu0
    %v3498 = vsel %vm2563, %v3495, 0
    %3500 = vmatpush.msra.mxu0 0.0
    %3501 = vmatpush.msra.mxu0 0.0
    %3502 = vmatpush.msra.mxu0 0.0
    %3503 = vmatpush.msra.mxu0 0.0
    %3504 = vmatpush.msra.mxu0 0.0
    %3505 = vmatpush.msra.mxu0 0.0
    %3506 = vmatpush.msra.mxu0 0.0
    %3507 = vmatpush.msra.mxu0 0.0
    %3508 = vmatpush.msra.mxu0 0.0
    %3509 = vmatpush.msra.mxu0 0.0
    %3510 = vmatpush.msra.mxu0 0.0
    %3511 = vmatpush.msra.mxu0 0.0
    %3512 = vmatpush.msra.mxu0 0.0
    %3513 = vmatpush.msra.mxu0 0.0
    %3514 = vmatpush.msra.mxu0 %v3385
    %3515 = vmatpush.msra.mxu0 %v3384
    %3516 = vmatmul.f32.gmra.mxu0 %v3498
    %v3517 = vpop.f32.mrf.mxu0
    %v3518 = vadd.f32 0.0, %v3517
    %3519 = vdwg.mxu0
    %vm3520 = vcmask 64512
    %v3521 = vsel %vm3520, %v3518, 0.0
    %3522 = vadd.xlane.f32.xlu0 %v3521
    %v3523 = vpop.xlane.xlu0 %3522
    %v3524 = vsel %vm2570, %v3523, 0.0
    %v3525 = vsel %vm3520, %v3524, 0.0
    %v3526 = vrot.slane %v3525, 4
    %v3527 = vadd.f32 %v3525, %v3526
    %v3528 = vrot.slane %v3527, 2
    %v3529 = vadd.f32 %v3527, %v3528
    %v3530 = vrot.slane %v3529, 1
    %v3531 = vadd.f32 %v3529, %v3530
    %v3532 = vrcp.pop %v3531
    %v3533 = vmul.f32 %v3531, %v3532
    %v3534 = vsub.f32 1.0, %v3533
    %v3535 = vmul.f32 %v3532, %v3534
    %v3536 = vadd.f32 %v3532, %v3535
    %vm3537 = vweird.f32 %v3531
    %vm3538 = vweird.f32 %v3532
    %vm3539 = vmor %vm3537, %vm3538
    %v3540 = vsel %vm3539, %v3532, %v3536
    %v3541 = vand.u32 2147483647, %v3531
    %vm3542 = vcmp.eq.f32.partialorder %v3541, 8.507059e+37
    %v3543 = vand.u32 %v3531, 2147483648
    %v3544 = vor.u32 1.1754944e-38, %v3543
    %v3545 = vsel %vm3542, %v3544, %v3540
    %v3546 = vmul.f32 %v3518, %v3545
    %v3547 = vsel %vm3520, %v3546, 0.0
    %3548 = vadd.xlane.f32.xlu0 %v3547
    %v3549 = vpop.xlane.xlu0 %3548
    %v3550 = vadd.f32 %v3549, 1.0
    %v3551 = vrsqrt.pop %v3550
    %v3552 = vmul.f32 %v3551, %v3550
    %v3553 = vmul.f32 %v3552, %v3551
    %v3554 = vmul.f32 0.5, %v3553
    %v3555 = vsub.f32 1.5, %v3554
    %v3556 = vmul.f32 %v3551, %v3555
    %vm3557 = vweird.f32 %v3550
    %vm3558 = vweird.f32 %v3551
    %vm3559 = vmor %vm3557, %vm3558
    %v3560 = vsel %vm3559, %v3551, %v3556
    %s3561 = scalar_lea.vmem [#allocation11], 2
    %v3562 = vld [vmem:[%s3561] sm:$0x1]
    %s3563 = scalar_lea.vmem [#allocation12], 2
    %v3564 = vld [vmem:[%s3563] sm:$0x1]
    %v3565 = vrot.slane %v3435, 4
    %v3566 = vadd.f32 %v3435, %v3565
    %v3567 = vrot.slane %v3566, 2
    %v3568 = vadd.f32 %v3566, %v3567
    %v3569 = vrot.slane %v3568, 1
    %v3570 = vadd.f32 %v3568, %v3569
    %v3571 = vrcp.pop 8.0
    %v3572 = vmul.f32 8.0, %v3571
    %v3573 = vsub.f32 1.0, %v3572
    %v3574 = vmul.f32 %v3571, %v3573
    %v3575 = vadd.f32 %v3571, %v3574
    %vm3576 = vweird.f32 %v3571
    %v3577 = vsel %vm3576, %v3571, %v3575
    %v3578 = vmul.f32 %v3570, %v3577
    %v3579 = vsub.f32 %v3435, %v3578
    %v3580 = vmul.f32 %v3579, %v3579
    %v3581 = vrot.slane %v3580, 4
    %v3582 = vadd.f32 %v3580, %v3581
    %v3583 = vrot.slane %v3582, 2
    %v3584 = vadd.f32 %v3582, %v3583
    %v3585 = vrot.slane %v3584, 1
    %v3586 = vadd.f32 %v3584, %v3585
    %v3587 = vmul.f32 %v3586, %v3577
    %v3588 = vadd.f32 %v3587, 1e-05
    %v3589 = vrsqrt.pop %v3588
    %v3590 = vmul.f32 %v3589, %v3588
    %v3591 = vmul.f32 %v3590, %v3589
    %v3592 = vmul.f32 0.5, %v3591
    %v3593 = vsub.f32 1.5, %v3592
    %v3594 = vmul.f32 %v3589, %v3593
    %vm3595 = vweird.f32 %v3588
    %vm3596 = vweird.f32 %v3589
    %vm3597 = vmor %vm3595, %vm3596
    %v3598 = vsel %vm3597, %v3589, %v3594
    %v3599 = vmul.f32 %v3579, %v3598
    %v3601 = vperm.slane %v3562, 0
    %v3603 = vmul.f32 %v3599, %v3601
    %v3605 = vperm.slane %v3564, 0
    %v3607 = vadd.f32 %v3603, %v3605
    %s3608 = scalar_lea.vmem [#allocation8], 256
    %v3609 = vld [vmem:[%s3608] sm:$0xff]
    %v3610 = vld [vmem:[%s3608 + $0x8] sm:$0xff]
    %v3611 = vld [vmem:[%s3608 + $0x10] sm:$0xff]
    %v3612 = vld [vmem:[%s3608 + $0x18] sm:$0xff]
    %v3613 = vld [vmem:[%s3608 + $0x20] sm:$0xff]
    %v3614 = vld [vmem:[%s3608 + $0x28] sm:$0xff]
    %v3615 = vld [vmem:[%s3608 + $0x30] sm:$0xff]
    %v3616 = vld [vmem:[%s3608 + $0x38] sm:$0xff]
    %v3617 = vld [vmem:[%s3608 + $0x40] sm:$0xff]
    %v3618 = vld [vmem:[%s3608 + $0x48] sm:$0xff]
    %v3619 = vld [vmem:[%s3608 + $0x50] sm:$0xff]
    %v3620 = vld [vmem:[%s3608 + $0x58] sm:$0xff]
    %v3621 = vld [vmem:[%s3608 + $0x60] sm:$0xff]
    %v3622 = vld [vmem:[%s3608 + $0x68] sm:$0xff]
    %v3623 = vld [vmem:[%s3608 + $0x70] sm:$0xff]
    %v3624 = vld [vmem:[%s3608 + $0x78] sm:$0xff]
    %s3625 = scalar_lea.vmem [#allocation9], 2
    %v3626 = vld [vmem:[%s3625] sm:$0x1]
    %v3628 = vperm.slane %v3626, 0
    %3630 = vmatpush.msra.mxu0 %v3624
    %3631 = vmatpush.msra.mxu0 %v3623
    %3632 = vmatpush.msra.mxu0 %v3622
    %3633 = vmatpush.msra.mxu0 %v3621
    %3634 = vmatpush.msra.mxu0 %v3620
    %3635 = vmatpush.msra.mxu0 %v3619
    %3636 = vmatpush.msra.mxu0 %v3618
    %3637 = vmatpush.msra.mxu0 %v3617
    %3638 = vmatpush.msra.mxu0 %v3616
    %3639 = vmatpush.msra.mxu0 %v3615
    %3640 = vmatpush.msra.mxu0 %v3614
    %3641 = vmatpush.msra.mxu0 %v3613
    %3642 = vmatpush.msra.mxu0 %v3612
    %3643 = vmatpush.msra.mxu0 %v3611
    %3644 = vmatpush.msra.mxu0 %v3610
    %3645 = vmatpush.msra.mxu0 %v3609
    %3646 = vmatmul.f32.gmra.mxu0 %v3607
    %v3647 = vpop.f32.mrf.mxu0
    %v3648 = vadd.f32 %v3628, %v3647
    %3649 = vdwg.mxu0
    %v3650 = vmul.f32 %v3560, %v3648
    %v3652 = vsel %vm3520, %v3546, 0
    %3654 = vmatpush.msra.mxu0 0.0
    %3655 = vmatpush.msra.mxu0 0.0
    %3656 = vmatpush.msra.mxu0 0.0
    %3657 = vmatpush.msra.mxu0 0.0
    %3658 = vmatpush.msra.mxu0 0.0
    %3659 = vmatpush.msra.mxu0 0.0
    %3660 = vmatpush.msra.mxu0 0.0
    %3661 = vmatpush.msra.mxu0 0.0
    %3662 = vmatpush.msra.mxu0 0.0
    %3663 = vmatpush.msra.mxu0 0.0
    %3664 = vmatpush.msra.mxu0 0.0
    %3665 = vmatpush.msra.mxu0 0.0
    %3666 = vmatpush.msra.mxu0 0.0
    %3667 = vmatpush.msra.mxu0 0.0
    %3668 = vmatpush.msra.mxu0 0.0
    %3669 = vmatpush.msra.mxu0 %v3650
    %3670 = vmatmul.f32.gmra.mxu0 %v3652
    %v3671 = vpop.f32.mrf.mxu0
    %v3672 = vadd.f32 %v3650, %v3671
    %3673 = vdwg.mxu0
    %v3674 = vmul.f32 %v3560, %v3672
    %vm3675 = vcmp.gt.f32.partialorder %v3674, 0.0
    %v3676 = vmul.f32 %v3674, 0.01
    %v3677 = vsel %vm3675, %v3674, %v3676
    %v3679 = vsel %vm3520, %v3384, 0
    %v3682 = vsel %vm3520, %v3385, 0
    %3684 = vmatpush.msra.mxu0 0.0
    %3685 = vmatpush.msra.mxu0 0.0
    %3686 = vmatpush.msra.mxu0 0.0
    %3687 = vmatpush.msra.mxu0 0.0
    %3688 = vmatpush.msra.mxu0 0.0
    %3689 = vmatpush.msra.mxu0 0.0
    %3690 = vmatpush.msra.mxu0 0.0
    %3691 = vmatpush.msra.mxu0 0.0
    %3692 = vmatpush.msra.mxu0 0.0
    %3693 = vmatpush.msra.mxu0 0.0
    %3694 = vmatpush.msra.mxu0 0.0
    %3695 = vmatpush.msra.mxu0 0.0
    %3696 = vmatpush.msra.mxu0 0.0
    %3697 = vmatpush.msra.mxu0 0.0
    %3698 = vmatpush.msra.mxu0 0.0
    %3699 = vmatpush.msra.mxu0 %v3677
    %3700 = vmatmul.f32.gmra.mxu0 %v3679
    %v3701 = vpop.f32.mrf.mxu0
    %v3702 = vadd.f32 0.0, %v3701
    %3703 = vmatmul.f32.gmra.mxu0 %v3682
    %v3704 = vpop.f32.mrf.mxu0
    %v3705 = vadd.f32 0.0, %v3704
    %3706 = vdwg.mxu0
    %v3707 = vsub.f32 %v3702, %v2763
    %v3708 = vsub.f32 %v3705, %v2764
    %s3709 = scalar_lea.vmem [#allocation11], 5
    %v3710 = vld [vmem:[%s3709] sm:$0x1]
    %s3711 = scalar_lea.vmem [#allocation12], 5
    %v3712 = vld [vmem:[%s3711] sm:$0x1]
    %v3713 = vadd.f32 %v3707, %v3708
    %v3714 = vrot.slane %v3713, 4
    %v3715 = vadd.f32 %v3713, %v3714
    %v3716 = vrot.slane %v3715, 2
    %v3717 = vadd.f32 %v3715, %v3716
    %v3718 = vrot.slane %v3717, 1
    %v3719 = vadd.f32 %v3717, %v3718
    %v3720 = vmul.f32 %v3719, %v2644
    %v3721 = vsub.f32 %v3707, %v3720
    %v3722 = vsub.f32 %v3708, %v3720
    %v3723 = vmul.f32 %v3721, %v3721
    %v3724 = vmul.f32 %v3722, %v3722
    %v3725 = vadd.f32 %v3723, %v3724
    %v3726 = vrot.slane %v3725, 4
    %v3727 = vadd.f32 %v3725, %v3726
    %v3728 = vrot.slane %v3727, 2
    %v3729 = vadd.f32 %v3727, %v3728
    %v3730 = vrot.slane %v3729, 1
    %v3731 = vadd.f32 %v3729, %v3730
    %v3732 = vmul.f32 %v3731, %v2644
    %v3733 = vadd.f32 %v3732, 1e-05
    %v3734 = vrsqrt.pop %v3733
    %v3735 = vmul.f32 %v3734, %v3733
    %v3736 = vmul.f32 %v3735, %v3734
    %v3737 = vmul.f32 0.5, %v3736
    %v3738 = vsub.f32 1.5, %v3737
    %v3739 = vmul.f32 %v3734, %v3738
    %vm3740 = vweird.f32 %v3733
    %vm3741 = vweird.f32 %v3734
    %vm3742 = vmor %vm3740, %vm3741
    %v3743 = vsel %vm3742, %v3734, %v3739
    %v3744 = vmul.f32 %v3721, %v3743
    %v3745 = vmul.f32 %v3722, %v3743
    %v3747 = vperm.slane %v3710, 0
    %v3749 = vmul.f32 %v3744, %v3747
    %v3750 = vmul.f32 %v3745, %v3747
    %v3752 = vperm.slane %v3712, 0
    %v3754 = vadd.f32 %v3749, %v3752
    %v3755 = vadd.f32 %v3750, %v3752
    %s3756 = scalar_lea.vmem [#allocation8], 640
    %v3757 = vld [vmem:[%s3756] sm:$0xff]
    %v3758 = vld [vmem:[%s3756 + $0x8] sm:$0xff]
    %v3759 = vld [vmem:[%s3756 + $0x10] sm:$0xff]
    %v3760 = vld [vmem:[%s3756 + $0x18] sm:$0xff]
    %v3761 = vld [vmem:[%s3756 + $0x20] sm:$0xff]
    %v3762 = vld [vmem:[%s3756 + $0x28] sm:$0xff]
    %v3763 = vld [vmem:[%s3756 + $0x30] sm:$0xff]
    %v3764 = vld [vmem:[%s3756 + $0x38] sm:$0xff]
    %v3765 = vld [vmem:[%s3756 + $0x40] sm:$0xff]
    %v3766 = vld [vmem:[%s3756 + $0x48] sm:$0xff]
    %v3767 = vld [vmem:[%s3756 + $0x50] sm:$0xff]
    %v3768 = vld [vmem:[%s3756 + $0x58] sm:$0xff]
    %v3769 = vld [vmem:[%s3756 + $0x60] sm:$0xff]
    %v3770 = vld [vmem:[%s3756 + $0x68] sm:$0xff]
    %v3771 = vld [vmem:[%s3756 + $0x70] sm:$0xff]
    %v3772 = vld [vmem:[%s3756 + $0x78] sm:$0xff]
    %s3773 = scalar_lea.vmem [#allocation9], 5
    %v3774 = vld [vmem:[%s3773] sm:$0x1]
    %v3776 = vperm.slane %v3774, 0
    %3778 = vmatpush.msra.mxu0 %v3772
    %3779 = vmatpush.msra.mxu0 %v3771
    %3780 = vmatpush.msra.mxu0 %v3770
    %3781 = vmatpush.msra.mxu0 %v3769
    %3782 = vmatpush.msra.mxu0 %v3768
    %3783 = vmatpush.msra.mxu0 %v3767
    %3784 = vmatpush.msra.mxu0 %v3766
    %3785 = vmatpush.msra.mxu0 %v3765
    %3786 = vmatpush.msra.mxu0 %v3764
    %3787 = vmatpush.msra.mxu0 %v3763
    %3788 = vmatpush.msra.mxu0 %v3762
    %3789 = vmatpush.msra.mxu0 %v3761
    %3790 = vmatpush.msra.mxu0 %v3760
    %3791 = vmatpush.msra.mxu0 %v3759
    %3792 = vmatpush.msra.mxu0 %v3758
    %3793 = vmatpush.msra.mxu0 %v3757
    %3794 = vmatmul.f32.gmra.mxu0 %v3754
    %v3795 = vpop.f32.mrf.mxu0
    %v3796 = vadd.f32 %v3776, %v3795
    %3797 = vmatmul.f32.gmra.mxu0 %v3755
    %v3798 = vpop.f32.mrf.mxu0
    %v3799 = vadd.f32 %v3776, %v3798
    %3800 = vdwg.mxu0
    %vm3801 = vcmp.gt.f32.partialorder %v3796, 0.0
    %vm3802 = vcmp.gt.f32.partialorder %v3799, 0.0
    %v3803 = vmul.f32 %v3796, 0.01
    %v3804 = vmul.f32 %v3799, 0.01
    %v3805 = vsel %vm3801, %v3796, %v3803
    %v3806 = vsel %vm3802, %v3799, %v3804
    %v3807 = vmul.f32 %v3805, %v3702
    %v3808 = vmul.f32 %v3806, %v3705
    %v3809 = vadd.f32 %v3807, %v2763
    %v3810 = vadd.f32 %v3808, %v2764
    %s3811 = scalar_lea.vmem [#allocation11], 3
    %v3812 = vld [vmem:[%s3811] sm:$0x1]
    %s3813 = scalar_lea.vmem [#allocation12], 3
    %v3814 = vld [vmem:[%s3813] sm:$0x1]
    %v3815 = vadd.f32 %v3809, %v3810
    %v3816 = vrot.slane %v3815, 4
    %v3817 = vadd.f32 %v3815, %v3816
    %v3818 = vrot.slane %v3817, 2
    %v3819 = vadd.f32 %v3817, %v3818
    %v3820 = vrot.slane %v3819, 1
    %v3821 = vadd.f32 %v3819, %v3820
    %v3822 = vmul.f32 %v3821, %v2644
    %v3823 = vsub.f32 %v3809, %v3822
    %v3824 = vsub.f32 %v3810, %v3822
    %v3825 = vmul.f32 %v3823, %v3823
    %v3826 = vmul.f32 %v3824, %v3824
    %v3827 = vadd.f32 %v3825, %v3826
    %v3828 = vrot.slane %v3827, 4
    %v3829 = vadd.f32 %v3827, %v3828
    %v3830 = vrot.slane %v3829, 2
    %v3831 = vadd.f32 %v3829, %v3830
    %v3832 = vrot.slane %v3831, 1
    %v3833 = vadd.f32 %v3831, %v3832
    %v3834 = vmul.f32 %v3833, %v2644
    %v3835 = vadd.f32 %v3834, 1e-05
    %v3836 = vrsqrt.pop %v3835
    %v3837 = vmul.f32 %v3836, %v3835
    %v3838 = vmul.f32 %v3837, %v3836
    %v3839 = vmul.f32 0.5, %v3838
    %v3840 = vsub.f32 1.5, %v3839
    %v3841 = vmul.f32 %v3836, %v3840
    %vm3842 = vweird.f32 %v3835
    %vm3843 = vweird.f32 %v3836
    %vm3844 = vmor %vm3842, %vm3843
    %v3845 = vsel %vm3844, %v3836, %v3841
    %v3846 = vmul.f32 %v3823, %v3845
    %v3847 = vmul.f32 %v3824, %v3845
    %v3849 = vperm.slane %v3812, 0
    %v3851 = vmul.f32 %v3846, %v3849
    %v3852 = vmul.f32 %v3847, %v3849
    %v3854 = vperm.slane %v3814, 0
    %v3856 = vadd.f32 %v3851, %v3854
    %v3857 = vadd.f32 %v3852, %v3854
    %s3858 = scalar_lea.vmem [#allocation8], 384
    %v3859 = vld [vmem:[%s3858] sm:$0xff]
    %v3860 = vld [vmem:[%s3858 + $0x8] sm:$0xff]
    %v3861 = vld [vmem:[%s3858 + $0x10] sm:$0xff]
    %v3862 = vld [vmem:[%s3858 + $0x18] sm:$0xff]
    %v3863 = vld [vmem:[%s3858 + $0x20] sm:$0xff]
    %v3864 = vld [vmem:[%s3858 + $0x28] sm:$0xff]
    %v3865 = vld [vmem:[%s3858 + $0x30] sm:$0xff]
    %v3866 = vld [vmem:[%s3858 + $0x38] sm:$0xff]
    %v3867 = vld [vmem:[%s3858 + $0x40] sm:$0xff]
    %v3868 = vld [vmem:[%s3858 + $0x48] sm:$0xff]
    %v3869 = vld [vmem:[%s3858 + $0x50] sm:$0xff]
    %v3870 = vld [vmem:[%s3858 + $0x58] sm:$0xff]
    %v3871 = vld [vmem:[%s3858 + $0x60] sm:$0xff]
    %v3872 = vld [vmem:[%s3858 + $0x68] sm:$0xff]
    %v3873 = vld [vmem:[%s3858 + $0x70] sm:$0xff]
    %v3874 = vld [vmem:[%s3858 + $0x78] sm:$0xff]
    %s3875 = scalar_lea.vmem [#allocation9], 3
    %v3876 = vld [vmem:[%s3875] sm:$0x1]
    %v3878 = vperm.slane %v3876, 0
    %3880 = vmatpush.msra.mxu0 %v3874
    %3881 = vmatpush.msra.mxu0 %v3873
    %3882 = vmatpush.msra.mxu0 %v3872
    %3883 = vmatpush.msra.mxu0 %v3871
    %3884 = vmatpush.msra.mxu0 %v3870
    %3885 = vmatpush.msra.mxu0 %v3869
    %3886 = vmatpush.msra.mxu0 %v3868
    %3887 = vmatpush.msra.mxu0 %v3867
    %3888 = vmatpush.msra.mxu0 %v3866
    %3889 = vmatpush.msra.mxu0 %v3865
    %3890 = vmatpush.msra.mxu0 %v3864
    %3891 = vmatpush.msra.mxu0 %v3863
    %3892 = vmatpush.msra.mxu0 %v3862
    %3893 = vmatpush.msra.mxu0 %v3861
    %3894 = vmatpush.msra.mxu0 %v3860
    %3895 = vmatpush.msra.mxu0 %v3859
    %3896 = vmatmul.f32.gmra.mxu0 %v3856
    %v3897 = vpop.f32.mrf.mxu0
    %v3898 = vadd.f32 %v3878, %v3897
    %3899 = vmatmul.f32.gmra.mxu0 %v3857
    %v3900 = vpop.f32.mrf.mxu0
    %v3901 = vadd.f32 %v3878, %v3900
    %3902 = vdwg.mxu0
    %v3903 = vmul.f32 %v2616, %v3898
    %v3904 = vmul.f32 %v2626, %v3901
    %3905 = vmatpush.msra.mxu0 0.0
    %3906 = vmatpush.msra.mxu0 0.0
    %3907 = vmatpush.msra.mxu0 0.0
    %3908 = vmatpush.msra.mxu0 0.0
    %3909 = vmatpush.msra.mxu0 0.0
    %3910 = vmatpush.msra.mxu0 0.0
    %3911 = vmatpush.msra.mxu0 0.0
    %3912 = vmatpush.msra.mxu0 0.0
    %3913 = vmatpush.msra.mxu0 0.0
    %3914 = vmatpush.msra.mxu0 0.0
    %3915 = vmatpush.msra.mxu0 0.0
    %3916 = vmatpush.msra.mxu0 0.0
    %3917 = vmatpush.msra.mxu0 0.0
    %3918 = vmatpush.msra.mxu0 0.0
    %3919 = vmatpush.msra.mxu0 %v3904
    %3920 = vmatpush.msra.mxu0 %v3903
    %3921 = vmatmul.f32.gmra.mxu0 %v2729
    %v3922 = vpop.f32.mrf.mxu0
    %v3923 = vadd.f32 %v3903, %v3922
    %3924 = vmatmul.f32.gmra.mxu0 %v2732
    %v3925 = vpop.f32.mrf.mxu0
    %v3926 = vadd.f32 %v3904, %v3925
    %3927 = vdwg.mxu0
    %v3928 = vmul.f32 %v2616, %v3923
    %v3929 = vmul.f32 %v2626, %v3926
    %vm3930 = vcmp.gt.f32.partialorder %v3928, 0.0
    %vm3931 = vcmp.gt.f32.partialorder %v3929, 0.0
    %v3932 = vmul.f32 %v3928, 0.01
    %v3933 = vmul.f32 %v3929, 0.01
    %v3934 = vsel %vm3930, %v3928, %v3932
    %v3935 = vsel %vm3931, %v3929, %v3933
    %v3937 = vsel %vm2563, %v2378, 0
    %v3940 = vsel %vm2563, %v2379, 0
    %v3943 = vsel %vm2563, %v2380, 0
    %v3946 = vsel %vm2563, %v2381, 0
    %3948 = vmatpush.msra.mxu0 0.0
    %3949 = vmatpush.msra.mxu0 0.0
    %3950 = vmatpush.msra.mxu0 0.0
    %3951 = vmatpush.msra.mxu0 0.0
    %3952 = vmatpush.msra.mxu0 0.0
    %3953 = vmatpush.msra.mxu0 0.0
    %3954 = vmatpush.msra.mxu0 0.0
    %3955 = vmatpush.msra.mxu0 0.0
    %3956 = vmatpush.msra.mxu0 0.0
    %3957 = vmatpush.msra.mxu0 0.0
    %3958 = vmatpush.msra.mxu0 0.0
    %3959 = vmatpush.msra.mxu0 0.0
    %3960 = vmatpush.msra.mxu0 0.0
    %3961 = vmatpush.msra.mxu0 0.0
    %3962 = vmatpush.msra.mxu0 %v3935
    %3963 = vmatpush.msra.mxu0 %v3934
    %3964 = vmatmul.f32.gmra.mxu0 %v3937
    %v3965 = vpop.f32.mrf.mxu0
    %v3966 = vadd.f32 0.0, %v3965
    %3967 = vmatmul.f32.gmra.mxu0 %v3940
    %v3968 = vpop.f32.mrf.mxu0
    %v3969 = vadd.f32 0.0, %v3968
    %3970 = vmatmul.f32.gmra.mxu0 %v3943
    %v3971 = vpop.f32.mrf.mxu0
    %v3972 = vadd.f32 0.0, %v3971
    %3973 = vmatmul.f32.gmra.mxu0 %v3946
    %v3974 = vpop.f32.mrf.mxu0
    %v3975 = vadd.f32 0.0, %v3974
    %3976 = vdwg.mxu0
    %v3977 = vsub.f32 %v3966, %v389
    %v3978 = vsub.f32 %v3969, %v390
    %v3979 = vsub.f32 %v3972, %v391
    %v3980 = vsub.f32 %v3975, %v392
    %s3981 = scalar_lea.vmem [#allocation11], 6
    %v3982 = vld [vmem:[%s3981] sm:$0x1]
    %s3983 = scalar_lea.vmem [#allocation12], 6
    %v3984 = vld [vmem:[%s3983] sm:$0x1]
    %v3985 = vadd.f32 %v3977, %v3978
    %v3986 = vadd.f32 %v3985, %v3979
    %v3987 = vadd.f32 %v3986, %v3980
    %v3988 = vrot.slane %v3987, 4
    %v3989 = vadd.f32 %v3987, %v3988
    %v3990 = vrot.slane %v3989, 2
    %v3991 = vadd.f32 %v3989, %v3990
    %v3992 = vrot.slane %v3991, 1
    %v3993 = vadd.f32 %v3991, %v3992
    %v3994 = vmul.f32 %v3993, %v234
    %v3995 = vsub.f32 %v3977, %v3994
    %v3996 = vsub.f32 %v3978, %v3994
    %v3997 = vsub.f32 %v3979, %v3994
    %v3998 = vsub.f32 %v3980, %v3994
    %v3999 = vmul.f32 %v3995, %v3995
    %v4000 = vmul.f32 %v3996, %v3996
    %v4001 = vmul.f32 %v3997, %v3997
    %v4002 = vmul.f32 %v3998, %v3998
    %v4003 = vadd.f32 %v3999, %v4000
    %v4004 = vadd.f32 %v4003, %v4001
    %v4005 = vadd.f32 %v4004, %v4002
    %v4006 = vrot.slane %v4005, 4
    %v4007 = vadd.f32 %v4005, %v4006
    %v4008 = vrot.slane %v4007, 2
    %v4009 = vadd.f32 %v4007, %v4008
    %v4010 = vrot.slane %v4009, 1
    %v4011 = vadd.f32 %v4009, %v4010
    %v4012 = vmul.f32 %v4011, %v234
    %v4013 = vadd.f32 %v4012, 1e-05
    %v4014 = vrsqrt.pop %v4013
    %v4015 = vmul.f32 %v4014, %v4013
    %v4016 = vmul.f32 %v4015, %v4014
    %v4017 = vmul.f32 0.5, %v4016
    %v4018 = vsub.f32 1.5, %v4017
    %v4019 = vmul.f32 %v4014, %v4018
    %vm4020 = vweird.f32 %v4013
    %vm4021 = vweird.f32 %v4014
    %vm4022 = vmor %vm4020, %vm4021
    %v4023 = vsel %vm4022, %v4014, %v4019
    %v4024 = vmul.f32 %v3995, %v4023
    %v4025 = vmul.f32 %v3996, %v4023
    %v4026 = vmul.f32 %v3997, %v4023
    %v4027 = vmul.f32 %v3998, %v4023
    %v4029 = vperm.slane %v3982, 0
    %v4031 = vmul.f32 %v4024, %v4029
    %v4032 = vmul.f32 %v4025, %v4029
    %v4033 = vmul.f32 %v4026, %v4029
    %v4034 = vmul.f32 %v4027, %v4029
    %v4036 = vperm.slane %v3984, 0
    %v4038 = vadd.f32 %v4031, %v4036
    %v4039 = vadd.f32 %v4032, %v4036
    %v4040 = vadd.f32 %v4033, %v4036
    %v4041 = vadd.f32 %v4034, %v4036
    %s4042 = scalar_lea.vmem [#allocation8], 768
    %v4043 = vld [vmem:[%s4042] sm:$0xff]
    %v4044 = vld [vmem:[%s4042 + $0x8] sm:$0xff]
    %v4045 = vld [vmem:[%s4042 + $0x10] sm:$0xff]
    %v4046 = vld [vmem:[%s4042 + $0x18] sm:$0xff]
    %v4047 = vld [vmem:[%s4042 + $0x20] sm:$0xff]
    %v4048 = vld [vmem:[%s4042 + $0x28] sm:$0xff]
    %v4049 = vld [vmem:[%s4042 + $0x30] sm:$0xff]
    %v4050 = vld [vmem:[%s4042 + $0x38] sm:$0xff]
    %v4051 = vld [vmem:[%s4042 + $0x40] sm:$0xff]
    %v4052 = vld [vmem:[%s4042 + $0x48] sm:$0xff]
    %v4053 = vld [vmem:[%s4042 + $0x50] sm:$0xff]
    %v4054 = vld [vmem:[%s4042 + $0x58] sm:$0xff]
    %v4055 = vld [vmem:[%s4042 + $0x60] sm:$0xff]
    %v4056 = vld [vmem:[%s4042 + $0x68] sm:$0xff]
    %v4057 = vld [vmem:[%s4042 + $0x70] sm:$0xff]
    %v4058 = vld [vmem:[%s4042 + $0x78] sm:$0xff]
    %s4059 = scalar_lea.vmem [#allocation9], 6
    %v4060 = vld [vmem:[%s4059] sm:$0x1]
    %v4062 = vperm.slane %v4060, 0
    %4064 = vmatpush.msra.mxu0 %v4058
    %4065 = vmatpush.msra.mxu0 %v4057
    %4066 = vmatpush.msra.mxu0 %v4056
    %4067 = vmatpush.msra.mxu0 %v4055
    %4068 = vmatpush.msra.mxu0 %v4054
    %4069 = vmatpush.msra.mxu0 %v4053
    %4070 = vmatpush.msra.mxu0 %v4052
    %4071 = vmatpush.msra.mxu0 %v4051
    %4072 = vmatpush.msra.mxu0 %v4050
    %4073 = vmatpush.msra.mxu0 %v4049
    %4074 = vmatpush.msra.mxu0 %v4048
    %4075 = vmatpush.msra.mxu0 %v4047
    %4076 = vmatpush.msra.mxu0 %v4046
    %4077 = vmatpush.msra.mxu0 %v4045
    %4078 = vmatpush.msra.mxu0 %v4044
    %4079 = vmatpush.msra.mxu0 %v4043
    %4080 = vmatmul.f32.gmra.mxu0 %v4038
    %v4081 = vpop.f32.mrf.mxu0
    %v4082 = vadd.f32 %v4062, %v4081
    %4083 = vmatmul.f32.gmra.mxu0 %v4039
    %v4084 = vpop.f32.mrf.mxu0
    %v4085 = vadd.f32 %v4062, %v4084
    %4086 = vmatmul.f32.gmra.mxu0 %v4040
    %v4087 = vpop.f32.mrf.mxu0
    %v4088 = vadd.f32 %v4062, %v4087
    %4089 = vmatmul.f32.gmra.mxu0 %v4041
    %v4090 = vpop.f32.mrf.mxu0
    %v4091 = vadd.f32 %v4062, %v4090
    %4092 = vdwg.mxu0
    %vm4093 = vcmp.gt.f32.partialorder %v4082, 0.0
    %vm4094 = vcmp.gt.f32.partialorder %v4085, 0.0
    %vm4095 = vcmp.gt.f32.partialorder %v4088, 0.0
    %vm4096 = vcmp.gt.f32.partialorder %v4091, 0.0
    %v4097 = vmul.f32 %v4082, 0.01
    %v4098 = vmul.f32 %v4085, 0.01
    %v4099 = vmul.f32 %v4088, 0.01
    %v4100 = vmul.f32 %v4091, 0.01
    %v4101 = vsel %vm4093, %v4082, %v4097
    %v4102 = vsel %vm4094, %v4085, %v4098
    %v4103 = vsel %vm4095, %v4088, %v4099
    %v4104 = vsel %vm4096, %v4091, %v4100
    %v4105 = vmul.f32 %v4101, %v3966
    %v4106 = vmul.f32 %v4102, %v3969
    %v4107 = vmul.f32 %v4103, %v3972
    %v4108 = vmul.f32 %v4104, %v3975
    %v4109 = vadd.f32 %v4105, %v389
    %v4110 = vadd.f32 %v4106, %v390
    %v4111 = vadd.f32 %v4107, %v391
    %v4112 = vadd.f32 %v4108, %v392
    %s4113 = scalar_lea.vmem [#allocation11], 4
    %v4114 = vld [vmem:[%s4113] sm:$0x1]
    %s4115 = scalar_lea.vmem [#allocation12], 4
    %v4116 = vld [vmem:[%s4115] sm:$0x1]
    %v4117 = vadd.f32 %v4109, %v4110
    %v4118 = vadd.f32 %v4117, %v4111
    %v4119 = vadd.f32 %v4118, %v4112
    %v4120 = vrot.slane %v4119, 4
    %v4121 = vadd.f32 %v4119, %v4120
    %v4122 = vrot.slane %v4121, 2
    %v4123 = vadd.f32 %v4121, %v4122
    %v4124 = vrot.slane %v4123, 1
    %v4125 = vadd.f32 %v4123, %v4124
    %v4126 = vmul.f32 %v4125, %v234
    %v4127 = vsub.f32 %v4109, %v4126
    %v4128 = vsub.f32 %v4110, %v4126
    %v4129 = vsub.f32 %v4111, %v4126
    %v4130 = vsub.f32 %v4112, %v4126
    %v4131 = vmul.f32 %v4127, %v4127
    %v4132 = vmul.f32 %v4128, %v4128
    %v4133 = vmul.f32 %v4129, %v4129
    %v4134 = vmul.f32 %v4130, %v4130
    %v4135 = vadd.f32 %v4131, %v4132
    %v4136 = vadd.f32 %v4135, %v4133
    %v4137 = vadd.f32 %v4136, %v4134
    %v4138 = vrot.slane %v4137, 4
    %v4139 = vadd.f32 %v4137, %v4138
    %v4140 = vrot.slane %v4139, 2
    %v4141 = vadd.f32 %v4139, %v4140
    %v4142 = vrot.slane %v4141, 1
    %v4143 = vadd.f32 %v4141, %v4142
    %v4144 = vmul.f32 %v4143, %v234
    %v4145 = vadd.f32 %v4144, 1e-05
    %v4146 = vrsqrt.pop %v4145
    %v4147 = vmul.f32 %v4146, %v4145
    %v4148 = vmul.f32 %v4147, %v4146
    %v4149 = vmul.f32 0.5, %v4148
    %v4150 = vsub.f32 1.5, %v4149
    %v4151 = vmul.f32 %v4146, %v4150
    %vm4152 = vweird.f32 %v4145
    %vm4153 = vweird.f32 %v4146
    %vm4154 = vmor %vm4152, %vm4153
    %v4155 = vsel %vm4154, %v4146, %v4151
    %v4156 = vmul.f32 %v4127, %v4155
    %v4157 = vmul.f32 %v4128, %v4155
    %v4158 = vmul.f32 %v4129, %v4155
    %v4159 = vmul.f32 %v4130, %v4155
    %v4161 = vperm.slane %v4114, 0
    %v4163 = vmul.f32 %v4156, %v4161
    %v4164 = vmul.f32 %v4157, %v4161
    %v4165 = vmul.f32 %v4158, %v4161
    %v4166 = vmul.f32 %v4159, %v4161
    %v4168 = vperm.slane %v4116, 0
    %v4170 = vadd.f32 %v4163, %v4168
    %v4171 = vadd.f32 %v4164, %v4168
    %v4172 = vadd.f32 %v4165, %v4168
    %v4173 = vadd.f32 %v4166, %v4168
    %s4174 = scalar_lea.vmem [#allocation8], 512
    %v4175 = vld [vmem:[%s4174] sm:$0xff]
    %v4176 = vld [vmem:[%s4174 + $0x8] sm:$0xff]
    %v4177 = vld [vmem:[%s4174 + $0x10] sm:$0xff]
    %v4178 = vld [vmem:[%s4174 + $0x18] sm:$0xff]
    %v4179 = vld [vmem:[%s4174 + $0x20] sm:$0xff]
    %v4180 = vld [vmem:[%s4174 + $0x28] sm:$0xff]
    %v4181 = vld [vmem:[%s4174 + $0x30] sm:$0xff]
    %v4182 = vld [vmem:[%s4174 + $0x38] sm:$0xff]
    %v4183 = vld [vmem:[%s4174 + $0x40] sm:$0xff]
    %v4184 = vld [vmem:[%s4174 + $0x48] sm:$0xff]
    %v4185 = vld [vmem:[%s4174 + $0x50] sm:$0xff]
    %v4186 = vld [vmem:[%s4174 + $0x58] sm:$0xff]
    %v4187 = vld [vmem:[%s4174 + $0x60] sm:$0xff]
    %v4188 = vld [vmem:[%s4174 + $0x68] sm:$0xff]
    %v4189 = vld [vmem:[%s4174 + $0x70] sm:$0xff]
    %v4190 = vld [vmem:[%s4174 + $0x78] sm:$0xff]
    %s4191 = scalar_lea.vmem [#allocation9], 4
    %v4192 = vld [vmem:[%s4191] sm:$0x1]
    %v4194 = vperm.slane %v4192, 0
    %4196 = vmatpush.msra.mxu0 %v4190
    %4197 = vmatpush.msra.mxu0 %v4189
    %4198 = vmatpush.msra.mxu0 %v4188
    %4199 = vmatpush.msra.mxu0 %v4187
    %4200 = vmatpush.msra.mxu0 %v4186
    %4201 = vmatpush.msra.mxu0 %v4185
    %4202 = vmatpush.msra.mxu0 %v4184
    %4203 = vmatpush.msra.mxu0 %v4183
    %4204 = vmatpush.msra.mxu0 %v4182
    %4205 = vmatpush.msra.mxu0 %v4181
    %4206 = vmatpush.msra.mxu0 %v4180
    %4207 = vmatpush.msra.mxu0 %v4179
    %4208 = vmatpush.msra.mxu0 %v4178
    %4209 = vmatpush.msra.mxu0 %v4177
    %4210 = vmatpush.msra.mxu0 %v4176
    %4211 = vmatpush.msra.mxu0 %v4175
    %4212 = vmatmul.f32.gmra.mxu0 %v4170
    %v4213 = vpop.f32.mrf.mxu0
    %v4214 = vadd.f32 %v4194, %v4213
    %4215 = vmatmul.f32.gmra.mxu0 %v4171
    %v4216 = vpop.f32.mrf.mxu0
    %v4217 = vadd.f32 %v4194, %v4216
    %4218 = vmatmul.f32.gmra.mxu0 %v4172
    %v4219 = vpop.f32.mrf.mxu0
    %v4220 = vadd.f32 %v4194, %v4219
    %4221 = vmatmul.f32.gmra.mxu0 %v4173
    %v4222 = vpop.f32.mrf.mxu0
    %v4223 = vadd.f32 %v4194, %v4222
    %4224 = vdwg.mxu0
    %v4225 = vmul.f32 %v186, %v4214
    %v4226 = vmul.f32 %v196, %v4217
    %v4227 = vmul.f32 %v206, %v4220
    %v4228 = vmul.f32 %v216, %v4223
    %4229 = vmatpush.msra.mxu0 0.0
    %4230 = vmatpush.msra.mxu0 0.0
    %4231 = vmatpush.msra.mxu0 0.0
    %4232 = vmatpush.msra.mxu0 0.0
    %4233 = vmatpush.msra.mxu0 0.0
    %4234 = vmatpush.msra.mxu0 0.0
    %4235 = vmatpush.msra.mxu0 0.0
    %4236 = vmatpush.msra.mxu0 0.0
    %4237 = vmatpush.msra.mxu0 0.0
    %4238 = vmatpush.msra.mxu0 0.0
    %4239 = vmatpush.msra.mxu0 0.0
    %4240 = vmatpush.msra.mxu0 0.0
    %4241 = vmatpush.msra.mxu0 %v4228
    %4242 = vmatpush.msra.mxu0 %v4227
    %4243 = vmatpush.msra.mxu0 %v4226
    %4244 = vmatpush.msra.mxu0 %v4225
    %4245 = vmatmul.f32.gmra.mxu0 %v337
    %v4246 = vpop.f32.mrf.mxu0
    %v4247 = vadd.f32 %v4225, %v4246
    %4248 = vmatmul.f32.gmra.mxu0 %v340
    %v4249 = vpop.f32.mrf.mxu0
    %v4250 = vadd.f32 %v4226, %v4249
    %4251 = vmatmul.f32.gmra.mxu0 %v343
    %v4252 = vpop.f32.mrf.mxu0
    %v4253 = vadd.f32 %v4227, %v4252
    %4254 = vmatmul.f32.gmra.mxu0 %v346
    %v4255 = vpop.f32.mrf.mxu0
    %v4256 = vadd.f32 %v4228, %v4255
    %4257 = vdwg.mxu0
    %v4258 = vmul.f32 %v186, %v4247
    %v4259 = vmul.f32 %v196, %v4250
    %v4260 = vmul.f32 %v206, %v4253
    %v4261 = vmul.f32 %v216, %v4256
    %vm4262 = vcmp.gt.f32.partialorder %v4258, 0.0
    %vm4263 = vcmp.gt.f32.partialorder %v4259, 0.0
    %vm4264 = vcmp.gt.f32.partialorder %v4260, 0.0
    %vm4265 = vcmp.gt.f32.partialorder %v4261, 0.0
    %v4266 = vmul.f32 %v4258, 0.01
    %v4267 = vmul.f32 %v4259, 0.01
    %v4268 = vmul.f32 %v4260, 0.01
    %v4269 = vmul.f32 %v4261, 0.01
    %v4270 = vsel %vm4262, %v4258, %v4266
    %v4271 = vsel %vm4263, %v4259, %v4267
    %v4272 = vsel %vm4264, %v4260, %v4268
    %v4273 = vsel %vm4265, %v4261, %v4269
    %v4274 = vadd.f32 %v4270, %v156
    %v4275 = vadd.f32 %v4271, %v157
    %v4276 = vadd.f32 %v4272, %v158
    %v4277 = vadd.f32 %v4273, %v159
    %4278 = vst [vmem:[#allocation16] sm:$0xff] %v4274
    %4279 = vst [vmem:[#allocation16 + $0x8] sm:$0xff] %v4275
    %4280 = vst [vmem:[#allocation16 + $0x10] sm:$0xff] %v4276
    %4281 = vst [vmem:[#allocation16 + $0x18] sm:$0xff] %v4277
    // Predicated region
    $region66: #{tpu_custom_call.1} parent=1 // pred_check
      _
    $region67: #{tpu_custom_call.1} parent=1 // pred_check_branch
      %4283 = sbr.rel (0) target = $region69
    $region68: #{tpu_custom_call.1} parent=1 // pred_region
      %4285 = vsyncadd [#allocation4], 0
      %s4286 = sshll.u32 [#allocation16], 4
      %s4287 = int_to_ptr.vmem [resolvable:$true] %s4286
      %s4288 = sshll.u32 %s8, 4
      %s4289 = int_to_ptr.hbm [resolvable:$true] %s4288
      %4294 = dma.vmem_to_hbm [thread:$0]  %s4287, 512, %s4289, [#allocation4], 128, 128, 8
    $region69: #{tpu_custom_call.1} parent=1 // pred_fallthru
      _
    // Predicated region
    $region70: #{tpu_custom_call.1} parent=1 // pred_check
      _
    $region71: #{tpu_custom_call.1} parent=1 // pred_check_branch
      %4296 = sbr.rel (0) target = $region73
    $region72: #{tpu_custom_call.1} parent=1 // pred_region
      %4298 = dma.done [#allocation4], 512
    $region73: #{tpu_custom_call.1} parent=1 // pred_fallthru
      _
    %4299 = vsyncpa [#allocation3], 1
    %4300 = vsyncpa [#allocation7], 1
    %4301 = vsyncpa [#allocation10], 1
    %4302 = vsyncpa [#allocation13], 1
    %4303 = vsyncpa [#allocation4], 1
    %4304 = vsyncpa [#allocation5], 1

</llo_original>
